<compile_context>
chip_gen: v5e
topology: v5e:2x2
jax: 0.10.0
libtpu: 0.0.40
codegen_flags: <defaults>
</compile_context>

<pallas_src>
import functools
import math

import jax
import jax.numpy as jnp
from jax import lax
from jax.experimental import pallas as pl
from jax.experimental.pallas import tpu as pltpu

THRESHOLD = 0.35


# ------------------------ fused GRU + conv/linear kernel ------------------------ #
def _cnet_kernel(x_ref, len_ref, wih_ref, bih_ref,
                 whh_f_ref, bhh_f_ref, whh_b_ref, bhh_b_ref,
                 cw_ref, cb_ref, lw_ref, lb_ref,
                 out_ref, vp_ref, gi_scr, *, threshold):
    # x_ref   : (nb*T, D) bf16            len_ref : (nb, 1) i32
    # wih_ref : (D, 6H) bf16 fused fwd|bwd gates (r|z|n), bih_ref: (1, 6H) f32
    # whh_*   : (H, 3H) bf16, bhh_*: (1, 3H) f32
    # cw_ref  : (ksize, C, Kc) bf16 (tap-major conv weight), cb_ref: (1, Kc) f32
    # lw_ref  : (Kc, V) f32, lb_ref: (1, V) f32
    # out_ref : (nb, T, 2H) f32 GRU output (fwd -> [..., :H], bwd -> [..., H:])
    # vp_ref  : (nb, V) f32 thresholded sigmoid output per sentence
    # gi_scr  : (nb, T, 6H) f32 hoisted input-gate pre-activations
    nb, T, six_h = gi_scr.shape
    H = six_h // 6
    C = 2 * H
    ksize, _, Kc = cw_ref.shape
    pad = (ksize - 1) // 2
    f32, bf16 = jnp.float32, jnp.bfloat16

    # -------- hoisted input projection: ONE (nb*T, D) x (D, 6H) GEMM, both dirs ----
    gi = jnp.dot(x_ref[...], wih_ref[...],
                 preferred_element_type=f32) + bih_ref[...]         # (nb*T, 6H) f32
    gi_scr[...] = gi.reshape(nb, T, six_h)

    lens = len_ref[...]                                             # (nb, 1) i32
    whh_f = whh_f_ref[...]
    bhh_f = bhh_f_ref[...]
    whh_b = whh_b_ref[...]
    bhh_b = bhh_b_ref[...]
    h0 = jnp.zeros((nb, H), f32)

    def make_step(col_off, whh, bhh, out_off):
        def step(t, h):
            gi_t = gi_scr[:, t, col_off:col_off + 3 * H]            # (nb, 3H) f32
            # single fused recurrent matmul (bf16 operands, f32 accumulation)
            gh = jnp.dot(h.astype(bf16), whh,
                         preferred_element_type=f32) + bhh          # (nb, 3H) f32
            # r and z share ONE sigmoid over the contiguous first 2H columns (one EUP stream)
            rz = jax.nn.sigmoid(gi_t[:, :2 * H] + gh[:, :2 * H])
            r, z = rz[:, :H], rz[:, H:]
            n = jnp.tanh(gi_t[:, 2 * H:] + r * gh[:, 2 * H:])
            h_new = (1.0 - z) * n + z * h
            mask = t < lens                                         # (nb, 1) bool
            # padded timesteps -> 0 (pad_packed semantics); carried h unchanged
            out_ref[:, t, out_off:out_off + H] = jnp.where(mask, h_new, 0.0)
            return jnp.where(mask, h_new, h)
        return step

    fwd_step = make_step(0, whh_f, bhh_f, 0)
    bwd_step = make_step(3 * H, whh_b, bhh_b, H)

    if T <= 64:
        # static unroll: small compile-time T -> Python loop (LLO scheduler sees all ILP)
        h = h0
        for t in range(T):
            h = fwd_step(t, h)
        h = h0
        for t in range(T - 1, -1, -1):
            h = bwd_step(t, h)
    else:
        # larger T: partially unrolled serial loops
        lax.fori_loop(0, T, fwd_step, h0, unroll=8)
        lax.fori_loop(0, T, lambda i, h: bwd_step(T - 1 - i, h), h0, unroll=8)

    # -------- fused Conv1d (k shifted matmuls) + ReLU + max-pool + Linear ----------
    g = out_ref[...]                                                # (nb, T, C) f32 (VMEM resident)
    if pad > 0:
        zpad = jnp.zeros((nb, pad, C), dtype=f32)
        gp = jnp.concatenate([zpad, g, zpad], axis=1)               # (nb, T + 2p, C)
    else:
        gp = g
    acc = jnp.zeros((nb * T, Kc), f32)
    for k in range(ksize):                                          # no lane-axis im2col concat
        sl = gp[:, k:k + T, :].reshape(nb * T, C).astype(bf16)
        acc = acc + jnp.dot(sl, cw_ref[k], preferred_element_type=f32)
    acc = jnp.maximum(acc + cb_ref[...], 0.0).reshape(nb, T, Kc)    # bias + ReLU
    pooled = jnp.max(acc, axis=1)                                   # max over time -> (nb, Kc)

    logits = jnp.dot(pooled, lw_ref[...],
                     preferred_element_type=f32) + lb_ref[...]      # (nb, V)
    vp = jax.nn.sigmoid(logits)
    vp_ref[...] = jnp.where(vp < threshold, 0.0, vp)                # strict '<' like torch.where


# ----------------------------------- wrapper ----------------------------------- #
def cnet_forward(params, review_emb, lengths, *, gru_block_n=128):
    B, S, T, D = review_emb.shape
    N = B * S
    H = params["whh_f"].shape[0]
    C = 2 * H
    ksize, _, Kc = params["conv_w"].shape
    V = params["lin_w"].shape[1]
    f32, bf16 = jnp.float32, jnp.bfloat16

    def _round_up(a, m):
        return ((a + m - 1) // m) * m

    # Target nb >= 128 so the recurrent matmul fills the MXU M-dimension; clamp to the
    # padded problem size so tiny demo shapes don't get blown up to a full tile.
    # (On v7x, keep n_pad // nb >= 2 for real shapes so both TensorCores get work.)
    nb = min(_round_up(gru_block_n, 8), _round_up(N, 8))
    n_pad = _round_up(N, nb)

    x = review_emb.astype(bf16).reshape(N, T, D)                    # batch-major, no HBM transpose
    len_flat = lengths.reshape(N).astype(jnp.int32)
    if n_pad != N:
        x = jnp.pad(x, ((0, n_pad - N), (0, 0), (0, 0)))
        len_flat = jnp.pad(len_flat, (0, n_pad - N))                # pad rows: len 0 -> zero output
    x = x.reshape(n_pad * T, D)
    len_col = len_flat.reshape(n_pad, 1)

    def _w2(shape):
        return pl.BlockSpec(shape, lambda i: (0, 0))

    gru_full, vp_full = pl.pallas_call(
        functools.partial(_cnet_kernel, threshold=THRESHOLD),
        grid=(n_pad // nb,),
        out_shape=(jax.ShapeDtypeStruct((n_pad, T, C), f32),
                   jax.ShapeDtypeStruct((n_pad, V), f32)),
        in_specs=[
            pl.BlockSpec((nb * T, D), lambda i: (i, 0)),            # x (block of nb sequences)
            pl.BlockSpec((nb, 1), lambda i: (i, 0)),                # lengths
            _w2((D, 6 * H)), _w2((1, 6 * H)),                       # fused input-proj (fwd|bwd)
            _w2((H, 3 * H)), _w2((1, 3 * H)),                       # whh_f, bhh_f
            _w2((H, 3 * H)), _w2((1, 3 * H)),                       # whh_b, bhh_b
            pl.BlockSpec((ksize, C, Kc), lambda i: (0, 0, 0)),      # conv weight (tap-major)
            _w2((1, Kc)), _w2((Kc, V)), _w2((1, V)),                # conv bias, lin_w, lin_b
        ],
        out_specs=(pl.BlockSpec((nb, T, C), lambda i: (i, 0, 0)),
                   pl.BlockSpec((nb, V), lambda i: (i, 0))),
        scratch_shapes=[pltpu.VMEM((nb, T, 6 * H), f32)],           # hoisted gate pre-activations
        compiler_params=pltpu.CompilerParams(
            dimension_semantics=("parallel",),
            vmem_limit_bytes=48 * 1024 * 1024),
    )(x, len_col,
      params["wih"].astype(bf16), params["bih"],
      params["whh_f"].astype(bf16), params["bhh_f"],
      params["whh_b"].astype(bf16), params["bhh_b"],
      params["conv_w"].astype(bf16), params["conv_b"],
      params["lin_w"], params["lin_b"])

    gru_repr = gru_full[:N].reshape(B, S * T, C)
    view_p = vp_full[:N].reshape(B, S, V)
    # per-batch sum of squared view_p over sentences: O(B*S*V), negligible -> plain XLA
    final_repr = jnp.sum(view_p * view_p, axis=1)
    return gru_repr, view_p, final_repr


# ----------------------------- deterministic params ----------------------------- #
def init_params(key, gru_in, gru_out, k_count, k_size, view_size):
    D, H, C = gru_in, gru_out, 2 * gru_out
    ks = jax.random.split(key, 14)
    sg = 1.0 / math.sqrt(H)            # PyTorch GRU init scale
    sc = 1.0 / math.sqrt(C * k_size)   # Conv1d init scale
    sl = 1.0 / math.sqrt(k_count)      # Linear init scale

    def u(k, shape, s):
        return jax.random.uniform(k, shape, jnp.float32, -s, s)

    wih_f = u(ks[0], (D, 3 * H), sg)
    wih_b = u(ks[4], (D, 3 * H), sg)
    bih_f = u(ks[2], (1, 3 * H), sg)
    bih_b = u(ks[6], (1, 3 * H), sg)

    conv_w = u(ks[10], (k_count, C, k_size), sc)            # torch layout (out, in, k)
    conv_w_tap = jnp.transpose(conv_w, (2, 1, 0))           # (k_size, C, k_count): w[k, c, o]

    params = {
        # fused (fwd|bwd) input projection, each direction fused gates (r|z|n), x @ W layout
        "wih": jnp.concatenate([wih_f, wih_b], axis=1),     # (D, 6H)
        "bih": jnp.concatenate([bih_f, bih_b], axis=1),     # (1, 6H)
        "whh_f": u(ks[1], (H, 3 * H), sg), "bhh_f": u(ks[3], (1, 3 * H), sg),
        "whh_b": u(ks[5], (H, 3 * H), sg), "bhh_b": u(ks[7], (1, 3 * H), sg),
        # Conv1d (tap-major) and Linear (transposed for x @ W)
        "conv_w": conv_w_tap,
        "conv_b": u(ks[11], (1, k_count), sc),
        "lin_w": u(ks[12], (k_count, view_size), sl),
        "lin_b": u(ks[13], (1, view_size), sl),
    }
    return params


if __name__ == "__main__":
    B, S, T = 2, 3, 8               # batch, sent_count, sent_length
    gru_in, gru_out = 16, 32
    k_count, k_size, view_size = 8, 3, 4

    key = jax.random.PRNGKey(0)
    k_inp, k_len, k_par = jax.random.split(key, 3)
    review_emb = jax.random.normal(k_inp, (B, S, T, gru_in), jnp.float32)
    lengths = jax.random.randint(k_len, (B, S), 1, T + 1)   # valid lengths in [1, T]
    params = init_params(k_par, gru_in, gru_out, k_count, k_size, view_size)

    fwd = jax.jit(cnet_forward)
    gru_repr, view_p, final_repr = fwd(params, review_emb, lengths)
    jax.block_until_ready((gru_repr, view_p, final_repr))

    assert gru_repr.shape == (B, S * T, 2 * gru_out)
    assert view_p.shape == (B, S, view_size)
    assert final_repr.shape == (B, view_size)
    assert bool(jnp.all(jnp.isfinite(gru_repr)))
    assert bool(jnp.all(jnp.isfinite(view_p)))
    assert bool(jnp.all(jnp.isfinite(final_repr)))
    # thresholded sigmoid outputs must be 0 or in [threshold, 1]
    assert bool(jnp.all((view_p == 0.0) | ((view_p >= THRESHOLD) & (view_p <= 1.0))))
    print("KERNEL_OK")
</pallas_src>

<mosaic_0001>
module attributes {stable_mosaic.version = 11 : i64} {
  func.func @_cnet_kernel(%arg0: i32, %arg1: memref<64x16xbf16, #tpu.memory_space<vmem>>, %arg2: memref<8x1xi32, #tpu.memory_space<vmem>>, %arg3: memref<16x192xbf16, #tpu.memory_space<vmem>>, %arg4: memref<1x192xf32, #tpu.memory_space<vmem>>, %arg5: memref<32x96xbf16, #tpu.memory_space<vmem>>, %arg6: memref<1x96xf32, #tpu.memory_space<vmem>>, %arg7: memref<32x96xbf16, #tpu.memory_space<vmem>>, %arg8: memref<1x96xf32, #tpu.memory_space<vmem>>, %arg9: memref<3x64x8xbf16, #tpu.memory_space<vmem>>, %arg10: memref<1x8xf32, #tpu.memory_space<vmem>>, %arg11: memref<8x4xf32, #tpu.memory_space<vmem>>, %arg12: memref<1x4xf32, #tpu.memory_space<vmem>>, %arg13: memref<8x8x64xf32, #tpu.memory_space<vmem>>, %arg14: memref<8x4xf32, #tpu.memory_space<vmem>>, %arg15: memref<8x8x192xf32, #tpu.memory_space<vmem>>) attributes {dimension_semantics = [#tpu.dimension_semantics<parallel>], iteration_bounds = array<i64: 1>, scalar_prefetch = 0 : i64, scratch_operands = 1 : i64, tpu.core_type = #tpu.core_type<tc>, window_params = [{transform_indices = @transform_0, window_bounds = array<i64: 64, 16>}, {transform_indices = @transform_1, window_bounds = array<i64: 8, 1>}, {pipeline_mode = #tpu.pipeline_mode<synchronous>, transform_indices = @transform_2, window_bounds = array<i64: 16, 192>}, {pipeline_mode = #tpu.pipeline_mode<synchronous>, transform_indices = @transform_3, window_bounds = array<i64: 1, 192>}, {pipeline_mode = #tpu.pipeline_mode<synchronous>, transform_indices = @transform_4, window_bounds = array<i64: 32, 96>}, {pipeline_mode = #tpu.pipeline_mode<synchronous>, transform_indices = @transform_5, window_bounds = array<i64: 1, 96>}, {pipeline_mode = #tpu.pipeline_mode<synchronous>, transform_indices = @transform_6, window_bounds = array<i64: 32, 96>}, {pipeline_mode = #tpu.pipeline_mode<synchronous>, transform_indices = @transform_7, window_bounds = array<i64: 1, 96>}, {pipeline_mode = #tpu.pipeline_mode<synchronous>, transform_indices = @transform_8, window_bounds = array<i64: 3, 64, 8>}, {pipeline_mode = #tpu.pipeline_mode<synchronous>, transform_indices = @transform_9, window_bounds = array<i64: 1, 8>}, {pipeline_mode = #tpu.pipeline_mode<synchronous>, transform_indices = @transform_10, window_bounds = array<i64: 8, 4>}, {pipeline_mode = #tpu.pipeline_mode<synchronous>, transform_indices = @transform_11, window_bounds = array<i64: 1, 4>}, {transform_indices = @transform_12, window_bounds = array<i64: 8, 8, 64>}, {transform_indices = @transform_13, window_bounds = array<i64: 8, 4>}]} {
    %c0 = arith.constant 0 : index
    %c0_0 = arith.constant 0 : index
    %0 = vector.load %arg1[%c0, %c0_0] : memref<64x16xbf16, #tpu.memory_space<vmem>>, vector<64x16xbf16>
    %c0_1 = arith.constant 0 : index
    %c0_2 = arith.constant 0 : index
    %1 = vector.load %arg3[%c0_1, %c0_2] : memref<16x192xbf16, #tpu.memory_space<vmem>>, vector<16x192xbf16>
    %cst = arith.constant dense<0.000000e+00> : vector<64x192xf32>
    %2 = tpu.matmul %0, %1, %cst {dimension_numbers = #tpu.dot_dimension_numbers<[1], [0], [0], [1], [0, 0, 1, 1], [], []>} : vector<64x16xbf16>, vector<16x192xbf16>, vector<64x192xf32> -> vector<64x192xf32>
    %c0_3 = arith.constant 0 : index
    %c0_4 = arith.constant 0 : index
    %3 = vector.load %arg4[%c0_3, %c0_4] : memref<1x192xf32, #tpu.memory_space<vmem>>, vector<1x192xf32>
    %4 = vector.broadcast %3 : vector<1x192xf32> to vector<64x192xf32>
    %5 = arith.addf %2, %4 : vector<64x192xf32>
    %6 = vector.shape_cast %5 : vector<64x192xf32> to vector<8x8x192xf32>
    %c0_5 = arith.constant 0 : index
    %c0_6 = arith.constant 0 : index
    %c0_7 = arith.constant 0 : index
    %7 = vector.load %arg15[%c0_5, %c0_6, %c0_7] : memref<8x8x192xf32, #tpu.memory_space<vmem>>, vector<8x8x192xf32>
    tpu.vector_store %arg15[%c0_5, %c0_6, %c0_7], %6 {strides = array<i32>} : memref<8x8x192xf32, #tpu.memory_space<vmem>>, vector<8x8x192xf32>,
    %c0_8 = arith.constant 0 : index
    %c0_9 = arith.constant 0 : index
    %8 = vector.load %arg2[%c0_8, %c0_9] : memref<8x1xi32, #tpu.memory_space<vmem>>, vector<8x1xi32>
    %c0_10 = arith.constant 0 : index
    %c0_11 = arith.constant 0 : index
    %9 = vector.load %arg5[%c0_10, %c0_11] : memref<32x96xbf16, #tpu.memory_space<vmem>>, vector<32x96xbf16>
    %c0_12 = arith.constant 0 : index
    %c0_13 = arith.constant 0 : index
    %10 = vector.load %arg6[%c0_12, %c0_13] : memref<1x96xf32, #tpu.memory_space<vmem>>, vector<1x96xf32>
    %c0_14 = arith.constant 0 : index
    %c0_15 = arith.constant 0 : index
    %11 = vector.load %arg7[%c0_14, %c0_15] : memref<32x96xbf16, #tpu.memory_space<vmem>>, vector<32x96xbf16>
    %c0_16 = arith.constant 0 : index
    %c0_17 = arith.constant 0 : index
    %12 = vector.load %arg8[%c0_16, %c0_17] : memref<1x96xf32, #tpu.memory_space<vmem>>, vector<1x96xf32>
    %cst_18 = arith.constant 0.000000e+00 : f32
    %13 = vector.broadcast %cst_18 : f32 to vector<8x32xf32>
    %c0_19 = arith.constant 0 : index
    %c0_20 = arith.constant 0 : index
    %c0_21 = arith.constant 0 : index
    %14 = vector.load %arg15[%c0_19, %c0_20, %c0_21] : memref<8x8x192xf32, #tpu.memory_space<vmem>>, vector<8x1x96xf32>
    %15 = vector.shape_cast %14 : vector<8x1x96xf32> to vector<8x96xf32>
    %16 = arith.truncf %13 : vector<8x32xf32> to vector<8x32xbf16>
    %cst_22 = arith.constant dense<0.000000e+00> : vector<8x96xf32>
    %17 = tpu.matmul %16, %9, %cst_22 {dimension_numbers = #tpu.dot_dimension_numbers<[1], [0], [0], [1], [0, 0, 1, 1], [], []>} : vector<8x32xbf16>, vector<32x96xbf16>, vector<8x96xf32> -> vector<8x96xf32>
    %18 = vector.broadcast %10 : vector<1x96xf32> to vector<8x96xf32>
    %19 = arith.addf %17, %18 : vector<8x96xf32>
    %20 = vector.extract_strided_slice %15 {offsets = [0, 0], sizes = [8, 64], strides = [1, 1]} : vector<8x96xf32> to vector<8x64xf32>
    %21 = vector.extract_strided_slice %19 {offsets = [0, 0], sizes = [8, 64], strides = [1, 1]} : vector<8x96xf32> to vector<8x64xf32>
    %22 = arith.addf %20, %21 : vector<8x64xf32>
    %23 = arith.negf %22 : vector<8x64xf32>
    %24 = math.exp %23 : vector<8x64xf32>
    %cst_23 = arith.constant 1.000000e+00 : f32
    %25 = vector.broadcast %cst_23 : f32 to vector<8x64xf32>
    %26 = arith.addf %25, %24 : vector<8x64xf32>
    %27 = arith.divf %25, %26 : vector<8x64xf32>
    %28 = vector.extract_strided_slice %27 {offsets = [0, 0], sizes = [8, 32], strides = [1, 1]} : vector<8x64xf32> to vector<8x32xf32>
    %29 = vector.extract_strided_slice %27 {offsets = [0, 32], sizes = [8, 32], strides = [1, 1]} : vector<8x64xf32> to vector<8x32xf32>
    %30 = vector.extract_strided_slice %15 {offsets = [0, 64], sizes = [8, 32], strides = [1, 1]} : vector<8x96xf32> to vector<8x32xf32>
    %31 = vector.extract_strided_slice %19 {offsets = [0, 64], sizes = [8, 32], strides = [1, 1]} : vector<8x96xf32> to vector<8x32xf32>
    %32 = arith.mulf %28, %31 : vector<8x32xf32>
    %33 = arith.addf %30, %32 : vector<8x32xf32>
    %34 = math.tanh %33 : vector<8x32xf32>
    %cst_24 = arith.constant 1.000000e+00 : f32
    %35 = vector.broadcast %cst_24 : f32 to vector<8x32xf32>
    %36 = arith.subf %35, %29 : vector<8x32xf32>
    %37 = arith.mulf %36, %34 : vector<8x32xf32>
    %38 = arith.mulf %29, %13 : vector<8x32xf32>
    %39 = arith.addf %37, %38 : vector<8x32xf32>
    %c0_i32 = arith.constant 0 : i32
    %40 = vector.broadcast %c0_i32 : i32 to vector<8x1xi32>
    %41 = arith.cmpi sgt, %8, %40 : vector<8x1xi32>
    %cst_25 = arith.constant 0.000000e+00 : f32
    %42 = vector.shape_cast %41 : vector<8x1xi1> to vector<8x1xi1>
    %43 = vector.broadcast %42 : vector<8x1xi1> to vector<8x32xi1>
    %44 = vector.broadcast %cst_25 : f32 to vector<8x32xf32>
    %45 = arith.select %43, %39, %44 : vector<8x32xi1>, vector<8x32xf32>
    %c0_26 = arith.constant 0 : index
    %c0_27 = arith.constant 0 : index
    %c0_28 = arith.constant 0 : index
    %46 = vector.load %arg13[%c0_26, %c0_27, %c0_28] : memref<8x8x64xf32, #tpu.memory_space<vmem>>, vector<8x1x32xf32>
    %47 = vector.shape_cast %46 : vector<8x1x32xf32> to vector<8x32xf32>
    %48 = vector.shape_cast %45 : vector<8x32xf32> to vector<8x1x32xf32>
    tpu.vector_store %arg13[%c0_26, %c0_27, %c0_28], %48 {strides = array<i32>} : memref<8x8x64xf32, #tpu.memory_space<vmem>>, vector<8x1x32xf32>,
    %49 = vector.shape_cast %41 : vector<8x1xi1> to vector<8x1xi1>
    %50 = vector.broadcast %49 : vector<8x1xi1> to vector<8x32xi1>
    %51 = arith.select %50, %39, %13 : vector<8x32xi1>, vector<8x32xf32>
    %c0_29 = arith.constant 0 : index
    %c1 = arith.constant 1 : index
    %c0_30 = arith.constant 0 : index
    %52 = vector.load %arg15[%c0_29, %c1, %c0_30] : memref<8x8x192xf32, #tpu.memory_space<vmem>>, vector<8x1x96xf32>
    %53 = vector.shape_cast %52 : vector<8x1x96xf32> to vector<8x96xf32>
    %54 = arith.truncf %51 : vector<8x32xf32> to vector<8x32xbf16>
    %cst_31 = arith.constant dense<0.000000e+00> : vector<8x96xf32>
    %55 = tpu.matmul %54, %9, %cst_31 {dimension_numbers = #tpu.dot_dimension_numbers<[1], [0], [0], [1], [0, 0, 1, 1], [], []>} : vector<8x32xbf16>, vector<32x96xbf16>, vector<8x96xf32> -> vector<8x96xf32>
    %56 = vector.broadcast %10 : vector<1x96xf32> to vector<8x96xf32>
    %57 = arith.addf %55, %56 : vector<8x96xf32>
    %58 = vector.extract_strided_slice %53 {offsets = [0, 0], sizes = [8, 64], strides = [1, 1]} : vector<8x96xf32> to vector<8x64xf32>
    %59 = vector.extract_strided_slice %57 {offsets = [0, 0], sizes = [8, 64], strides = [1, 1]} : vector<8x96xf32> to vector<8x64xf32>
    %60 = arith.addf %58, %59 : vector<8x64xf32>
    %61 = arith.negf %60 : vector<8x64xf32>
    %62 = math.exp %61 : vector<8x64xf32>
    %cst_32 = arith.constant 1.000000e+00 : f32
    %63 = vector.broadcast %cst_32 : f32 to vector<8x64xf32>
    %64 = arith.addf %63, %62 : vector<8x64xf32>
    %65 = arith.divf %63, %64 : vector<8x64xf32>
    %66 = vector.extract_strided_slice %65 {offsets = [0, 0], sizes = [8, 32], strides = [1, 1]} : vector<8x64xf32> to vector<8x32xf32>
    %67 = vector.extract_strided_slice %65 {offsets = [0, 32], sizes = [8, 32], strides = [1, 1]} : vector<8x64xf32> to vector<8x32xf32>
    %68 = vector.extract_strided_slice %53 {offsets = [0, 64], sizes = [8, 32], strides = [1, 1]} : vector<8x96xf32> to vector<8x32xf32>
    %69 = vector.extract_strided_slice %57 {offsets = [0, 64], sizes = [8, 32], strides = [1, 1]} : vector<8x96xf32> to vector<8x32xf32>
    %70 = arith.mulf %66, %69 : vector<8x32xf32>
    %71 = arith.addf %68, %70 : vector<8x32xf32>
    %72 = math.tanh %71 : vector<8x32xf32>
    %cst_33 = arith.constant 1.000000e+00 : f32
    %73 = vector.broadcast %cst_33 : f32 to vector<8x32xf32>
    %74 = arith.subf %73, %67 : vector<8x32xf32>
    %75 = arith.mulf %74, %72 : vector<8x32xf32>
    %76 = arith.mulf %67, %51 : vector<8x32xf32>
    %77 = arith.addf %75, %76 : vector<8x32xf32>
    %c1_i32 = arith.constant 1 : i32
    %78 = vector.broadcast %c1_i32 : i32 to vector<8x1xi32>
    %79 = arith.cmpi sgt, %8, %78 : vector<8x1xi32>
    %cst_34 = arith.constant 0.000000e+00 : f32
    %80 = vector.shape_cast %79 : vector<8x1xi1> to vector<8x1xi1>
    %81 = vector.broadcast %80 : vector<8x1xi1> to vector<8x32xi1>
    %82 = vector.broadcast %cst_34 : f32 to vector<8x32xf32>
    %83 = arith.select %81, %77, %82 : vector<8x32xi1>, vector<8x32xf32>
    %c0_35 = arith.constant 0 : index
    %c1_36 = arith.constant 1 : index
    %c0_37 = arith.constant 0 : index
    %84 = vector.load %arg13[%c0_35, %c1_36, %c0_37] : memref<8x8x64xf32, #tpu.memory_space<vmem>>, vector<8x1x32xf32>
    %85 = vector.shape_cast %84 : vector<8x1x32xf32> to vector<8x32xf32>
    %86 = vector.shape_cast %83 : vector<8x32xf32> to vector<8x1x32xf32>
    tpu.vector_store %arg13[%c0_35, %c1_36, %c0_37], %86 {strides = array<i32>} : memref<8x8x64xf32, #tpu.memory_space<vmem>>, vector<8x1x32xf32>,
    %87 = vector.shape_cast %79 : vector<8x1xi1> to vector<8x1xi1>
    %88 = vector.broadcast %87 : vector<8x1xi1> to vector<8x32xi1>
    %89 = arith.select %88, %77, %51 : vector<8x32xi1>, vector<8x32xf32>
    %c0_38 = arith.constant 0 : index
    %c2 = arith.constant 2 : index
    %c0_39 = arith.constant 0 : index
    %90 = vector.load %arg15[%c0_38, %c2, %c0_39] : memref<8x8x192xf32, #tpu.memory_space<vmem>>, vector<8x1x96xf32>
    %91 = vector.shape_cast %90 : vector<8x1x96xf32> to vector<8x96xf32>
    %92 = arith.truncf %89 : vector<8x32xf32> to vector<8x32xbf16>
    %cst_40 = arith.constant dense<0.000000e+00> : vector<8x96xf32>
    %93 = tpu.matmul %92, %9, %cst_40 {dimension_numbers = #tpu.dot_dimension_numbers<[1], [0], [0], [1], [0, 0, 1, 1], [], []>} : vector<8x32xbf16>, vector<32x96xbf16>, vector<8x96xf32> -> vector<8x96xf32>
    %94 = vector.broadcast %10 : vector<1x96xf32> to vector<8x96xf32>
    %95 = arith.addf %93, %94 : vector<8x96xf32>
    %96 = vector.extract_strided_slice %91 {offsets = [0, 0], sizes = [8, 64], strides = [1, 1]} : vector<8x96xf32> to vector<8x64xf32>
    %97 = vector.extract_strided_slice %95 {offsets = [0, 0], sizes = [8, 64], strides = [1, 1]} : vector<8x96xf32> to vector<8x64xf32>
    %98 = arith.addf %96, %97 : vector<8x64xf32>
    %99 = arith.negf %98 : vector<8x64xf32>
    %100 = math.exp %99 : vector<8x64xf32>
    %cst_41 = arith.constant 1.000000e+00 : f32
    %101 = vector.broadcast %cst_41 : f32 to vector<8x64xf32>
    %102 = arith.addf %101, %100 : vector<8x64xf32>
    %103 = arith.divf %101, %102 : vector<8x64xf32>
    %104 = vector.extract_strided_slice %103 {offsets = [0, 0], sizes = [8, 32], strides = [1, 1]} : vector<8x64xf32> to vector<8x32xf32>
    %105 = vector.extract_strided_slice %103 {offsets = [0, 32], sizes = [8, 32], strides = [1, 1]} : vector<8x64xf32> to vector<8x32xf32>
    %106 = vector.extract_strided_slice %91 {offsets = [0, 64], sizes = [8, 32], strides = [1, 1]} : vector<8x96xf32> to vector<8x32xf32>
    %107 = vector.extract_strided_slice %95 {offsets = [0, 64], sizes = [8, 32], strides = [1, 1]} : vector<8x96xf32> to vector<8x32xf32>
    %108 = arith.mulf %104, %107 : vector<8x32xf32>
    %109 = arith.addf %106, %108 : vector<8x32xf32>
    %110 = math.tanh %109 : vector<8x32xf32>
    %cst_42 = arith.constant 1.000000e+00 : f32
    %111 = vector.broadcast %cst_42 : f32 to vector<8x32xf32>
    %112 = arith.subf %111, %105 : vector<8x32xf32>
    %113 = arith.mulf %112, %110 : vector<8x32xf32>
    %114 = arith.mulf %105, %89 : vector<8x32xf32>
    %115 = arith.addf %113, %114 : vector<8x32xf32>
    %c2_i32 = arith.constant 2 : i32
    %116 = vector.broadcast %c2_i32 : i32 to vector<8x1xi32>
    %117 = arith.cmpi sgt, %8, %116 : vector<8x1xi32>
    %cst_43 = arith.constant 0.000000e+00 : f32
    %118 = vector.shape_cast %117 : vector<8x1xi1> to vector<8x1xi1>
    %119 = vector.broadcast %118 : vector<8x1xi1> to vector<8x32xi1>
    %120 = vector.broadcast %cst_43 : f32 to vector<8x32xf32>
    %121 = arith.select %119, %115, %120 : vector<8x32xi1>, vector<8x32xf32>
    %c0_44 = arith.constant 0 : index
    %c2_45 = arith.constant 2 : index
    %c0_46 = arith.constant 0 : index
    %122 = vector.load %arg13[%c0_44, %c2_45, %c0_46] : memref<8x8x64xf32, #tpu.memory_space<vmem>>, vector<8x1x32xf32>
    %123 = vector.shape_cast %122 : vector<8x1x32xf32> to vector<8x32xf32>
    %124 = vector.shape_cast %121 : vector<8x32xf32> to vector<8x1x32xf32>
    tpu.vector_store %arg13[%c0_44, %c2_45, %c0_46], %124 {strides = array<i32>} : memref<8x8x64xf32, #tpu.memory_space<vmem>>, vector<8x1x32xf32>,
    %125 = vector.shape_cast %117 : vector<8x1xi1> to vector<8x1xi1>
    %126 = vector.broadcast %125 : vector<8x1xi1> to vector<8x32xi1>
    %127 = arith.select %126, %115, %89 : vector<8x32xi1>, vector<8x32xf32>
    %c0_47 = arith.constant 0 : index
    %c3 = arith.constant 3 : index
    %c0_48 = arith.constant 0 : index
    %128 = vector.load %arg15[%c0_47, %c3, %c0_48] : memref<8x8x192xf32, #tpu.memory_space<vmem>>, vector<8x1x96xf32>
    %129 = vector.shape_cast %128 : vector<8x1x96xf32> to vector<8x96xf32>
    %130 = arith.truncf %127 : vector<8x32xf32> to vector<8x32xbf16>
    %cst_49 = arith.constant dense<0.000000e+00> : vector<8x96xf32>
    %131 = tpu.matmul %130, %9, %cst_49 {dimension_numbers = #tpu.dot_dimension_numbers<[1], [0], [0], [1], [0, 0, 1, 1], [], []>} : vector<8x32xbf16>, vector<32x96xbf16>, vector<8x96xf32> -> vector<8x96xf32>
    %132 = vector.broadcast %10 : vector<1x96xf32> to vector<8x96xf32>
    %133 = arith.addf %131, %132 : vector<8x96xf32>
    %134 = vector.extract_strided_slice %129 {offsets = [0, 0], sizes = [8, 64], strides = [1, 1]} : vector<8x96xf32> to vector<8x64xf32>
    %135 = vector.extract_strided_slice %133 {offsets = [0, 0], sizes = [8, 64], strides = [1, 1]} : vector<8x96xf32> to vector<8x64xf32>
    %136 = arith.addf %134, %135 : vector<8x64xf32>
    %137 = arith.negf %136 : vector<8x64xf32>
    %138 = math.exp %137 : vector<8x64xf32>
    %cst_50 = arith.constant 1.000000e+00 : f32
    %139 = vector.broadcast %cst_50 : f32 to vector<8x64xf32>
    %140 = arith.addf %139, %138 : vector<8x64xf32>
    %141 = arith.divf %139, %140 : vector<8x64xf32>
    %142 = vector.extract_strided_slice %141 {offsets = [0, 0], sizes = [8, 32], strides = [1, 1]} : vector<8x64xf32> to vector<8x32xf32>
    %143 = vector.extract_strided_slice %141 {offsets = [0, 32], sizes = [8, 32], strides = [1, 1]} : vector<8x64xf32> to vector<8x32xf32>
    %144 = vector.extract_strided_slice %129 {offsets = [0, 64], sizes = [8, 32], strides = [1, 1]} : vector<8x96xf32> to vector<8x32xf32>
    %145 = vector.extract_strided_slice %133 {offsets = [0, 64], sizes = [8, 32], strides = [1, 1]} : vector<8x96xf32> to vector<8x32xf32>
    %146 = arith.mulf %142, %145 : vector<8x32xf32>
    %147 = arith.addf %144, %146 : vector<8x32xf32>
    %148 = math.tanh %147 : vector<8x32xf32>
    %cst_51 = arith.constant 1.000000e+00 : f32
    %149 = vector.broadcast %cst_51 : f32 to vector<8x32xf32>
    %150 = arith.subf %149, %143 : vector<8x32xf32>
    %151 = arith.mulf %150, %148 : vector<8x32xf32>
    %152 = arith.mulf %143, %127 : vector<8x32xf32>
    %153 = arith.addf %151, %152 : vector<8x32xf32>
    %c3_i32 = arith.constant 3 : i32
    %154 = vector.broadcast %c3_i32 : i32 to vector<8x1xi32>
    %155 = arith.cmpi sgt, %8, %154 : vector<8x1xi32>
    %cst_52 = arith.constant 0.000000e+00 : f32
    %156 = vector.shape_cast %155 : vector<8x1xi1> to vector<8x1xi1>
    %157 = vector.broadcast %156 : vector<8x1xi1> to vector<8x32xi1>
    %158 = vector.broadcast %cst_52 : f32 to vector<8x32xf32>
    %159 = arith.select %157, %153, %158 : vector<8x32xi1>, vector<8x32xf32>
    %c0_53 = arith.constant 0 : index
    %c3_54 = arith.constant 3 : index
    %c0_55 = arith.constant 0 : index
    %160 = vector.load %arg13[%c0_53, %c3_54, %c0_55] : memref<8x8x64xf32, #tpu.memory_space<vmem>>, vector<8x1x32xf32>
    %161 = vector.shape_cast %160 : vector<8x1x32xf32> to vector<8x32xf32>
    %162 = vector.shape_cast %159 : vector<8x32xf32> to vector<8x1x32xf32>
    tpu.vector_store %arg13[%c0_53, %c3_54, %c0_55], %162 {strides = array<i32>} : memref<8x8x64xf32, #tpu.memory_space<vmem>>, vector<8x1x32xf32>,
    %163 = vector.shape_cast %155 : vector<8x1xi1> to vector<8x1xi1>
    %164 = vector.broadcast %163 : vector<8x1xi1> to vector<8x32xi1>
    %165 = arith.select %164, %153, %127 : vector<8x32xi1>, vector<8x32xf32>
    %c0_56 = arith.constant 0 : index
    %c4 = arith.constant 4 : index
    %c0_57 = arith.constant 0 : index
    %166 = vector.load %arg15[%c0_56, %c4, %c0_57] : memref<8x8x192xf32, #tpu.memory_space<vmem>>, vector<8x1x96xf32>
    %167 = vector.shape_cast %166 : vector<8x1x96xf32> to vector<8x96xf32>
    %168 = arith.truncf %165 : vector<8x32xf32> to vector<8x32xbf16>
    %cst_58 = arith.constant dense<0.000000e+00> : vector<8x96xf32>
    %169 = tpu.matmul %168, %9, %cst_58 {dimension_numbers = #tpu.dot_dimension_numbers<[1], [0], [0], [1], [0, 0, 1, 1], [], []>} : vector<8x32xbf16>, vector<32x96xbf16>, vector<8x96xf32> -> vector<8x96xf32>
    %170 = vector.broadcast %10 : vector<1x96xf32> to vector<8x96xf32>
    %171 = arith.addf %169, %170 : vector<8x96xf32>
    %172 = vector.extract_strided_slice %167 {offsets = [0, 0], sizes = [8, 64], strides = [1, 1]} : vector<8x96xf32> to vector<8x64xf32>
    %173 = vector.extract_strided_slice %171 {offsets = [0, 0], sizes = [8, 64], strides = [1, 1]} : vector<8x96xf32> to vector<8x64xf32>
    %174 = arith.addf %172, %173 : vector<8x64xf32>
    %175 = arith.negf %174 : vector<8x64xf32>
    %176 = math.exp %175 : vector<8x64xf32>
    %cst_59 = arith.constant 1.000000e+00 : f32
    %177 = vector.broadcast %cst_59 : f32 to vector<8x64xf32>
    %178 = arith.addf %177, %176 : vector<8x64xf32>
    %179 = arith.divf %177, %178 : vector<8x64xf32>
    %180 = vector.extract_strided_slice %179 {offsets = [0, 0], sizes = [8, 32], strides = [1, 1]} : vector<8x64xf32> to vector<8x32xf32>
    %181 = vector.extract_strided_slice %179 {offsets = [0, 32], sizes = [8, 32], strides = [1, 1]} : vector<8x64xf32> to vector<8x32xf32>
    %182 = vector.extract_strided_slice %167 {offsets = [0, 64], sizes = [8, 32], strides = [1, 1]} : vector<8x96xf32> to vector<8x32xf32>
    %183 = vector.extract_strided_slice %171 {offsets = [0, 64], sizes = [8, 32], strides = [1, 1]} : vector<8x96xf32> to vector<8x32xf32>
    %184 = arith.mulf %180, %183 : vector<8x32xf32>
    %185 = arith.addf %182, %184 : vector<8x32xf32>
    %186 = math.tanh %185 : vector<8x32xf32>
    %cst_60 = arith.constant 1.000000e+00 : f32
    %187 = vector.broadcast %cst_60 : f32 to vector<8x32xf32>
    %188 = arith.subf %187, %181 : vector<8x32xf32>
    %189 = arith.mulf %188, %186 : vector<8x32xf32>
    %190 = arith.mulf %181, %165 : vector<8x32xf32>
    %191 = arith.addf %189, %190 : vector<8x32xf32>
    %c4_i32 = arith.constant 4 : i32
    %192 = vector.broadcast %c4_i32 : i32 to vector<8x1xi32>
    %193 = arith.cmpi sgt, %8, %192 : vector<8x1xi32>
    %cst_61 = arith.constant 0.000000e+00 : f32
    %194 = vector.shape_cast %193 : vector<8x1xi1> to vector<8x1xi1>
    %195 = vector.broadcast %194 : vector<8x1xi1> to vector<8x32xi1>
    %196 = vector.broadcast %cst_61 : f32 to vector<8x32xf32>
    %197 = arith.select %195, %191, %196 : vector<8x32xi1>, vector<8x32xf32>
    %c0_62 = arith.constant 0 : index
    %c4_63 = arith.constant 4 : index
    %c0_64 = arith.constant 0 : index
    %198 = vector.load %arg13[%c0_62, %c4_63, %c0_64] : memref<8x8x64xf32, #tpu.memory_space<vmem>>, vector<8x1x32xf32>
    %199 = vector.shape_cast %198 : vector<8x1x32xf32> to vector<8x32xf32>
    %200 = vector.shape_cast %197 : vector<8x32xf32> to vector<8x1x32xf32>
    tpu.vector_store %arg13[%c0_62, %c4_63, %c0_64], %200 {strides = array<i32>} : memref<8x8x64xf32, #tpu.memory_space<vmem>>, vector<8x1x32xf32>,
    %201 = vector.shape_cast %193 : vector<8x1xi1> to vector<8x1xi1>
    %202 = vector.broadcast %201 : vector<8x1xi1> to vector<8x32xi1>
    %203 = arith.select %202, %191, %165 : vector<8x32xi1>, vector<8x32xf32>
    %c0_65 = arith.constant 0 : index
    %c5 = arith.constant 5 : index
    %c0_66 = arith.constant 0 : index
    %204 = vector.load %arg15[%c0_65, %c5, %c0_66] : memref<8x8x192xf32, #tpu.memory_space<vmem>>, vector<8x1x96xf32>
    %205 = vector.shape_cast %204 : vector<8x1x96xf32> to vector<8x96xf32>
    %206 = arith.truncf %203 : vector<8x32xf32> to vector<8x32xbf16>
    %cst_67 = arith.constant dense<0.000000e+00> : vector<8x96xf32>
    %207 = tpu.matmul %206, %9, %cst_67 {dimension_numbers = #tpu.dot_dimension_numbers<[1], [0], [0], [1], [0, 0, 1, 1], [], []>} : vector<8x32xbf16>, vector<32x96xbf16>, vector<8x96xf32> -> vector<8x96xf32>
    %208 = vector.broadcast %10 : vector<1x96xf32> to vector<8x96xf32>
    %209 = arith.addf %207, %208 : vector<8x96xf32>
    %210 = vector.extract_strided_slice %205 {offsets = [0, 0], sizes = [8, 64], strides = [1, 1]} : vector<8x96xf32> to vector<8x64xf32>
    %211 = vector.extract_strided_slice %209 {offsets = [0, 0], sizes = [8, 64], strides = [1, 1]} : vector<8x96xf32> to vector<8x64xf32>
    %212 = arith.addf %210, %211 : vector<8x64xf32>
    %213 = arith.negf %212 : vector<8x64xf32>
    %214 = math.exp %213 : vector<8x64xf32>
    %cst_68 = arith.constant 1.000000e+00 : f32
    %215 = vector.broadcast %cst_68 : f32 to vector<8x64xf32>
    %216 = arith.addf %215, %214 : vector<8x64xf32>
    %217 = arith.divf %215, %216 : vector<8x64xf32>
    %218 = vector.extract_strided_slice %217 {offsets = [0, 0], sizes = [8, 32], strides = [1, 1]} : vector<8x64xf32> to vector<8x32xf32>
    %219 = vector.extract_strided_slice %217 {offsets = [0, 32], sizes = [8, 32], strides = [1, 1]} : vector<8x64xf32> to vector<8x32xf32>
    %220 = vector.extract_strided_slice %205 {offsets = [0, 64], sizes = [8, 32], strides = [1, 1]} : vector<8x96xf32> to vector<8x32xf32>
    %221 = vector.extract_strided_slice %209 {offsets = [0, 64], sizes = [8, 32], strides = [1, 1]} : vector<8x96xf32> to vector<8x32xf32>
    %222 = arith.mulf %218, %221 : vector<8x32xf32>
    %223 = arith.addf %220, %222 : vector<8x32xf32>
    %224 = math.tanh %223 : vector<8x32xf32>
    %cst_69 = arith.constant 1.000000e+00 : f32
    %225 = vector.broadcast %cst_69 : f32 to vector<8x32xf32>
    %226 = arith.subf %225, %219 : vector<8x32xf32>
    %227 = arith.mulf %226, %224 : vector<8x32xf32>
    %228 = arith.mulf %219, %203 : vector<8x32xf32>
    %229 = arith.addf %227, %228 : vector<8x32xf32>
    %c5_i32 = arith.constant 5 : i32
    %230 = vector.broadcast %c5_i32 : i32 to vector<8x1xi32>
    %231 = arith.cmpi sgt, %8, %230 : vector<8x1xi32>
    %cst_70 = arith.constant 0.000000e+00 : f32
    %232 = vector.shape_cast %231 : vector<8x1xi1> to vector<8x1xi1>
    %233 = vector.broadcast %232 : vector<8x1xi1> to vector<8x32xi1>
    %234 = vector.broadcast %cst_70 : f32 to vector<8x32xf32>
    %235 = arith.select %233, %229, %234 : vector<8x32xi1>, vector<8x32xf32>
    %c0_71 = arith.constant 0 : index
    %c5_72 = arith.constant 5 : index
    %c0_73 = arith.constant 0 : index
    %236 = vector.load %arg13[%c0_71, %c5_72, %c0_73] : memref<8x8x64xf32, #tpu.memory_space<vmem>>, vector<8x1x32xf32>
    %237 = vector.shape_cast %236 : vector<8x1x32xf32> to vector<8x32xf32>
    %238 = vector.shape_cast %235 : vector<8x32xf32> to vector<8x1x32xf32>
    tpu.vector_store %arg13[%c0_71, %c5_72, %c0_73], %238 {strides = array<i32>} : memref<8x8x64xf32, #tpu.memory_space<vmem>>, vector<8x1x32xf32>,
    %239 = vector.shape_cast %231 : vector<8x1xi1> to vector<8x1xi1>
    %240 = vector.broadcast %239 : vector<8x1xi1> to vector<8x32xi1>
    %241 = arith.select %240, %229, %203 : vector<8x32xi1>, vector<8x32xf32>
    %c0_74 = arith.constant 0 : index
    %c6 = arith.constant 6 : index
    %c0_75 = arith.constant 0 : index
    %242 = vector.load %arg15[%c0_74, %c6, %c0_75] : memref<8x8x192xf32, #tpu.memory_space<vmem>>, vector<8x1x96xf32>
    %243 = vector.shape_cast %242 : vector<8x1x96xf32> to vector<8x96xf32>
    %244 = arith.truncf %241 : vector<8x32xf32> to vector<8x32xbf16>
    %cst_76 = arith.constant dense<0.000000e+00> : vector<8x96xf32>
    %245 = tpu.matmul %244, %9, %cst_76 {dimension_numbers = #tpu.dot_dimension_numbers<[1], [0], [0], [1], [0, 0, 1, 1], [], []>} : vector<8x32xbf16>, vector<32x96xbf16>, vector<8x96xf32> -> vector<8x96xf32>
    %246 = vector.broadcast %10 : vector<1x96xf32> to vector<8x96xf32>
    %247 = arith.addf %245, %246 : vector<8x96xf32>
    %248 = vector.extract_strided_slice %243 {offsets = [0, 0], sizes = [8, 64], strides = [1, 1]} : vector<8x96xf32> to vector<8x64xf32>
    %249 = vector.extract_strided_slice %247 {offsets = [0, 0], sizes = [8, 64], strides = [1, 1]} : vector<8x96xf32> to vector<8x64xf32>
    %250 = arith.addf %248, %249 : vector<8x64xf32>
    %251 = arith.negf %250 : vector<8x64xf32>
    %252 = math.exp %251 : vector<8x64xf32>
    %cst_77 = arith.constant 1.000000e+00 : f32
    %253 = vector.broadcast %cst_77 : f32 to vector<8x64xf32>
    %254 = arith.addf %253, %252 : vector<8x64xf32>
    %255 = arith.divf %253, %254 : vector<8x64xf32>
    %256 = vector.extract_strided_slice %255 {offsets = [0, 0], sizes = [8, 32], strides = [1, 1]} : vector<8x64xf32> to vector<8x32xf32>
    %257 = vector.extract_strided_slice %255 {offsets = [0, 32], sizes = [8, 32], strides = [1, 1]} : vector<8x64xf32> to vector<8x32xf32>
    %258 = vector.extract_strided_slice %243 {offsets = [0, 64], sizes = [8, 32], strides = [1, 1]} : vector<8x96xf32> to vector<8x32xf32>
    %259 = vector.extract_strided_slice %247 {offsets = [0, 64], sizes = [8, 32], strides = [1, 1]} : vector<8x96xf32> to vector<8x32xf32>
    %260 = arith.mulf %256, %259 : vector<8x32xf32>
    %261 = arith.addf %258, %260 : vector<8x32xf32>
    %262 = math.tanh %261 : vector<8x32xf32>
    %cst_78 = arith.constant 1.000000e+00 : f32
    %263 = vector.broadcast %cst_78 : f32 to vector<8x32xf32>
    %264 = arith.subf %263, %257 : vector<8x32xf32>
    %265 = arith.mulf %264, %262 : vector<8x32xf32>
    %266 = arith.mulf %257, %241 : vector<8x32xf32>
    %267 = arith.addf %265, %266 : vector<8x32xf32>
    %c6_i32 = arith.constant 6 : i32
    %268 = vector.broadcast %c6_i32 : i32 to vector<8x1xi32>
    %269 = arith.cmpi sgt, %8, %268 : vector<8x1xi32>
    %cst_79 = arith.constant 0.000000e+00 : f32
    %270 = vector.shape_cast %269 : vector<8x1xi1> to vector<8x1xi1>
    %271 = vector.broadcast %270 : vector<8x1xi1> to vector<8x32xi1>
    %272 = vector.broadcast %cst_79 : f32 to vector<8x32xf32>
    %273 = arith.select %271, %267, %272 : vector<8x32xi1>, vector<8x32xf32>
    %c0_80 = arith.constant 0 : index
    %c6_81 = arith.constant 6 : index
    %c0_82 = arith.constant 0 : index
    %274 = vector.load %arg13[%c0_80, %c6_81, %c0_82] : memref<8x8x64xf32, #tpu.memory_space<vmem>>, vector<8x1x32xf32>
    %275 = vector.shape_cast %274 : vector<8x1x32xf32> to vector<8x32xf32>
    %276 = vector.shape_cast %273 : vector<8x32xf32> to vector<8x1x32xf32>
    tpu.vector_store %arg13[%c0_80, %c6_81, %c0_82], %276 {strides = array<i32>} : memref<8x8x64xf32, #tpu.memory_space<vmem>>, vector<8x1x32xf32>,
    %277 = vector.shape_cast %269 : vector<8x1xi1> to vector<8x1xi1>
    %278 = vector.broadcast %277 : vector<8x1xi1> to vector<8x32xi1>
    %279 = arith.select %278, %267, %241 : vector<8x32xi1>, vector<8x32xf32>
    %c0_83 = arith.constant 0 : index
    %c7 = arith.constant 7 : index
    %c0_84 = arith.constant 0 : index
    %280 = vector.load %arg15[%c0_83, %c7, %c0_84] : memref<8x8x192xf32, #tpu.memory_space<vmem>>, vector<8x1x96xf32>
    %281 = vector.shape_cast %280 : vector<8x1x96xf32> to vector<8x96xf32>
    %282 = arith.truncf %279 : vector<8x32xf32> to vector<8x32xbf16>
    %cst_85 = arith.constant dense<0.000000e+00> : vector<8x96xf32>
    %283 = tpu.matmul %282, %9, %cst_85 {dimension_numbers = #tpu.dot_dimension_numbers<[1], [0], [0], [1], [0, 0, 1, 1], [], []>} : vector<8x32xbf16>, vector<32x96xbf16>, vector<8x96xf32> -> vector<8x96xf32>
    %284 = vector.broadcast %10 : vector<1x96xf32> to vector<8x96xf32>
    %285 = arith.addf %283, %284 : vector<8x96xf32>
    %286 = vector.extract_strided_slice %281 {offsets = [0, 0], sizes = [8, 64], strides = [1, 1]} : vector<8x96xf32> to vector<8x64xf32>
    %287 = vector.extract_strided_slice %285 {offsets = [0, 0], sizes = [8, 64], strides = [1, 1]} : vector<8x96xf32> to vector<8x64xf32>
    %288 = arith.addf %286, %287 : vector<8x64xf32>
    %289 = arith.negf %288 : vector<8x64xf32>
    %290 = math.exp %289 : vector<8x64xf32>
    %cst_86 = arith.constant 1.000000e+00 : f32
    %291 = vector.broadcast %cst_86 : f32 to vector<8x64xf32>
    %292 = arith.addf %291, %290 : vector<8x64xf32>
    %293 = arith.divf %291, %292 : vector<8x64xf32>
    %294 = vector.extract_strided_slice %293 {offsets = [0, 0], sizes = [8, 32], strides = [1, 1]} : vector<8x64xf32> to vector<8x32xf32>
    %295 = vector.extract_strided_slice %293 {offsets = [0, 32], sizes = [8, 32], strides = [1, 1]} : vector<8x64xf32> to vector<8x32xf32>
    %296 = vector.extract_strided_slice %281 {offsets = [0, 64], sizes = [8, 32], strides = [1, 1]} : vector<8x96xf32> to vector<8x32xf32>
    %297 = vector.extract_strided_slice %285 {offsets = [0, 64], sizes = [8, 32], strides = [1, 1]} : vector<8x96xf32> to vector<8x32xf32>
    %298 = arith.mulf %294, %297 : vector<8x32xf32>
    %299 = arith.addf %296, %298 : vector<8x32xf32>
    %300 = math.tanh %299 : vector<8x32xf32>
    %cst_87 = arith.constant 1.000000e+00 : f32
    %301 = vector.broadcast %cst_87 : f32 to vector<8x32xf32>
    %302 = arith.subf %301, %295 : vector<8x32xf32>
    %303 = arith.mulf %302, %300 : vector<8x32xf32>
    %304 = arith.mulf %295, %279 : vector<8x32xf32>
    %305 = arith.addf %303, %304 : vector<8x32xf32>
    %c7_i32 = arith.constant 7 : i32
    %306 = vector.broadcast %c7_i32 : i32 to vector<8x1xi32>
    %307 = arith.cmpi sgt, %8, %306 : vector<8x1xi32>
    %cst_88 = arith.constant 0.000000e+00 : f32
    %308 = vector.shape_cast %307 : vector<8x1xi1> to vector<8x1xi1>
    %309 = vector.broadcast %308 : vector<8x1xi1> to vector<8x32xi1>
    %310 = vector.broadcast %cst_88 : f32 to vector<8x32xf32>
    %311 = arith.select %309, %305, %310 : vector<8x32xi1>, vector<8x32xf32>
    %c0_89 = arith.constant 0 : index
    %c7_90 = arith.constant 7 : index
    %c0_91 = arith.constant 0 : index
    %312 = vector.load %arg13[%c0_89, %c7_90, %c0_91] : memref<8x8x64xf32, #tpu.memory_space<vmem>>, vector<8x1x32xf32>
    %313 = vector.shape_cast %312 : vector<8x1x32xf32> to vector<8x32xf32>
    %314 = vector.shape_cast %311 : vector<8x32xf32> to vector<8x1x32xf32>
    tpu.vector_store %arg13[%c0_89, %c7_90, %c0_91], %314 {strides = array<i32>} : memref<8x8x64xf32, #tpu.memory_space<vmem>>, vector<8x1x32xf32>,
    %c0_92 = arith.constant 0 : index
    %c7_93 = arith.constant 7 : index
    %c96 = arith.constant 96 : index
    %315 = vector.load %arg15[%c0_92, %c7_93, %c96] : memref<8x8x192xf32, #tpu.memory_space<vmem>>, vector<8x1x96xf32>
    %316 = vector.shape_cast %315 : vector<8x1x96xf32> to vector<8x96xf32>
    %317 = arith.truncf %13 : vector<8x32xf32> to vector<8x32xbf16>
    %cst_94 = arith.constant dense<0.000000e+00> : vector<8x96xf32>
    %318 = tpu.matmul %317, %11, %cst_94 {dimension_numbers = #tpu.dot_dimension_numbers<[1], [0], [0], [1], [0, 0, 1, 1], [], []>} : vector<8x32xbf16>, vector<32x96xbf16>, vector<8x96xf32> -> vector<8x96xf32>
    %319 = vector.broadcast %12 : vector<1x96xf32> to vector<8x96xf32>
    %320 = arith.addf %318, %319 : vector<8x96xf32>
    %321 = vector.extract_strided_slice %316 {offsets = [0, 0], sizes = [8, 64], strides = [1, 1]} : vector<8x96xf32> to vector<8x64xf32>
    %322 = vector.extract_strided_slice %320 {offsets = [0, 0], sizes = [8, 64], strides = [1, 1]} : vector<8x96xf32> to vector<8x64xf32>
    %323 = arith.addf %321, %322 : vector<8x64xf32>
    %324 = arith.negf %323 : vector<8x64xf32>
    %325 = math.exp %324 : vector<8x64xf32>
    %cst_95 = arith.constant 1.000000e+00 : f32
    %326 = vector.broadcast %cst_95 : f32 to vector<8x64xf32>
    %327 = arith.addf %326, %325 : vector<8x64xf32>
    %328 = arith.divf %326, %327 : vector<8x64xf32>
    %329 = vector.extract_strided_slice %328 {offsets = [0, 0], sizes = [8, 32], strides = [1, 1]} : vector<8x64xf32> to vector<8x32xf32>
    %330 = vector.extract_strided_slice %328 {offsets = [0, 32], sizes = [8, 32], strides = [1, 1]} : vector<8x64xf32> to vector<8x32xf32>
    %331 = vector.extract_strided_slice %316 {offsets = [0, 64], sizes = [8, 32], strides = [1, 1]} : vector<8x96xf32> to vector<8x32xf32>
    %332 = vector.extract_strided_slice %320 {offsets = [0, 64], sizes = [8, 32], strides = [1, 1]} : vector<8x96xf32> to vector<8x32xf32>
    %333 = arith.mulf %329, %332 : vector<8x32xf32>
    %334 = arith.addf %331, %333 : vector<8x32xf32>
    %335 = math.tanh %334 : vector<8x32xf32>
    %cst_96 = arith.constant 1.000000e+00 : f32
    %336 = vector.broadcast %cst_96 : f32 to vector<8x32xf32>
    %337 = arith.subf %336, %330 : vector<8x32xf32>
    %338 = arith.mulf %337, %335 : vector<8x32xf32>
    %339 = arith.mulf %330, %13 : vector<8x32xf32>
    %340 = arith.addf %338, %339 : vector<8x32xf32>
    %c7_i32_97 = arith.constant 7 : i32
    %341 = vector.broadcast %c7_i32_97 : i32 to vector<8x1xi32>
    %342 = arith.cmpi sgt, %8, %341 : vector<8x1xi32>
    %cst_98 = arith.constant 0.000000e+00 : f32
    %343 = vector.shape_cast %342 : vector<8x1xi1> to vector<8x1xi1>
    %344 = vector.broadcast %343 : vector<8x1xi1> to vector<8x32xi1>
    %345 = vector.broadcast %cst_98 : f32 to vector<8x32xf32>
    %346 = arith.select %344, %340, %345 : vector<8x32xi1>, vector<8x32xf32>
    %c0_99 = arith.constant 0 : index
    %c7_100 = arith.constant 7 : index
    %c32 = arith.constant 32 : index
    %347 = vector.load %arg13[%c0_99, %c7_100, %c32] : memref<8x8x64xf32, #tpu.memory_space<vmem>>, vector<8x1x32xf32>
    %348 = vector.shape_cast %347 : vector<8x1x32xf32> to vector<8x32xf32>
    %349 = vector.shape_cast %346 : vector<8x32xf32> to vector<8x1x32xf32>
    tpu.vector_store %arg13[%c0_99, %c7_100, %c32], %349 {strides = array<i32>} : memref<8x8x64xf32, #tpu.memory_space<vmem>>, vector<8x1x32xf32>,
    %350 = vector.shape_cast %342 : vector<8x1xi1> to vector<8x1xi1>
    %351 = vector.broadcast %350 : vector<8x1xi1> to vector<8x32xi1>
    %352 = arith.select %351, %340, %13 : vector<8x32xi1>, vector<8x32xf32>
    %c0_101 = arith.constant 0 : index
    %c6_102 = arith.constant 6 : index
    %c96_103 = arith.constant 96 : index
    %353 = vector.load %arg15[%c0_101, %c6_102, %c96_103] : memref<8x8x192xf32, #tpu.memory_space<vmem>>, vector<8x1x96xf32>
    %354 = vector.shape_cast %353 : vector<8x1x96xf32> to vector<8x96xf32>
    %355 = arith.truncf %352 : vector<8x32xf32> to vector<8x32xbf16>
    %cst_104 = arith.constant dense<0.000000e+00> : vector<8x96xf32>
    %356 = tpu.matmul %355, %11, %cst_104 {dimension_numbers = #tpu.dot_dimension_numbers<[1], [0], [0], [1], [0, 0, 1, 1], [], []>} : vector<8x32xbf16>, vector<32x96xbf16>, vector<8x96xf32> -> vector<8x96xf32>
    %357 = vector.broadcast %12 : vector<1x96xf32> to vector<8x96xf32>
    %358 = arith.addf %356, %357 : vector<8x96xf32>
    %359 = vector.extract_strided_slice %354 {offsets = [0, 0], sizes = [8, 64], strides = [1, 1]} : vector<8x96xf32> to vector<8x64xf32>
    %360 = vector.extract_strided_slice %358 {offsets = [0, 0], sizes = [8, 64], strides = [1, 1]} : vector<8x96xf32> to vector<8x64xf32>
    %361 = arith.addf %359, %360 : vector<8x64xf32>
    %362 = arith.negf %361 : vector<8x64xf32>
    %363 = math.exp %362 : vector<8x64xf32>
    %cst_105 = arith.constant 1.000000e+00 : f32
    %364 = vector.broadcast %cst_105 : f32 to vector<8x64xf32>
    %365 = arith.addf %364, %363 : vector<8x64xf32>
    %366 = arith.divf %364, %365 : vector<8x64xf32>
    %367 = vector.extract_strided_slice %366 {offsets = [0, 0], sizes = [8, 32], strides = [1, 1]} : vector<8x64xf32> to vector<8x32xf32>
    %368 = vector.extract_strided_slice %366 {offsets = [0, 32], sizes = [8, 32], strides = [1, 1]} : vector<8x64xf32> to vector<8x32xf32>
    %369 = vector.extract_strided_slice %354 {offsets = [0, 64], sizes = [8, 32], strides = [1, 1]} : vector<8x96xf32> to vector<8x32xf32>
    %370 = vector.extract_strided_slice %358 {offsets = [0, 64], sizes = [8, 32], strides = [1, 1]} : vector<8x96xf32> to vector<8x32xf32>
    %371 = arith.mulf %367, %370 : vector<8x32xf32>
    %372 = arith.addf %369, %371 : vector<8x32xf32>
    %373 = math.tanh %372 : vector<8x32xf32>
    %cst_106 = arith.constant 1.000000e+00 : f32
    %374 = vector.broadcast %cst_106 : f32 to vector<8x32xf32>
    %375 = arith.subf %374, %368 : vector<8x32xf32>
    %376 = arith.mulf %375, %373 : vector<8x32xf32>
    %377 = arith.mulf %368, %352 : vector<8x32xf32>
    %378 = arith.addf %376, %377 : vector<8x32xf32>
    %c6_i32_107 = arith.constant 6 : i32
    %379 = vector.broadcast %c6_i32_107 : i32 to vector<8x1xi32>
    %380 = arith.cmpi sgt, %8, %379 : vector<8x1xi32>
    %cst_108 = arith.constant 0.000000e+00 : f32
    %381 = vector.shape_cast %380 : vector<8x1xi1> to vector<8x1xi1>
    %382 = vector.broadcast %381 : vector<8x1xi1> to vector<8x32xi1>
    %383 = vector.broadcast %cst_108 : f32 to vector<8x32xf32>
    %384 = arith.select %382, %378, %383 : vector<8x32xi1>, vector<8x32xf32>
    %c0_109 = arith.constant 0 : index
    %c6_110 = arith.constant 6 : index
    %c32_111 = arith.constant 32 : index
    %385 = vector.load %arg13[%c0_109, %c6_110, %c32_111] : memref<8x8x64xf32, #tpu.memory_space<vmem>>, vector<8x1x32xf32>
    %386 = vector.shape_cast %385 : vector<8x1x32xf32> to vector<8x32xf32>
    %387 = vector.shape_cast %384 : vector<8x32xf32> to vector<8x1x32xf32>
    tpu.vector_store %arg13[%c0_109, %c6_110, %c32_111], %387 {strides = array<i32>} : memref<8x8x64xf32, #tpu.memory_space<vmem>>, vector<8x1x32xf32>,
    %388 = vector.shape_cast %380 : vector<8x1xi1> to vector<8x1xi1>
    %389 = vector.broadcast %388 : vector<8x1xi1> to vector<8x32xi1>
    %390 = arith.select %389, %378, %352 : vector<8x32xi1>, vector<8x32xf32>
    %c0_112 = arith.constant 0 : index
    %c5_113 = arith.constant 5 : index
    %c96_114 = arith.constant 96 : index
    %391 = vector.load %arg15[%c0_112, %c5_113, %c96_114] : memref<8x8x192xf32, #tpu.memory_space<vmem>>, vector<8x1x96xf32>
    %392 = vector.shape_cast %391 : vector<8x1x96xf32> to vector<8x96xf32>
    %393 = arith.truncf %390 : vector<8x32xf32> to vector<8x32xbf16>
    %cst_115 = arith.constant dense<0.000000e+00> : vector<8x96xf32>
    %394 = tpu.matmul %393, %11, %cst_115 {dimension_numbers = #tpu.dot_dimension_numbers<[1], [0], [0], [1], [0, 0, 1, 1], [], []>} : vector<8x32xbf16>, vector<32x96xbf16>, vector<8x96xf32> -> vector<8x96xf32>
    %395 = vector.broadcast %12 : vector<1x96xf32> to vector<8x96xf32>
    %396 = arith.addf %394, %395 : vector<8x96xf32>
    %397 = vector.extract_strided_slice %392 {offsets = [0, 0], sizes = [8, 64], strides = [1, 1]} : vector<8x96xf32> to vector<8x64xf32>
    %398 = vector.extract_strided_slice %396 {offsets = [0, 0], sizes = [8, 64], strides = [1, 1]} : vector<8x96xf32> to vector<8x64xf32>
    %399 = arith.addf %397, %398 : vector<8x64xf32>
    %400 = arith.negf %399 : vector<8x64xf32>
    %401 = math.exp %400 : vector<8x64xf32>
    %cst_116 = arith.constant 1.000000e+00 : f32
    %402 = vector.broadcast %cst_116 : f32 to vector<8x64xf32>
    %403 = arith.addf %402, %401 : vector<8x64xf32>
    %404 = arith.divf %402, %403 : vector<8x64xf32>
    %405 = vector.extract_strided_slice %404 {offsets = [0, 0], sizes = [8, 32], strides = [1, 1]} : vector<8x64xf32> to vector<8x32xf32>
    %406 = vector.extract_strided_slice %404 {offsets = [0, 32], sizes = [8, 32], strides = [1, 1]} : vector<8x64xf32> to vector<8x32xf32>
    %407 = vector.extract_strided_slice %392 {offsets = [0, 64], sizes = [8, 32], strides = [1, 1]} : vector<8x96xf32> to vector<8x32xf32>
    %408 = vector.extract_strided_slice %396 {offsets = [0, 64], sizes = [8, 32], strides = [1, 1]} : vector<8x96xf32> to vector<8x32xf32>
    %409 = arith.mulf %405, %408 : vector<8x32xf32>
    %410 = arith.addf %407, %409 : vector<8x32xf32>
    %411 = math.tanh %410 : vector<8x32xf32>
    %cst_117 = arith.constant 1.000000e+00 : f32
    %412 = vector.broadcast %cst_117 : f32 to vector<8x32xf32>
    %413 = arith.subf %412, %406 : vector<8x32xf32>
    %414 = arith.mulf %413, %411 : vector<8x32xf32>
    %415 = arith.mulf %406, %390 : vector<8x32xf32>
    %416 = arith.addf %414, %415 : vector<8x32xf32>
    %c5_i32_118 = arith.constant 5 : i32
    %417 = vector.broadcast %c5_i32_118 : i32 to vector<8x1xi32>
    %418 = arith.cmpi sgt, %8, %417 : vector<8x1xi32>
    %cst_119 = arith.constant 0.000000e+00 : f32
    %419 = vector.shape_cast %418 : vector<8x1xi1> to vector<8x1xi1>
    %420 = vector.broadcast %419 : vector<8x1xi1> to vector<8x32xi1>
    %421 = vector.broadcast %cst_119 : f32 to vector<8x32xf32>
    %422 = arith.select %420, %416, %421 : vector<8x32xi1>, vector<8x32xf32>
    %c0_120 = arith.constant 0 : index
    %c5_121 = arith.constant 5 : index
    %c32_122 = arith.constant 32 : index
    %423 = vector.load %arg13[%c0_120, %c5_121, %c32_122] : memref<8x8x64xf32, #tpu.memory_space<vmem>>, vector<8x1x32xf32>
    %424 = vector.shape_cast %423 : vector<8x1x32xf32> to vector<8x32xf32>
    %425 = vector.shape_cast %422 : vector<8x32xf32> to vector<8x1x32xf32>
    tpu.vector_store %arg13[%c0_120, %c5_121, %c32_122], %425 {strides = array<i32>} : memref<8x8x64xf32, #tpu.memory_space<vmem>>, vector<8x1x32xf32>,
    %426 = vector.shape_cast %418 : vector<8x1xi1> to vector<8x1xi1>
    %427 = vector.broadcast %426 : vector<8x1xi1> to vector<8x32xi1>
    %428 = arith.select %427, %416, %390 : vector<8x32xi1>, vector<8x32xf32>
    %c0_123 = arith.constant 0 : index
    %c4_124 = arith.constant 4 : index
    %c96_125 = arith.constant 96 : index
    %429 = vector.load %arg15[%c0_123, %c4_124, %c96_125] : memref<8x8x192xf32, #tpu.memory_space<vmem>>, vector<8x1x96xf32>
    %430 = vector.shape_cast %429 : vector<8x1x96xf32> to vector<8x96xf32>
    %431 = arith.truncf %428 : vector<8x32xf32> to vector<8x32xbf16>
    %cst_126 = arith.constant dense<0.000000e+00> : vector<8x96xf32>
    %432 = tpu.matmul %431, %11, %cst_126 {dimension_numbers = #tpu.dot_dimension_numbers<[1], [0], [0], [1], [0, 0, 1, 1], [], []>} : vector<8x32xbf16>, vector<32x96xbf16>, vector<8x96xf32> -> vector<8x96xf32>
    %433 = vector.broadcast %12 : vector<1x96xf32> to vector<8x96xf32>
    %434 = arith.addf %432, %433 : vector<8x96xf32>
    %435 = vector.extract_strided_slice %430 {offsets = [0, 0], sizes = [8, 64], strides = [1, 1]} : vector<8x96xf32> to vector<8x64xf32>
    %436 = vector.extract_strided_slice %434 {offsets = [0, 0], sizes = [8, 64], strides = [1, 1]} : vector<8x96xf32> to vector<8x64xf32>
    %437 = arith.addf %435, %436 : vector<8x64xf32>
    %438 = arith.negf %437 : vector<8x64xf32>
    %439 = math.exp %438 : vector<8x64xf32>
    %cst_127 = arith.constant 1.000000e+00 : f32
    %440 = vector.broadcast %cst_127 : f32 to vector<8x64xf32>
    %441 = arith.addf %440, %439 : vector<8x64xf32>
    %442 = arith.divf %440, %441 : vector<8x64xf32>
    %443 = vector.extract_strided_slice %442 {offsets = [0, 0], sizes = [8, 32], strides = [1, 1]} : vector<8x64xf32> to vector<8x32xf32>
    %444 = vector.extract_strided_slice %442 {offsets = [0, 32], sizes = [8, 32], strides = [1, 1]} : vector<8x64xf32> to vector<8x32xf32>
    %445 = vector.extract_strided_slice %430 {offsets = [0, 64], sizes = [8, 32], strides = [1, 1]} : vector<8x96xf32> to vector<8x32xf32>
    %446 = vector.extract_strided_slice %434 {offsets = [0, 64], sizes = [8, 32], strides = [1, 1]} : vector<8x96xf32> to vector<8x32xf32>
    %447 = arith.mulf %443, %446 : vector<8x32xf32>
    %448 = arith.addf %445, %447 : vector<8x32xf32>
    %449 = math.tanh %448 : vector<8x32xf32>
    %cst_128 = arith.constant 1.000000e+00 : f32
    %450 = vector.broadcast %cst_128 : f32 to vector<8x32xf32>
    %451 = arith.subf %450, %444 : vector<8x32xf32>
    %452 = arith.mulf %451, %449 : vector<8x32xf32>
    %453 = arith.mulf %444, %428 : vector<8x32xf32>
    %454 = arith.addf %452, %453 : vector<8x32xf32>
    %c4_i32_129 = arith.constant 4 : i32
    %455 = vector.broadcast %c4_i32_129 : i32 to vector<8x1xi32>
    %456 = arith.cmpi sgt, %8, %455 : vector<8x1xi32>
    %cst_130 = arith.constant 0.000000e+00 : f32
    %457 = vector.shape_cast %456 : vector<8x1xi1> to vector<8x1xi1>
    %458 = vector.broadcast %457 : vector<8x1xi1> to vector<8x32xi1>
    %459 = vector.broadcast %cst_130 : f32 to vector<8x32xf32>
    %460 = arith.select %458, %454, %459 : vector<8x32xi1>, vector<8x32xf32>
    %c0_131 = arith.constant 0 : index
    %c4_132 = arith.constant 4 : index
    %c32_133 = arith.constant 32 : index
    %461 = vector.load %arg13[%c0_131, %c4_132, %c32_133] : memref<8x8x64xf32, #tpu.memory_space<vmem>>, vector<8x1x32xf32>
    %462 = vector.shape_cast %461 : vector<8x1x32xf32> to vector<8x32xf32>
    %463 = vector.shape_cast %460 : vector<8x32xf32> to vector<8x1x32xf32>
    tpu.vector_store %arg13[%c0_131, %c4_132, %c32_133], %463 {strides = array<i32>} : memref<8x8x64xf32, #tpu.memory_space<vmem>>, vector<8x1x32xf32>,
    %464 = vector.shape_cast %456 : vector<8x1xi1> to vector<8x1xi1>
    %465 = vector.broadcast %464 : vector<8x1xi1> to vector<8x32xi1>
    %466 = arith.select %465, %454, %428 : vector<8x32xi1>, vector<8x32xf32>
    %c0_134 = arith.constant 0 : index
    %c3_135 = arith.constant 3 : index
    %c96_136 = arith.constant 96 : index
    %467 = vector.load %arg15[%c0_134, %c3_135, %c96_136] : memref<8x8x192xf32, #tpu.memory_space<vmem>>, vector<8x1x96xf32>
    %468 = vector.shape_cast %467 : vector<8x1x96xf32> to vector<8x96xf32>
    %469 = arith.truncf %466 : vector<8x32xf32> to vector<8x32xbf16>
    %cst_137 = arith.constant dense<0.000000e+00> : vector<8x96xf32>
    %470 = tpu.matmul %469, %11, %cst_137 {dimension_numbers = #tpu.dot_dimension_numbers<[1], [0], [0], [1], [0, 0, 1, 1], [], []>} : vector<8x32xbf16>, vector<32x96xbf16>, vector<8x96xf32> -> vector<8x96xf32>
    %471 = vector.broadcast %12 : vector<1x96xf32> to vector<8x96xf32>
    %472 = arith.addf %470, %471 : vector<8x96xf32>
    %473 = vector.extract_strided_slice %468 {offsets = [0, 0], sizes = [8, 64], strides = [1, 1]} : vector<8x96xf32> to vector<8x64xf32>
    %474 = vector.extract_strided_slice %472 {offsets = [0, 0], sizes = [8, 64], strides = [1, 1]} : vector<8x96xf32> to vector<8x64xf32>
    %475 = arith.addf %473, %474 : vector<8x64xf32>
    %476 = arith.negf %475 : vector<8x64xf32>
    %477 = math.exp %476 : vector<8x64xf32>
    %cst_138 = arith.constant 1.000000e+00 : f32
    %478 = vector.broadcast %cst_138 : f32 to vector<8x64xf32>
    %479 = arith.addf %478, %477 : vector<8x64xf32>
    %480 = arith.divf %478, %479 : vector<8x64xf32>
    %481 = vector.extract_strided_slice %480 {offsets = [0, 0], sizes = [8, 32], strides = [1, 1]} : vector<8x64xf32> to vector<8x32xf32>
    %482 = vector.extract_strided_slice %480 {offsets = [0, 32], sizes = [8, 32], strides = [1, 1]} : vector<8x64xf32> to vector<8x32xf32>
    %483 = vector.extract_strided_slice %468 {offsets = [0, 64], sizes = [8, 32], strides = [1, 1]} : vector<8x96xf32> to vector<8x32xf32>
    %484 = vector.extract_strided_slice %472 {offsets = [0, 64], sizes = [8, 32], strides = [1, 1]} : vector<8x96xf32> to vector<8x32xf32>
    %485 = arith.mulf %481, %484 : vector<8x32xf32>
    %486 = arith.addf %483, %485 : vector<8x32xf32>
    %487 = math.tanh %486 : vector<8x32xf32>
    %cst_139 = arith.constant 1.000000e+00 : f32
    %488 = vector.broadcast %cst_139 : f32 to vector<8x32xf32>
    %489 = arith.subf %488, %482 : vector<8x32xf32>
    %490 = arith.mulf %489, %487 : vector<8x32xf32>
    %491 = arith.mulf %482, %466 : vector<8x32xf32>
    %492 = arith.addf %490, %491 : vector<8x32xf32>
    %c3_i32_140 = arith.constant 3 : i32
    %493 = vector.broadcast %c3_i32_140 : i32 to vector<8x1xi32>
    %494 = arith.cmpi sgt, %8, %493 : vector<8x1xi32>
    %cst_141 = arith.constant 0.000000e+00 : f32
    %495 = vector.shape_cast %494 : vector<8x1xi1> to vector<8x1xi1>
    %496 = vector.broadcast %495 : vector<8x1xi1> to vector<8x32xi1>
    %497 = vector.broadcast %cst_141 : f32 to vector<8x32xf32>
    %498 = arith.select %496, %492, %497 : vector<8x32xi1>, vector<8x32xf32>
    %c0_142 = arith.constant 0 : index
    %c3_143 = arith.constant 3 : index
    %c32_144 = arith.constant 32 : index
    %499 = vector.load %arg13[%c0_142, %c3_143, %c32_144] : memref<8x8x64xf32, #tpu.memory_space<vmem>>, vector<8x1x32xf32>
    %500 = vector.shape_cast %499 : vector<8x1x32xf32> to vector<8x32xf32>
    %501 = vector.shape_cast %498 : vector<8x32xf32> to vector<8x1x32xf32>
    tpu.vector_store %arg13[%c0_142, %c3_143, %c32_144], %501 {strides = array<i32>} : memref<8x8x64xf32, #tpu.memory_space<vmem>>, vector<8x1x32xf32>,
    %502 = vector.shape_cast %494 : vector<8x1xi1> to vector<8x1xi1>
    %503 = vector.broadcast %502 : vector<8x1xi1> to vector<8x32xi1>
    %504 = arith.select %503, %492, %466 : vector<8x32xi1>, vector<8x32xf32>
    %c0_145 = arith.constant 0 : index
    %c2_146 = arith.constant 2 : index
    %c96_147 = arith.constant 96 : index
    %505 = vector.load %arg15[%c0_145, %c2_146, %c96_147] : memref<8x8x192xf32, #tpu.memory_space<vmem>>, vector<8x1x96xf32>
    %506 = vector.shape_cast %505 : vector<8x1x96xf32> to vector<8x96xf32>
    %507 = arith.truncf %504 : vector<8x32xf32> to vector<8x32xbf16>
    %cst_148 = arith.constant dense<0.000000e+00> : vector<8x96xf32>
    %508 = tpu.matmul %507, %11, %cst_148 {dimension_numbers = #tpu.dot_dimension_numbers<[1], [0], [0], [1], [0, 0, 1, 1], [], []>} : vector<8x32xbf16>, vector<32x96xbf16>, vector<8x96xf32> -> vector<8x96xf32>
    %509 = vector.broadcast %12 : vector<1x96xf32> to vector<8x96xf32>
    %510 = arith.addf %508, %509 : vector<8x96xf32>
    %511 = vector.extract_strided_slice %506 {offsets = [0, 0], sizes = [8, 64], strides = [1, 1]} : vector<8x96xf32> to vector<8x64xf32>
    %512 = vector.extract_strided_slice %510 {offsets = [0, 0], sizes = [8, 64], strides = [1, 1]} : vector<8x96xf32> to vector<8x64xf32>
    %513 = arith.addf %511, %512 : vector<8x64xf32>
    %514 = arith.negf %513 : vector<8x64xf32>
    %515 = math.exp %514 : vector<8x64xf32>
    %cst_149 = arith.constant 1.000000e+00 : f32
    %516 = vector.broadcast %cst_149 : f32 to vector<8x64xf32>
    %517 = arith.addf %516, %515 : vector<8x64xf32>
    %518 = arith.divf %516, %517 : vector<8x64xf32>
    %519 = vector.extract_strided_slice %518 {offsets = [0, 0], sizes = [8, 32], strides = [1, 1]} : vector<8x64xf32> to vector<8x32xf32>
    %520 = vector.extract_strided_slice %518 {offsets = [0, 32], sizes = [8, 32], strides = [1, 1]} : vector<8x64xf32> to vector<8x32xf32>
    %521 = vector.extract_strided_slice %506 {offsets = [0, 64], sizes = [8, 32], strides = [1, 1]} : vector<8x96xf32> to vector<8x32xf32>
    %522 = vector.extract_strided_slice %510 {offsets = [0, 64], sizes = [8, 32], strides = [1, 1]} : vector<8x96xf32> to vector<8x32xf32>
    %523 = arith.mulf %519, %522 : vector<8x32xf32>
    %524 = arith.addf %521, %523 : vector<8x32xf32>
    %525 = math.tanh %524 : vector<8x32xf32>
    %cst_150 = arith.constant 1.000000e+00 : f32
    %526 = vector.broadcast %cst_150 : f32 to vector<8x32xf32>
    %527 = arith.subf %526, %520 : vector<8x32xf32>
    %528 = arith.mulf %527, %525 : vector<8x32xf32>
    %529 = arith.mulf %520, %504 : vector<8x32xf32>
    %530 = arith.addf %528, %529 : vector<8x32xf32>
    %c2_i32_151 = arith.constant 2 : i32
    %531 = vector.broadcast %c2_i32_151 : i32 to vector<8x1xi32>
    %532 = arith.cmpi sgt, %8, %531 : vector<8x1xi32>
    %cst_152 = arith.constant 0.000000e+00 : f32
    %533 = vector.shape_cast %532 : vector<8x1xi1> to vector<8x1xi1>
    %534 = vector.broadcast %533 : vector<8x1xi1> to vector<8x32xi1>
    %535 = vector.broadcast %cst_152 : f32 to vector<8x32xf32>
    %536 = arith.select %534, %530, %535 : vector<8x32xi1>, vector<8x32xf32>
    %c0_153 = arith.constant 0 : index
    %c2_154 = arith.constant 2 : index
    %c32_155 = arith.constant 32 : index
    %537 = vector.load %arg13[%c0_153, %c2_154, %c32_155] : memref<8x8x64xf32, #tpu.memory_space<vmem>>, vector<8x1x32xf32>
    %538 = vector.shape_cast %537 : vector<8x1x32xf32> to vector<8x32xf32>
    %539 = vector.shape_cast %536 : vector<8x32xf32> to vector<8x1x32xf32>
    tpu.vector_store %arg13[%c0_153, %c2_154, %c32_155], %539 {strides = array<i32>} : memref<8x8x64xf32, #tpu.memory_space<vmem>>, vector<8x1x32xf32>,
    %540 = vector.shape_cast %532 : vector<8x1xi1> to vector<8x1xi1>
    %541 = vector.broadcast %540 : vector<8x1xi1> to vector<8x32xi1>
    %542 = arith.select %541, %530, %504 : vector<8x32xi1>, vector<8x32xf32>
    %c0_156 = arith.constant 0 : index
    %c1_157 = arith.constant 1 : index
    %c96_158 = arith.constant 96 : index
    %543 = vector.load %arg15[%c0_156, %c1_157, %c96_158] : memref<8x8x192xf32, #tpu.memory_space<vmem>>, vector<8x1x96xf32>
    %544 = vector.shape_cast %543 : vector<8x1x96xf32> to vector<8x96xf32>
    %545 = arith.truncf %542 : vector<8x32xf32> to vector<8x32xbf16>
    %cst_159 = arith.constant dense<0.000000e+00> : vector<8x96xf32>
    %546 = tpu.matmul %545, %11, %cst_159 {dimension_numbers = #tpu.dot_dimension_numbers<[1], [0], [0], [1], [0, 0, 1, 1], [], []>} : vector<8x32xbf16>, vector<32x96xbf16>, vector<8x96xf32> -> vector<8x96xf32>
    %547 = vector.broadcast %12 : vector<1x96xf32> to vector<8x96xf32>
    %548 = arith.addf %546, %547 : vector<8x96xf32>
    %549 = vector.extract_strided_slice %544 {offsets = [0, 0], sizes = [8, 64], strides = [1, 1]} : vector<8x96xf32> to vector<8x64xf32>
    %550 = vector.extract_strided_slice %548 {offsets = [0, 0], sizes = [8, 64], strides = [1, 1]} : vector<8x96xf32> to vector<8x64xf32>
    %551 = arith.addf %549, %550 : vector<8x64xf32>
    %552 = arith.negf %551 : vector<8x64xf32>
    %553 = math.exp %552 : vector<8x64xf32>
    %cst_160 = arith.constant 1.000000e+00 : f32
    %554 = vector.broadcast %cst_160 : f32 to vector<8x64xf32>
    %555 = arith.addf %554, %553 : vector<8x64xf32>
    %556 = arith.divf %554, %555 : vector<8x64xf32>
    %557 = vector.extract_strided_slice %556 {offsets = [0, 0], sizes = [8, 32], strides = [1, 1]} : vector<8x64xf32> to vector<8x32xf32>
    %558 = vector.extract_strided_slice %556 {offsets = [0, 32], sizes = [8, 32], strides = [1, 1]} : vector<8x64xf32> to vector<8x32xf32>
    %559 = vector.extract_strided_slice %544 {offsets = [0, 64], sizes = [8, 32], strides = [1, 1]} : vector<8x96xf32> to vector<8x32xf32>
    %560 = vector.extract_strided_slice %548 {offsets = [0, 64], sizes = [8, 32], strides = [1, 1]} : vector<8x96xf32> to vector<8x32xf32>
    %561 = arith.mulf %557, %560 : vector<8x32xf32>
    %562 = arith.addf %559, %561 : vector<8x32xf32>
    %563 = math.tanh %562 : vector<8x32xf32>
    %cst_161 = arith.constant 1.000000e+00 : f32
    %564 = vector.broadcast %cst_161 : f32 to vector<8x32xf32>
    %565 = arith.subf %564, %558 : vector<8x32xf32>
    %566 = arith.mulf %565, %563 : vector<8x32xf32>
    %567 = arith.mulf %558, %542 : vector<8x32xf32>
    %568 = arith.addf %566, %567 : vector<8x32xf32>
    %c1_i32_162 = arith.constant 1 : i32
    %569 = vector.broadcast %c1_i32_162 : i32 to vector<8x1xi32>
    %570 = arith.cmpi sgt, %8, %569 : vector<8x1xi32>
    %cst_163 = arith.constant 0.000000e+00 : f32
    %571 = vector.shape_cast %570 : vector<8x1xi1> to vector<8x1xi1>
    %572 = vector.broadcast %571 : vector<8x1xi1> to vector<8x32xi1>
    %573 = vector.broadcast %cst_163 : f32 to vector<8x32xf32>
    %574 = arith.select %572, %568, %573 : vector<8x32xi1>, vector<8x32xf32>
    %c0_164 = arith.constant 0 : index
    %c1_165 = arith.constant 1 : index
    %c32_166 = arith.constant 32 : index
    %575 = vector.load %arg13[%c0_164, %c1_165, %c32_166] : memref<8x8x64xf32, #tpu.memory_space<vmem>>, vector<8x1x32xf32>
    %576 = vector.shape_cast %575 : vector<8x1x32xf32> to vector<8x32xf32>
    %577 = vector.shape_cast %574 : vector<8x32xf32> to vector<8x1x32xf32>
    tpu.vector_store %arg13[%c0_164, %c1_165, %c32_166], %577 {strides = array<i32>} : memref<8x8x64xf32, #tpu.memory_space<vmem>>, vector<8x1x32xf32>,
    %578 = vector.shape_cast %570 : vector<8x1xi1> to vector<8x1xi1>
    %579 = vector.broadcast %578 : vector<8x1xi1> to vector<8x32xi1>
    %580 = arith.select %579, %568, %542 : vector<8x32xi1>, vector<8x32xf32>
    %c0_167 = arith.constant 0 : index
    %c0_168 = arith.constant 0 : index
    %c96_169 = arith.constant 96 : index
    %581 = vector.load %arg15[%c0_167, %c0_168, %c96_169] : memref<8x8x192xf32, #tpu.memory_space<vmem>>, vector<8x1x96xf32>
    %582 = vector.shape_cast %581 : vector<8x1x96xf32> to vector<8x96xf32>
    %583 = arith.truncf %580 : vector<8x32xf32> to vector<8x32xbf16>
    %cst_170 = arith.constant dense<0.000000e+00> : vector<8x96xf32>
    %584 = tpu.matmul %583, %11, %cst_170 {dimension_numbers = #tpu.dot_dimension_numbers<[1], [0], [0], [1], [0, 0, 1, 1], [], []>} : vector<8x32xbf16>, vector<32x96xbf16>, vector<8x96xf32> -> vector<8x96xf32>
    %585 = vector.broadcast %12 : vector<1x96xf32> to vector<8x96xf32>
    %586 = arith.addf %584, %585 : vector<8x96xf32>
    %587 = vector.extract_strided_slice %582 {offsets = [0, 0], sizes = [8, 64], strides = [1, 1]} : vector<8x96xf32> to vector<8x64xf32>
    %588 = vector.extract_strided_slice %586 {offsets = [0, 0], sizes = [8, 64], strides = [1, 1]} : vector<8x96xf32> to vector<8x64xf32>
    %589 = arith.addf %587, %588 : vector<8x64xf32>
    %590 = arith.negf %589 : vector<8x64xf32>
    %591 = math.exp %590 : vector<8x64xf32>
    %cst_171 = arith.constant 1.000000e+00 : f32
    %592 = vector.broadcast %cst_171 : f32 to vector<8x64xf32>
    %593 = arith.addf %592, %591 : vector<8x64xf32>
    %594 = arith.divf %592, %593 : vector<8x64xf32>
    %595 = vector.extract_strided_slice %594 {offsets = [0, 0], sizes = [8, 32], strides = [1, 1]} : vector<8x64xf32> to vector<8x32xf32>
    %596 = vector.extract_strided_slice %594 {offsets = [0, 32], sizes = [8, 32], strides = [1, 1]} : vector<8x64xf32> to vector<8x32xf32>
    %597 = vector.extract_strided_slice %582 {offsets = [0, 64], sizes = [8, 32], strides = [1, 1]} : vector<8x96xf32> to vector<8x32xf32>
    %598 = vector.extract_strided_slice %586 {offsets = [0, 64], sizes = [8, 32], strides = [1, 1]} : vector<8x96xf32> to vector<8x32xf32>
    %599 = arith.mulf %595, %598 : vector<8x32xf32>
    %600 = arith.addf %597, %599 : vector<8x32xf32>
    %601 = math.tanh %600 : vector<8x32xf32>
    %cst_172 = arith.constant 1.000000e+00 : f32
    %602 = vector.broadcast %cst_172 : f32 to vector<8x32xf32>
    %603 = arith.subf %602, %596 : vector<8x32xf32>
    %604 = arith.mulf %603, %601 : vector<8x32xf32>
    %605 = arith.mulf %596, %580 : vector<8x32xf32>
    %606 = arith.addf %604, %605 : vector<8x32xf32>
    %c0_i32_173 = arith.constant 0 : i32
    %607 = vector.broadcast %c0_i32_173 : i32 to vector<8x1xi32>
    %608 = arith.cmpi sgt, %8, %607 : vector<8x1xi32>
    %cst_174 = arith.constant 0.000000e+00 : f32
    %609 = vector.shape_cast %608 : vector<8x1xi1> to vector<8x1xi1>
    %610 = vector.broadcast %609 : vector<8x1xi1> to vector<8x32xi1>
    %611 = vector.broadcast %cst_174 : f32 to vector<8x32xf32>
    %612 = arith.select %610, %606, %611 : vector<8x32xi1>, vector<8x32xf32>
    %c0_175 = arith.constant 0 : index
    %c0_176 = arith.constant 0 : index
    %c32_177 = arith.constant 32 : index
    %613 = vector.load %arg13[%c0_175, %c0_176, %c32_177] : memref<8x8x64xf32, #tpu.memory_space<vmem>>, vector<8x1x32xf32>
    %614 = vector.shape_cast %613 : vector<8x1x32xf32> to vector<8x32xf32>
    %615 = vector.shape_cast %612 : vector<8x32xf32> to vector<8x1x32xf32>
    tpu.vector_store %arg13[%c0_175, %c0_176, %c32_177], %615 {strides = array<i32>} : memref<8x8x64xf32, #tpu.memory_space<vmem>>, vector<8x1x32xf32>,
    %c0_178 = arith.constant 0 : index
    %c0_179 = arith.constant 0 : index
    %c0_180 = arith.constant 0 : index
    %616 = vector.load %arg13[%c0_178, %c0_179, %c0_180] : memref<8x8x64xf32, #tpu.memory_space<vmem>>, vector<8x8x64xf32>
    %cst_181 = arith.constant 0.000000e+00 : f32
    %617 = vector.broadcast %cst_181 : f32 to vector<8x1x64xf32>
    %618 = tpu.concatenate %617, %616, %617 in 1 : vector<8x1x64xf32>, vector<8x8x64xf32>, vector<8x1x64xf32> -> vector<8x10x64xf32>
    %cst_182 = arith.constant 0.000000e+00 : f32
    %619 = vector.broadcast %cst_182 : f32 to vector<64x8xf32>
    %620 = vector.extract_strided_slice %618 {offsets = [0, 0, 0], sizes = [8, 8, 64], strides = [1, 1, 1]} : vector<8x10x64xf32> to vector<8x8x64xf32>
    %621 = vector.shape_cast %620 : vector<8x8x64xf32> to vector<64x64xf32>
    %622 = arith.truncf %621 : vector<64x64xf32> to vector<64x64xbf16>
    %c0_183 = arith.constant 0 : index
    %c0_184 = arith.constant 0 : index
    %c0_185 = arith.constant 0 : index
    %623 = vector.load %arg9[%c0_183, %c0_184, %c0_185] : memref<3x64x8xbf16, #tpu.memory_space<vmem>>, vector<1x64x8xbf16>
    %624 = vector.shape_cast %623 : vector<1x64x8xbf16> to vector<64x8xbf16>
    %cst_186 = arith.constant dense<0.000000e+00> : vector<64x8xf32>
    %625 = tpu.matmul %622, %624, %cst_186 {dimension_numbers = #tpu.dot_dimension_numbers<[1], [0], [0], [1], [0, 0, 1, 1], [], []>} : vector<64x64xbf16>, vector<64x8xbf16>, vector<64x8xf32> -> vector<64x8xf32>
    %626 = arith.addf %619, %625 : vector<64x8xf32>
    %627 = vector.extract_strided_slice %618 {offsets = [0, 1, 0], sizes = [8, 8, 64], strides = [1, 1, 1]} : vector<8x10x64xf32> to vector<8x8x64xf32>
    %628 = vector.shape_cast %627 : vector<8x8x64xf32> to vector<64x64xf32>
    %629 = arith.truncf %628 : vector<64x64xf32> to vector<64x64xbf16>
    %c1_187 = arith.constant 1 : index
    %c0_188 = arith.constant 0 : index
    %c0_189 = arith.constant 0 : index
    %630 = vector.load %arg9[%c1_187, %c0_188, %c0_189] : memref<3x64x8xbf16, #tpu.memory_space<vmem>>, vector<1x64x8xbf16>
    %631 = vector.shape_cast %630 : vector<1x64x8xbf16> to vector<64x8xbf16>
    %cst_190 = arith.constant dense<0.000000e+00> : vector<64x8xf32>
    %632 = tpu.matmul %629, %631, %cst_190 {dimension_numbers = #tpu.dot_dimension_numbers<[1], [0], [0], [1], [0, 0, 1, 1], [], []>} : vector<64x64xbf16>, vector<64x8xbf16>, vector<64x8xf32> -> vector<64x8xf32>
    %633 = arith.addf %626, %632 : vector<64x8xf32>
    %634 = vector.extract_strided_slice %618 {offsets = [0, 2, 0], sizes = [8, 8, 64], strides = [1, 1, 1]} : vector<8x10x64xf32> to vector<8x8x64xf32>
    %635 = vector.shape_cast %634 : vector<8x8x64xf32> to vector<64x64xf32>
    %636 = arith.truncf %635 : vector<64x64xf32> to vector<64x64xbf16>
    %c2_191 = arith.constant 2 : index
    %c0_192 = arith.constant 0 : index
    %c0_193 = arith.constant 0 : index
    %637 = vector.load %arg9[%c2_191, %c0_192, %c0_193] : memref<3x64x8xbf16, #tpu.memory_space<vmem>>, vector<1x64x8xbf16>
    %638 = vector.shape_cast %637 : vector<1x64x8xbf16> to vector<64x8xbf16>
    %cst_194 = arith.constant dense<0.000000e+00> : vector<64x8xf32>
    %639 = tpu.matmul %636, %638, %cst_194 {dimension_numbers = #tpu.dot_dimension_numbers<[1], [0], [0], [1], [0, 0, 1, 1], [], []>} : vector<64x64xbf16>, vector<64x8xbf16>, vector<64x8xf32> -> vector<64x8xf32>
    %640 = arith.addf %633, %639 : vector<64x8xf32>
    %c0_195 = arith.constant 0 : index
    %c0_196 = arith.constant 0 : index
    %641 = vector.load %arg10[%c0_195, %c0_196] : memref<1x8xf32, #tpu.memory_space<vmem>>, vector<1x8xf32>
    %642 = vector.broadcast %641 : vector<1x8xf32> to vector<64x8xf32>
    %643 = arith.addf %640, %642 : vector<64x8xf32>
    %cst_197 = arith.constant 0.000000e+00 : f32
    %644 = vector.broadcast %cst_197 : f32 to vector<64x8xf32>
    %645 = arith.maximumf %643, %644 : vector<64x8xf32>
    %646 = vector.shape_cast %645 : vector<64x8xf32> to vector<8x8x8xf32>
    %cst_198 = arith.constant dense<0xFF800000> : vector<8x8xf32>
    %647 = vector.multi_reduction <maximumf>, %646, %cst_198 [1] : vector<8x8x8xf32> to vector<8x8xf32>
    %c0_199 = arith.constant 0 : index
    %c0_200 = arith.constant 0 : index
    %648 = vector.load %arg11[%c0_199, %c0_200] : memref<8x4xf32, #tpu.memory_space<vmem>>, vector<8x4xf32>
    %cst_201 = arith.constant dense<0.000000e+00> : vector<8x4xf32>
    %649 = tpu.matmul %647, %648, %cst_201 {dimension_numbers = #tpu.dot_dimension_numbers<[1], [0], [0], [1], [0, 0, 1, 1], [], []>} : vector<8x8xf32>, vector<8x4xf32>, vector<8x4xf32> -> vector<8x4xf32>
    %c0_202 = arith.constant 0 : index
    %c0_203 = arith.constant 0 : index
    %650 = vector.load %arg12[%c0_202, %c0_203] : memref<1x4xf32, #tpu.memory_space<vmem>>, vector<1x4xf32>
    %651 = vector.broadcast %650 : vector<1x4xf32> to vector<8x4xf32>
    %652 = arith.addf %649, %651 : vector<8x4xf32>
    %653 = arith.negf %652 : vector<8x4xf32>
    %654 = math.exp %653 : vector<8x4xf32>
    %cst_204 = arith.constant 1.000000e+00 : f32
    %655 = vector.broadcast %cst_204 : f32 to vector<8x4xf32>
    %656 = arith.addf %655, %654 : vector<8x4xf32>
    %657 = arith.divf %655, %656 : vector<8x4xf32>
    %cst_205 = arith.constant 3.500000e-01 : f32
    %658 = vector.broadcast %cst_205 : f32 to vector<8x4xf32>
    %659 = arith.cmpf olt, %657, %658 : vector<8x4xf32>
    %cst_206 = arith.constant 0.000000e+00 : f32
    %660 = vector.broadcast %cst_206 : f32 to vector<8x4xf32>
    %661 = arith.select %659, %660, %657 : vector<8x4xi1>, vector<8x4xf32>
    %c0_207 = arith.constant 0 : index
    %c0_208 = arith.constant 0 : index
    %662 = vector.load %arg14[%c0_207, %c0_208] : memref<8x4xf32, #tpu.memory_space<vmem>>, vector<8x4xf32>
    tpu.vector_store %arg14[%c0_207, %c0_208], %661 {strides = array<i32>} : memref<8x4xf32, #tpu.memory_space<vmem>>, vector<8x4xf32>,
    return
  }
  func.func @transform_0(%arg0: i32) -> (i32, i32) {
    %c0_i32 = arith.constant 0 : i32
    %c0_i32_0 = arith.constant 0 : i32
    return %arg0, %c0_i32 : i32, i32
  }
  func.func @transform_1(%arg0: i32) -> (i32, i32) {
    %c0_i32 = arith.constant 0 : i32
    %c0_i32_0 = arith.constant 0 : i32
    return %arg0, %c0_i32 : i32, i32
  }
  func.func @transform_2(%arg0: i32) -> (i32, i32) {
    %c0_i32 = arith.constant 0 : i32
    %c0_i32_0 = arith.constant 0 : i32
    %c0_i32_1 = arith.constant 0 : i32
    return %c0_i32, %c0_i32_0 : i32, i32
  }
  func.func @transform_3(%arg0: i32) -> (i32, i32) {
    %c0_i32 = arith.constant 0 : i32
    %c0_i32_0 = arith.constant 0 : i32
    %c0_i32_1 = arith.constant 0 : i32
    return %c0_i32, %c0_i32_0 : i32, i32
  }
  func.func @transform_4(%arg0: i32) -> (i32, i32) {
    %c0_i32 = arith.constant 0 : i32
    %c0_i32_0 = arith.constant 0 : i32
    %c0_i32_1 = arith.constant 0 : i32
    return %c0_i32, %c0_i32_0 : i32, i32
  }
  func.func @transform_5(%arg0: i32) -> (i32, i32) {
    %c0_i32 = arith.constant 0 : i32
    %c0_i32_0 = arith.constant 0 : i32
    %c0_i32_1 = arith.constant 0 : i32
    return %c0_i32, %c0_i32_0 : i32, i32
  }
  func.func @transform_6(%arg0: i32) -> (i32, i32) {
    %c0_i32 = arith.constant 0 : i32
    %c0_i32_0 = arith.constant 0 : i32
    %c0_i32_1 = arith.constant 0 : i32
    return %c0_i32, %c0_i32_0 : i32, i32
  }
  func.func @transform_7(%arg0: i32) -> (i32, i32) {
    %c0_i32 = arith.constant 0 : i32
    %c0_i32_0 = arith.constant 0 : i32
    %c0_i32_1 = arith.constant 0 : i32
    return %c0_i32, %c0_i32_0 : i32, i32
  }
  func.func @transform_8(%arg0: i32) -> (i32, i32, i32) {
    %c0_i32 = arith.constant 0 : i32
    %c0_i32_0 = arith.constant 0 : i32
    %c0_i32_1 = arith.constant 0 : i32
    %c0_i32_2 = arith.constant 0 : i32
    return %c0_i32, %c0_i32_0, %c0_i32_1 : i32, i32, i32
  }
  func.func @transform_9(%arg0: i32) -> (i32, i32) {
    %c0_i32 = arith.constant 0 : i32
    %c0_i32_0 = arith.constant 0 : i32
    %c0_i32_1 = arith.constant 0 : i32
    return %c0_i32, %c0_i32_0 : i32, i32
  }
  func.func @transform_10(%arg0: i32) -> (i32, i32) {
    %c0_i32 = arith.constant 0 : i32
    %c0_i32_0 = arith.constant 0 : i32
    %c0_i32_1 = arith.constant 0 : i32
    return %c0_i32, %c0_i32_0 : i32, i32
  }
  func.func @transform_11(%arg0: i32) -> (i32, i32) {
    %c0_i32 = arith.constant 0 : i32
    %c0_i32_0 = arith.constant 0 : i32
    %c0_i32_1 = arith.constant 0 : i32
    return %c0_i32, %c0_i32_0 : i32, i32
  }
  func.func @transform_12(%arg0: i32) -> (i32, i32, i32) {
    %c0_i32 = arith.constant 0 : i32
    %c0_i32_0 = arith.constant 0 : i32
    %c0_i32_1 = arith.constant 0 : i32
    return %arg0, %c0_i32, %c0_i32_0 : i32, i32, i32
  }
  func.func @transform_13(%arg0: i32) -> (i32, i32) {
    %c0_i32 = arith.constant 0 : i32
    %c0_i32_0 = arith.constant 0 : i32
    return %arg0, %c0_i32 : i32, i32
  }
}

</mosaic_0001>

<llo_original>
// kernel: cnet_forward.1
$region0: #{cnet_forward.1}
  #allocation0 [shape = 'u32[]', space=smem, size = 0x4, offset = 0x4, fixed_abs, tag = 'smem constant byte address 0x4 - core index']
  #allocation1 [shape = 'u32[72,128]{1,0:T(1,128)}', space=vmem, size = 0x9000, scoped, tag = 'internal scratch']
  #allocation2 [shape = 'f32[8,8,192]{2,1,0:T(8,128)}', space=vmem, size = 0x10000, scoped, tag = 'scratch operand']
  %s0 = inlined_call_operand.vmem [shape: bf16[64,16], index: 0, kind: input, shape index: {}]
  %s1 = inlined_call_operand.vmem [shape: s32[8,1], index: 1, kind: input, shape index: {}]
  %s2 = inlined_call_operand.vmem [shape: bf16[16,192], index: 2, kind: input, shape index: {}]
  %s3 = inlined_call_operand.vmem [shape: f32[1,192], index: 3, kind: input, shape index: {}]
  %s4 = inlined_call_operand.vmem [shape: bf16[32,96], index: 4, kind: input, shape index: {}]
  %s5 = inlined_call_operand.vmem [shape: f32[1,96], index: 5, kind: input, shape index: {}]
  %s6 = inlined_call_operand.vmem [shape: bf16[32,96], index: 6, kind: input, shape index: {}]
  %s7 = inlined_call_operand.vmem [shape: f32[1,96], index: 7, kind: input, shape index: {}]
  %s8 = inlined_call_operand.vmem [shape: bf16[3,64,8], index: 8, kind: input, shape index: {}]
  %s9 = inlined_call_operand.vmem [shape: f32[1,8], index: 9, kind: input, shape index: {}]
  %s10 = inlined_call_operand.vmem [shape: f32[8,4], index: 10, kind: input, shape index: {}]
  %s11 = inlined_call_operand.vmem [shape: f32[1,4], index: 11, kind: input, shape index: {}]
  %s12 = inlined_call_operand.vmem [shape: f32[8,8,64], index: 12, kind: output, shape index: {0}]
  %s13 = inlined_call_operand.vmem [shape: f32[8,4], index: 13, kind: output, shape index: {1}]
  %14 = xla_tuple %s12, %s13
  %s15 = sld [smem:[#allocation0]]
  $region66: #{cnet_forward.1} parent=0
    _
  %s17 = ssub.s32 1, %s15
  %s18 = scalar_select 0, %s17, %s15
  // Predicated region
  $region2: #{cnet_forward.1} parent=0 // pred_check
    _
  $region3: #{cnet_forward.1} parent=0 // pred_check_branch
    %20 = sbr.rel (0) target = $region5
  $region4: #{cnet_forward.1} parent=0 // pred_region
    _
  $region5: #{cnet_forward.1} parent=0 // pred_fallthru
    _
  // Predicated region
  $region6: #{cnet_forward.1} parent=0 // pred_check
    _
  $region7: #{cnet_forward.1} parent=0 // pred_check_branch
    %22 = sbr.rel (0) target = $region9
  $region8: #{cnet_forward.1} parent=0 // pred_region
    _
  $region9: #{cnet_forward.1} parent=0 // pred_fallthru
    _
  // Predicated region
  $region10: #{cnet_forward.1} parent=0 // pred_check
    _
  $region11: #{cnet_forward.1} parent=0 // pred_check_branch
    %24 = sbr.rel (0) target = $region13
  $region12: #{cnet_forward.1} parent=0 // pred_region
    _
  $region13: #{cnet_forward.1} parent=0 // pred_fallthru
    _
  // Predicated region
  $region14: #{cnet_forward.1} parent=0 // pred_check
    _
  $region15: #{cnet_forward.1} parent=0 // pred_check_branch
    %26 = sbr.rel (0) target = $region17
  $region16: #{cnet_forward.1} parent=0 // pred_region
    _
  $region17: #{cnet_forward.1} parent=0 // pred_fallthru
    _
  // Predicated region
  $region18: #{cnet_forward.1} parent=0 // pred_check
    _
  $region19: #{cnet_forward.1} parent=0 // pred_check_branch
    %28 = sbr.rel (0) target = $region21
  $region20: #{cnet_forward.1} parent=0 // pred_region
    _
  $region21: #{cnet_forward.1} parent=0 // pred_fallthru
    _
  // Predicated region
  $region22: #{cnet_forward.1} parent=0 // pred_check
    _
  $region23: #{cnet_forward.1} parent=0 // pred_check_branch
    %30 = sbr.rel (0) target = $region25
  $region24: #{cnet_forward.1} parent=0 // pred_region
    _
  $region25: #{cnet_forward.1} parent=0 // pred_fallthru
    _
  // Predicated region
  $region26: #{cnet_forward.1} parent=0 // pred_check
    _
  $region27: #{cnet_forward.1} parent=0 // pred_check_branch
    %32 = sbr.rel (0) target = $region29
  $region28: #{cnet_forward.1} parent=0 // pred_region
    _
  $region29: #{cnet_forward.1} parent=0 // pred_fallthru
    _
  // Predicated region
  $region30: #{cnet_forward.1} parent=0 // pred_check
    _
  $region31: #{cnet_forward.1} parent=0 // pred_check_branch
    %34 = sbr.rel (0) target = $region33
  $region32: #{cnet_forward.1} parent=0 // pred_region
    _
  $region33: #{cnet_forward.1} parent=0 // pred_fallthru
    _
  // Predicated region
  $region34: #{cnet_forward.1} parent=0 // pred_check
    _
  $region35: #{cnet_forward.1} parent=0 // pred_check_branch
    %36 = sbr.rel (0) target = $region37
  $region36: #{cnet_forward.1} parent=0 // pred_region
    _
  $region37: #{cnet_forward.1} parent=0 // pred_fallthru
    _
  // Predicated region
  $region38: #{cnet_forward.1} parent=0 // pred_check
    _
  $region39: #{cnet_forward.1} parent=0 // pred_check_branch
    %38 = sbr.rel (0) target = $region41
  $region40: #{cnet_forward.1} parent=0 // pred_region
    _
  $region41: #{cnet_forward.1} parent=0 // pred_fallthru
    _
  // Predicated region
  $region42: #{cnet_forward.1} parent=0 // pred_check
    _
  $region43: #{cnet_forward.1} parent=0 // pred_check_branch
    %40 = sbr.rel (0) target = $region45
  $region44: #{cnet_forward.1} parent=0 // pred_region
    _
  $region45: #{cnet_forward.1} parent=0 // pred_fallthru
    _
  // Predicated region
  $region46: #{cnet_forward.1} parent=0 // pred_check
    _
  $region47: #{cnet_forward.1} parent=0 // pred_check_branch
    %42 = sbr.rel (0) target = $region49
  $region48: #{cnet_forward.1} parent=0 // pred_region
    _
  $region49: #{cnet_forward.1} parent=0 // pred_fallthru
    _
  %v44 = vld [vmem:[%s0] sm:$0xf]
  %v45 = vld [vmem:[%s0 + $0x4] sm:$0xf]
  %v46 = vld [vmem:[%s0 + $0x8] sm:$0xf]
  %v47 = vld [vmem:[%s0 + $0xc] sm:$0xf]
  %v48 = vld [vmem:[%s0 + $0x10] sm:$0xf]
  %v49 = vld [vmem:[%s0 + $0x14] sm:$0xf]
  %v50 = vld [vmem:[%s0 + $0x18] sm:$0xf]
  %v51 = vld [vmem:[%s0 + $0x1c] sm:$0xf]
  %v52 = vld [vmem:[%s2] sm:$0xff]
  %v53 = vld [vmem:[%s2 + $0x8] sm:$0xff]
  %v54 = vld [vmem:[%s3] sm:$0x3]
  %v56 = vperm.slane %v54, 0
  %v57 = vperm.slane %v54, 1
  %v68 = vunpack.c.l.b16 %v44
  %v69 = vunpack.c.l.b16 %v45
  %v70 = vunpack.c.l.b16 %v46
  %v71 = vunpack.c.l.b16 %v47
  %v72 = vunpack.c.l.b16 %v48
  %v73 = vunpack.c.l.b16 %v49
  %v74 = vunpack.c.l.b16 %v50
  %v75 = vunpack.c.l.b16 %v51
  %v76 = vpack.c.b16 %v69, %v68
  %v77 = vpack.c.b16 %v71, %v70
  %v78 = vpack.c.b16 %v73, %v72
  %v79 = vpack.c.b16 %v75, %v74
  %v82 = vunpack.c.l.b16 %v52
  %v83 = vunpack.c.h.b16 %v52
  %v84 = vunpack.c.l.b16 %v53
  %v85 = vunpack.c.h.b16 %v53
  %v86 = vpack.c.b16 %v84, %v82
  %v87 = vpack.c.b16 %v85, %v83
  %vm90 = vcmask 130048
  %v92 = vsel %vm90, %v76, 0
  %v95 = vsel %vm90, %v77, 0
  %v98 = vsel %vm90, %v78, 0
  %v101 = vsel %vm90, %v79, 0
  %103 = vmatpush.bf16.msra.mxu0 0
  %104 = vmatpush.bf16.msra.mxu0 0
  %105 = vmatpush.bf16.msra.mxu0 0
  %106 = vmatpush.bf16.msra.mxu0 0
  %107 = vmatpush.bf16.msra.mxu0 0
  %108 = vmatpush.bf16.msra.mxu0 0
  %109 = vmatpush.bf16.msra.mxu0 0
  %110 = vmatpush.bf16.msra.mxu0 %v86
  %111 = vmatmul.bf16.gmra.mxu0 %v92
  %v112 = vpop.f32.mrf.mxu0
  %v113 = vadd.f32 %v56, %v112
  %v114 = vpop.f32.mrf.mxu0
  %v115 = vadd.f32 %v56, %v114
  %116 = vmatmul.bf16.gmra.mxu0 %v95
  %v117 = vpop.f32.mrf.mxu0
  %v118 = vadd.f32 %v56, %v117
  %v119 = vpop.f32.mrf.mxu0
  %v120 = vadd.f32 %v56, %v119
  %121 = vmatmul.bf16.gmra.mxu0 %v98
  %v122 = vpop.f32.mrf.mxu0
  %v123 = vadd.f32 %v56, %v122
  %v124 = vpop.f32.mrf.mxu0
  %v125 = vadd.f32 %v56, %v124
  %126 = vmatmul.bf16.gmra.mxu0 %v101
  %v127 = vpop.f32.mrf.mxu0
  %v128 = vadd.f32 %v56, %v127
  %v129 = vpop.f32.mrf.mxu0
  %v130 = vadd.f32 %v56, %v129
  %131 = vdwg.mxu0
  %132 = vmatpush.bf16.msra.mxu0 0
  %133 = vmatpush.bf16.msra.mxu0 0
  %134 = vmatpush.bf16.msra.mxu0 0
  %135 = vmatpush.bf16.msra.mxu0 0
  %136 = vmatpush.bf16.msra.mxu0 0
  %137 = vmatpush.bf16.msra.mxu0 0
  %138 = vmatpush.bf16.msra.mxu0 0
  %139 = vmatpush.bf16.msra.mxu0 %v87
  %140 = vmatmul.bf16.gmra.mxu0 %v92
  %v141 = vpop.f32.mrf.mxu0
  %v142 = vadd.f32 %v57, %v141
  %v143 = vpop.f32.mrf.mxu0
  %v144 = vadd.f32 %v57, %v143
  %145 = vmatmul.bf16.gmra.mxu0 %v95
  %v146 = vpop.f32.mrf.mxu0
  %v147 = vadd.f32 %v57, %v146
  %v148 = vpop.f32.mrf.mxu0
  %v149 = vadd.f32 %v57, %v148
  %150 = vmatmul.bf16.gmra.mxu0 %v98
  %v151 = vpop.f32.mrf.mxu0
  %v152 = vadd.f32 %v57, %v151
  %v153 = vpop.f32.mrf.mxu0
  %v154 = vadd.f32 %v57, %v153
  %155 = vmatmul.bf16.gmra.mxu0 %v101
  %v156 = vpop.f32.mrf.mxu0
  %v157 = vadd.f32 %v57, %v156
  %v158 = vpop.f32.mrf.mxu0
  %v159 = vadd.f32 %v57, %v158
  %160 = vdwg.mxu0
  %161 = vst [vmem:[#allocation2] sm:$0xff] %v113
  %vm162 = vcmask 523264
  %163 = vst.msk [vmem:[#allocation2 + $0x8] sm:$0xff] %vm162, %v142
  %164 = vst [vmem:[#allocation2 + $0x10] sm:$0xff] %v115
  %165 = vst.msk [vmem:[#allocation2 + $0x18] sm:$0xff] %vm162, %v144
  %166 = vst [vmem:[#allocation2 + $0x20] sm:$0xff] %v118
  %167 = vst.msk [vmem:[#allocation2 + $0x28] sm:$0xff] %vm162, %v147
  %168 = vst [vmem:[#allocation2 + $0x30] sm:$0xff] %v120
  %169 = vst.msk [vmem:[#allocation2 + $0x38] sm:$0xff] %vm162, %v149
  %170 = vst [vmem:[#allocation2 + $0x40] sm:$0xff] %v123
  %171 = vst.msk [vmem:[#allocation2 + $0x48] sm:$0xff] %vm162, %v152
  %172 = vst [vmem:[#allocation2 + $0x50] sm:$0xff] %v125
  %173 = vst.msk [vmem:[#allocation2 + $0x58] sm:$0xff] %vm162, %v154
  %174 = vst [vmem:[#allocation2 + $0x60] sm:$0xff] %v128
  %175 = vst.msk [vmem:[#allocation2 + $0x68] sm:$0xff] %vm162, %v157
  %176 = vst [vmem:[#allocation2 + $0x70] sm:$0xff] %v130
  %177 = vst.msk [vmem:[#allocation2 + $0x78] sm:$0xff] %vm162, %v159
  %v178 = vld [vmem:[%s1] sm:$0xff]
  %v179 = vld [vmem:[%s4] sm:$0xf]
  %v180 = vld [vmem:[%s4 + $0x4] sm:$0xf]
  %v181 = vld [vmem:[%s4 + $0x8] sm:$0xf]
  %v182 = vld [vmem:[%s4 + $0xc] sm:$0xf]
  %v183 = vld [vmem:[%s5] sm:$0x1]
  %v184 = vld [vmem:[%s6] sm:$0xf]
  %v185 = vld [vmem:[%s6 + $0x4] sm:$0xf]
  %v186 = vld [vmem:[%s6 + $0x8] sm:$0xf]
  %v187 = vld [vmem:[%s6 + $0xc] sm:$0xf]
  %v188 = vld [vmem:[%s7] sm:$0x1]
  %v189 = vld [vmem:[#allocation2] ss:$0 sm:$0xff]
  %v190 = vld [vmem:[#allocation2 + $0x10] ss:$0 sm:$0xff]
  %v191 = vld [vmem:[#allocation2 + $0x20] ss:$0 sm:$0xff]
  %v192 = vld [vmem:[#allocation2 + $0x30] ss:$0 sm:$0xff]
  %v193 = vld [vmem:[#allocation2 + $0x40] ss:$0 sm:$0xff]
  %v194 = vld [vmem:[#allocation2 + $0x50] ss:$0 sm:$0xff]
  %v195 = vld [vmem:[#allocation2 + $0x60] ss:$0 sm:$0xff]
  %v196 = vld [vmem:[#allocation2 + $0x70] ss:$0 sm:$0xff]
  %v198 = vperm.slane %v183, 0
  %v204 = vunpack.c.l.b16 %v179
  %v205 = vunpack.c.l.b16 %v180
  %v206 = vunpack.c.l.b16 %v181
  %v207 = vunpack.c.l.b16 %v182
  %v208 = vpack.c.b16 %v205, %v204
  %v209 = vpack.c.b16 %v207, %v206
  %vm212 = vcmask 261120
  %v214 = vsel %vm212, 0, 0
  %216 = vmatpush.bf16.msra.mxu0 0
  %217 = vmatpush.bf16.msra.mxu0 0
  %218 = vmatpush.bf16.msra.mxu0 0
  %219 = vmatpush.bf16.msra.mxu0 0
  %220 = vmatpush.bf16.msra.mxu0 0
  %221 = vmatpush.bf16.msra.mxu0 0
  %222 = vmatpush.bf16.msra.mxu0 %v209
  %223 = vmatpush.bf16.msra.mxu0 %v208
  %224 = vmatmul.bf16.gmra.mxu0 %v214
  %v225 = vpop.f32.mrf.mxu0
  %v226 = vadd.f32 %v198, %v225
  %v227 = vpop.f32.mrf.mxu0
  %228 = vdwg.mxu0
  %v230 = vrot.slane %v226, 1
  %v231 = vrot.slane %v226, 2
  %v232 = vrot.slane %v226, 3
  %v233 = vrot.slane %v226, 4
  %v234 = vrot.slane %v226, 5
  %v235 = vrot.slane %v226, 6
  %v236 = vrot.slane %v226, 7
  %v245 = vadd.f32 %v189, %v226
  %v246 = vadd.f32 %v190, %v230
  %v247 = vadd.f32 %v191, %v231
  %v248 = vadd.f32 %v192, %v232
  %v249 = vadd.f32 %v193, %v233
  %v250 = vadd.f32 %v194, %v234
  %v251 = vadd.f32 %v195, %v235
  %v252 = vadd.f32 %v196, %v236
  %v253 = vxor.u32 %v245, 2147483648
  %v254 = vxor.u32 %v246, 2147483648
  %v255 = vxor.u32 %v247, 2147483648
  %v256 = vxor.u32 %v248, 2147483648
  %v257 = vxor.u32 %v249, 2147483648
  %v258 = vxor.u32 %v250, 2147483648
  %v259 = vxor.u32 %v251, 2147483648
  %v260 = vxor.u32 %v252, 2147483648
  %v261 = vmul.f32 %v253, 1.442695
  %v262 = vpow.pop %v261
  %v263 = vmul.f32 %v254, 1.442695
  %v264 = vpow.pop %v263
  %v265 = vmul.f32 %v255, 1.442695
  %v266 = vpow.pop %v265
  %v267 = vmul.f32 %v256, 1.442695
  %v268 = vpow.pop %v267
  %v269 = vmul.f32 %v257, 1.442695
  %v270 = vpow.pop %v269
  %v271 = vmul.f32 %v258, 1.442695
  %v272 = vpow.pop %v271
  %v273 = vmul.f32 %v259, 1.442695
  %v274 = vpow.pop %v273
  %v275 = vmul.f32 %v260, 1.442695
  %v276 = vpow.pop %v275
  %v277 = vadd.f32 %v262, 1.0
  %v278 = vadd.f32 %v264, 1.0
  %v279 = vadd.f32 %v266, 1.0
  %v280 = vadd.f32 %v268, 1.0
  %v281 = vadd.f32 %v270, 1.0
  %v282 = vadd.f32 %v272, 1.0
  %v283 = vadd.f32 %v274, 1.0
  %v284 = vadd.f32 %v276, 1.0
  %v285 = vrcp.pop %v277
  %v286 = vmul.f32 %v277, %v285
  %v287 = vsub.f32 1.0, %v286
  %v288 = vmul.f32 %v285, %v287
  %v289 = vadd.f32 %v285, %v288
  %vm290 = vweird.f32 %v277
  %vm291 = vweird.f32 %v285
  %vm292 = vmor %vm290, %vm291
  %v293 = vsel %vm292, %v285, %v289
  %v294 = vand.u32 2147483647, %v277
  %vm295 = vcmp.eq.f32.partialorder %v294, 8.507059e+37
  %v296 = vand.u32 %v277, 2147483648
  %v297 = vor.u32 1.1754944e-38, %v296
  %v298 = vsel %vm295, %v297, %v293
  %v299 = vmul.f32 1.0, %v298
  %v300 = vrcp.pop %v278
  %v301 = vmul.f32 %v278, %v300
  %v302 = vsub.f32 1.0, %v301
  %v303 = vmul.f32 %v300, %v302
  %v304 = vadd.f32 %v300, %v303
  %vm305 = vweird.f32 %v278
  %vm306 = vweird.f32 %v300
  %vm307 = vmor %vm305, %vm306
  %v308 = vsel %vm307, %v300, %v304
  %v309 = vand.u32 2147483647, %v278
  %vm310 = vcmp.eq.f32.partialorder %v309, 8.507059e+37
  %v311 = vand.u32 %v278, 2147483648
  %v312 = vor.u32 1.1754944e-38, %v311
  %v313 = vsel %vm310, %v312, %v308
  %v314 = vmul.f32 1.0, %v313
  %v315 = vrcp.pop %v279
  %v316 = vmul.f32 %v279, %v315
  %v317 = vsub.f32 1.0, %v316
  %v318 = vmul.f32 %v315, %v317
  %v319 = vadd.f32 %v315, %v318
  %vm320 = vweird.f32 %v279
  %vm321 = vweird.f32 %v315
  %vm322 = vmor %vm320, %vm321
  %v323 = vsel %vm322, %v315, %v319
  %v324 = vand.u32 2147483647, %v279
  %vm325 = vcmp.eq.f32.partialorder %v324, 8.507059e+37
  %v326 = vand.u32 %v279, 2147483648
  %v327 = vor.u32 1.1754944e-38, %v326
  %v328 = vsel %vm325, %v327, %v323
  %v329 = vmul.f32 1.0, %v328
  %v330 = vrcp.pop %v280
  %v331 = vmul.f32 %v280, %v330
  %v332 = vsub.f32 1.0, %v331
  %v333 = vmul.f32 %v330, %v332
  %v334 = vadd.f32 %v330, %v333
  %vm335 = vweird.f32 %v280
  %vm336 = vweird.f32 %v330
  %vm337 = vmor %vm335, %vm336
  %v338 = vsel %vm337, %v330, %v334
  %v339 = vand.u32 2147483647, %v280
  %vm340 = vcmp.eq.f32.partialorder %v339, 8.507059e+37
  %v341 = vand.u32 %v280, 2147483648
  %v342 = vor.u32 1.1754944e-38, %v341
  %v343 = vsel %vm340, %v342, %v338
  %v344 = vmul.f32 1.0, %v343
  %v345 = vrcp.pop %v281
  %v346 = vmul.f32 %v281, %v345
  %v347 = vsub.f32 1.0, %v346
  %v348 = vmul.f32 %v345, %v347
  %v349 = vadd.f32 %v345, %v348
  %vm350 = vweird.f32 %v281
  %vm351 = vweird.f32 %v345
  %vm352 = vmor %vm350, %vm351
  %v353 = vsel %vm352, %v345, %v349
  %v354 = vand.u32 2147483647, %v281
  %vm355 = vcmp.eq.f32.partialorder %v354, 8.507059e+37
  %v356 = vand.u32 %v281, 2147483648
  %v357 = vor.u32 1.1754944e-38, %v356
  %v358 = vsel %vm355, %v357, %v353
  %v359 = vmul.f32 1.0, %v358
  %v360 = vrcp.pop %v282
  %v361 = vmul.f32 %v282, %v360
  %v362 = vsub.f32 1.0, %v361
  %v363 = vmul.f32 %v360, %v362
  %v364 = vadd.f32 %v360, %v363
  %vm365 = vweird.f32 %v282
  %vm366 = vweird.f32 %v360
  %vm367 = vmor %vm365, %vm366
  %v368 = vsel %vm367, %v360, %v364
  %v369 = vand.u32 2147483647, %v282
  %vm370 = vcmp.eq.f32.partialorder %v369, 8.507059e+37
  %v371 = vand.u32 %v282, 2147483648
  %v372 = vor.u32 1.1754944e-38, %v371
  %v373 = vsel %vm370, %v372, %v368
  %v374 = vmul.f32 1.0, %v373
  %v375 = vrcp.pop %v283
  %v376 = vmul.f32 %v283, %v375
  %v377 = vsub.f32 1.0, %v376
  %v378 = vmul.f32 %v375, %v377
  %v379 = vadd.f32 %v375, %v378
  %vm380 = vweird.f32 %v283
  %vm381 = vweird.f32 %v375
  %vm382 = vmor %vm380, %vm381
  %v383 = vsel %vm382, %v375, %v379
  %v384 = vand.u32 2147483647, %v283
  %vm385 = vcmp.eq.f32.partialorder %v384, 8.507059e+37
  %v386 = vand.u32 %v283, 2147483648
  %v387 = vor.u32 1.1754944e-38, %v386
  %v388 = vsel %vm385, %v387, %v383
  %v389 = vmul.f32 1.0, %v388
  %v390 = vrcp.pop %v284
  %v391 = vmul.f32 %v284, %v390
  %v392 = vsub.f32 1.0, %v391
  %v393 = vmul.f32 %v390, %v392
  %v394 = vadd.f32 %v390, %v393
  %vm395 = vweird.f32 %v284
  %vm396 = vweird.f32 %v390
  %vm397 = vmor %vm395, %vm396
  %v398 = vsel %vm397, %v390, %v394
  %v399 = vand.u32 2147483647, %v284
  %vm400 = vcmp.eq.f32.partialorder %v399, 8.507059e+37
  %v401 = vand.u32 %v284, 2147483648
  %v402 = vor.u32 1.1754944e-38, %v401
  %v403 = vsel %vm400, %v402, %v398
  %v404 = vmul.f32 1.0, %v403
  %405 = vrot.lane.b32.xlu0 %v226, 64
  %v406 = vpop.permute.xlu0 %405
  %407 = vrot.lane.b32.xlu0 %v230, 64
  %v408 = vpop.permute.xlu0 %407
  %409 = vrot.lane.b32.xlu0 %v231, 64
  %v410 = vpop.permute.xlu0 %409
  %411 = vrot.lane.b32.xlu0 %v232, 64
  %v412 = vpop.permute.xlu0 %411
  %413 = vrot.lane.b32.xlu0 %v233, 64
  %v414 = vpop.permute.xlu0 %413
  %415 = vrot.lane.b32.xlu0 %v234, 64
  %v416 = vpop.permute.xlu0 %415
  %417 = vrot.lane.b32.xlu0 %v235, 64
  %v418 = vpop.permute.xlu0 %417
  %419 = vrot.lane.b32.xlu0 %v236, 64
  %v420 = vpop.permute.xlu0 %419
  %v429 = vmul.f32 %v299, %v406
  %v430 = vmul.f32 %v314, %v408
  %v431 = vmul.f32 %v329, %v410
  %v432 = vmul.f32 %v344, %v412
  %v433 = vmul.f32 %v359, %v414
  %v434 = vmul.f32 %v374, %v416
  %v435 = vmul.f32 %v389, %v418
  %v436 = vmul.f32 %v404, %v420
  %445 = vrot.lane.b32.xlu0 %v429, 64
  %v446 = vpop.permute.xlu0 %445
  %447 = vrot.lane.b32.xlu0 %v430, 64
  %v448 = vpop.permute.xlu0 %447
  %449 = vrot.lane.b32.xlu0 %v431, 64
  %v450 = vpop.permute.xlu0 %449
  %451 = vrot.lane.b32.xlu0 %v432, 64
  %v452 = vpop.permute.xlu0 %451
  %453 = vrot.lane.b32.xlu0 %v433, 64
  %v454 = vpop.permute.xlu0 %453
  %455 = vrot.lane.b32.xlu0 %v434, 64
  %v456 = vpop.permute.xlu0 %455
  %457 = vrot.lane.b32.xlu0 %v435, 64
  %v458 = vpop.permute.xlu0 %457
  %459 = vrot.lane.b32.xlu0 %v436, 64
  %v460 = vpop.permute.xlu0 %459
  %v469 = vadd.f32 %v189, %v446
  %v470 = vadd.f32 %v190, %v448
  %v471 = vadd.f32 %v191, %v450
  %v472 = vadd.f32 %v192, %v452
  %v473 = vadd.f32 %v193, %v454
  %v474 = vadd.f32 %v194, %v456
  %v475 = vadd.f32 %v195, %v458
  %v476 = vadd.f32 %v196, %v460
  %v477 = vtanh.pop %v469
  %v478 = vtanh.pop %v470
  %v479 = vtanh.pop %v471
  %v480 = vtanh.pop %v472
  %v481 = vtanh.pop %v473
  %v482 = vtanh.pop %v474
  %v483 = vtanh.pop %v475
  %v484 = vtanh.pop %v476
  %v485 = vsub.f32 1.0, %v299
  %v486 = vsub.f32 1.0, %v314
  %v487 = vsub.f32 1.0, %v329
  %v488 = vsub.f32 1.0, %v344
  %v489 = vsub.f32 1.0, %v359
  %v490 = vsub.f32 1.0, %v374
  %v491 = vsub.f32 1.0, %v389
  %v492 = vsub.f32 1.0, %v404
  %501 = vrot.lane.b32.xlu0 %v477, 96
  %v502 = vpop.permute.xlu0 %501
  %503 = vrot.lane.b32.xlu0 %v478, 96
  %v504 = vpop.permute.xlu0 %503
  %505 = vrot.lane.b32.xlu0 %v479, 96
  %v506 = vpop.permute.xlu0 %505
  %507 = vrot.lane.b32.xlu0 %v480, 96
  %v508 = vpop.permute.xlu0 %507
  %509 = vrot.lane.b32.xlu0 %v481, 96
  %v510 = vpop.permute.xlu0 %509
  %511 = vrot.lane.b32.xlu0 %v482, 96
  %v512 = vpop.permute.xlu0 %511
  %513 = vrot.lane.b32.xlu0 %v483, 96
  %v514 = vpop.permute.xlu0 %513
  %515 = vrot.lane.b32.xlu0 %v484, 96
  %v516 = vpop.permute.xlu0 %515
  %v525 = vmul.f32 %v485, %v502
  %v526 = vmul.f32 %v486, %v504
  %v527 = vmul.f32 %v487, %v506
  %v528 = vmul.f32 %v488, %v508
  %v529 = vmul.f32 %v489, %v510
  %v530 = vmul.f32 %v490, %v512
  %v531 = vmul.f32 %v491, %v514
  %v532 = vmul.f32 %v492, %v516
  %v533 = vmul.f32 %v299, 0.0
  %v534 = vmul.f32 %v314, 0.0
  %v535 = vmul.f32 %v329, 0.0
  %v536 = vmul.f32 %v344, 0.0
  %v537 = vmul.f32 %v359, 0.0
  %v538 = vmul.f32 %v374, 0.0
  %v539 = vmul.f32 %v389, 0.0
  %v540 = vmul.f32 %v404, 0.0
  %v541 = vadd.f32 %v525, %v533
  %v542 = vadd.f32 %v526, %v534
  %v543 = vadd.f32 %v527, %v535
  %v544 = vadd.f32 %v528, %v536
  %v545 = vadd.f32 %v529, %v537
  %v546 = vadd.f32 %v530, %v538
  %v547 = vadd.f32 %v531, %v539
  %v548 = vadd.f32 %v532, %v540
  %vm549 = vcmp.gt.s32.totalorder %v178, 0
  %v550 = vsel %vm549, 1, 0
  %551 = vset.pattern.permute.xlu0 0
  %552 = vperm.xlu0 %551, %v550
  %v553 = vpop.permute.xlu0 %552
  %vm554 = vcmp.eq.s32.totalorder %v553, 1
  %v563 = vrot.slane %v542, 7
  %vm564 = vcmask 1041409
  %v565 = vsel %vm564, %v563, %v541
  %v566 = vrot.slane %v543, 6
  %vm567 = vcmask 1042434
  %v568 = vsel %vm567, %v566, %v565
  %v569 = vrot.slane %v544, 5
  %vm570 = vcmask 1043459
  %v571 = vsel %vm570, %v569, %v568
  %v572 = vrot.slane %v545, 4
  %vm573 = vcmask 1044484
  %v574 = vsel %vm573, %v572, %v571
  %v575 = vrot.slane %v546, 3
  %vm576 = vcmask 1045509
  %v577 = vsel %vm576, %v575, %v574
  %v578 = vrot.slane %v547, 2
  %vm579 = vcmask 1046534
  %v580 = vsel %vm579, %v578, %v577
  %v581 = vrot.slane %v548, 1
  %vm582 = vcmask 1047559
  %v583 = vsel %vm582, %v581, %v580
  %584 = vrot.lane.b32.xlu0 %v583, 96
  %v585 = vpop.permute.xlu0 %584
  %v587 = vsel %vm554, %v585, 0.0
  %v589 = vrot.slane %v587, 1
  %v590 = vrot.slane %v587, 2
  %v591 = vrot.slane %v587, 3
  %v592 = vrot.slane %v587, 4
  %v593 = vrot.slane %v587, 5
  %v594 = vrot.slane %v587, 6
  %v595 = vrot.slane %v587, 7
  %vm603 = vcmask 253952
  %604 = vst.msk [vmem:[%s12] sm:$0x1] %vm603, %v587
  %605 = vst.msk [vmem:[%s12 + $0x8] sm:$0x1] %vm603, %v589
  %606 = vst.msk [vmem:[%s12 + $0x10] sm:$0x1] %vm603, %v590
  %607 = vst.msk [vmem:[%s12 + $0x18] sm:$0x1] %vm603, %v591
  %608 = vst.msk [vmem:[%s12 + $0x20] sm:$0x1] %vm603, %v592
  %609 = vst.msk [vmem:[%s12 + $0x28] sm:$0x1] %vm603, %v593
  %610 = vst.msk [vmem:[%s12 + $0x30] sm:$0x1] %vm603, %v594
  %611 = vst.msk [vmem:[%s12 + $0x38] sm:$0x1] %vm603, %v595
  %v612 = vld [vmem:[#allocation2 + $0x1] ss:$0 sm:$0xff]
  %v613 = vld [vmem:[#allocation2 + $0x11] ss:$0 sm:$0xff]
  %v614 = vld [vmem:[#allocation2 + $0x21] ss:$0 sm:$0xff]
  %v615 = vld [vmem:[#allocation2 + $0x31] ss:$0 sm:$0xff]
  %v616 = vld [vmem:[#allocation2 + $0x41] ss:$0 sm:$0xff]
  %v617 = vld [vmem:[#allocation2 + $0x51] ss:$0 sm:$0xff]
  %v618 = vld [vmem:[#allocation2 + $0x61] ss:$0 sm:$0xff]
  %v619 = vld [vmem:[#allocation2 + $0x71] ss:$0 sm:$0xff]
  %v620 = vpack.c.bf16 %v587, %v587
  %v622 = vsel %vm212, %v620, 0
  %624 = vmatpush.bf16.msra.mxu0 0
  %625 = vmatpush.bf16.msra.mxu0 0
  %626 = vmatpush.bf16.msra.mxu0 0
  %627 = vmatpush.bf16.msra.mxu0 0
  %628 = vmatpush.bf16.msra.mxu0 0
  %629 = vmatpush.bf16.msra.mxu0 0
  %630 = vmatpush.bf16.msra.mxu0 %v209
  %631 = vmatpush.bf16.msra.mxu0 %v208
  %632 = vmatmul.bf16.gmra.mxu0 %v622
  %v633 = vpop.f32.mrf.mxu0
  %v634 = vadd.f32 %v198, %v633
  %v635 = vpop.f32.mrf.mxu0
  %636 = vdwg.mxu0
  %v638 = vrot.slane %v634, 1
  %v639 = vrot.slane %v634, 2
  %v640 = vrot.slane %v634, 3
  %v641 = vrot.slane %v634, 4
  %v642 = vrot.slane %v634, 5
  %v643 = vrot.slane %v634, 6
  %v644 = vrot.slane %v634, 7
  %v653 = vadd.f32 %v612, %v634
  %v654 = vadd.f32 %v613, %v638
  %v655 = vadd.f32 %v614, %v639
  %v656 = vadd.f32 %v615, %v640
  %v657 = vadd.f32 %v616, %v641
  %v658 = vadd.f32 %v617, %v642
  %v659 = vadd.f32 %v618, %v643
  %v660 = vadd.f32 %v619, %v644
  %v661 = vxor.u32 %v653, 2147483648
  %v662 = vxor.u32 %v654, 2147483648
  %v663 = vxor.u32 %v655, 2147483648
  %v664 = vxor.u32 %v656, 2147483648
  %v665 = vxor.u32 %v657, 2147483648
  %v666 = vxor.u32 %v658, 2147483648
  %v667 = vxor.u32 %v659, 2147483648
  %v668 = vxor.u32 %v660, 2147483648
  %v669 = vmul.f32 %v661, 1.442695
  %v670 = vpow.pop %v669
  %v671 = vmul.f32 %v662, 1.442695
  %v672 = vpow.pop %v671
  %v673 = vmul.f32 %v663, 1.442695
  %v674 = vpow.pop %v673
  %v675 = vmul.f32 %v664, 1.442695
  %v676 = vpow.pop %v675
  %v677 = vmul.f32 %v665, 1.442695
  %v678 = vpow.pop %v677
  %v679 = vmul.f32 %v666, 1.442695
  %v680 = vpow.pop %v679
  %v681 = vmul.f32 %v667, 1.442695
  %v682 = vpow.pop %v681
  %v683 = vmul.f32 %v668, 1.442695
  %v684 = vpow.pop %v683
  %v685 = vadd.f32 %v670, 1.0
  %v686 = vadd.f32 %v672, 1.0
  %v687 = vadd.f32 %v674, 1.0
  %v688 = vadd.f32 %v676, 1.0
  %v689 = vadd.f32 %v678, 1.0
  %v690 = vadd.f32 %v680, 1.0
  %v691 = vadd.f32 %v682, 1.0
  %v692 = vadd.f32 %v684, 1.0
  %v693 = vrcp.pop %v685
  %v694 = vmul.f32 %v685, %v693
  %v695 = vsub.f32 1.0, %v694
  %v696 = vmul.f32 %v693, %v695
  %v697 = vadd.f32 %v693, %v696
  %vm698 = vweird.f32 %v685
  %vm699 = vweird.f32 %v693
  %vm700 = vmor %vm698, %vm699
  %v701 = vsel %vm700, %v693, %v697
  %v702 = vand.u32 2147483647, %v685
  %vm703 = vcmp.eq.f32.partialorder %v702, 8.507059e+37
  %v704 = vand.u32 %v685, 2147483648
  %v705 = vor.u32 1.1754944e-38, %v704
  %v706 = vsel %vm703, %v705, %v701
  %v707 = vmul.f32 1.0, %v706
  %v708 = vrcp.pop %v686
  %v709 = vmul.f32 %v686, %v708
  %v710 = vsub.f32 1.0, %v709
  %v711 = vmul.f32 %v708, %v710
  %v712 = vadd.f32 %v708, %v711
  %vm713 = vweird.f32 %v686
  %vm714 = vweird.f32 %v708
  %vm715 = vmor %vm713, %vm714
  %v716 = vsel %vm715, %v708, %v712
  %v717 = vand.u32 2147483647, %v686
  %vm718 = vcmp.eq.f32.partialorder %v717, 8.507059e+37
  %v719 = vand.u32 %v686, 2147483648
  %v720 = vor.u32 1.1754944e-38, %v719
  %v721 = vsel %vm718, %v720, %v716
  %v722 = vmul.f32 1.0, %v721
  %v723 = vrcp.pop %v687
  %v724 = vmul.f32 %v687, %v723
  %v725 = vsub.f32 1.0, %v724
  %v726 = vmul.f32 %v723, %v725
  %v727 = vadd.f32 %v723, %v726
  %vm728 = vweird.f32 %v687
  %vm729 = vweird.f32 %v723
  %vm730 = vmor %vm728, %vm729
  %v731 = vsel %vm730, %v723, %v727
  %v732 = vand.u32 2147483647, %v687
  %vm733 = vcmp.eq.f32.partialorder %v732, 8.507059e+37
  %v734 = vand.u32 %v687, 2147483648
  %v735 = vor.u32 1.1754944e-38, %v734
  %v736 = vsel %vm733, %v735, %v731
  %v737 = vmul.f32 1.0, %v736
  %v738 = vrcp.pop %v688
  %v739 = vmul.f32 %v688, %v738
  %v740 = vsub.f32 1.0, %v739
  %v741 = vmul.f32 %v738, %v740
  %v742 = vadd.f32 %v738, %v741
  %vm743 = vweird.f32 %v688
  %vm744 = vweird.f32 %v738
  %vm745 = vmor %vm743, %vm744
  %v746 = vsel %vm745, %v738, %v742
  %v747 = vand.u32 2147483647, %v688
  %vm748 = vcmp.eq.f32.partialorder %v747, 8.507059e+37
  %v749 = vand.u32 %v688, 2147483648
  %v750 = vor.u32 1.1754944e-38, %v749
  %v751 = vsel %vm748, %v750, %v746
  %v752 = vmul.f32 1.0, %v751
  %v753 = vrcp.pop %v689
  %v754 = vmul.f32 %v689, %v753
  %v755 = vsub.f32 1.0, %v754
  %v756 = vmul.f32 %v753, %v755
  %v757 = vadd.f32 %v753, %v756
  %vm758 = vweird.f32 %v689
  %vm759 = vweird.f32 %v753
  %vm760 = vmor %vm758, %vm759
  %v761 = vsel %vm760, %v753, %v757
  %v762 = vand.u32 2147483647, %v689
  %vm763 = vcmp.eq.f32.partialorder %v762, 8.507059e+37
  %v764 = vand.u32 %v689, 2147483648
  %v765 = vor.u32 1.1754944e-38, %v764
  %v766 = vsel %vm763, %v765, %v761
  %v767 = vmul.f32 1.0, %v766
  %v768 = vrcp.pop %v690
  %v769 = vmul.f32 %v690, %v768
  %v770 = vsub.f32 1.0, %v769
  %v771 = vmul.f32 %v768, %v770
  %v772 = vadd.f32 %v768, %v771
  %vm773 = vweird.f32 %v690
  %vm774 = vweird.f32 %v768
  %vm775 = vmor %vm773, %vm774
  %v776 = vsel %vm775, %v768, %v772
  %v777 = vand.u32 2147483647, %v690
  %vm778 = vcmp.eq.f32.partialorder %v777, 8.507059e+37
  %v779 = vand.u32 %v690, 2147483648
  %v780 = vor.u32 1.1754944e-38, %v779
  %v781 = vsel %vm778, %v780, %v776
  %v782 = vmul.f32 1.0, %v781
  %v783 = vrcp.pop %v691
  %v784 = vmul.f32 %v691, %v783
  %v785 = vsub.f32 1.0, %v784
  %v786 = vmul.f32 %v783, %v785
  %v787 = vadd.f32 %v783, %v786
  %vm788 = vweird.f32 %v691
  %vm789 = vweird.f32 %v783
  %vm790 = vmor %vm788, %vm789
  %v791 = vsel %vm790, %v783, %v787
  %v792 = vand.u32 2147483647, %v691
  %vm793 = vcmp.eq.f32.partialorder %v792, 8.507059e+37
  %v794 = vand.u32 %v691, 2147483648
  %v795 = vor.u32 1.1754944e-38, %v794
  %v796 = vsel %vm793, %v795, %v791
  %v797 = vmul.f32 1.0, %v796
  %v798 = vrcp.pop %v692
  %v799 = vmul.f32 %v692, %v798
  %v800 = vsub.f32 1.0, %v799
  %v801 = vmul.f32 %v798, %v800
  %v802 = vadd.f32 %v798, %v801
  %vm803 = vweird.f32 %v692
  %vm804 = vweird.f32 %v798
  %vm805 = vmor %vm803, %vm804
  %v806 = vsel %vm805, %v798, %v802
  %v807 = vand.u32 2147483647, %v692
  %vm808 = vcmp.eq.f32.partialorder %v807, 8.507059e+37
  %v809 = vand.u32 %v692, 2147483648
  %v810 = vor.u32 1.1754944e-38, %v809
  %v811 = vsel %vm808, %v810, %v806
  %v812 = vmul.f32 1.0, %v811
  %813 = vrot.lane.b32.xlu0 %v634, 64
  %v814 = vpop.permute.xlu0 %813
  %815 = vrot.lane.b32.xlu0 %v638, 64
  %v816 = vpop.permute.xlu0 %815
  %817 = vrot.lane.b32.xlu0 %v639, 64
  %v818 = vpop.permute.xlu0 %817
  %819 = vrot.lane.b32.xlu0 %v640, 64
  %v820 = vpop.permute.xlu0 %819
  %821 = vrot.lane.b32.xlu0 %v641, 64
  %v822 = vpop.permute.xlu0 %821
  %823 = vrot.lane.b32.xlu0 %v642, 64
  %v824 = vpop.permute.xlu0 %823
  %825 = vrot.lane.b32.xlu0 %v643, 64
  %v826 = vpop.permute.xlu0 %825
  %827 = vrot.lane.b32.xlu0 %v644, 64
  %v828 = vpop.permute.xlu0 %827
  %v837 = vmul.f32 %v707, %v814
  %v838 = vmul.f32 %v722, %v816
  %v839 = vmul.f32 %v737, %v818
  %v840 = vmul.f32 %v752, %v820
  %v841 = vmul.f32 %v767, %v822
  %v842 = vmul.f32 %v782, %v824
  %v843 = vmul.f32 %v797, %v826
  %v844 = vmul.f32 %v812, %v828
  %853 = vrot.lane.b32.xlu0 %v837, 64
  %v854 = vpop.permute.xlu0 %853
  %855 = vrot.lane.b32.xlu0 %v838, 64
  %v856 = vpop.permute.xlu0 %855
  %857 = vrot.lane.b32.xlu0 %v839, 64
  %v858 = vpop.permute.xlu0 %857
  %859 = vrot.lane.b32.xlu0 %v840, 64
  %v860 = vpop.permute.xlu0 %859
  %861 = vrot.lane.b32.xlu0 %v841, 64
  %v862 = vpop.permute.xlu0 %861
  %863 = vrot.lane.b32.xlu0 %v842, 64
  %v864 = vpop.permute.xlu0 %863
  %865 = vrot.lane.b32.xlu0 %v843, 64
  %v866 = vpop.permute.xlu0 %865
  %867 = vrot.lane.b32.xlu0 %v844, 64
  %v868 = vpop.permute.xlu0 %867
  %v877 = vadd.f32 %v612, %v854
  %v878 = vadd.f32 %v613, %v856
  %v879 = vadd.f32 %v614, %v858
  %v880 = vadd.f32 %v615, %v860
  %v881 = vadd.f32 %v616, %v862
  %v882 = vadd.f32 %v617, %v864
  %v883 = vadd.f32 %v618, %v866
  %v884 = vadd.f32 %v619, %v868
  %v885 = vtanh.pop %v877
  %v886 = vtanh.pop %v878
  %v887 = vtanh.pop %v879
  %v888 = vtanh.pop %v880
  %v889 = vtanh.pop %v881
  %v890 = vtanh.pop %v882
  %v891 = vtanh.pop %v883
  %v892 = vtanh.pop %v884
  %v893 = vsub.f32 1.0, %v707
  %v894 = vsub.f32 1.0, %v722
  %v895 = vsub.f32 1.0, %v737
  %v896 = vsub.f32 1.0, %v752
  %v897 = vsub.f32 1.0, %v767
  %v898 = vsub.f32 1.0, %v782
  %v899 = vsub.f32 1.0, %v797
  %v900 = vsub.f32 1.0, %v812
  %909 = vrot.lane.b32.xlu0 %v885, 96
  %v910 = vpop.permute.xlu0 %909
  %911 = vrot.lane.b32.xlu0 %v886, 96
  %v912 = vpop.permute.xlu0 %911
  %913 = vrot.lane.b32.xlu0 %v887, 96
  %v914 = vpop.permute.xlu0 %913
  %915 = vrot.lane.b32.xlu0 %v888, 96
  %v916 = vpop.permute.xlu0 %915
  %917 = vrot.lane.b32.xlu0 %v889, 96
  %v918 = vpop.permute.xlu0 %917
  %919 = vrot.lane.b32.xlu0 %v890, 96
  %v920 = vpop.permute.xlu0 %919
  %921 = vrot.lane.b32.xlu0 %v891, 96
  %v922 = vpop.permute.xlu0 %921
  %923 = vrot.lane.b32.xlu0 %v892, 96
  %v924 = vpop.permute.xlu0 %923
  %v933 = vmul.f32 %v893, %v910
  %v934 = vmul.f32 %v894, %v912
  %v935 = vmul.f32 %v895, %v914
  %v936 = vmul.f32 %v896, %v916
  %v937 = vmul.f32 %v897, %v918
  %v938 = vmul.f32 %v898, %v920
  %v939 = vmul.f32 %v899, %v922
  %v940 = vmul.f32 %v900, %v924
  %941 = vrot.lane.b32.xlu0 %v587, 32
  %v942 = vpop.permute.xlu0 %941
  %943 = vrot.lane.b32.xlu0 %v589, 32
  %v944 = vpop.permute.xlu0 %943
  %945 = vrot.lane.b32.xlu0 %v590, 32
  %v946 = vpop.permute.xlu0 %945
  %947 = vrot.lane.b32.xlu0 %v591, 32
  %v948 = vpop.permute.xlu0 %947
  %949 = vrot.lane.b32.xlu0 %v592, 32
  %v950 = vpop.permute.xlu0 %949
  %951 = vrot.lane.b32.xlu0 %v593, 32
  %v952 = vpop.permute.xlu0 %951
  %953 = vrot.lane.b32.xlu0 %v594, 32
  %v954 = vpop.permute.xlu0 %953
  %955 = vrot.lane.b32.xlu0 %v595, 32
  %v956 = vpop.permute.xlu0 %955
  %v965 = vmul.f32 %v707, %v942
  %v966 = vmul.f32 %v722, %v944
  %v967 = vmul.f32 %v737, %v946
  %v968 = vmul.f32 %v752, %v948
  %v969 = vmul.f32 %v767, %v950
  %v970 = vmul.f32 %v782, %v952
  %v971 = vmul.f32 %v797, %v954
  %v972 = vmul.f32 %v812, %v956
  %v973 = vadd.f32 %v933, %v965
  %v974 = vadd.f32 %v934, %v966
  %v975 = vadd.f32 %v935, %v967
  %v976 = vadd.f32 %v936, %v968
  %v977 = vadd.f32 %v937, %v969
  %v978 = vadd.f32 %v938, %v970
  %v979 = vadd.f32 %v939, %v971
  %v980 = vadd.f32 %v940, %v972
  %vm981 = vcmp.gt.s32.totalorder %v178, 1
  %v982 = vsel %vm981, 1, 0
  %983 = vset.pattern.permute.xlu0 0
  %984 = vperm.xlu0 %983, %v982
  %v985 = vpop.permute.xlu0 %984
  %vm986 = vcmp.eq.s32.totalorder %v985, 1
  %v995 = vrot.slane %v974, 7
  %v996 = vsel %vm564, %v995, %v973
  %v997 = vrot.slane %v975, 6
  %v998 = vsel %vm567, %v997, %v996
  %v999 = vrot.slane %v976, 5
  %v1000 = vsel %vm570, %v999, %v998
  %v1001 = vrot.slane %v977, 4
  %v1002 = vsel %vm573, %v1001, %v1000
  %v1003 = vrot.slane %v978, 3
  %v1004 = vsel %vm576, %v1003, %v1002
  %v1005 = vrot.slane %v979, 2
  %v1006 = vsel %vm579, %v1005, %v1004
  %v1007 = vrot.slane %v980, 1
  %v1008 = vsel %vm582, %v1007, %v1006
  %1009 = vrot.lane.b32.xlu0 %v1008, 96
  %v1010 = vpop.permute.xlu0 %1009
  %v1012 = vsel %vm986, %v1010, 0.0
  %v1014 = vrot.slane %v1012, 1
  %v1015 = vrot.slane %v1012, 2
  %v1016 = vrot.slane %v1012, 3
  %v1017 = vrot.slane %v1012, 4
  %v1018 = vrot.slane %v1012, 5
  %v1019 = vrot.slane %v1012, 6
  %v1020 = vrot.slane %v1012, 7
  %1028 = vst.msk [vmem:[%s12 + $0x1] sm:$0x1] %vm603, %v1012
  %1029 = vst.msk [vmem:[%s12 + $0x9] sm:$0x1] %vm603, %v1014
  %1030 = vst.msk [vmem:[%s12 + $0x11] sm:$0x1] %vm603, %v1015
  %1031 = vst.msk [vmem:[%s12 + $0x19] sm:$0x1] %vm603, %v1016
  %1032 = vst.msk [vmem:[%s12 + $0x21] sm:$0x1] %vm603, %v1017
  %1033 = vst.msk [vmem:[%s12 + $0x29] sm:$0x1] %vm603, %v1018
  %1034 = vst.msk [vmem:[%s12 + $0x31] sm:$0x1] %vm603, %v1019
  %1035 = vst.msk [vmem:[%s12 + $0x39] sm:$0x1] %vm603, %v1020
  %v1036 = vsel %vm986, %v1010, %v587
  %v1037 = vld [vmem:[#allocation2 + $0x2] ss:$0 sm:$0xff]
  %v1038 = vld [vmem:[#allocation2 + $0x12] ss:$0 sm:$0xff]
  %v1039 = vld [vmem:[#allocation2 + $0x22] ss:$0 sm:$0xff]
  %v1040 = vld [vmem:[#allocation2 + $0x32] ss:$0 sm:$0xff]
  %v1041 = vld [vmem:[#allocation2 + $0x42] ss:$0 sm:$0xff]
  %v1042 = vld [vmem:[#allocation2 + $0x52] ss:$0 sm:$0xff]
  %v1043 = vld [vmem:[#allocation2 + $0x62] ss:$0 sm:$0xff]
  %v1044 = vld [vmem:[#allocation2 + $0x72] ss:$0 sm:$0xff]
  %v1045 = vpack.c.bf16 %v1036, %v1036
  %v1047 = vsel %vm212, %v1045, 0
  %1049 = vmatpush.bf16.msra.mxu0 0
  %1050 = vmatpush.bf16.msra.mxu0 0
  %1051 = vmatpush.bf16.msra.mxu0 0
  %1052 = vmatpush.bf16.msra.mxu0 0
  %1053 = vmatpush.bf16.msra.mxu0 0
  %1054 = vmatpush.bf16.msra.mxu0 0
  %1055 = vmatpush.bf16.msra.mxu0 %v209
  %1056 = vmatpush.bf16.msra.mxu0 %v208
  %1057 = vmatmul.bf16.gmra.mxu0 %v1047
  %v1058 = vpop.f32.mrf.mxu0
  %v1059 = vadd.f32 %v198, %v1058
  %v1060 = vpop.f32.mrf.mxu0
  %1061 = vdwg.mxu0
  %v1063 = vrot.slane %v1059, 1
  %v1064 = vrot.slane %v1059, 2
  %v1065 = vrot.slane %v1059, 3
  %v1066 = vrot.slane %v1059, 4
  %v1067 = vrot.slane %v1059, 5
  %v1068 = vrot.slane %v1059, 6
  %v1069 = vrot.slane %v1059, 7
  %v1078 = vadd.f32 %v1037, %v1059
  %v1079 = vadd.f32 %v1038, %v1063
  %v1080 = vadd.f32 %v1039, %v1064
  %v1081 = vadd.f32 %v1040, %v1065
  %v1082 = vadd.f32 %v1041, %v1066
  %v1083 = vadd.f32 %v1042, %v1067
  %v1084 = vadd.f32 %v1043, %v1068
  %v1085 = vadd.f32 %v1044, %v1069
  %v1086 = vxor.u32 %v1078, 2147483648
  %v1087 = vxor.u32 %v1079, 2147483648
  %v1088 = vxor.u32 %v1080, 2147483648
  %v1089 = vxor.u32 %v1081, 2147483648
  %v1090 = vxor.u32 %v1082, 2147483648
  %v1091 = vxor.u32 %v1083, 2147483648
  %v1092 = vxor.u32 %v1084, 2147483648
  %v1093 = vxor.u32 %v1085, 2147483648
  %v1094 = vmul.f32 %v1086, 1.442695
  %v1095 = vpow.pop %v1094
  %v1096 = vmul.f32 %v1087, 1.442695
  %v1097 = vpow.pop %v1096
  %v1098 = vmul.f32 %v1088, 1.442695
  %v1099 = vpow.pop %v1098
  %v1100 = vmul.f32 %v1089, 1.442695
  %v1101 = vpow.pop %v1100
  %v1102 = vmul.f32 %v1090, 1.442695
  %v1103 = vpow.pop %v1102
  %v1104 = vmul.f32 %v1091, 1.442695
  %v1105 = vpow.pop %v1104
  %v1106 = vmul.f32 %v1092, 1.442695
  %v1107 = vpow.pop %v1106
  %v1108 = vmul.f32 %v1093, 1.442695
  %v1109 = vpow.pop %v1108
  %v1110 = vadd.f32 %v1095, 1.0
  %v1111 = vadd.f32 %v1097, 1.0
  %v1112 = vadd.f32 %v1099, 1.0
  %v1113 = vadd.f32 %v1101, 1.0
  %v1114 = vadd.f32 %v1103, 1.0
  %v1115 = vadd.f32 %v1105, 1.0
  %v1116 = vadd.f32 %v1107, 1.0
  %v1117 = vadd.f32 %v1109, 1.0
  %v1118 = vrcp.pop %v1110
  %v1119 = vmul.f32 %v1110, %v1118
  %v1120 = vsub.f32 1.0, %v1119
  %v1121 = vmul.f32 %v1118, %v1120
  %v1122 = vadd.f32 %v1118, %v1121
  %vm1123 = vweird.f32 %v1110
  %vm1124 = vweird.f32 %v1118
  %vm1125 = vmor %vm1123, %vm1124
  %v1126 = vsel %vm1125, %v1118, %v1122
  %v1127 = vand.u32 2147483647, %v1110
  %vm1128 = vcmp.eq.f32.partialorder %v1127, 8.507059e+37
  %v1129 = vand.u32 %v1110, 2147483648
  %v1130 = vor.u32 1.1754944e-38, %v1129
  %v1131 = vsel %vm1128, %v1130, %v1126
  %v1132 = vmul.f32 1.0, %v1131
  %v1133 = vrcp.pop %v1111
  %v1134 = vmul.f32 %v1111, %v1133
  %v1135 = vsub.f32 1.0, %v1134
  %v1136 = vmul.f32 %v1133, %v1135
  %v1137 = vadd.f32 %v1133, %v1136
  %vm1138 = vweird.f32 %v1111
  %vm1139 = vweird.f32 %v1133
  %vm1140 = vmor %vm1138, %vm1139
  %v1141 = vsel %vm1140, %v1133, %v1137
  %v1142 = vand.u32 2147483647, %v1111
  %vm1143 = vcmp.eq.f32.partialorder %v1142, 8.507059e+37
  %v1144 = vand.u32 %v1111, 2147483648
  %v1145 = vor.u32 1.1754944e-38, %v1144
  %v1146 = vsel %vm1143, %v1145, %v1141
  %v1147 = vmul.f32 1.0, %v1146
  %v1148 = vrcp.pop %v1112
  %v1149 = vmul.f32 %v1112, %v1148
  %v1150 = vsub.f32 1.0, %v1149
  %v1151 = vmul.f32 %v1148, %v1150
  %v1152 = vadd.f32 %v1148, %v1151
  %vm1153 = vweird.f32 %v1112
  %vm1154 = vweird.f32 %v1148
  %vm1155 = vmor %vm1153, %vm1154
  %v1156 = vsel %vm1155, %v1148, %v1152
  %v1157 = vand.u32 2147483647, %v1112
  %vm1158 = vcmp.eq.f32.partialorder %v1157, 8.507059e+37
  %v1159 = vand.u32 %v1112, 2147483648
  %v1160 = vor.u32 1.1754944e-38, %v1159
  %v1161 = vsel %vm1158, %v1160, %v1156
  %v1162 = vmul.f32 1.0, %v1161
  %v1163 = vrcp.pop %v1113
  %v1164 = vmul.f32 %v1113, %v1163
  %v1165 = vsub.f32 1.0, %v1164
  %v1166 = vmul.f32 %v1163, %v1165
  %v1167 = vadd.f32 %v1163, %v1166
  %vm1168 = vweird.f32 %v1113
  %vm1169 = vweird.f32 %v1163
  %vm1170 = vmor %vm1168, %vm1169
  %v1171 = vsel %vm1170, %v1163, %v1167
  %v1172 = vand.u32 2147483647, %v1113
  %vm1173 = vcmp.eq.f32.partialorder %v1172, 8.507059e+37
  %v1174 = vand.u32 %v1113, 2147483648
  %v1175 = vor.u32 1.1754944e-38, %v1174
  %v1176 = vsel %vm1173, %v1175, %v1171
  %v1177 = vmul.f32 1.0, %v1176
  %v1178 = vrcp.pop %v1114
  %v1179 = vmul.f32 %v1114, %v1178
  %v1180 = vsub.f32 1.0, %v1179
  %v1181 = vmul.f32 %v1178, %v1180
  %v1182 = vadd.f32 %v1178, %v1181
  %vm1183 = vweird.f32 %v1114
  %vm1184 = vweird.f32 %v1178
  %vm1185 = vmor %vm1183, %vm1184
  %v1186 = vsel %vm1185, %v1178, %v1182
  %v1187 = vand.u32 2147483647, %v1114
  %vm1188 = vcmp.eq.f32.partialorder %v1187, 8.507059e+37
  %v1189 = vand.u32 %v1114, 2147483648
  %v1190 = vor.u32 1.1754944e-38, %v1189
  %v1191 = vsel %vm1188, %v1190, %v1186
  %v1192 = vmul.f32 1.0, %v1191
  %v1193 = vrcp.pop %v1115
  %v1194 = vmul.f32 %v1115, %v1193
  %v1195 = vsub.f32 1.0, %v1194
  %v1196 = vmul.f32 %v1193, %v1195
  %v1197 = vadd.f32 %v1193, %v1196
  %vm1198 = vweird.f32 %v1115
  %vm1199 = vweird.f32 %v1193
  %vm1200 = vmor %vm1198, %vm1199
  %v1201 = vsel %vm1200, %v1193, %v1197
  %v1202 = vand.u32 2147483647, %v1115
  %vm1203 = vcmp.eq.f32.partialorder %v1202, 8.507059e+37
  %v1204 = vand.u32 %v1115, 2147483648
  %v1205 = vor.u32 1.1754944e-38, %v1204
  %v1206 = vsel %vm1203, %v1205, %v1201
  %v1207 = vmul.f32 1.0, %v1206
  %v1208 = vrcp.pop %v1116
  %v1209 = vmul.f32 %v1116, %v1208
  %v1210 = vsub.f32 1.0, %v1209
  %v1211 = vmul.f32 %v1208, %v1210
  %v1212 = vadd.f32 %v1208, %v1211
  %vm1213 = vweird.f32 %v1116
  %vm1214 = vweird.f32 %v1208
  %vm1215 = vmor %vm1213, %vm1214
  %v1216 = vsel %vm1215, %v1208, %v1212
  %v1217 = vand.u32 2147483647, %v1116
  %vm1218 = vcmp.eq.f32.partialorder %v1217, 8.507059e+37
  %v1219 = vand.u32 %v1116, 2147483648
  %v1220 = vor.u32 1.1754944e-38, %v1219
  %v1221 = vsel %vm1218, %v1220, %v1216
  %v1222 = vmul.f32 1.0, %v1221
  %v1223 = vrcp.pop %v1117
  %v1224 = vmul.f32 %v1117, %v1223
  %v1225 = vsub.f32 1.0, %v1224
  %v1226 = vmul.f32 %v1223, %v1225
  %v1227 = vadd.f32 %v1223, %v1226
  %vm1228 = vweird.f32 %v1117
  %vm1229 = vweird.f32 %v1223
  %vm1230 = vmor %vm1228, %vm1229
  %v1231 = vsel %vm1230, %v1223, %v1227
  %v1232 = vand.u32 2147483647, %v1117
  %vm1233 = vcmp.eq.f32.partialorder %v1232, 8.507059e+37
  %v1234 = vand.u32 %v1117, 2147483648
  %v1235 = vor.u32 1.1754944e-38, %v1234
  %v1236 = vsel %vm1233, %v1235, %v1231
  %v1237 = vmul.f32 1.0, %v1236
  %1238 = vrot.lane.b32.xlu0 %v1059, 64
  %v1239 = vpop.permute.xlu0 %1238
  %1240 = vrot.lane.b32.xlu0 %v1063, 64
  %v1241 = vpop.permute.xlu0 %1240
  %1242 = vrot.lane.b32.xlu0 %v1064, 64
  %v1243 = vpop.permute.xlu0 %1242
  %1244 = vrot.lane.b32.xlu0 %v1065, 64
  %v1245 = vpop.permute.xlu0 %1244
  %1246 = vrot.lane.b32.xlu0 %v1066, 64
  %v1247 = vpop.permute.xlu0 %1246
  %1248 = vrot.lane.b32.xlu0 %v1067, 64
  %v1249 = vpop.permute.xlu0 %1248
  %1250 = vrot.lane.b32.xlu0 %v1068, 64
  %v1251 = vpop.permute.xlu0 %1250
  %1252 = vrot.lane.b32.xlu0 %v1069, 64
  %v1253 = vpop.permute.xlu0 %1252
  %v1262 = vmul.f32 %v1132, %v1239
  %v1263 = vmul.f32 %v1147, %v1241
  %v1264 = vmul.f32 %v1162, %v1243
  %v1265 = vmul.f32 %v1177, %v1245
  %v1266 = vmul.f32 %v1192, %v1247
  %v1267 = vmul.f32 %v1207, %v1249
  %v1268 = vmul.f32 %v1222, %v1251
  %v1269 = vmul.f32 %v1237, %v1253
  %1278 = vrot.lane.b32.xlu0 %v1262, 64
  %v1279 = vpop.permute.xlu0 %1278
  %1280 = vrot.lane.b32.xlu0 %v1263, 64
  %v1281 = vpop.permute.xlu0 %1280
  %1282 = vrot.lane.b32.xlu0 %v1264, 64
  %v1283 = vpop.permute.xlu0 %1282
  %1284 = vrot.lane.b32.xlu0 %v1265, 64
  %v1285 = vpop.permute.xlu0 %1284
  %1286 = vrot.lane.b32.xlu0 %v1266, 64
  %v1287 = vpop.permute.xlu0 %1286
  %1288 = vrot.lane.b32.xlu0 %v1267, 64
  %v1289 = vpop.permute.xlu0 %1288
  %1290 = vrot.lane.b32.xlu0 %v1268, 64
  %v1291 = vpop.permute.xlu0 %1290
  %1292 = vrot.lane.b32.xlu0 %v1269, 64
  %v1293 = vpop.permute.xlu0 %1292
  %v1302 = vadd.f32 %v1037, %v1279
  %v1303 = vadd.f32 %v1038, %v1281
  %v1304 = vadd.f32 %v1039, %v1283
  %v1305 = vadd.f32 %v1040, %v1285
  %v1306 = vadd.f32 %v1041, %v1287
  %v1307 = vadd.f32 %v1042, %v1289
  %v1308 = vadd.f32 %v1043, %v1291
  %v1309 = vadd.f32 %v1044, %v1293
  %v1310 = vtanh.pop %v1302
  %v1311 = vtanh.pop %v1303
  %v1312 = vtanh.pop %v1304
  %v1313 = vtanh.pop %v1305
  %v1314 = vtanh.pop %v1306
  %v1315 = vtanh.pop %v1307
  %v1316 = vtanh.pop %v1308
  %v1317 = vtanh.pop %v1309
  %v1318 = vsub.f32 1.0, %v1132
  %v1319 = vsub.f32 1.0, %v1147
  %v1320 = vsub.f32 1.0, %v1162
  %v1321 = vsub.f32 1.0, %v1177
  %v1322 = vsub.f32 1.0, %v1192
  %v1323 = vsub.f32 1.0, %v1207
  %v1324 = vsub.f32 1.0, %v1222
  %v1325 = vsub.f32 1.0, %v1237
  %1334 = vrot.lane.b32.xlu0 %v1310, 96
  %v1335 = vpop.permute.xlu0 %1334
  %1336 = vrot.lane.b32.xlu0 %v1311, 96
  %v1337 = vpop.permute.xlu0 %1336
  %1338 = vrot.lane.b32.xlu0 %v1312, 96
  %v1339 = vpop.permute.xlu0 %1338
  %1340 = vrot.lane.b32.xlu0 %v1313, 96
  %v1341 = vpop.permute.xlu0 %1340
  %1342 = vrot.lane.b32.xlu0 %v1314, 96
  %v1343 = vpop.permute.xlu0 %1342
  %1344 = vrot.lane.b32.xlu0 %v1315, 96
  %v1345 = vpop.permute.xlu0 %1344
  %1346 = vrot.lane.b32.xlu0 %v1316, 96
  %v1347 = vpop.permute.xlu0 %1346
  %1348 = vrot.lane.b32.xlu0 %v1317, 96
  %v1349 = vpop.permute.xlu0 %1348
  %v1358 = vmul.f32 %v1318, %v1335
  %v1359 = vmul.f32 %v1319, %v1337
  %v1360 = vmul.f32 %v1320, %v1339
  %v1361 = vmul.f32 %v1321, %v1341
  %v1362 = vmul.f32 %v1322, %v1343
  %v1363 = vmul.f32 %v1323, %v1345
  %v1364 = vmul.f32 %v1324, %v1347
  %v1365 = vmul.f32 %v1325, %v1349
  %v1367 = vrot.slane %v1036, 1
  %v1368 = vrot.slane %v1036, 2
  %v1369 = vrot.slane %v1036, 3
  %v1370 = vrot.slane %v1036, 4
  %v1371 = vrot.slane %v1036, 5
  %v1372 = vrot.slane %v1036, 6
  %v1373 = vrot.slane %v1036, 7
  %1374 = vrot.lane.b32.xlu0 %v1036, 32
  %v1375 = vpop.permute.xlu0 %1374
  %1376 = vrot.lane.b32.xlu0 %v1367, 32
  %v1377 = vpop.permute.xlu0 %1376
  %1378 = vrot.lane.b32.xlu0 %v1368, 32
  %v1379 = vpop.permute.xlu0 %1378
  %1380 = vrot.lane.b32.xlu0 %v1369, 32
  %v1381 = vpop.permute.xlu0 %1380
  %1382 = vrot.lane.b32.xlu0 %v1370, 32
  %v1383 = vpop.permute.xlu0 %1382
  %1384 = vrot.lane.b32.xlu0 %v1371, 32
  %v1385 = vpop.permute.xlu0 %1384
  %1386 = vrot.lane.b32.xlu0 %v1372, 32
  %v1387 = vpop.permute.xlu0 %1386
  %1388 = vrot.lane.b32.xlu0 %v1373, 32
  %v1389 = vpop.permute.xlu0 %1388
  %v1398 = vmul.f32 %v1132, %v1375
  %v1399 = vmul.f32 %v1147, %v1377
  %v1400 = vmul.f32 %v1162, %v1379
  %v1401 = vmul.f32 %v1177, %v1381
  %v1402 = vmul.f32 %v1192, %v1383
  %v1403 = vmul.f32 %v1207, %v1385
  %v1404 = vmul.f32 %v1222, %v1387
  %v1405 = vmul.f32 %v1237, %v1389
  %v1406 = vadd.f32 %v1358, %v1398
  %v1407 = vadd.f32 %v1359, %v1399
  %v1408 = vadd.f32 %v1360, %v1400
  %v1409 = vadd.f32 %v1361, %v1401
  %v1410 = vadd.f32 %v1362, %v1402
  %v1411 = vadd.f32 %v1363, %v1403
  %v1412 = vadd.f32 %v1364, %v1404
  %v1413 = vadd.f32 %v1365, %v1405
  %vm1414 = vcmp.gt.s32.totalorder %v178, 2
  %v1415 = vsel %vm1414, 1, 0
  %1416 = vset.pattern.permute.xlu0 0
  %1417 = vperm.xlu0 %1416, %v1415
  %v1418 = vpop.permute.xlu0 %1417
  %vm1419 = vcmp.eq.s32.totalorder %v1418, 1
  %v1428 = vrot.slane %v1407, 7
  %v1429 = vsel %vm564, %v1428, %v1406
  %v1430 = vrot.slane %v1408, 6
  %v1431 = vsel %vm567, %v1430, %v1429
  %v1432 = vrot.slane %v1409, 5
  %v1433 = vsel %vm570, %v1432, %v1431
  %v1434 = vrot.slane %v1410, 4
  %v1435 = vsel %vm573, %v1434, %v1433
  %v1436 = vrot.slane %v1411, 3
  %v1437 = vsel %vm576, %v1436, %v1435
  %v1438 = vrot.slane %v1412, 2
  %v1439 = vsel %vm579, %v1438, %v1437
  %v1440 = vrot.slane %v1413, 1
  %v1441 = vsel %vm582, %v1440, %v1439
  %1442 = vrot.lane.b32.xlu0 %v1441, 96
  %v1443 = vpop.permute.xlu0 %1442
  %v1445 = vsel %vm1419, %v1443, 0.0
  %v1447 = vrot.slane %v1445, 1
  %v1448 = vrot.slane %v1445, 2
  %v1449 = vrot.slane %v1445, 3
  %v1450 = vrot.slane %v1445, 4
  %v1451 = vrot.slane %v1445, 5
  %v1452 = vrot.slane %v1445, 6
  %v1453 = vrot.slane %v1445, 7
  %1461 = vst.msk [vmem:[%s12 + $0x2] sm:$0x1] %vm603, %v1445
  %1462 = vst.msk [vmem:[%s12 + $0xa] sm:$0x1] %vm603, %v1447
  %1463 = vst.msk [vmem:[%s12 + $0x12] sm:$0x1] %vm603, %v1448
  %1464 = vst.msk [vmem:[%s12 + $0x1a] sm:$0x1] %vm603, %v1449
  %1465 = vst.msk [vmem:[%s12 + $0x22] sm:$0x1] %vm603, %v1450
  %1466 = vst.msk [vmem:[%s12 + $0x2a] sm:$0x1] %vm603, %v1451
  %1467 = vst.msk [vmem:[%s12 + $0x32] sm:$0x1] %vm603, %v1452
  %1468 = vst.msk [vmem:[%s12 + $0x3a] sm:$0x1] %vm603, %v1453
  %v1469 = vsel %vm1419, %v1443, %v1036
  %v1470 = vld [vmem:[#allocation2 + $0x3] ss:$0 sm:$0xff]
  %v1471 = vld [vmem:[#allocation2 + $0x13] ss:$0 sm:$0xff]
  %v1472 = vld [vmem:[#allocation2 + $0x23] ss:$0 sm:$0xff]
  %v1473 = vld [vmem:[#allocation2 + $0x33] ss:$0 sm:$0xff]
  %v1474 = vld [vmem:[#allocation2 + $0x43] ss:$0 sm:$0xff]
  %v1475 = vld [vmem:[#allocation2 + $0x53] ss:$0 sm:$0xff]
  %v1476 = vld [vmem:[#allocation2 + $0x63] ss:$0 sm:$0xff]
  %v1477 = vld [vmem:[#allocation2 + $0x73] ss:$0 sm:$0xff]
  %v1478 = vpack.c.bf16 %v1469, %v1469
  %v1480 = vsel %vm212, %v1478, 0
  %1482 = vmatpush.bf16.msra.mxu0 0
  %1483 = vmatpush.bf16.msra.mxu0 0
  %1484 = vmatpush.bf16.msra.mxu0 0
  %1485 = vmatpush.bf16.msra.mxu0 0
  %1486 = vmatpush.bf16.msra.mxu0 0
  %1487 = vmatpush.bf16.msra.mxu0 0
  %1488 = vmatpush.bf16.msra.mxu0 %v209
  %1489 = vmatpush.bf16.msra.mxu0 %v208
  %1490 = vmatmul.bf16.gmra.mxu0 %v1480
  %v1491 = vpop.f32.mrf.mxu0
  %v1492 = vadd.f32 %v198, %v1491
  %v1493 = vpop.f32.mrf.mxu0
  %1494 = vdwg.mxu0
  %v1496 = vrot.slane %v1492, 1
  %v1497 = vrot.slane %v1492, 2
  %v1498 = vrot.slane %v1492, 3
  %v1499 = vrot.slane %v1492, 4
  %v1500 = vrot.slane %v1492, 5
  %v1501 = vrot.slane %v1492, 6
  %v1502 = vrot.slane %v1492, 7
  %v1511 = vadd.f32 %v1470, %v1492
  %v1512 = vadd.f32 %v1471, %v1496
  %v1513 = vadd.f32 %v1472, %v1497
  %v1514 = vadd.f32 %v1473, %v1498
  %v1515 = vadd.f32 %v1474, %v1499
  %v1516 = vadd.f32 %v1475, %v1500
  %v1517 = vadd.f32 %v1476, %v1501
  %v1518 = vadd.f32 %v1477, %v1502
  %v1519 = vxor.u32 %v1511, 2147483648
  %v1520 = vxor.u32 %v1512, 2147483648
  %v1521 = vxor.u32 %v1513, 2147483648
  %v1522 = vxor.u32 %v1514, 2147483648
  %v1523 = vxor.u32 %v1515, 2147483648
  %v1524 = vxor.u32 %v1516, 2147483648
  %v1525 = vxor.u32 %v1517, 2147483648
  %v1526 = vxor.u32 %v1518, 2147483648
  %v1527 = vmul.f32 %v1519, 1.442695
  %v1528 = vpow.pop %v1527
  %v1529 = vmul.f32 %v1520, 1.442695
  %v1530 = vpow.pop %v1529
  %v1531 = vmul.f32 %v1521, 1.442695
  %v1532 = vpow.pop %v1531
  %v1533 = vmul.f32 %v1522, 1.442695
  %v1534 = vpow.pop %v1533
  %v1535 = vmul.f32 %v1523, 1.442695
  %v1536 = vpow.pop %v1535
  %v1537 = vmul.f32 %v1524, 1.442695
  %v1538 = vpow.pop %v1537
  %v1539 = vmul.f32 %v1525, 1.442695
  %v1540 = vpow.pop %v1539
  %v1541 = vmul.f32 %v1526, 1.442695
  %v1542 = vpow.pop %v1541
  %v1543 = vadd.f32 %v1528, 1.0
  %v1544 = vadd.f32 %v1530, 1.0
  %v1545 = vadd.f32 %v1532, 1.0
  %v1546 = vadd.f32 %v1534, 1.0
  %v1547 = vadd.f32 %v1536, 1.0
  %v1548 = vadd.f32 %v1538, 1.0
  %v1549 = vadd.f32 %v1540, 1.0
  %v1550 = vadd.f32 %v1542, 1.0
  %v1551 = vrcp.pop %v1543
  %v1552 = vmul.f32 %v1543, %v1551
  %v1553 = vsub.f32 1.0, %v1552
  %v1554 = vmul.f32 %v1551, %v1553
  %v1555 = vadd.f32 %v1551, %v1554
  %vm1556 = vweird.f32 %v1543
  %vm1557 = vweird.f32 %v1551
  %vm1558 = vmor %vm1556, %vm1557
  %v1559 = vsel %vm1558, %v1551, %v1555
  %v1560 = vand.u32 2147483647, %v1543
  %vm1561 = vcmp.eq.f32.partialorder %v1560, 8.507059e+37
  %v1562 = vand.u32 %v1543, 2147483648
  %v1563 = vor.u32 1.1754944e-38, %v1562
  %v1564 = vsel %vm1561, %v1563, %v1559
  %v1565 = vmul.f32 1.0, %v1564
  %v1566 = vrcp.pop %v1544
  %v1567 = vmul.f32 %v1544, %v1566
  %v1568 = vsub.f32 1.0, %v1567
  %v1569 = vmul.f32 %v1566, %v1568
  %v1570 = vadd.f32 %v1566, %v1569
  %vm1571 = vweird.f32 %v1544
  %vm1572 = vweird.f32 %v1566
  %vm1573 = vmor %vm1571, %vm1572
  %v1574 = vsel %vm1573, %v1566, %v1570
  %v1575 = vand.u32 2147483647, %v1544
  %vm1576 = vcmp.eq.f32.partialorder %v1575, 8.507059e+37
  %v1577 = vand.u32 %v1544, 2147483648
  %v1578 = vor.u32 1.1754944e-38, %v1577
  %v1579 = vsel %vm1576, %v1578, %v1574
  %v1580 = vmul.f32 1.0, %v1579
  %v1581 = vrcp.pop %v1545
  %v1582 = vmul.f32 %v1545, %v1581
  %v1583 = vsub.f32 1.0, %v1582
  %v1584 = vmul.f32 %v1581, %v1583
  %v1585 = vadd.f32 %v1581, %v1584
  %vm1586 = vweird.f32 %v1545
  %vm1587 = vweird.f32 %v1581
  %vm1588 = vmor %vm1586, %vm1587
  %v1589 = vsel %vm1588, %v1581, %v1585
  %v1590 = vand.u32 2147483647, %v1545
  %vm1591 = vcmp.eq.f32.partialorder %v1590, 8.507059e+37
  %v1592 = vand.u32 %v1545, 2147483648
  %v1593 = vor.u32 1.1754944e-38, %v1592
  %v1594 = vsel %vm1591, %v1593, %v1589
  %v1595 = vmul.f32 1.0, %v1594
  %v1596 = vrcp.pop %v1546
  %v1597 = vmul.f32 %v1546, %v1596
  %v1598 = vsub.f32 1.0, %v1597
  %v1599 = vmul.f32 %v1596, %v1598
  %v1600 = vadd.f32 %v1596, %v1599
  %vm1601 = vweird.f32 %v1546
  %vm1602 = vweird.f32 %v1596
  %vm1603 = vmor %vm1601, %vm1602
  %v1604 = vsel %vm1603, %v1596, %v1600
  %v1605 = vand.u32 2147483647, %v1546
  %vm1606 = vcmp.eq.f32.partialorder %v1605, 8.507059e+37
  %v1607 = vand.u32 %v1546, 2147483648
  %v1608 = vor.u32 1.1754944e-38, %v1607
  %v1609 = vsel %vm1606, %v1608, %v1604
  %v1610 = vmul.f32 1.0, %v1609
  %v1611 = vrcp.pop %v1547
  %v1612 = vmul.f32 %v1547, %v1611
  %v1613 = vsub.f32 1.0, %v1612
  %v1614 = vmul.f32 %v1611, %v1613
  %v1615 = vadd.f32 %v1611, %v1614
  %vm1616 = vweird.f32 %v1547
  %vm1617 = vweird.f32 %v1611
  %vm1618 = vmor %vm1616, %vm1617
  %v1619 = vsel %vm1618, %v1611, %v1615
  %v1620 = vand.u32 2147483647, %v1547
  %vm1621 = vcmp.eq.f32.partialorder %v1620, 8.507059e+37
  %v1622 = vand.u32 %v1547, 2147483648
  %v1623 = vor.u32 1.1754944e-38, %v1622
  %v1624 = vsel %vm1621, %v1623, %v1619
  %v1625 = vmul.f32 1.0, %v1624
  %v1626 = vrcp.pop %v1548
  %v1627 = vmul.f32 %v1548, %v1626
  %v1628 = vsub.f32 1.0, %v1627
  %v1629 = vmul.f32 %v1626, %v1628
  %v1630 = vadd.f32 %v1626, %v1629
  %vm1631 = vweird.f32 %v1548
  %vm1632 = vweird.f32 %v1626
  %vm1633 = vmor %vm1631, %vm1632
  %v1634 = vsel %vm1633, %v1626, %v1630
  %v1635 = vand.u32 2147483647, %v1548
  %vm1636 = vcmp.eq.f32.partialorder %v1635, 8.507059e+37
  %v1637 = vand.u32 %v1548, 2147483648
  %v1638 = vor.u32 1.1754944e-38, %v1637
  %v1639 = vsel %vm1636, %v1638, %v1634
  %v1640 = vmul.f32 1.0, %v1639
  %v1641 = vrcp.pop %v1549
  %v1642 = vmul.f32 %v1549, %v1641
  %v1643 = vsub.f32 1.0, %v1642
  %v1644 = vmul.f32 %v1641, %v1643
  %v1645 = vadd.f32 %v1641, %v1644
  %vm1646 = vweird.f32 %v1549
  %vm1647 = vweird.f32 %v1641
  %vm1648 = vmor %vm1646, %vm1647
  %v1649 = vsel %vm1648, %v1641, %v1645
  %v1650 = vand.u32 2147483647, %v1549
  %vm1651 = vcmp.eq.f32.partialorder %v1650, 8.507059e+37
  %v1652 = vand.u32 %v1549, 2147483648
  %v1653 = vor.u32 1.1754944e-38, %v1652
  %v1654 = vsel %vm1651, %v1653, %v1649
  %v1655 = vmul.f32 1.0, %v1654
  %v1656 = vrcp.pop %v1550
  %v1657 = vmul.f32 %v1550, %v1656
  %v1658 = vsub.f32 1.0, %v1657
  %v1659 = vmul.f32 %v1656, %v1658
  %v1660 = vadd.f32 %v1656, %v1659
  %vm1661 = vweird.f32 %v1550
  %vm1662 = vweird.f32 %v1656
  %vm1663 = vmor %vm1661, %vm1662
  %v1664 = vsel %vm1663, %v1656, %v1660
  %v1665 = vand.u32 2147483647, %v1550
  %vm1666 = vcmp.eq.f32.partialorder %v1665, 8.507059e+37
  %v1667 = vand.u32 %v1550, 2147483648
  %v1668 = vor.u32 1.1754944e-38, %v1667
  %v1669 = vsel %vm1666, %v1668, %v1664
  %v1670 = vmul.f32 1.0, %v1669
  %1671 = vrot.lane.b32.xlu0 %v1492, 64
  %v1672 = vpop.permute.xlu0 %1671
  %1673 = vrot.lane.b32.xlu0 %v1496, 64
  %v1674 = vpop.permute.xlu0 %1673
  %1675 = vrot.lane.b32.xlu0 %v1497, 64
  %v1676 = vpop.permute.xlu0 %1675
  %1677 = vrot.lane.b32.xlu0 %v1498, 64
  %v1678 = vpop.permute.xlu0 %1677
  %1679 = vrot.lane.b32.xlu0 %v1499, 64
  %v1680 = vpop.permute.xlu0 %1679
  %1681 = vrot.lane.b32.xlu0 %v1500, 64
  %v1682 = vpop.permute.xlu0 %1681
  %1683 = vrot.lane.b32.xlu0 %v1501, 64
  %v1684 = vpop.permute.xlu0 %1683
  %1685 = vrot.lane.b32.xlu0 %v1502, 64
  %v1686 = vpop.permute.xlu0 %1685
  %v1695 = vmul.f32 %v1565, %v1672
  %v1696 = vmul.f32 %v1580, %v1674
  %v1697 = vmul.f32 %v1595, %v1676
  %v1698 = vmul.f32 %v1610, %v1678
  %v1699 = vmul.f32 %v1625, %v1680
  %v1700 = vmul.f32 %v1640, %v1682
  %v1701 = vmul.f32 %v1655, %v1684
  %v1702 = vmul.f32 %v1670, %v1686
  %1711 = vrot.lane.b32.xlu0 %v1695, 64
  %v1712 = vpop.permute.xlu0 %1711
  %1713 = vrot.lane.b32.xlu0 %v1696, 64
  %v1714 = vpop.permute.xlu0 %1713
  %1715 = vrot.lane.b32.xlu0 %v1697, 64
  %v1716 = vpop.permute.xlu0 %1715
  %1717 = vrot.lane.b32.xlu0 %v1698, 64
  %v1718 = vpop.permute.xlu0 %1717
  %1719 = vrot.lane.b32.xlu0 %v1699, 64
  %v1720 = vpop.permute.xlu0 %1719
  %1721 = vrot.lane.b32.xlu0 %v1700, 64
  %v1722 = vpop.permute.xlu0 %1721
  %1723 = vrot.lane.b32.xlu0 %v1701, 64
  %v1724 = vpop.permute.xlu0 %1723
  %1725 = vrot.lane.b32.xlu0 %v1702, 64
  %v1726 = vpop.permute.xlu0 %1725
  %v1735 = vadd.f32 %v1470, %v1712
  %v1736 = vadd.f32 %v1471, %v1714
  %v1737 = vadd.f32 %v1472, %v1716
  %v1738 = vadd.f32 %v1473, %v1718
  %v1739 = vadd.f32 %v1474, %v1720
  %v1740 = vadd.f32 %v1475, %v1722
  %v1741 = vadd.f32 %v1476, %v1724
  %v1742 = vadd.f32 %v1477, %v1726
  %v1743 = vtanh.pop %v1735
  %v1744 = vtanh.pop %v1736
  %v1745 = vtanh.pop %v1737
  %v1746 = vtanh.pop %v1738
  %v1747 = vtanh.pop %v1739
  %v1748 = vtanh.pop %v1740
  %v1749 = vtanh.pop %v1741
  %v1750 = vtanh.pop %v1742
  %v1751 = vsub.f32 1.0, %v1565
  %v1752 = vsub.f32 1.0, %v1580
  %v1753 = vsub.f32 1.0, %v1595
  %v1754 = vsub.f32 1.0, %v1610
  %v1755 = vsub.f32 1.0, %v1625
  %v1756 = vsub.f32 1.0, %v1640
  %v1757 = vsub.f32 1.0, %v1655
  %v1758 = vsub.f32 1.0, %v1670
  %1767 = vrot.lane.b32.xlu0 %v1743, 96
  %v1768 = vpop.permute.xlu0 %1767
  %1769 = vrot.lane.b32.xlu0 %v1744, 96
  %v1770 = vpop.permute.xlu0 %1769
  %1771 = vrot.lane.b32.xlu0 %v1745, 96
  %v1772 = vpop.permute.xlu0 %1771
  %1773 = vrot.lane.b32.xlu0 %v1746, 96
  %v1774 = vpop.permute.xlu0 %1773
  %1775 = vrot.lane.b32.xlu0 %v1747, 96
  %v1776 = vpop.permute.xlu0 %1775
  %1777 = vrot.lane.b32.xlu0 %v1748, 96
  %v1778 = vpop.permute.xlu0 %1777
  %1779 = vrot.lane.b32.xlu0 %v1749, 96
  %v1780 = vpop.permute.xlu0 %1779
  %1781 = vrot.lane.b32.xlu0 %v1750, 96
  %v1782 = vpop.permute.xlu0 %1781
  %v1791 = vmul.f32 %v1751, %v1768
  %v1792 = vmul.f32 %v1752, %v1770
  %v1793 = vmul.f32 %v1753, %v1772
  %v1794 = vmul.f32 %v1754, %v1774
  %v1795 = vmul.f32 %v1755, %v1776
  %v1796 = vmul.f32 %v1756, %v1778
  %v1797 = vmul.f32 %v1757, %v1780
  %v1798 = vmul.f32 %v1758, %v1782
  %v1800 = vrot.slane %v1469, 1
  %v1801 = vrot.slane %v1469, 2
  %v1802 = vrot.slane %v1469, 3
  %v1803 = vrot.slane %v1469, 4
  %v1804 = vrot.slane %v1469, 5
  %v1805 = vrot.slane %v1469, 6
  %v1806 = vrot.slane %v1469, 7
  %1807 = vrot.lane.b32.xlu0 %v1469, 32
  %v1808 = vpop.permute.xlu0 %1807
  %1809 = vrot.lane.b32.xlu0 %v1800, 32
  %v1810 = vpop.permute.xlu0 %1809
  %1811 = vrot.lane.b32.xlu0 %v1801, 32
  %v1812 = vpop.permute.xlu0 %1811
  %1813 = vrot.lane.b32.xlu0 %v1802, 32
  %v1814 = vpop.permute.xlu0 %1813
  %1815 = vrot.lane.b32.xlu0 %v1803, 32
  %v1816 = vpop.permute.xlu0 %1815
  %1817 = vrot.lane.b32.xlu0 %v1804, 32
  %v1818 = vpop.permute.xlu0 %1817
  %1819 = vrot.lane.b32.xlu0 %v1805, 32
  %v1820 = vpop.permute.xlu0 %1819
  %1821 = vrot.lane.b32.xlu0 %v1806, 32
  %v1822 = vpop.permute.xlu0 %1821
  %v1831 = vmul.f32 %v1565, %v1808
  %v1832 = vmul.f32 %v1580, %v1810
  %v1833 = vmul.f32 %v1595, %v1812
  %v1834 = vmul.f32 %v1610, %v1814
  %v1835 = vmul.f32 %v1625, %v1816
  %v1836 = vmul.f32 %v1640, %v1818
  %v1837 = vmul.f32 %v1655, %v1820
  %v1838 = vmul.f32 %v1670, %v1822
  %v1839 = vadd.f32 %v1791, %v1831
  %v1840 = vadd.f32 %v1792, %v1832
  %v1841 = vadd.f32 %v1793, %v1833
  %v1842 = vadd.f32 %v1794, %v1834
  %v1843 = vadd.f32 %v1795, %v1835
  %v1844 = vadd.f32 %v1796, %v1836
  %v1845 = vadd.f32 %v1797, %v1837
  %v1846 = vadd.f32 %v1798, %v1838
  %vm1847 = vcmp.gt.s32.totalorder %v178, 3
  %v1848 = vsel %vm1847, 1, 0
  %1849 = vset.pattern.permute.xlu0 0
  %1850 = vperm.xlu0 %1849, %v1848
  %v1851 = vpop.permute.xlu0 %1850
  %vm1852 = vcmp.eq.s32.totalorder %v1851, 1
  %v1861 = vrot.slane %v1840, 7
  %v1862 = vsel %vm564, %v1861, %v1839
  %v1863 = vrot.slane %v1841, 6
  %v1864 = vsel %vm567, %v1863, %v1862
  %v1865 = vrot.slane %v1842, 5
  %v1866 = vsel %vm570, %v1865, %v1864
  %v1867 = vrot.slane %v1843, 4
  %v1868 = vsel %vm573, %v1867, %v1866
  %v1869 = vrot.slane %v1844, 3
  %v1870 = vsel %vm576, %v1869, %v1868
  %v1871 = vrot.slane %v1845, 2
  %v1872 = vsel %vm579, %v1871, %v1870
  %v1873 = vrot.slane %v1846, 1
  %v1874 = vsel %vm582, %v1873, %v1872
  %1875 = vrot.lane.b32.xlu0 %v1874, 96
  %v1876 = vpop.permute.xlu0 %1875
  %v1878 = vsel %vm1852, %v1876, 0.0
  %v1880 = vrot.slane %v1878, 1
  %v1881 = vrot.slane %v1878, 2
  %v1882 = vrot.slane %v1878, 3
  %v1883 = vrot.slane %v1878, 4
  %v1884 = vrot.slane %v1878, 5
  %v1885 = vrot.slane %v1878, 6
  %v1886 = vrot.slane %v1878, 7
  %1894 = vst.msk [vmem:[%s12 + $0x3] sm:$0x1] %vm603, %v1878
  %1895 = vst.msk [vmem:[%s12 + $0xb] sm:$0x1] %vm603, %v1880
  %1896 = vst.msk [vmem:[%s12 + $0x13] sm:$0x1] %vm603, %v1881
  %1897 = vst.msk [vmem:[%s12 + $0x1b] sm:$0x1] %vm603, %v1882
  %1898 = vst.msk [vmem:[%s12 + $0x23] sm:$0x1] %vm603, %v1883
  %1899 = vst.msk [vmem:[%s12 + $0x2b] sm:$0x1] %vm603, %v1884
  %1900 = vst.msk [vmem:[%s12 + $0x33] sm:$0x1] %vm603, %v1885
  %1901 = vst.msk [vmem:[%s12 + $0x3b] sm:$0x1] %vm603, %v1886
  %v1902 = vsel %vm1852, %v1876, %v1469
  %v1903 = vld [vmem:[#allocation2 + $0x4] ss:$0 sm:$0xff]
  %v1904 = vld [vmem:[#allocation2 + $0x14] ss:$0 sm:$0xff]
  %v1905 = vld [vmem:[#allocation2 + $0x24] ss:$0 sm:$0xff]
  %v1906 = vld [vmem:[#allocation2 + $0x34] ss:$0 sm:$0xff]
  %v1907 = vld [vmem:[#allocation2 + $0x44] ss:$0 sm:$0xff]
  %v1908 = vld [vmem:[#allocation2 + $0x54] ss:$0 sm:$0xff]
  %v1909 = vld [vmem:[#allocation2 + $0x64] ss:$0 sm:$0xff]
  %v1910 = vld [vmem:[#allocation2 + $0x74] ss:$0 sm:$0xff]
  %v1911 = vpack.c.bf16 %v1902, %v1902
  %v1913 = vsel %vm212, %v1911, 0
  %1915 = vmatpush.bf16.msra.mxu0 0
  %1916 = vmatpush.bf16.msra.mxu0 0
  %1917 = vmatpush.bf16.msra.mxu0 0
  %1918 = vmatpush.bf16.msra.mxu0 0
  %1919 = vmatpush.bf16.msra.mxu0 0
  %1920 = vmatpush.bf16.msra.mxu0 0
  %1921 = vmatpush.bf16.msra.mxu0 %v209
  %1922 = vmatpush.bf16.msra.mxu0 %v208
  %1923 = vmatmul.bf16.gmra.mxu0 %v1913
  %v1924 = vpop.f32.mrf.mxu0
  %v1925 = vadd.f32 %v198, %v1924
  %v1926 = vpop.f32.mrf.mxu0
  %1927 = vdwg.mxu0
  %v1929 = vrot.slane %v1925, 1
  %v1930 = vrot.slane %v1925, 2
  %v1931 = vrot.slane %v1925, 3
  %v1932 = vrot.slane %v1925, 4
  %v1933 = vrot.slane %v1925, 5
  %v1934 = vrot.slane %v1925, 6
  %v1935 = vrot.slane %v1925, 7
  %v1944 = vadd.f32 %v1903, %v1925
  %v1945 = vadd.f32 %v1904, %v1929
  %v1946 = vadd.f32 %v1905, %v1930
  %v1947 = vadd.f32 %v1906, %v1931
  %v1948 = vadd.f32 %v1907, %v1932
  %v1949 = vadd.f32 %v1908, %v1933
  %v1950 = vadd.f32 %v1909, %v1934
  %v1951 = vadd.f32 %v1910, %v1935
  %v1952 = vxor.u32 %v1944, 2147483648
  %v1953 = vxor.u32 %v1945, 2147483648
  %v1954 = vxor.u32 %v1946, 2147483648
  %v1955 = vxor.u32 %v1947, 2147483648
  %v1956 = vxor.u32 %v1948, 2147483648
  %v1957 = vxor.u32 %v1949, 2147483648
  %v1958 = vxor.u32 %v1950, 2147483648
  %v1959 = vxor.u32 %v1951, 2147483648
  %v1960 = vmul.f32 %v1952, 1.442695
  %v1961 = vpow.pop %v1960
  %v1962 = vmul.f32 %v1953, 1.442695
  %v1963 = vpow.pop %v1962
  %v1964 = vmul.f32 %v1954, 1.442695
  %v1965 = vpow.pop %v1964
  %v1966 = vmul.f32 %v1955, 1.442695
  %v1967 = vpow.pop %v1966
  %v1968 = vmul.f32 %v1956, 1.442695
  %v1969 = vpow.pop %v1968
  %v1970 = vmul.f32 %v1957, 1.442695
  %v1971 = vpow.pop %v1970
  %v1972 = vmul.f32 %v1958, 1.442695
  %v1973 = vpow.pop %v1972
  %v1974 = vmul.f32 %v1959, 1.442695
  %v1975 = vpow.pop %v1974
  %v1976 = vadd.f32 %v1961, 1.0
  %v1977 = vadd.f32 %v1963, 1.0
  %v1978 = vadd.f32 %v1965, 1.0
  %v1979 = vadd.f32 %v1967, 1.0
  %v1980 = vadd.f32 %v1969, 1.0
  %v1981 = vadd.f32 %v1971, 1.0
  %v1982 = vadd.f32 %v1973, 1.0
  %v1983 = vadd.f32 %v1975, 1.0
  %v1984 = vrcp.pop %v1976
  %v1985 = vmul.f32 %v1976, %v1984
  %v1986 = vsub.f32 1.0, %v1985
  %v1987 = vmul.f32 %v1984, %v1986
  %v1988 = vadd.f32 %v1984, %v1987
  %vm1989 = vweird.f32 %v1976
  %vm1990 = vweird.f32 %v1984
  %vm1991 = vmor %vm1989, %vm1990
  %v1992 = vsel %vm1991, %v1984, %v1988
  %v1993 = vand.u32 2147483647, %v1976
  %vm1994 = vcmp.eq.f32.partialorder %v1993, 8.507059e+37
  %v1995 = vand.u32 %v1976, 2147483648
  %v1996 = vor.u32 1.1754944e-38, %v1995
  %v1997 = vsel %vm1994, %v1996, %v1992
  %v1998 = vmul.f32 1.0, %v1997
  %v1999 = vrcp.pop %v1977
  %v2000 = vmul.f32 %v1977, %v1999
  %v2001 = vsub.f32 1.0, %v2000
  %v2002 = vmul.f32 %v1999, %v2001
  %v2003 = vadd.f32 %v1999, %v2002
  %vm2004 = vweird.f32 %v1977
  %vm2005 = vweird.f32 %v1999
  %vm2006 = vmor %vm2004, %vm2005
  %v2007 = vsel %vm2006, %v1999, %v2003
  %v2008 = vand.u32 2147483647, %v1977
  %vm2009 = vcmp.eq.f32.partialorder %v2008, 8.507059e+37
  %v2010 = vand.u32 %v1977, 2147483648
  %v2011 = vor.u32 1.1754944e-38, %v2010
  %v2012 = vsel %vm2009, %v2011, %v2007
  %v2013 = vmul.f32 1.0, %v2012
  %v2014 = vrcp.pop %v1978
  %v2015 = vmul.f32 %v1978, %v2014
  %v2016 = vsub.f32 1.0, %v2015
  %v2017 = vmul.f32 %v2014, %v2016
  %v2018 = vadd.f32 %v2014, %v2017
  %vm2019 = vweird.f32 %v1978
  %vm2020 = vweird.f32 %v2014
  %vm2021 = vmor %vm2019, %vm2020
  %v2022 = vsel %vm2021, %v2014, %v2018
  %v2023 = vand.u32 2147483647, %v1978
  %vm2024 = vcmp.eq.f32.partialorder %v2023, 8.507059e+37
  %v2025 = vand.u32 %v1978, 2147483648
  %v2026 = vor.u32 1.1754944e-38, %v2025
  %v2027 = vsel %vm2024, %v2026, %v2022
  %v2028 = vmul.f32 1.0, %v2027
  %v2029 = vrcp.pop %v1979
  %v2030 = vmul.f32 %v1979, %v2029
  %v2031 = vsub.f32 1.0, %v2030
  %v2032 = vmul.f32 %v2029, %v2031
  %v2033 = vadd.f32 %v2029, %v2032
  %vm2034 = vweird.f32 %v1979
  %vm2035 = vweird.f32 %v2029
  %vm2036 = vmor %vm2034, %vm2035
  %v2037 = vsel %vm2036, %v2029, %v2033
  %v2038 = vand.u32 2147483647, %v1979
  %vm2039 = vcmp.eq.f32.partialorder %v2038, 8.507059e+37
  %v2040 = vand.u32 %v1979, 2147483648
  %v2041 = vor.u32 1.1754944e-38, %v2040
  %v2042 = vsel %vm2039, %v2041, %v2037
  %v2043 = vmul.f32 1.0, %v2042
  %v2044 = vrcp.pop %v1980
  %v2045 = vmul.f32 %v1980, %v2044
  %v2046 = vsub.f32 1.0, %v2045
  %v2047 = vmul.f32 %v2044, %v2046
  %v2048 = vadd.f32 %v2044, %v2047
  %vm2049 = vweird.f32 %v1980
  %vm2050 = vweird.f32 %v2044
  %vm2051 = vmor %vm2049, %vm2050
  %v2052 = vsel %vm2051, %v2044, %v2048
  %v2053 = vand.u32 2147483647, %v1980
  %vm2054 = vcmp.eq.f32.partialorder %v2053, 8.507059e+37
  %v2055 = vand.u32 %v1980, 2147483648
  %v2056 = vor.u32 1.1754944e-38, %v2055
  %v2057 = vsel %vm2054, %v2056, %v2052
  %v2058 = vmul.f32 1.0, %v2057
  %v2059 = vrcp.pop %v1981
  %v2060 = vmul.f32 %v1981, %v2059
  %v2061 = vsub.f32 1.0, %v2060
  %v2062 = vmul.f32 %v2059, %v2061
  %v2063 = vadd.f32 %v2059, %v2062
  %vm2064 = vweird.f32 %v1981
  %vm2065 = vweird.f32 %v2059
  %vm2066 = vmor %vm2064, %vm2065
  %v2067 = vsel %vm2066, %v2059, %v2063
  %v2068 = vand.u32 2147483647, %v1981
  %vm2069 = vcmp.eq.f32.partialorder %v2068, 8.507059e+37
  %v2070 = vand.u32 %v1981, 2147483648
  %v2071 = vor.u32 1.1754944e-38, %v2070
  %v2072 = vsel %vm2069, %v2071, %v2067
  %v2073 = vmul.f32 1.0, %v2072
  %v2074 = vrcp.pop %v1982
  %v2075 = vmul.f32 %v1982, %v2074
  %v2076 = vsub.f32 1.0, %v2075
  %v2077 = vmul.f32 %v2074, %v2076
  %v2078 = vadd.f32 %v2074, %v2077
  %vm2079 = vweird.f32 %v1982
  %vm2080 = vweird.f32 %v2074
  %vm2081 = vmor %vm2079, %vm2080
  %v2082 = vsel %vm2081, %v2074, %v2078
  %v2083 = vand.u32 2147483647, %v1982
  %vm2084 = vcmp.eq.f32.partialorder %v2083, 8.507059e+37
  %v2085 = vand.u32 %v1982, 2147483648
  %v2086 = vor.u32 1.1754944e-38, %v2085
  %v2087 = vsel %vm2084, %v2086, %v2082
  %v2088 = vmul.f32 1.0, %v2087
  %v2089 = vrcp.pop %v1983
  %v2090 = vmul.f32 %v1983, %v2089
  %v2091 = vsub.f32 1.0, %v2090
  %v2092 = vmul.f32 %v2089, %v2091
  %v2093 = vadd.f32 %v2089, %v2092
  %vm2094 = vweird.f32 %v1983
  %vm2095 = vweird.f32 %v2089
  %vm2096 = vmor %vm2094, %vm2095
  %v2097 = vsel %vm2096, %v2089, %v2093
  %v2098 = vand.u32 2147483647, %v1983
  %vm2099 = vcmp.eq.f32.partialorder %v2098, 8.507059e+37
  %v2100 = vand.u32 %v1983, 2147483648
  %v2101 = vor.u32 1.1754944e-38, %v2100
  %v2102 = vsel %vm2099, %v2101, %v2097
  %v2103 = vmul.f32 1.0, %v2102
  %2104 = vrot.lane.b32.xlu0 %v1925, 64
  %v2105 = vpop.permute.xlu0 %2104
  %2106 = vrot.lane.b32.xlu0 %v1929, 64
  %v2107 = vpop.permute.xlu0 %2106
  %2108 = vrot.lane.b32.xlu0 %v1930, 64
  %v2109 = vpop.permute.xlu0 %2108
  %2110 = vrot.lane.b32.xlu0 %v1931, 64
  %v2111 = vpop.permute.xlu0 %2110
  %2112 = vrot.lane.b32.xlu0 %v1932, 64
  %v2113 = vpop.permute.xlu0 %2112
  %2114 = vrot.lane.b32.xlu0 %v1933, 64
  %v2115 = vpop.permute.xlu0 %2114
  %2116 = vrot.lane.b32.xlu0 %v1934, 64
  %v2117 = vpop.permute.xlu0 %2116
  %2118 = vrot.lane.b32.xlu0 %v1935, 64
  %v2119 = vpop.permute.xlu0 %2118
  %v2128 = vmul.f32 %v1998, %v2105
  %v2129 = vmul.f32 %v2013, %v2107
  %v2130 = vmul.f32 %v2028, %v2109
  %v2131 = vmul.f32 %v2043, %v2111
  %v2132 = vmul.f32 %v2058, %v2113
  %v2133 = vmul.f32 %v2073, %v2115
  %v2134 = vmul.f32 %v2088, %v2117
  %v2135 = vmul.f32 %v2103, %v2119
  %2144 = vrot.lane.b32.xlu0 %v2128, 64
  %v2145 = vpop.permute.xlu0 %2144
  %2146 = vrot.lane.b32.xlu0 %v2129, 64
  %v2147 = vpop.permute.xlu0 %2146
  %2148 = vrot.lane.b32.xlu0 %v2130, 64
  %v2149 = vpop.permute.xlu0 %2148
  %2150 = vrot.lane.b32.xlu0 %v2131, 64
  %v2151 = vpop.permute.xlu0 %2150
  %2152 = vrot.lane.b32.xlu0 %v2132, 64
  %v2153 = vpop.permute.xlu0 %2152
  %2154 = vrot.lane.b32.xlu0 %v2133, 64
  %v2155 = vpop.permute.xlu0 %2154
  %2156 = vrot.lane.b32.xlu0 %v2134, 64
  %v2157 = vpop.permute.xlu0 %2156
  %2158 = vrot.lane.b32.xlu0 %v2135, 64
  %v2159 = vpop.permute.xlu0 %2158
  %v2168 = vadd.f32 %v1903, %v2145
  %v2169 = vadd.f32 %v1904, %v2147
  %v2170 = vadd.f32 %v1905, %v2149
  %v2171 = vadd.f32 %v1906, %v2151
  %v2172 = vadd.f32 %v1907, %v2153
  %v2173 = vadd.f32 %v1908, %v2155
  %v2174 = vadd.f32 %v1909, %v2157
  %v2175 = vadd.f32 %v1910, %v2159
  %v2176 = vtanh.pop %v2168
  %v2177 = vtanh.pop %v2169
  %v2178 = vtanh.pop %v2170
  %v2179 = vtanh.pop %v2171
  %v2180 = vtanh.pop %v2172
  %v2181 = vtanh.pop %v2173
  %v2182 = vtanh.pop %v2174
  %v2183 = vtanh.pop %v2175
  %v2184 = vsub.f32 1.0, %v1998
  %v2185 = vsub.f32 1.0, %v2013
  %v2186 = vsub.f32 1.0, %v2028
  %v2187 = vsub.f32 1.0, %v2043
  %v2188 = vsub.f32 1.0, %v2058
  %v2189 = vsub.f32 1.0, %v2073
  %v2190 = vsub.f32 1.0, %v2088
  %v2191 = vsub.f32 1.0, %v2103
  %2200 = vrot.lane.b32.xlu0 %v2176, 96
  %v2201 = vpop.permute.xlu0 %2200
  %2202 = vrot.lane.b32.xlu0 %v2177, 96
  %v2203 = vpop.permute.xlu0 %2202
  %2204 = vrot.lane.b32.xlu0 %v2178, 96
  %v2205 = vpop.permute.xlu0 %2204
  %2206 = vrot.lane.b32.xlu0 %v2179, 96
  %v2207 = vpop.permute.xlu0 %2206
  %2208 = vrot.lane.b32.xlu0 %v2180, 96
  %v2209 = vpop.permute.xlu0 %2208
  %2210 = vrot.lane.b32.xlu0 %v2181, 96
  %v2211 = vpop.permute.xlu0 %2210
  %2212 = vrot.lane.b32.xlu0 %v2182, 96
  %v2213 = vpop.permute.xlu0 %2212
  %2214 = vrot.lane.b32.xlu0 %v2183, 96
  %v2215 = vpop.permute.xlu0 %2214
  %v2224 = vmul.f32 %v2184, %v2201
  %v2225 = vmul.f32 %v2185, %v2203
  %v2226 = vmul.f32 %v2186, %v2205
  %v2227 = vmul.f32 %v2187, %v2207
  %v2228 = vmul.f32 %v2188, %v2209
  %v2229 = vmul.f32 %v2189, %v2211
  %v2230 = vmul.f32 %v2190, %v2213
  %v2231 = vmul.f32 %v2191, %v2215
  %v2233 = vrot.slane %v1902, 1
  %v2234 = vrot.slane %v1902, 2
  %v2235 = vrot.slane %v1902, 3
  %v2236 = vrot.slane %v1902, 4
  %v2237 = vrot.slane %v1902, 5
  %v2238 = vrot.slane %v1902, 6
  %v2239 = vrot.slane %v1902, 7
  %2240 = vrot.lane.b32.xlu0 %v1902, 32
  %v2241 = vpop.permute.xlu0 %2240
  %2242 = vrot.lane.b32.xlu0 %v2233, 32
  %v2243 = vpop.permute.xlu0 %2242
  %2244 = vrot.lane.b32.xlu0 %v2234, 32
  %v2245 = vpop.permute.xlu0 %2244
  %2246 = vrot.lane.b32.xlu0 %v2235, 32
  %v2247 = vpop.permute.xlu0 %2246
  %2248 = vrot.lane.b32.xlu0 %v2236, 32
  %v2249 = vpop.permute.xlu0 %2248
  %2250 = vrot.lane.b32.xlu0 %v2237, 32
  %v2251 = vpop.permute.xlu0 %2250
  %2252 = vrot.lane.b32.xlu0 %v2238, 32
  %v2253 = vpop.permute.xlu0 %2252
  %2254 = vrot.lane.b32.xlu0 %v2239, 32
  %v2255 = vpop.permute.xlu0 %2254
  %v2264 = vmul.f32 %v1998, %v2241
  %v2265 = vmul.f32 %v2013, %v2243
  %v2266 = vmul.f32 %v2028, %v2245
  %v2267 = vmul.f32 %v2043, %v2247
  %v2268 = vmul.f32 %v2058, %v2249
  %v2269 = vmul.f32 %v2073, %v2251
  %v2270 = vmul.f32 %v2088, %v2253
  %v2271 = vmul.f32 %v2103, %v2255
  %v2272 = vadd.f32 %v2224, %v2264
  %v2273 = vadd.f32 %v2225, %v2265
  %v2274 = vadd.f32 %v2226, %v2266
  %v2275 = vadd.f32 %v2227, %v2267
  %v2276 = vadd.f32 %v2228, %v2268
  %v2277 = vadd.f32 %v2229, %v2269
  %v2278 = vadd.f32 %v2230, %v2270
  %v2279 = vadd.f32 %v2231, %v2271
  %vm2280 = vcmp.gt.s32.totalorder %v178, 4
  %v2281 = vsel %vm2280, 1, 0
  %2282 = vset.pattern.permute.xlu0 0
  %2283 = vperm.xlu0 %2282, %v2281
  %v2284 = vpop.permute.xlu0 %2283
  %vm2285 = vcmp.eq.s32.totalorder %v2284, 1
  %v2294 = vrot.slane %v2273, 7
  %v2295 = vsel %vm564, %v2294, %v2272
  %v2296 = vrot.slane %v2274, 6
  %v2297 = vsel %vm567, %v2296, %v2295
  %v2298 = vrot.slane %v2275, 5
  %v2299 = vsel %vm570, %v2298, %v2297
  %v2300 = vrot.slane %v2276, 4
  %v2301 = vsel %vm573, %v2300, %v2299
  %v2302 = vrot.slane %v2277, 3
  %v2303 = vsel %vm576, %v2302, %v2301
  %v2304 = vrot.slane %v2278, 2
  %v2305 = vsel %vm579, %v2304, %v2303
  %v2306 = vrot.slane %v2279, 1
  %v2307 = vsel %vm582, %v2306, %v2305
  %2308 = vrot.lane.b32.xlu0 %v2307, 96
  %v2309 = vpop.permute.xlu0 %2308
  %v2311 = vsel %vm2285, %v2309, 0.0
  %v2313 = vrot.slane %v2311, 1
  %v2314 = vrot.slane %v2311, 2
  %v2315 = vrot.slane %v2311, 3
  %v2316 = vrot.slane %v2311, 4
  %v2317 = vrot.slane %v2311, 5
  %v2318 = vrot.slane %v2311, 6
  %v2319 = vrot.slane %v2311, 7
  %2327 = vst.msk [vmem:[%s12 + $0x4] sm:$0x1] %vm603, %v2311
  %2328 = vst.msk [vmem:[%s12 + $0xc] sm:$0x1] %vm603, %v2313
  %2329 = vst.msk [vmem:[%s12 + $0x14] sm:$0x1] %vm603, %v2314
  %2330 = vst.msk [vmem:[%s12 + $0x1c] sm:$0x1] %vm603, %v2315
  %2331 = vst.msk [vmem:[%s12 + $0x24] sm:$0x1] %vm603, %v2316
  %2332 = vst.msk [vmem:[%s12 + $0x2c] sm:$0x1] %vm603, %v2317
  %2333 = vst.msk [vmem:[%s12 + $0x34] sm:$0x1] %vm603, %v2318
  %2334 = vst.msk [vmem:[%s12 + $0x3c] sm:$0x1] %vm603, %v2319
  %v2335 = vsel %vm2285, %v2309, %v1902
  %v2336 = vld [vmem:[#allocation2 + $0x5] ss:$0 sm:$0xff]
  %v2337 = vld [vmem:[#allocation2 + $0x15] ss:$0 sm:$0xff]
  %v2338 = vld [vmem:[#allocation2 + $0x25] ss:$0 sm:$0xff]
  %v2339 = vld [vmem:[#allocation2 + $0x35] ss:$0 sm:$0xff]
  %v2340 = vld [vmem:[#allocation2 + $0x45] ss:$0 sm:$0xff]
  %v2341 = vld [vmem:[#allocation2 + $0x55] ss:$0 sm:$0xff]
  %v2342 = vld [vmem:[#allocation2 + $0x65] ss:$0 sm:$0xff]
  %v2343 = vld [vmem:[#allocation2 + $0x75] ss:$0 sm:$0xff]
  %v2344 = vpack.c.bf16 %v2335, %v2335
  %v2346 = vsel %vm212, %v2344, 0
  %2348 = vmatpush.bf16.msra.mxu0 0
  %2349 = vmatpush.bf16.msra.mxu0 0
  %2350 = vmatpush.bf16.msra.mxu0 0
  %2351 = vmatpush.bf16.msra.mxu0 0
  %2352 = vmatpush.bf16.msra.mxu0 0
  %2353 = vmatpush.bf16.msra.mxu0 0
  %2354 = vmatpush.bf16.msra.mxu0 %v209
  %2355 = vmatpush.bf16.msra.mxu0 %v208
  %2356 = vmatmul.bf16.gmra.mxu0 %v2346
  %v2357 = vpop.f32.mrf.mxu0
  %v2358 = vadd.f32 %v198, %v2357
  %v2359 = vpop.f32.mrf.mxu0
  %2360 = vdwg.mxu0
  %v2362 = vrot.slane %v2358, 1
  %v2363 = vrot.slane %v2358, 2
  %v2364 = vrot.slane %v2358, 3
  %v2365 = vrot.slane %v2358, 4
  %v2366 = vrot.slane %v2358, 5
  %v2367 = vrot.slane %v2358, 6
  %v2368 = vrot.slane %v2358, 7
  %v2377 = vadd.f32 %v2336, %v2358
  %v2378 = vadd.f32 %v2337, %v2362
  %v2379 = vadd.f32 %v2338, %v2363
  %v2380 = vadd.f32 %v2339, %v2364
  %v2381 = vadd.f32 %v2340, %v2365
  %v2382 = vadd.f32 %v2341, %v2366
  %v2383 = vadd.f32 %v2342, %v2367
  %v2384 = vadd.f32 %v2343, %v2368
  %v2385 = vxor.u32 %v2377, 2147483648
  %v2386 = vxor.u32 %v2378, 2147483648
  %v2387 = vxor.u32 %v2379, 2147483648
  %v2388 = vxor.u32 %v2380, 2147483648
  %v2389 = vxor.u32 %v2381, 2147483648
  %v2390 = vxor.u32 %v2382, 2147483648
  %v2391 = vxor.u32 %v2383, 2147483648
  %v2392 = vxor.u32 %v2384, 2147483648
  %v2393 = vmul.f32 %v2385, 1.442695
  %v2394 = vpow.pop %v2393
  %v2395 = vmul.f32 %v2386, 1.442695
  %v2396 = vpow.pop %v2395
  %v2397 = vmul.f32 %v2387, 1.442695
  %v2398 = vpow.pop %v2397
  %v2399 = vmul.f32 %v2388, 1.442695
  %v2400 = vpow.pop %v2399
  %v2401 = vmul.f32 %v2389, 1.442695
  %v2402 = vpow.pop %v2401
  %v2403 = vmul.f32 %v2390, 1.442695
  %v2404 = vpow.pop %v2403
  %v2405 = vmul.f32 %v2391, 1.442695
  %v2406 = vpow.pop %v2405
  %v2407 = vmul.f32 %v2392, 1.442695
  %v2408 = vpow.pop %v2407
  %v2409 = vadd.f32 %v2394, 1.0
  %v2410 = vadd.f32 %v2396, 1.0
  %v2411 = vadd.f32 %v2398, 1.0
  %v2412 = vadd.f32 %v2400, 1.0
  %v2413 = vadd.f32 %v2402, 1.0
  %v2414 = vadd.f32 %v2404, 1.0
  %v2415 = vadd.f32 %v2406, 1.0
  %v2416 = vadd.f32 %v2408, 1.0
  %v2417 = vrcp.pop %v2409
  %v2418 = vmul.f32 %v2409, %v2417
  %v2419 = vsub.f32 1.0, %v2418
  %v2420 = vmul.f32 %v2417, %v2419
  %v2421 = vadd.f32 %v2417, %v2420
  %vm2422 = vweird.f32 %v2409
  %vm2423 = vweird.f32 %v2417
  %vm2424 = vmor %vm2422, %vm2423
  %v2425 = vsel %vm2424, %v2417, %v2421
  %v2426 = vand.u32 2147483647, %v2409
  %vm2427 = vcmp.eq.f32.partialorder %v2426, 8.507059e+37
  %v2428 = vand.u32 %v2409, 2147483648
  %v2429 = vor.u32 1.1754944e-38, %v2428
  %v2430 = vsel %vm2427, %v2429, %v2425
  %v2431 = vmul.f32 1.0, %v2430
  %v2432 = vrcp.pop %v2410
  %v2433 = vmul.f32 %v2410, %v2432
  %v2434 = vsub.f32 1.0, %v2433
  %v2435 = vmul.f32 %v2432, %v2434
  %v2436 = vadd.f32 %v2432, %v2435
  %vm2437 = vweird.f32 %v2410
  %vm2438 = vweird.f32 %v2432
  %vm2439 = vmor %vm2437, %vm2438
  %v2440 = vsel %vm2439, %v2432, %v2436
  %v2441 = vand.u32 2147483647, %v2410
  %vm2442 = vcmp.eq.f32.partialorder %v2441, 8.507059e+37
  %v2443 = vand.u32 %v2410, 2147483648
  %v2444 = vor.u32 1.1754944e-38, %v2443
  %v2445 = vsel %vm2442, %v2444, %v2440
  %v2446 = vmul.f32 1.0, %v2445
  %v2447 = vrcp.pop %v2411
  %v2448 = vmul.f32 %v2411, %v2447
  %v2449 = vsub.f32 1.0, %v2448
  %v2450 = vmul.f32 %v2447, %v2449
  %v2451 = vadd.f32 %v2447, %v2450
  %vm2452 = vweird.f32 %v2411
  %vm2453 = vweird.f32 %v2447
  %vm2454 = vmor %vm2452, %vm2453
  %v2455 = vsel %vm2454, %v2447, %v2451
  %v2456 = vand.u32 2147483647, %v2411
  %vm2457 = vcmp.eq.f32.partialorder %v2456, 8.507059e+37
  %v2458 = vand.u32 %v2411, 2147483648
  %v2459 = vor.u32 1.1754944e-38, %v2458
  %v2460 = vsel %vm2457, %v2459, %v2455
  %v2461 = vmul.f32 1.0, %v2460
  %v2462 = vrcp.pop %v2412
  %v2463 = vmul.f32 %v2412, %v2462
  %v2464 = vsub.f32 1.0, %v2463
  %v2465 = vmul.f32 %v2462, %v2464
  %v2466 = vadd.f32 %v2462, %v2465
  %vm2467 = vweird.f32 %v2412
  %vm2468 = vweird.f32 %v2462
  %vm2469 = vmor %vm2467, %vm2468
  %v2470 = vsel %vm2469, %v2462, %v2466
  %v2471 = vand.u32 2147483647, %v2412
  %vm2472 = vcmp.eq.f32.partialorder %v2471, 8.507059e+37
  %v2473 = vand.u32 %v2412, 2147483648
  %v2474 = vor.u32 1.1754944e-38, %v2473
  %v2475 = vsel %vm2472, %v2474, %v2470
  %v2476 = vmul.f32 1.0, %v2475
  %v2477 = vrcp.pop %v2413
  %v2478 = vmul.f32 %v2413, %v2477
  %v2479 = vsub.f32 1.0, %v2478
  %v2480 = vmul.f32 %v2477, %v2479
  %v2481 = vadd.f32 %v2477, %v2480
  %vm2482 = vweird.f32 %v2413
  %vm2483 = vweird.f32 %v2477
  %vm2484 = vmor %vm2482, %vm2483
  %v2485 = vsel %vm2484, %v2477, %v2481
  %v2486 = vand.u32 2147483647, %v2413
  %vm2487 = vcmp.eq.f32.partialorder %v2486, 8.507059e+37
  %v2488 = vand.u32 %v2413, 2147483648
  %v2489 = vor.u32 1.1754944e-38, %v2488
  %v2490 = vsel %vm2487, %v2489, %v2485
  %v2491 = vmul.f32 1.0, %v2490
  %v2492 = vrcp.pop %v2414
  %v2493 = vmul.f32 %v2414, %v2492
  %v2494 = vsub.f32 1.0, %v2493
  %v2495 = vmul.f32 %v2492, %v2494
  %v2496 = vadd.f32 %v2492, %v2495
  %vm2497 = vweird.f32 %v2414
  %vm2498 = vweird.f32 %v2492
  %vm2499 = vmor %vm2497, %vm2498
  %v2500 = vsel %vm2499, %v2492, %v2496
  %v2501 = vand.u32 2147483647, %v2414
  %vm2502 = vcmp.eq.f32.partialorder %v2501, 8.507059e+37
  %v2503 = vand.u32 %v2414, 2147483648
  %v2504 = vor.u32 1.1754944e-38, %v2503
  %v2505 = vsel %vm2502, %v2504, %v2500
  %v2506 = vmul.f32 1.0, %v2505
  %v2507 = vrcp.pop %v2415
  %v2508 = vmul.f32 %v2415, %v2507
  %v2509 = vsub.f32 1.0, %v2508
  %v2510 = vmul.f32 %v2507, %v2509
  %v2511 = vadd.f32 %v2507, %v2510
  %vm2512 = vweird.f32 %v2415
  %vm2513 = vweird.f32 %v2507
  %vm2514 = vmor %vm2512, %vm2513
  %v2515 = vsel %vm2514, %v2507, %v2511
  %v2516 = vand.u32 2147483647, %v2415
  %vm2517 = vcmp.eq.f32.partialorder %v2516, 8.507059e+37
  %v2518 = vand.u32 %v2415, 2147483648
  %v2519 = vor.u32 1.1754944e-38, %v2518
  %v2520 = vsel %vm2517, %v2519, %v2515
  %v2521 = vmul.f32 1.0, %v2520
  %v2522 = vrcp.pop %v2416
  %v2523 = vmul.f32 %v2416, %v2522
  %v2524 = vsub.f32 1.0, %v2523
  %v2525 = vmul.f32 %v2522, %v2524
  %v2526 = vadd.f32 %v2522, %v2525
  %vm2527 = vweird.f32 %v2416
  %vm2528 = vweird.f32 %v2522
  %vm2529 = vmor %vm2527, %vm2528
  %v2530 = vsel %vm2529, %v2522, %v2526
  %v2531 = vand.u32 2147483647, %v2416
  %vm2532 = vcmp.eq.f32.partialorder %v2531, 8.507059e+37
  %v2533 = vand.u32 %v2416, 2147483648
  %v2534 = vor.u32 1.1754944e-38, %v2533
  %v2535 = vsel %vm2532, %v2534, %v2530
  %v2536 = vmul.f32 1.0, %v2535
  %2537 = vrot.lane.b32.xlu0 %v2358, 64
  %v2538 = vpop.permute.xlu0 %2537
  %2539 = vrot.lane.b32.xlu0 %v2362, 64
  %v2540 = vpop.permute.xlu0 %2539
  %2541 = vrot.lane.b32.xlu0 %v2363, 64
  %v2542 = vpop.permute.xlu0 %2541
  %2543 = vrot.lane.b32.xlu0 %v2364, 64
  %v2544 = vpop.permute.xlu0 %2543
  %2545 = vrot.lane.b32.xlu0 %v2365, 64
  %v2546 = vpop.permute.xlu0 %2545
  %2547 = vrot.lane.b32.xlu0 %v2366, 64
  %v2548 = vpop.permute.xlu0 %2547
  %2549 = vrot.lane.b32.xlu0 %v2367, 64
  %v2550 = vpop.permute.xlu0 %2549
  %2551 = vrot.lane.b32.xlu0 %v2368, 64
  %v2552 = vpop.permute.xlu0 %2551
  %v2561 = vmul.f32 %v2431, %v2538
  %v2562 = vmul.f32 %v2446, %v2540
  %v2563 = vmul.f32 %v2461, %v2542
  %v2564 = vmul.f32 %v2476, %v2544
  %v2565 = vmul.f32 %v2491, %v2546
  %v2566 = vmul.f32 %v2506, %v2548
  %v2567 = vmul.f32 %v2521, %v2550
  %v2568 = vmul.f32 %v2536, %v2552
  %2577 = vrot.lane.b32.xlu0 %v2561, 64
  %v2578 = vpop.permute.xlu0 %2577
  %2579 = vrot.lane.b32.xlu0 %v2562, 64
  %v2580 = vpop.permute.xlu0 %2579
  %2581 = vrot.lane.b32.xlu0 %v2563, 64
  %v2582 = vpop.permute.xlu0 %2581
  %2583 = vrot.lane.b32.xlu0 %v2564, 64
  %v2584 = vpop.permute.xlu0 %2583
  %2585 = vrot.lane.b32.xlu0 %v2565, 64
  %v2586 = vpop.permute.xlu0 %2585
  %2587 = vrot.lane.b32.xlu0 %v2566, 64
  %v2588 = vpop.permute.xlu0 %2587
  %2589 = vrot.lane.b32.xlu0 %v2567, 64
  %v2590 = vpop.permute.xlu0 %2589
  %2591 = vrot.lane.b32.xlu0 %v2568, 64
  %v2592 = vpop.permute.xlu0 %2591
  %v2601 = vadd.f32 %v2336, %v2578
  %v2602 = vadd.f32 %v2337, %v2580
  %v2603 = vadd.f32 %v2338, %v2582
  %v2604 = vadd.f32 %v2339, %v2584
  %v2605 = vadd.f32 %v2340, %v2586
  %v2606 = vadd.f32 %v2341, %v2588
  %v2607 = vadd.f32 %v2342, %v2590
  %v2608 = vadd.f32 %v2343, %v2592
  %v2609 = vtanh.pop %v2601
  %v2610 = vtanh.pop %v2602
  %v2611 = vtanh.pop %v2603
  %v2612 = vtanh.pop %v2604
  %v2613 = vtanh.pop %v2605
  %v2614 = vtanh.pop %v2606
  %v2615 = vtanh.pop %v2607
  %v2616 = vtanh.pop %v2608
  %v2617 = vsub.f32 1.0, %v2431
  %v2618 = vsub.f32 1.0, %v2446
  %v2619 = vsub.f32 1.0, %v2461
  %v2620 = vsub.f32 1.0, %v2476
  %v2621 = vsub.f32 1.0, %v2491
  %v2622 = vsub.f32 1.0, %v2506
  %v2623 = vsub.f32 1.0, %v2521
  %v2624 = vsub.f32 1.0, %v2536
  %2633 = vrot.lane.b32.xlu0 %v2609, 96
  %v2634 = vpop.permute.xlu0 %2633
  %2635 = vrot.lane.b32.xlu0 %v2610, 96
  %v2636 = vpop.permute.xlu0 %2635
  %2637 = vrot.lane.b32.xlu0 %v2611, 96
  %v2638 = vpop.permute.xlu0 %2637
  %2639 = vrot.lane.b32.xlu0 %v2612, 96
  %v2640 = vpop.permute.xlu0 %2639
  %2641 = vrot.lane.b32.xlu0 %v2613, 96
  %v2642 = vpop.permute.xlu0 %2641
  %2643 = vrot.lane.b32.xlu0 %v2614, 96
  %v2644 = vpop.permute.xlu0 %2643
  %2645 = vrot.lane.b32.xlu0 %v2615, 96
  %v2646 = vpop.permute.xlu0 %2645
  %2647 = vrot.lane.b32.xlu0 %v2616, 96
  %v2648 = vpop.permute.xlu0 %2647
  %v2657 = vmul.f32 %v2617, %v2634
  %v2658 = vmul.f32 %v2618, %v2636
  %v2659 = vmul.f32 %v2619, %v2638
  %v2660 = vmul.f32 %v2620, %v2640
  %v2661 = vmul.f32 %v2621, %v2642
  %v2662 = vmul.f32 %v2622, %v2644
  %v2663 = vmul.f32 %v2623, %v2646
  %v2664 = vmul.f32 %v2624, %v2648
  %v2666 = vrot.slane %v2335, 1
  %v2667 = vrot.slane %v2335, 2
  %v2668 = vrot.slane %v2335, 3
  %v2669 = vrot.slane %v2335, 4
  %v2670 = vrot.slane %v2335, 5
  %v2671 = vrot.slane %v2335, 6
  %v2672 = vrot.slane %v2335, 7
  %2673 = vrot.lane.b32.xlu0 %v2335, 32
  %v2674 = vpop.permute.xlu0 %2673
  %2675 = vrot.lane.b32.xlu0 %v2666, 32
  %v2676 = vpop.permute.xlu0 %2675
  %2677 = vrot.lane.b32.xlu0 %v2667, 32
  %v2678 = vpop.permute.xlu0 %2677
  %2679 = vrot.lane.b32.xlu0 %v2668, 32
  %v2680 = vpop.permute.xlu0 %2679
  %2681 = vrot.lane.b32.xlu0 %v2669, 32
  %v2682 = vpop.permute.xlu0 %2681
  %2683 = vrot.lane.b32.xlu0 %v2670, 32
  %v2684 = vpop.permute.xlu0 %2683
  %2685 = vrot.lane.b32.xlu0 %v2671, 32
  %v2686 = vpop.permute.xlu0 %2685
  %2687 = vrot.lane.b32.xlu0 %v2672, 32
  %v2688 = vpop.permute.xlu0 %2687
  %v2697 = vmul.f32 %v2431, %v2674
  %v2698 = vmul.f32 %v2446, %v2676
  %v2699 = vmul.f32 %v2461, %v2678
  %v2700 = vmul.f32 %v2476, %v2680
  %v2701 = vmul.f32 %v2491, %v2682
  %v2702 = vmul.f32 %v2506, %v2684
  %v2703 = vmul.f32 %v2521, %v2686
  %v2704 = vmul.f32 %v2536, %v2688
  %v2705 = vadd.f32 %v2657, %v2697
  %v2706 = vadd.f32 %v2658, %v2698
  %v2707 = vadd.f32 %v2659, %v2699
  %v2708 = vadd.f32 %v2660, %v2700
  %v2709 = vadd.f32 %v2661, %v2701
  %v2710 = vadd.f32 %v2662, %v2702
  %v2711 = vadd.f32 %v2663, %v2703
  %v2712 = vadd.f32 %v2664, %v2704
  %vm2713 = vcmp.gt.s32.totalorder %v178, 5
  %v2714 = vsel %vm2713, 1, 0
  %2715 = vset.pattern.permute.xlu0 0
  %2716 = vperm.xlu0 %2715, %v2714
  %v2717 = vpop.permute.xlu0 %2716
  %vm2718 = vcmp.eq.s32.totalorder %v2717, 1
  %v2727 = vrot.slane %v2706, 7
  %v2728 = vsel %vm564, %v2727, %v2705
  %v2729 = vrot.slane %v2707, 6
  %v2730 = vsel %vm567, %v2729, %v2728
  %v2731 = vrot.slane %v2708, 5
  %v2732 = vsel %vm570, %v2731, %v2730
  %v2733 = vrot.slane %v2709, 4
  %v2734 = vsel %vm573, %v2733, %v2732
  %v2735 = vrot.slane %v2710, 3
  %v2736 = vsel %vm576, %v2735, %v2734
  %v2737 = vrot.slane %v2711, 2
  %v2738 = vsel %vm579, %v2737, %v2736
  %v2739 = vrot.slane %v2712, 1
  %v2740 = vsel %vm582, %v2739, %v2738
  %2741 = vrot.lane.b32.xlu0 %v2740, 96
  %v2742 = vpop.permute.xlu0 %2741
  %v2744 = vsel %vm2718, %v2742, 0.0
  %v2746 = vrot.slane %v2744, 1
  %v2747 = vrot.slane %v2744, 2
  %v2748 = vrot.slane %v2744, 3
  %v2749 = vrot.slane %v2744, 4
  %v2750 = vrot.slane %v2744, 5
  %v2751 = vrot.slane %v2744, 6
  %v2752 = vrot.slane %v2744, 7
  %2760 = vst.msk [vmem:[%s12 + $0x5] sm:$0x1] %vm603, %v2744
  %2761 = vst.msk [vmem:[%s12 + $0xd] sm:$0x1] %vm603, %v2746
  %2762 = vst.msk [vmem:[%s12 + $0x15] sm:$0x1] %vm603, %v2747
  %2763 = vst.msk [vmem:[%s12 + $0x1d] sm:$0x1] %vm603, %v2748
  %2764 = vst.msk [vmem:[%s12 + $0x25] sm:$0x1] %vm603, %v2749
  %2765 = vst.msk [vmem:[%s12 + $0x2d] sm:$0x1] %vm603, %v2750
  %2766 = vst.msk [vmem:[%s12 + $0x35] sm:$0x1] %vm603, %v2751
  %2767 = vst.msk [vmem:[%s12 + $0x3d] sm:$0x1] %vm603, %v2752
  %v2768 = vsel %vm2718, %v2742, %v2335
  %v2769 = vld [vmem:[#allocation2 + $0x6] ss:$0 sm:$0xff]
  %v2770 = vld [vmem:[#allocation2 + $0x16] ss:$0 sm:$0xff]
  %v2771 = vld [vmem:[#allocation2 + $0x26] ss:$0 sm:$0xff]
  %v2772 = vld [vmem:[#allocation2 + $0x36] ss:$0 sm:$0xff]
  %v2773 = vld [vmem:[#allocation2 + $0x46] ss:$0 sm:$0xff]
  %v2774 = vld [vmem:[#allocation2 + $0x56] ss:$0 sm:$0xff]
  %v2775 = vld [vmem:[#allocation2 + $0x66] ss:$0 sm:$0xff]
  %v2776 = vld [vmem:[#allocation2 + $0x76] ss:$0 sm:$0xff]
  %v2777 = vpack.c.bf16 %v2768, %v2768
  %v2779 = vsel %vm212, %v2777, 0
  %2781 = vmatpush.bf16.msra.mxu0 0
  %2782 = vmatpush.bf16.msra.mxu0 0
  %2783 = vmatpush.bf16.msra.mxu0 0
  %2784 = vmatpush.bf16.msra.mxu0 0
  %2785 = vmatpush.bf16.msra.mxu0 0
  %2786 = vmatpush.bf16.msra.mxu0 0
  %2787 = vmatpush.bf16.msra.mxu0 %v209
  %2788 = vmatpush.bf16.msra.mxu0 %v208
  %2789 = vmatmul.bf16.gmra.mxu0 %v2779
  %v2790 = vpop.f32.mrf.mxu0
  %v2791 = vadd.f32 %v198, %v2790
  %v2792 = vpop.f32.mrf.mxu0
  %2793 = vdwg.mxu0
  %v2795 = vrot.slane %v2791, 1
  %v2796 = vrot.slane %v2791, 2
  %v2797 = vrot.slane %v2791, 3
  %v2798 = vrot.slane %v2791, 4
  %v2799 = vrot.slane %v2791, 5
  %v2800 = vrot.slane %v2791, 6
  %v2801 = vrot.slane %v2791, 7
  %v2810 = vadd.f32 %v2769, %v2791
  %v2811 = vadd.f32 %v2770, %v2795
  %v2812 = vadd.f32 %v2771, %v2796
  %v2813 = vadd.f32 %v2772, %v2797
  %v2814 = vadd.f32 %v2773, %v2798
  %v2815 = vadd.f32 %v2774, %v2799
  %v2816 = vadd.f32 %v2775, %v2800
  %v2817 = vadd.f32 %v2776, %v2801
  %v2818 = vxor.u32 %v2810, 2147483648
  %v2819 = vxor.u32 %v2811, 2147483648
  %v2820 = vxor.u32 %v2812, 2147483648
  %v2821 = vxor.u32 %v2813, 2147483648
  %v2822 = vxor.u32 %v2814, 2147483648
  %v2823 = vxor.u32 %v2815, 2147483648
  %v2824 = vxor.u32 %v2816, 2147483648
  %v2825 = vxor.u32 %v2817, 2147483648
  %v2826 = vmul.f32 %v2818, 1.442695
  %v2827 = vpow.pop %v2826
  %v2828 = vmul.f32 %v2819, 1.442695
  %v2829 = vpow.pop %v2828
  %v2830 = vmul.f32 %v2820, 1.442695
  %v2831 = vpow.pop %v2830
  %v2832 = vmul.f32 %v2821, 1.442695
  %v2833 = vpow.pop %v2832
  %v2834 = vmul.f32 %v2822, 1.442695
  %v2835 = vpow.pop %v2834
  %v2836 = vmul.f32 %v2823, 1.442695
  %v2837 = vpow.pop %v2836
  %v2838 = vmul.f32 %v2824, 1.442695
  %v2839 = vpow.pop %v2838
  %v2840 = vmul.f32 %v2825, 1.442695
  %v2841 = vpow.pop %v2840
  %v2842 = vadd.f32 %v2827, 1.0
  %v2843 = vadd.f32 %v2829, 1.0
  %v2844 = vadd.f32 %v2831, 1.0
  %v2845 = vadd.f32 %v2833, 1.0
  %v2846 = vadd.f32 %v2835, 1.0
  %v2847 = vadd.f32 %v2837, 1.0
  %v2848 = vadd.f32 %v2839, 1.0
  %v2849 = vadd.f32 %v2841, 1.0
  %v2850 = vrcp.pop %v2842
  %v2851 = vmul.f32 %v2842, %v2850
  %v2852 = vsub.f32 1.0, %v2851
  %v2853 = vmul.f32 %v2850, %v2852
  %v2854 = vadd.f32 %v2850, %v2853
  %vm2855 = vweird.f32 %v2842
  %vm2856 = vweird.f32 %v2850
  %vm2857 = vmor %vm2855, %vm2856
  %v2858 = vsel %vm2857, %v2850, %v2854
  %v2859 = vand.u32 2147483647, %v2842
  %vm2860 = vcmp.eq.f32.partialorder %v2859, 8.507059e+37
  %v2861 = vand.u32 %v2842, 2147483648
  %v2862 = vor.u32 1.1754944e-38, %v2861
  %v2863 = vsel %vm2860, %v2862, %v2858
  %v2864 = vmul.f32 1.0, %v2863
  %v2865 = vrcp.pop %v2843
  %v2866 = vmul.f32 %v2843, %v2865
  %v2867 = vsub.f32 1.0, %v2866
  %v2868 = vmul.f32 %v2865, %v2867
  %v2869 = vadd.f32 %v2865, %v2868
  %vm2870 = vweird.f32 %v2843
  %vm2871 = vweird.f32 %v2865
  %vm2872 = vmor %vm2870, %vm2871
  %v2873 = vsel %vm2872, %v2865, %v2869
  %v2874 = vand.u32 2147483647, %v2843
  %vm2875 = vcmp.eq.f32.partialorder %v2874, 8.507059e+37
  %v2876 = vand.u32 %v2843, 2147483648
  %v2877 = vor.u32 1.1754944e-38, %v2876
  %v2878 = vsel %vm2875, %v2877, %v2873
  %v2879 = vmul.f32 1.0, %v2878
  %v2880 = vrcp.pop %v2844
  %v2881 = vmul.f32 %v2844, %v2880
  %v2882 = vsub.f32 1.0, %v2881
  %v2883 = vmul.f32 %v2880, %v2882
  %v2884 = vadd.f32 %v2880, %v2883
  %vm2885 = vweird.f32 %v2844
  %vm2886 = vweird.f32 %v2880
  %vm2887 = vmor %vm2885, %vm2886
  %v2888 = vsel %vm2887, %v2880, %v2884
  %v2889 = vand.u32 2147483647, %v2844
  %vm2890 = vcmp.eq.f32.partialorder %v2889, 8.507059e+37
  %v2891 = vand.u32 %v2844, 2147483648
  %v2892 = vor.u32 1.1754944e-38, %v2891
  %v2893 = vsel %vm2890, %v2892, %v2888
  %v2894 = vmul.f32 1.0, %v2893
  %v2895 = vrcp.pop %v2845
  %v2896 = vmul.f32 %v2845, %v2895
  %v2897 = vsub.f32 1.0, %v2896
  %v2898 = vmul.f32 %v2895, %v2897
  %v2899 = vadd.f32 %v2895, %v2898
  %vm2900 = vweird.f32 %v2845
  %vm2901 = vweird.f32 %v2895
  %vm2902 = vmor %vm2900, %vm2901
  %v2903 = vsel %vm2902, %v2895, %v2899
  %v2904 = vand.u32 2147483647, %v2845
  %vm2905 = vcmp.eq.f32.partialorder %v2904, 8.507059e+37
  %v2906 = vand.u32 %v2845, 2147483648
  %v2907 = vor.u32 1.1754944e-38, %v2906
  %v2908 = vsel %vm2905, %v2907, %v2903
  %v2909 = vmul.f32 1.0, %v2908
  %v2910 = vrcp.pop %v2846
  %v2911 = vmul.f32 %v2846, %v2910
  %v2912 = vsub.f32 1.0, %v2911
  %v2913 = vmul.f32 %v2910, %v2912
  %v2914 = vadd.f32 %v2910, %v2913
  %vm2915 = vweird.f32 %v2846
  %vm2916 = vweird.f32 %v2910
  %vm2917 = vmor %vm2915, %vm2916
  %v2918 = vsel %vm2917, %v2910, %v2914
  %v2919 = vand.u32 2147483647, %v2846
  %vm2920 = vcmp.eq.f32.partialorder %v2919, 8.507059e+37
  %v2921 = vand.u32 %v2846, 2147483648
  %v2922 = vor.u32 1.1754944e-38, %v2921
  %v2923 = vsel %vm2920, %v2922, %v2918
  %v2924 = vmul.f32 1.0, %v2923
  %v2925 = vrcp.pop %v2847
  %v2926 = vmul.f32 %v2847, %v2925
  %v2927 = vsub.f32 1.0, %v2926
  %v2928 = vmul.f32 %v2925, %v2927
  %v2929 = vadd.f32 %v2925, %v2928
  %vm2930 = vweird.f32 %v2847
  %vm2931 = vweird.f32 %v2925
  %vm2932 = vmor %vm2930, %vm2931
  %v2933 = vsel %vm2932, %v2925, %v2929
  %v2934 = vand.u32 2147483647, %v2847
  %vm2935 = vcmp.eq.f32.partialorder %v2934, 8.507059e+37
  %v2936 = vand.u32 %v2847, 2147483648
  %v2937 = vor.u32 1.1754944e-38, %v2936
  %v2938 = vsel %vm2935, %v2937, %v2933
  %v2939 = vmul.f32 1.0, %v2938
  %v2940 = vrcp.pop %v2848
  %v2941 = vmul.f32 %v2848, %v2940
  %v2942 = vsub.f32 1.0, %v2941
  %v2943 = vmul.f32 %v2940, %v2942
  %v2944 = vadd.f32 %v2940, %v2943
  %vm2945 = vweird.f32 %v2848
  %vm2946 = vweird.f32 %v2940
  %vm2947 = vmor %vm2945, %vm2946
  %v2948 = vsel %vm2947, %v2940, %v2944
  %v2949 = vand.u32 2147483647, %v2848
  %vm2950 = vcmp.eq.f32.partialorder %v2949, 8.507059e+37
  %v2951 = vand.u32 %v2848, 2147483648
  %v2952 = vor.u32 1.1754944e-38, %v2951
  %v2953 = vsel %vm2950, %v2952, %v2948
  %v2954 = vmul.f32 1.0, %v2953
  %v2955 = vrcp.pop %v2849
  %v2956 = vmul.f32 %v2849, %v2955
  %v2957 = vsub.f32 1.0, %v2956
  %v2958 = vmul.f32 %v2955, %v2957
  %v2959 = vadd.f32 %v2955, %v2958
  %vm2960 = vweird.f32 %v2849
  %vm2961 = vweird.f32 %v2955
  %vm2962 = vmor %vm2960, %vm2961
  %v2963 = vsel %vm2962, %v2955, %v2959
  %v2964 = vand.u32 2147483647, %v2849
  %vm2965 = vcmp.eq.f32.partialorder %v2964, 8.507059e+37
  %v2966 = vand.u32 %v2849, 2147483648
  %v2967 = vor.u32 1.1754944e-38, %v2966
  %v2968 = vsel %vm2965, %v2967, %v2963
  %v2969 = vmul.f32 1.0, %v2968
  %2970 = vrot.lane.b32.xlu0 %v2791, 64
  %v2971 = vpop.permute.xlu0 %2970
  %2972 = vrot.lane.b32.xlu0 %v2795, 64
  %v2973 = vpop.permute.xlu0 %2972
  %2974 = vrot.lane.b32.xlu0 %v2796, 64
  %v2975 = vpop.permute.xlu0 %2974
  %2976 = vrot.lane.b32.xlu0 %v2797, 64
  %v2977 = vpop.permute.xlu0 %2976
  %2978 = vrot.lane.b32.xlu0 %v2798, 64
  %v2979 = vpop.permute.xlu0 %2978
  %2980 = vrot.lane.b32.xlu0 %v2799, 64
  %v2981 = vpop.permute.xlu0 %2980
  %2982 = vrot.lane.b32.xlu0 %v2800, 64
  %v2983 = vpop.permute.xlu0 %2982
  %2984 = vrot.lane.b32.xlu0 %v2801, 64
  %v2985 = vpop.permute.xlu0 %2984
  %v2994 = vmul.f32 %v2864, %v2971
  %v2995 = vmul.f32 %v2879, %v2973
  %v2996 = vmul.f32 %v2894, %v2975
  %v2997 = vmul.f32 %v2909, %v2977
  %v2998 = vmul.f32 %v2924, %v2979
  %v2999 = vmul.f32 %v2939, %v2981
  %v3000 = vmul.f32 %v2954, %v2983
  %v3001 = vmul.f32 %v2969, %v2985
  %3010 = vrot.lane.b32.xlu0 %v2994, 64
  %v3011 = vpop.permute.xlu0 %3010
  %3012 = vrot.lane.b32.xlu0 %v2995, 64
  %v3013 = vpop.permute.xlu0 %3012
  %3014 = vrot.lane.b32.xlu0 %v2996, 64
  %v3015 = vpop.permute.xlu0 %3014
  %3016 = vrot.lane.b32.xlu0 %v2997, 64
  %v3017 = vpop.permute.xlu0 %3016
  %3018 = vrot.lane.b32.xlu0 %v2998, 64
  %v3019 = vpop.permute.xlu0 %3018
  %3020 = vrot.lane.b32.xlu0 %v2999, 64
  %v3021 = vpop.permute.xlu0 %3020
  %3022 = vrot.lane.b32.xlu0 %v3000, 64
  %v3023 = vpop.permute.xlu0 %3022
  %3024 = vrot.lane.b32.xlu0 %v3001, 64
  %v3025 = vpop.permute.xlu0 %3024
  %v3034 = vadd.f32 %v2769, %v3011
  %v3035 = vadd.f32 %v2770, %v3013
  %v3036 = vadd.f32 %v2771, %v3015
  %v3037 = vadd.f32 %v2772, %v3017
  %v3038 = vadd.f32 %v2773, %v3019
  %v3039 = vadd.f32 %v2774, %v3021
  %v3040 = vadd.f32 %v2775, %v3023
  %v3041 = vadd.f32 %v2776, %v3025
  %v3042 = vtanh.pop %v3034
  %v3043 = vtanh.pop %v3035
  %v3044 = vtanh.pop %v3036
  %v3045 = vtanh.pop %v3037
  %v3046 = vtanh.pop %v3038
  %v3047 = vtanh.pop %v3039
  %v3048 = vtanh.pop %v3040
  %v3049 = vtanh.pop %v3041
  %v3050 = vsub.f32 1.0, %v2864
  %v3051 = vsub.f32 1.0, %v2879
  %v3052 = vsub.f32 1.0, %v2894
  %v3053 = vsub.f32 1.0, %v2909
  %v3054 = vsub.f32 1.0, %v2924
  %v3055 = vsub.f32 1.0, %v2939
  %v3056 = vsub.f32 1.0, %v2954
  %v3057 = vsub.f32 1.0, %v2969
  %3066 = vrot.lane.b32.xlu0 %v3042, 96
  %v3067 = vpop.permute.xlu0 %3066
  %3068 = vrot.lane.b32.xlu0 %v3043, 96
  %v3069 = vpop.permute.xlu0 %3068
  %3070 = vrot.lane.b32.xlu0 %v3044, 96
  %v3071 = vpop.permute.xlu0 %3070
  %3072 = vrot.lane.b32.xlu0 %v3045, 96
  %v3073 = vpop.permute.xlu0 %3072
  %3074 = vrot.lane.b32.xlu0 %v3046, 96
  %v3075 = vpop.permute.xlu0 %3074
  %3076 = vrot.lane.b32.xlu0 %v3047, 96
  %v3077 = vpop.permute.xlu0 %3076
  %3078 = vrot.lane.b32.xlu0 %v3048, 96
  %v3079 = vpop.permute.xlu0 %3078
  %3080 = vrot.lane.b32.xlu0 %v3049, 96
  %v3081 = vpop.permute.xlu0 %3080
  %v3090 = vmul.f32 %v3050, %v3067
  %v3091 = vmul.f32 %v3051, %v3069
  %v3092 = vmul.f32 %v3052, %v3071
  %v3093 = vmul.f32 %v3053, %v3073
  %v3094 = vmul.f32 %v3054, %v3075
  %v3095 = vmul.f32 %v3055, %v3077
  %v3096 = vmul.f32 %v3056, %v3079
  %v3097 = vmul.f32 %v3057, %v3081
  %v3099 = vrot.slane %v2768, 1
  %v3100 = vrot.slane %v2768, 2
  %v3101 = vrot.slane %v2768, 3
  %v3102 = vrot.slane %v2768, 4
  %v3103 = vrot.slane %v2768, 5
  %v3104 = vrot.slane %v2768, 6
  %v3105 = vrot.slane %v2768, 7
  %3106 = vrot.lane.b32.xlu0 %v2768, 32
  %v3107 = vpop.permute.xlu0 %3106
  %3108 = vrot.lane.b32.xlu0 %v3099, 32
  %v3109 = vpop.permute.xlu0 %3108
  %3110 = vrot.lane.b32.xlu0 %v3100, 32
  %v3111 = vpop.permute.xlu0 %3110
  %3112 = vrot.lane.b32.xlu0 %v3101, 32
  %v3113 = vpop.permute.xlu0 %3112
  %3114 = vrot.lane.b32.xlu0 %v3102, 32
  %v3115 = vpop.permute.xlu0 %3114
  %3116 = vrot.lane.b32.xlu0 %v3103, 32
  %v3117 = vpop.permute.xlu0 %3116
  %3118 = vrot.lane.b32.xlu0 %v3104, 32
  %v3119 = vpop.permute.xlu0 %3118
  %3120 = vrot.lane.b32.xlu0 %v3105, 32
  %v3121 = vpop.permute.xlu0 %3120
  %v3130 = vmul.f32 %v2864, %v3107
  %v3131 = vmul.f32 %v2879, %v3109
  %v3132 = vmul.f32 %v2894, %v3111
  %v3133 = vmul.f32 %v2909, %v3113
  %v3134 = vmul.f32 %v2924, %v3115
  %v3135 = vmul.f32 %v2939, %v3117
  %v3136 = vmul.f32 %v2954, %v3119
  %v3137 = vmul.f32 %v2969, %v3121
  %v3138 = vadd.f32 %v3090, %v3130
  %v3139 = vadd.f32 %v3091, %v3131
  %v3140 = vadd.f32 %v3092, %v3132
  %v3141 = vadd.f32 %v3093, %v3133
  %v3142 = vadd.f32 %v3094, %v3134
  %v3143 = vadd.f32 %v3095, %v3135
  %v3144 = vadd.f32 %v3096, %v3136
  %v3145 = vadd.f32 %v3097, %v3137
  %vm3146 = vcmp.gt.s32.totalorder %v178, 6
  %v3147 = vsel %vm3146, 1, 0
  %3148 = vset.pattern.permute.xlu0 0
  %3149 = vperm.xlu0 %3148, %v3147
  %v3150 = vpop.permute.xlu0 %3149
  %vm3151 = vcmp.eq.s32.totalorder %v3150, 1
  %v3160 = vrot.slane %v3139, 7
  %v3161 = vsel %vm564, %v3160, %v3138
  %v3162 = vrot.slane %v3140, 6
  %v3163 = vsel %vm567, %v3162, %v3161
  %v3164 = vrot.slane %v3141, 5
  %v3165 = vsel %vm570, %v3164, %v3163
  %v3166 = vrot.slane %v3142, 4
  %v3167 = vsel %vm573, %v3166, %v3165
  %v3168 = vrot.slane %v3143, 3
  %v3169 = vsel %vm576, %v3168, %v3167
  %v3170 = vrot.slane %v3144, 2
  %v3171 = vsel %vm579, %v3170, %v3169
  %v3172 = vrot.slane %v3145, 1
  %v3173 = vsel %vm582, %v3172, %v3171
  %3174 = vrot.lane.b32.xlu0 %v3173, 96
  %v3175 = vpop.permute.xlu0 %3174
  %v3177 = vsel %vm3151, %v3175, 0.0
  %v3179 = vrot.slane %v3177, 1
  %v3180 = vrot.slane %v3177, 2
  %v3181 = vrot.slane %v3177, 3
  %v3182 = vrot.slane %v3177, 4
  %v3183 = vrot.slane %v3177, 5
  %v3184 = vrot.slane %v3177, 6
  %v3185 = vrot.slane %v3177, 7
  %3193 = vst.msk [vmem:[%s12 + $0x6] sm:$0x1] %vm603, %v3177
  %3194 = vst.msk [vmem:[%s12 + $0xe] sm:$0x1] %vm603, %v3179
  %3195 = vst.msk [vmem:[%s12 + $0x16] sm:$0x1] %vm603, %v3180
  %3196 = vst.msk [vmem:[%s12 + $0x1e] sm:$0x1] %vm603, %v3181
  %3197 = vst.msk [vmem:[%s12 + $0x26] sm:$0x1] %vm603, %v3182
  %3198 = vst.msk [vmem:[%s12 + $0x2e] sm:$0x1] %vm603, %v3183
  %3199 = vst.msk [vmem:[%s12 + $0x36] sm:$0x1] %vm603, %v3184
  %3200 = vst.msk [vmem:[%s12 + $0x3e] sm:$0x1] %vm603, %v3185
  %v3201 = vsel %vm3151, %v3175, %v2768
  %v3202 = vld [vmem:[#allocation2 + $0x7] ss:$0 sm:$0xff]
  %v3203 = vld [vmem:[#allocation2 + $0x17] ss:$0 sm:$0xff]
  %v3204 = vld [vmem:[#allocation2 + $0x27] ss:$0 sm:$0xff]
  %v3205 = vld [vmem:[#allocation2 + $0x37] ss:$0 sm:$0xff]
  %v3206 = vld [vmem:[#allocation2 + $0x47] ss:$0 sm:$0xff]
  %v3207 = vld [vmem:[#allocation2 + $0x57] ss:$0 sm:$0xff]
  %v3208 = vld [vmem:[#allocation2 + $0x67] ss:$0 sm:$0xff]
  %v3209 = vld [vmem:[#allocation2 + $0x77] ss:$0 sm:$0xff]
  %v3210 = vpack.c.bf16 %v3201, %v3201
  %v3212 = vsel %vm212, %v3210, 0
  %3214 = vmatpush.bf16.msra.mxu0 0
  %3215 = vmatpush.bf16.msra.mxu0 0
  %3216 = vmatpush.bf16.msra.mxu0 0
  %3217 = vmatpush.bf16.msra.mxu0 0
  %3218 = vmatpush.bf16.msra.mxu0 0
  %3219 = vmatpush.bf16.msra.mxu0 0
  %3220 = vmatpush.bf16.msra.mxu0 %v209
  %3221 = vmatpush.bf16.msra.mxu0 %v208
  %3222 = vmatmul.bf16.gmra.mxu0 %v3212
  %v3223 = vpop.f32.mrf.mxu0
  %v3224 = vadd.f32 %v198, %v3223
  %v3225 = vpop.f32.mrf.mxu0
  %3226 = vdwg.mxu0
  %v3228 = vrot.slane %v3224, 1
  %v3229 = vrot.slane %v3224, 2
  %v3230 = vrot.slane %v3224, 3
  %v3231 = vrot.slane %v3224, 4
  %v3232 = vrot.slane %v3224, 5
  %v3233 = vrot.slane %v3224, 6
  %v3234 = vrot.slane %v3224, 7
  %v3243 = vadd.f32 %v3202, %v3224
  %v3244 = vadd.f32 %v3203, %v3228
  %v3245 = vadd.f32 %v3204, %v3229
  %v3246 = vadd.f32 %v3205, %v3230
  %v3247 = vadd.f32 %v3206, %v3231
  %v3248 = vadd.f32 %v3207, %v3232
  %v3249 = vadd.f32 %v3208, %v3233
  %v3250 = vadd.f32 %v3209, %v3234
  %v3251 = vxor.u32 %v3243, 2147483648
  %v3252 = vxor.u32 %v3244, 2147483648
  %v3253 = vxor.u32 %v3245, 2147483648
  %v3254 = vxor.u32 %v3246, 2147483648
  %v3255 = vxor.u32 %v3247, 2147483648
  %v3256 = vxor.u32 %v3248, 2147483648
  %v3257 = vxor.u32 %v3249, 2147483648
  %v3258 = vxor.u32 %v3250, 2147483648
  %v3259 = vmul.f32 %v3251, 1.442695
  %v3260 = vpow.pop %v3259
  %v3261 = vmul.f32 %v3252, 1.442695
  %v3262 = vpow.pop %v3261
  %v3263 = vmul.f32 %v3253, 1.442695
  %v3264 = vpow.pop %v3263
  %v3265 = vmul.f32 %v3254, 1.442695
  %v3266 = vpow.pop %v3265
  %v3267 = vmul.f32 %v3255, 1.442695
  %v3268 = vpow.pop %v3267
  %v3269 = vmul.f32 %v3256, 1.442695
  %v3270 = vpow.pop %v3269
  %v3271 = vmul.f32 %v3257, 1.442695
  %v3272 = vpow.pop %v3271
  %v3273 = vmul.f32 %v3258, 1.442695
  %v3274 = vpow.pop %v3273
  %v3275 = vadd.f32 %v3260, 1.0
  %v3276 = vadd.f32 %v3262, 1.0
  %v3277 = vadd.f32 %v3264, 1.0
  %v3278 = vadd.f32 %v3266, 1.0
  %v3279 = vadd.f32 %v3268, 1.0
  %v3280 = vadd.f32 %v3270, 1.0
  %v3281 = vadd.f32 %v3272, 1.0
  %v3282 = vadd.f32 %v3274, 1.0
  %v3283 = vrcp.pop %v3275
  %v3284 = vmul.f32 %v3275, %v3283
  %v3285 = vsub.f32 1.0, %v3284
  %v3286 = vmul.f32 %v3283, %v3285
  %v3287 = vadd.f32 %v3283, %v3286
  %vm3288 = vweird.f32 %v3275
  %vm3289 = vweird.f32 %v3283
  %vm3290 = vmor %vm3288, %vm3289
  %v3291 = vsel %vm3290, %v3283, %v3287
  %v3292 = vand.u32 2147483647, %v3275
  %vm3293 = vcmp.eq.f32.partialorder %v3292, 8.507059e+37
  %v3294 = vand.u32 %v3275, 2147483648
  %v3295 = vor.u32 1.1754944e-38, %v3294
  %v3296 = vsel %vm3293, %v3295, %v3291
  %v3297 = vmul.f32 1.0, %v3296
  %v3298 = vrcp.pop %v3276
  %v3299 = vmul.f32 %v3276, %v3298
  %v3300 = vsub.f32 1.0, %v3299
  %v3301 = vmul.f32 %v3298, %v3300
  %v3302 = vadd.f32 %v3298, %v3301
  %vm3303 = vweird.f32 %v3276
  %vm3304 = vweird.f32 %v3298
  %vm3305 = vmor %vm3303, %vm3304
  %v3306 = vsel %vm3305, %v3298, %v3302
  %v3307 = vand.u32 2147483647, %v3276
  %vm3308 = vcmp.eq.f32.partialorder %v3307, 8.507059e+37
  %v3309 = vand.u32 %v3276, 2147483648
  %v3310 = vor.u32 1.1754944e-38, %v3309
  %v3311 = vsel %vm3308, %v3310, %v3306
  %v3312 = vmul.f32 1.0, %v3311
  %v3313 = vrcp.pop %v3277
  %v3314 = vmul.f32 %v3277, %v3313
  %v3315 = vsub.f32 1.0, %v3314
  %v3316 = vmul.f32 %v3313, %v3315
  %v3317 = vadd.f32 %v3313, %v3316
  %vm3318 = vweird.f32 %v3277
  %vm3319 = vweird.f32 %v3313
  %vm3320 = vmor %vm3318, %vm3319
  %v3321 = vsel %vm3320, %v3313, %v3317
  %v3322 = vand.u32 2147483647, %v3277
  %vm3323 = vcmp.eq.f32.partialorder %v3322, 8.507059e+37
  %v3324 = vand.u32 %v3277, 2147483648
  %v3325 = vor.u32 1.1754944e-38, %v3324
  %v3326 = vsel %vm3323, %v3325, %v3321
  %v3327 = vmul.f32 1.0, %v3326
  %v3328 = vrcp.pop %v3278
  %v3329 = vmul.f32 %v3278, %v3328
  %v3330 = vsub.f32 1.0, %v3329
  %v3331 = vmul.f32 %v3328, %v3330
  %v3332 = vadd.f32 %v3328, %v3331
  %vm3333 = vweird.f32 %v3278
  %vm3334 = vweird.f32 %v3328
  %vm3335 = vmor %vm3333, %vm3334
  %v3336 = vsel %vm3335, %v3328, %v3332
  %v3337 = vand.u32 2147483647, %v3278
  %vm3338 = vcmp.eq.f32.partialorder %v3337, 8.507059e+37
  %v3339 = vand.u32 %v3278, 2147483648
  %v3340 = vor.u32 1.1754944e-38, %v3339
  %v3341 = vsel %vm3338, %v3340, %v3336
  %v3342 = vmul.f32 1.0, %v3341
  %v3343 = vrcp.pop %v3279
  %v3344 = vmul.f32 %v3279, %v3343
  %v3345 = vsub.f32 1.0, %v3344
  %v3346 = vmul.f32 %v3343, %v3345
  %v3347 = vadd.f32 %v3343, %v3346
  %vm3348 = vweird.f32 %v3279
  %vm3349 = vweird.f32 %v3343
  %vm3350 = vmor %vm3348, %vm3349
  %v3351 = vsel %vm3350, %v3343, %v3347
  %v3352 = vand.u32 2147483647, %v3279
  %vm3353 = vcmp.eq.f32.partialorder %v3352, 8.507059e+37
  %v3354 = vand.u32 %v3279, 2147483648
  %v3355 = vor.u32 1.1754944e-38, %v3354
  %v3356 = vsel %vm3353, %v3355, %v3351
  %v3357 = vmul.f32 1.0, %v3356
  %v3358 = vrcp.pop %v3280
  %v3359 = vmul.f32 %v3280, %v3358
  %v3360 = vsub.f32 1.0, %v3359
  %v3361 = vmul.f32 %v3358, %v3360
  %v3362 = vadd.f32 %v3358, %v3361
  %vm3363 = vweird.f32 %v3280
  %vm3364 = vweird.f32 %v3358
  %vm3365 = vmor %vm3363, %vm3364
  %v3366 = vsel %vm3365, %v3358, %v3362
  %v3367 = vand.u32 2147483647, %v3280
  %vm3368 = vcmp.eq.f32.partialorder %v3367, 8.507059e+37
  %v3369 = vand.u32 %v3280, 2147483648
  %v3370 = vor.u32 1.1754944e-38, %v3369
  %v3371 = vsel %vm3368, %v3370, %v3366
  %v3372 = vmul.f32 1.0, %v3371
  %v3373 = vrcp.pop %v3281
  %v3374 = vmul.f32 %v3281, %v3373
  %v3375 = vsub.f32 1.0, %v3374
  %v3376 = vmul.f32 %v3373, %v3375
  %v3377 = vadd.f32 %v3373, %v3376
  %vm3378 = vweird.f32 %v3281
  %vm3379 = vweird.f32 %v3373
  %vm3380 = vmor %vm3378, %vm3379
  %v3381 = vsel %vm3380, %v3373, %v3377
  %v3382 = vand.u32 2147483647, %v3281
  %vm3383 = vcmp.eq.f32.partialorder %v3382, 8.507059e+37
  %v3384 = vand.u32 %v3281, 2147483648
  %v3385 = vor.u32 1.1754944e-38, %v3384
  %v3386 = vsel %vm3383, %v3385, %v3381
  %v3387 = vmul.f32 1.0, %v3386
  %v3388 = vrcp.pop %v3282
  %v3389 = vmul.f32 %v3282, %v3388
  %v3390 = vsub.f32 1.0, %v3389
  %v3391 = vmul.f32 %v3388, %v3390
  %v3392 = vadd.f32 %v3388, %v3391
  %vm3393 = vweird.f32 %v3282
  %vm3394 = vweird.f32 %v3388
  %vm3395 = vmor %vm3393, %vm3394
  %v3396 = vsel %vm3395, %v3388, %v3392
  %v3397 = vand.u32 2147483647, %v3282
  %vm3398 = vcmp.eq.f32.partialorder %v3397, 8.507059e+37
  %v3399 = vand.u32 %v3282, 2147483648
  %v3400 = vor.u32 1.1754944e-38, %v3399
  %v3401 = vsel %vm3398, %v3400, %v3396
  %v3402 = vmul.f32 1.0, %v3401
  %3403 = vrot.lane.b32.xlu0 %v3224, 64
  %v3404 = vpop.permute.xlu0 %3403
  %3405 = vrot.lane.b32.xlu0 %v3228, 64
  %v3406 = vpop.permute.xlu0 %3405
  %3407 = vrot.lane.b32.xlu0 %v3229, 64
  %v3408 = vpop.permute.xlu0 %3407
  %3409 = vrot.lane.b32.xlu0 %v3230, 64
  %v3410 = vpop.permute.xlu0 %3409
  %3411 = vrot.lane.b32.xlu0 %v3231, 64
  %v3412 = vpop.permute.xlu0 %3411
  %3413 = vrot.lane.b32.xlu0 %v3232, 64
  %v3414 = vpop.permute.xlu0 %3413
  %3415 = vrot.lane.b32.xlu0 %v3233, 64
  %v3416 = vpop.permute.xlu0 %3415
  %3417 = vrot.lane.b32.xlu0 %v3234, 64
  %v3418 = vpop.permute.xlu0 %3417
  %v3427 = vmul.f32 %v3297, %v3404
  %v3428 = vmul.f32 %v3312, %v3406
  %v3429 = vmul.f32 %v3327, %v3408
  %v3430 = vmul.f32 %v3342, %v3410
  %v3431 = vmul.f32 %v3357, %v3412
  %v3432 = vmul.f32 %v3372, %v3414
  %v3433 = vmul.f32 %v3387, %v3416
  %v3434 = vmul.f32 %v3402, %v3418
  %3443 = vrot.lane.b32.xlu0 %v3427, 64
  %v3444 = vpop.permute.xlu0 %3443
  %3445 = vrot.lane.b32.xlu0 %v3428, 64
  %v3446 = vpop.permute.xlu0 %3445
  %3447 = vrot.lane.b32.xlu0 %v3429, 64
  %v3448 = vpop.permute.xlu0 %3447
  %3449 = vrot.lane.b32.xlu0 %v3430, 64
  %v3450 = vpop.permute.xlu0 %3449
  %3451 = vrot.lane.b32.xlu0 %v3431, 64
  %v3452 = vpop.permute.xlu0 %3451
  %3453 = vrot.lane.b32.xlu0 %v3432, 64
  %v3454 = vpop.permute.xlu0 %3453
  %3455 = vrot.lane.b32.xlu0 %v3433, 64
  %v3456 = vpop.permute.xlu0 %3455
  %3457 = vrot.lane.b32.xlu0 %v3434, 64
  %v3458 = vpop.permute.xlu0 %3457
  %v3467 = vadd.f32 %v3202, %v3444
  %v3468 = vadd.f32 %v3203, %v3446
  %v3469 = vadd.f32 %v3204, %v3448
  %v3470 = vadd.f32 %v3205, %v3450
  %v3471 = vadd.f32 %v3206, %v3452
  %v3472 = vadd.f32 %v3207, %v3454
  %v3473 = vadd.f32 %v3208, %v3456
  %v3474 = vadd.f32 %v3209, %v3458
  %v3475 = vtanh.pop %v3467
  %v3476 = vtanh.pop %v3468
  %v3477 = vtanh.pop %v3469
  %v3478 = vtanh.pop %v3470
  %v3479 = vtanh.pop %v3471
  %v3480 = vtanh.pop %v3472
  %v3481 = vtanh.pop %v3473
  %v3482 = vtanh.pop %v3474
  %v3483 = vsub.f32 1.0, %v3297
  %v3484 = vsub.f32 1.0, %v3312
  %v3485 = vsub.f32 1.0, %v3327
  %v3486 = vsub.f32 1.0, %v3342
  %v3487 = vsub.f32 1.0, %v3357
  %v3488 = vsub.f32 1.0, %v3372
  %v3489 = vsub.f32 1.0, %v3387
  %v3490 = vsub.f32 1.0, %v3402
  %3499 = vrot.lane.b32.xlu0 %v3475, 96
  %v3500 = vpop.permute.xlu0 %3499
  %3501 = vrot.lane.b32.xlu0 %v3476, 96
  %v3502 = vpop.permute.xlu0 %3501
  %3503 = vrot.lane.b32.xlu0 %v3477, 96
  %v3504 = vpop.permute.xlu0 %3503
  %3505 = vrot.lane.b32.xlu0 %v3478, 96
  %v3506 = vpop.permute.xlu0 %3505
  %3507 = vrot.lane.b32.xlu0 %v3479, 96
  %v3508 = vpop.permute.xlu0 %3507
  %3509 = vrot.lane.b32.xlu0 %v3480, 96
  %v3510 = vpop.permute.xlu0 %3509
  %3511 = vrot.lane.b32.xlu0 %v3481, 96
  %v3512 = vpop.permute.xlu0 %3511
  %3513 = vrot.lane.b32.xlu0 %v3482, 96
  %v3514 = vpop.permute.xlu0 %3513
  %v3523 = vmul.f32 %v3483, %v3500
  %v3524 = vmul.f32 %v3484, %v3502
  %v3525 = vmul.f32 %v3485, %v3504
  %v3526 = vmul.f32 %v3486, %v3506
  %v3527 = vmul.f32 %v3487, %v3508
  %v3528 = vmul.f32 %v3488, %v3510
  %v3529 = vmul.f32 %v3489, %v3512
  %v3530 = vmul.f32 %v3490, %v3514
  %v3532 = vrot.slane %v3201, 1
  %v3533 = vrot.slane %v3201, 2
  %v3534 = vrot.slane %v3201, 3
  %v3535 = vrot.slane %v3201, 4
  %v3536 = vrot.slane %v3201, 5
  %v3537 = vrot.slane %v3201, 6
  %v3538 = vrot.slane %v3201, 7
  %3539 = vrot.lane.b32.xlu0 %v3201, 32
  %v3540 = vpop.permute.xlu0 %3539
  %3541 = vrot.lane.b32.xlu0 %v3532, 32
  %v3542 = vpop.permute.xlu0 %3541
  %3543 = vrot.lane.b32.xlu0 %v3533, 32
  %v3544 = vpop.permute.xlu0 %3543
  %3545 = vrot.lane.b32.xlu0 %v3534, 32
  %v3546 = vpop.permute.xlu0 %3545
  %3547 = vrot.lane.b32.xlu0 %v3535, 32
  %v3548 = vpop.permute.xlu0 %3547
  %3549 = vrot.lane.b32.xlu0 %v3536, 32
  %v3550 = vpop.permute.xlu0 %3549
  %3551 = vrot.lane.b32.xlu0 %v3537, 32
  %v3552 = vpop.permute.xlu0 %3551
  %3553 = vrot.lane.b32.xlu0 %v3538, 32
  %v3554 = vpop.permute.xlu0 %3553
  %v3563 = vmul.f32 %v3297, %v3540
  %v3564 = vmul.f32 %v3312, %v3542
  %v3565 = vmul.f32 %v3327, %v3544
  %v3566 = vmul.f32 %v3342, %v3546
  %v3567 = vmul.f32 %v3357, %v3548
  %v3568 = vmul.f32 %v3372, %v3550
  %v3569 = vmul.f32 %v3387, %v3552
  %v3570 = vmul.f32 %v3402, %v3554
  %v3571 = vadd.f32 %v3523, %v3563
  %v3572 = vadd.f32 %v3524, %v3564
  %v3573 = vadd.f32 %v3525, %v3565
  %v3574 = vadd.f32 %v3526, %v3566
  %v3575 = vadd.f32 %v3527, %v3567
  %v3576 = vadd.f32 %v3528, %v3568
  %v3577 = vadd.f32 %v3529, %v3569
  %v3578 = vadd.f32 %v3530, %v3570
  %vm3579 = vcmp.gt.s32.totalorder %v178, 7
  %v3580 = vsel %vm3579, 1, 0
  %3581 = vset.pattern.permute.xlu0 0
  %3582 = vperm.xlu0 %3581, %v3580
  %v3583 = vpop.permute.xlu0 %3582
  %vm3584 = vcmp.eq.s32.totalorder %v3583, 1
  %v3593 = vrot.slane %v3572, 7
  %v3594 = vsel %vm564, %v3593, %v3571
  %v3595 = vrot.slane %v3573, 6
  %v3596 = vsel %vm567, %v3595, %v3594
  %v3597 = vrot.slane %v3574, 5
  %v3598 = vsel %vm570, %v3597, %v3596
  %v3599 = vrot.slane %v3575, 4
  %v3600 = vsel %vm573, %v3599, %v3598
  %v3601 = vrot.slane %v3576, 3
  %v3602 = vsel %vm576, %v3601, %v3600
  %v3603 = vrot.slane %v3577, 2
  %v3604 = vsel %vm579, %v3603, %v3602
  %v3605 = vrot.slane %v3578, 1
  %v3606 = vsel %vm582, %v3605, %v3604
  %3607 = vrot.lane.b32.xlu0 %v3606, 96
  %v3608 = vpop.permute.xlu0 %3607
  %v3610 = vsel %vm3584, %v3608, 0.0
  %v3612 = vrot.slane %v3610, 1
  %v3613 = vrot.slane %v3610, 2
  %v3614 = vrot.slane %v3610, 3
  %v3615 = vrot.slane %v3610, 4
  %v3616 = vrot.slane %v3610, 5
  %v3617 = vrot.slane %v3610, 6
  %v3618 = vrot.slane %v3610, 7
  %3626 = vst.msk [vmem:[%s12 + $0x7] sm:$0x1] %vm603, %v3610
  %3627 = vst.msk [vmem:[%s12 + $0xf] sm:$0x1] %vm603, %v3612
  %3628 = vst.msk [vmem:[%s12 + $0x17] sm:$0x1] %vm603, %v3613
  %3629 = vst.msk [vmem:[%s12 + $0x1f] sm:$0x1] %vm603, %v3614
  %3630 = vst.msk [vmem:[%s12 + $0x27] sm:$0x1] %vm603, %v3615
  %3631 = vst.msk [vmem:[%s12 + $0x2f] sm:$0x1] %vm603, %v3616
  %3632 = vst.msk [vmem:[%s12 + $0x37] sm:$0x1] %vm603, %v3617
  %3633 = vst.msk [vmem:[%s12 + $0x3f] sm:$0x1] %vm603, %v3618
  %v3634 = vld [vmem:[#allocation2 + $0x7] ss:$0 sm:$0xff]
  %v3635 = vld [vmem:[#allocation2 + $0xf] ss:$0 sm:$0xff]
  %v3636 = vld [vmem:[#allocation2 + $0x17] ss:$0 sm:$0xff]
  %v3637 = vld [vmem:[#allocation2 + $0x1f] ss:$0 sm:$0xff]
  %v3638 = vld [vmem:[#allocation2 + $0x27] ss:$0 sm:$0xff]
  %v3639 = vld [vmem:[#allocation2 + $0x2f] ss:$0 sm:$0xff]
  %v3640 = vld [vmem:[#allocation2 + $0x37] ss:$0 sm:$0xff]
  %v3641 = vld [vmem:[#allocation2 + $0x3f] ss:$0 sm:$0xff]
  %v3642 = vld [vmem:[#allocation2 + $0x47] ss:$0 sm:$0xff]
  %v3643 = vld [vmem:[#allocation2 + $0x4f] ss:$0 sm:$0xff]
  %v3644 = vld [vmem:[#allocation2 + $0x57] ss:$0 sm:$0xff]
  %v3645 = vld [vmem:[#allocation2 + $0x5f] ss:$0 sm:$0xff]
  %v3646 = vld [vmem:[#allocation2 + $0x67] ss:$0 sm:$0xff]
  %v3647 = vld [vmem:[#allocation2 + $0x6f] ss:$0 sm:$0xff]
  %v3648 = vld [vmem:[#allocation2 + $0x77] ss:$0 sm:$0xff]
  %v3649 = vld [vmem:[#allocation2 + $0x7f] ss:$0 sm:$0xff]
  %v3651 = vperm.slane %v188, 0
  %v3657 = vunpack.c.l.b16 %v184
  %v3658 = vunpack.c.l.b16 %v185
  %v3659 = vunpack.c.l.b16 %v186
  %v3660 = vunpack.c.l.b16 %v187
  %v3661 = vpack.c.b16 %v3658, %v3657
  %v3662 = vpack.c.b16 %v3660, %v3659
  %3665 = vmatpush.bf16.msra.mxu0 0
  %3666 = vmatpush.bf16.msra.mxu0 0
  %3667 = vmatpush.bf16.msra.mxu0 0
  %3668 = vmatpush.bf16.msra.mxu0 0
  %3669 = vmatpush.bf16.msra.mxu0 0
  %3670 = vmatpush.bf16.msra.mxu0 0
  %3671 = vmatpush.bf16.msra.mxu0 %v3662
  %3672 = vmatpush.bf16.msra.mxu0 %v3661
  %3673 = vmatmul.bf16.gmra.mxu0 %v214
  %v3674 = vpop.f32.mrf.mxu0
  %v3675 = vadd.f32 %v3651, %v3674
  %v3676 = vpop.f32.mrf.mxu0
  %3677 = vdwg.mxu0
  %v3679 = vrot.slane %v3675, 1
  %v3680 = vrot.slane %v3675, 2
  %v3681 = vrot.slane %v3675, 3
  %v3682 = vrot.slane %v3675, 4
  %v3683 = vrot.slane %v3675, 5
  %v3684 = vrot.slane %v3675, 6
  %v3685 = vrot.slane %v3675, 7
  %3686 = vrot.lane.b32.xlu0 %v3675, 96
  %v3687 = vpop.permute.xlu0 %3686
  %3688 = vrot.lane.b32.xlu0 %v3679, 96
  %v3689 = vpop.permute.xlu0 %3688
  %3690 = vrot.lane.b32.xlu0 %v3680, 96
  %v3691 = vpop.permute.xlu0 %3690
  %3692 = vrot.lane.b32.xlu0 %v3681, 96
  %v3693 = vpop.permute.xlu0 %3692
  %3694 = vrot.lane.b32.xlu0 %v3682, 96
  %v3695 = vpop.permute.xlu0 %3694
  %3696 = vrot.lane.b32.xlu0 %v3683, 96
  %v3697 = vpop.permute.xlu0 %3696
  %3698 = vrot.lane.b32.xlu0 %v3684, 96
  %v3699 = vpop.permute.xlu0 %3698
  %3700 = vrot.lane.b32.xlu0 %v3685, 96
  %v3701 = vpop.permute.xlu0 %3700
  %v3710 = vadd.f32 %v3634, %v3687
  %v3711 = vadd.f32 %v3635, %v3687
  %v3712 = vadd.f32 %v3636, %v3689
  %v3713 = vadd.f32 %v3637, %v3689
  %v3714 = vadd.f32 %v3638, %v3691
  %v3715 = vadd.f32 %v3639, %v3691
  %v3716 = vadd.f32 %v3640, %v3693
  %v3717 = vadd.f32 %v3641, %v3693
  %v3718 = vadd.f32 %v3642, %v3695
  %v3719 = vadd.f32 %v3643, %v3695
  %v3720 = vadd.f32 %v3644, %v3697
  %v3721 = vadd.f32 %v3645, %v3697
  %v3722 = vadd.f32 %v3646, %v3699
  %v3723 = vadd.f32 %v3647, %v3699
  %v3724 = vadd.f32 %v3648, %v3701
  %v3725 = vadd.f32 %v3649, %v3701
  %v3726 = vxor.u32 %v3710, 2147483648
  %v3727 = vxor.u32 %v3711, 2147483648
  %v3728 = vxor.u32 %v3712, 2147483648
  %v3729 = vxor.u32 %v3713, 2147483648
  %v3730 = vxor.u32 %v3714, 2147483648
  %v3731 = vxor.u32 %v3715, 2147483648
  %v3732 = vxor.u32 %v3716, 2147483648
  %v3733 = vxor.u32 %v3717, 2147483648
  %v3734 = vxor.u32 %v3718, 2147483648
  %v3735 = vxor.u32 %v3719, 2147483648
  %v3736 = vxor.u32 %v3720, 2147483648
  %v3737 = vxor.u32 %v3721, 2147483648
  %v3738 = vxor.u32 %v3722, 2147483648
  %v3739 = vxor.u32 %v3723, 2147483648
  %v3740 = vxor.u32 %v3724, 2147483648
  %v3741 = vxor.u32 %v3725, 2147483648
  %v3742 = vmul.f32 %v3726, 1.442695
  %v3743 = vpow.pop %v3742
  %v3744 = vmul.f32 %v3727, 1.442695
  %v3745 = vpow.pop %v3744
  %v3746 = vmul.f32 %v3728, 1.442695
  %v3747 = vpow.pop %v3746
  %v3748 = vmul.f32 %v3729, 1.442695
  %v3749 = vpow.pop %v3748
  %v3750 = vmul.f32 %v3730, 1.442695
  %v3751 = vpow.pop %v3750
  %v3752 = vmul.f32 %v3731, 1.442695
  %v3753 = vpow.pop %v3752
  %v3754 = vmul.f32 %v3732, 1.442695
  %v3755 = vpow.pop %v3754
  %v3756 = vmul.f32 %v3733, 1.442695
  %v3757 = vpow.pop %v3756
  %v3758 = vmul.f32 %v3734, 1.442695
  %v3759 = vpow.pop %v3758
  %v3760 = vmul.f32 %v3735, 1.442695
  %v3761 = vpow.pop %v3760
  %v3762 = vmul.f32 %v3736, 1.442695
  %v3763 = vpow.pop %v3762
  %v3764 = vmul.f32 %v3737, 1.442695
  %v3765 = vpow.pop %v3764
  %v3766 = vmul.f32 %v3738, 1.442695
  %v3767 = vpow.pop %v3766
  %v3768 = vmul.f32 %v3739, 1.442695
  %v3769 = vpow.pop %v3768
  %v3770 = vmul.f32 %v3740, 1.442695
  %v3771 = vpow.pop %v3770
  %v3772 = vmul.f32 %v3741, 1.442695
  %v3773 = vpow.pop %v3772
  %v3774 = vadd.f32 %v3743, 1.0
  %v3775 = vadd.f32 %v3745, 1.0
  %v3776 = vadd.f32 %v3747, 1.0
  %v3777 = vadd.f32 %v3749, 1.0
  %v3778 = vadd.f32 %v3751, 1.0
  %v3779 = vadd.f32 %v3753, 1.0
  %v3780 = vadd.f32 %v3755, 1.0
  %v3781 = vadd.f32 %v3757, 1.0
  %v3782 = vadd.f32 %v3759, 1.0
  %v3783 = vadd.f32 %v3761, 1.0
  %v3784 = vadd.f32 %v3763, 1.0
  %v3785 = vadd.f32 %v3765, 1.0
  %v3786 = vadd.f32 %v3767, 1.0
  %v3787 = vadd.f32 %v3769, 1.0
  %v3788 = vadd.f32 %v3771, 1.0
  %v3789 = vadd.f32 %v3773, 1.0
  %v3790 = vrcp.pop %v3774
  %v3791 = vmul.f32 %v3774, %v3790
  %v3792 = vsub.f32 1.0, %v3791
  %v3793 = vmul.f32 %v3790, %v3792
  %v3794 = vadd.f32 %v3790, %v3793
  %vm3795 = vweird.f32 %v3774
  %vm3796 = vweird.f32 %v3790
  %vm3797 = vmor %vm3795, %vm3796
  %v3798 = vsel %vm3797, %v3790, %v3794
  %v3799 = vand.u32 2147483647, %v3774
  %vm3800 = vcmp.eq.f32.partialorder %v3799, 8.507059e+37
  %v3801 = vand.u32 %v3774, 2147483648
  %v3802 = vor.u32 1.1754944e-38, %v3801
  %v3803 = vsel %vm3800, %v3802, %v3798
  %v3804 = vmul.f32 1.0, %v3803
  %v3805 = vrcp.pop %v3775
  %v3806 = vmul.f32 %v3775, %v3805
  %v3807 = vsub.f32 1.0, %v3806
  %v3808 = vmul.f32 %v3805, %v3807
  %v3809 = vadd.f32 %v3805, %v3808
  %vm3810 = vweird.f32 %v3775
  %vm3811 = vweird.f32 %v3805
  %vm3812 = vmor %vm3810, %vm3811
  %v3813 = vsel %vm3812, %v3805, %v3809
  %v3814 = vand.u32 2147483647, %v3775
  %vm3815 = vcmp.eq.f32.partialorder %v3814, 8.507059e+37
  %v3816 = vand.u32 %v3775, 2147483648
  %v3817 = vor.u32 1.1754944e-38, %v3816
  %v3818 = vsel %vm3815, %v3817, %v3813
  %v3819 = vmul.f32 1.0, %v3818
  %v3820 = vrcp.pop %v3776
  %v3821 = vmul.f32 %v3776, %v3820
  %v3822 = vsub.f32 1.0, %v3821
  %v3823 = vmul.f32 %v3820, %v3822
  %v3824 = vadd.f32 %v3820, %v3823
  %vm3825 = vweird.f32 %v3776
  %vm3826 = vweird.f32 %v3820
  %vm3827 = vmor %vm3825, %vm3826
  %v3828 = vsel %vm3827, %v3820, %v3824
  %v3829 = vand.u32 2147483647, %v3776
  %vm3830 = vcmp.eq.f32.partialorder %v3829, 8.507059e+37
  %v3831 = vand.u32 %v3776, 2147483648
  %v3832 = vor.u32 1.1754944e-38, %v3831
  %v3833 = vsel %vm3830, %v3832, %v3828
  %v3834 = vmul.f32 1.0, %v3833
  %v3835 = vrcp.pop %v3777
  %v3836 = vmul.f32 %v3777, %v3835
  %v3837 = vsub.f32 1.0, %v3836
  %v3838 = vmul.f32 %v3835, %v3837
  %v3839 = vadd.f32 %v3835, %v3838
  %vm3840 = vweird.f32 %v3777
  %vm3841 = vweird.f32 %v3835
  %vm3842 = vmor %vm3840, %vm3841
  %v3843 = vsel %vm3842, %v3835, %v3839
  %v3844 = vand.u32 2147483647, %v3777
  %vm3845 = vcmp.eq.f32.partialorder %v3844, 8.507059e+37
  %v3846 = vand.u32 %v3777, 2147483648
  %v3847 = vor.u32 1.1754944e-38, %v3846
  %v3848 = vsel %vm3845, %v3847, %v3843
  %v3849 = vmul.f32 1.0, %v3848
  %v3850 = vrcp.pop %v3778
  %v3851 = vmul.f32 %v3778, %v3850
  %v3852 = vsub.f32 1.0, %v3851
  %v3853 = vmul.f32 %v3850, %v3852
  %v3854 = vadd.f32 %v3850, %v3853
  %vm3855 = vweird.f32 %v3778
  %vm3856 = vweird.f32 %v3850
  %vm3857 = vmor %vm3855, %vm3856
  %v3858 = vsel %vm3857, %v3850, %v3854
  %v3859 = vand.u32 2147483647, %v3778
  %vm3860 = vcmp.eq.f32.partialorder %v3859, 8.507059e+37
  %v3861 = vand.u32 %v3778, 2147483648
  %v3862 = vor.u32 1.1754944e-38, %v3861
  %v3863 = vsel %vm3860, %v3862, %v3858
  %v3864 = vmul.f32 1.0, %v3863
  %v3865 = vrcp.pop %v3779
  %v3866 = vmul.f32 %v3779, %v3865
  %v3867 = vsub.f32 1.0, %v3866
  %v3868 = vmul.f32 %v3865, %v3867
  %v3869 = vadd.f32 %v3865, %v3868
  %vm3870 = vweird.f32 %v3779
  %vm3871 = vweird.f32 %v3865
  %vm3872 = vmor %vm3870, %vm3871
  %v3873 = vsel %vm3872, %v3865, %v3869
  %v3874 = vand.u32 2147483647, %v3779
  %vm3875 = vcmp.eq.f32.partialorder %v3874, 8.507059e+37
  %v3876 = vand.u32 %v3779, 2147483648
  %v3877 = vor.u32 1.1754944e-38, %v3876
  %v3878 = vsel %vm3875, %v3877, %v3873
  %v3879 = vmul.f32 1.0, %v3878
  %v3880 = vrcp.pop %v3780
  %v3881 = vmul.f32 %v3780, %v3880
  %v3882 = vsub.f32 1.0, %v3881
  %v3883 = vmul.f32 %v3880, %v3882
  %v3884 = vadd.f32 %v3880, %v3883
  %vm3885 = vweird.f32 %v3780
  %vm3886 = vweird.f32 %v3880
  %vm3887 = vmor %vm3885, %vm3886
  %v3888 = vsel %vm3887, %v3880, %v3884
  %v3889 = vand.u32 2147483647, %v3780
  %vm3890 = vcmp.eq.f32.partialorder %v3889, 8.507059e+37
  %v3891 = vand.u32 %v3780, 2147483648
  %v3892 = vor.u32 1.1754944e-38, %v3891
  %v3893 = vsel %vm3890, %v3892, %v3888
  %v3894 = vmul.f32 1.0, %v3893
  %v3895 = vrcp.pop %v3781
  %v3896 = vmul.f32 %v3781, %v3895
  %v3897 = vsub.f32 1.0, %v3896
  %v3898 = vmul.f32 %v3895, %v3897
  %v3899 = vadd.f32 %v3895, %v3898
  %vm3900 = vweird.f32 %v3781
  %vm3901 = vweird.f32 %v3895
  %vm3902 = vmor %vm3900, %vm3901
  %v3903 = vsel %vm3902, %v3895, %v3899
  %v3904 = vand.u32 2147483647, %v3781
  %vm3905 = vcmp.eq.f32.partialorder %v3904, 8.507059e+37
  %v3906 = vand.u32 %v3781, 2147483648
  %v3907 = vor.u32 1.1754944e-38, %v3906
  %v3908 = vsel %vm3905, %v3907, %v3903
  %v3909 = vmul.f32 1.0, %v3908
  %v3910 = vrcp.pop %v3782
  %v3911 = vmul.f32 %v3782, %v3910
  %v3912 = vsub.f32 1.0, %v3911
  %v3913 = vmul.f32 %v3910, %v3912
  %v3914 = vadd.f32 %v3910, %v3913
  %vm3915 = vweird.f32 %v3782
  %vm3916 = vweird.f32 %v3910
  %vm3917 = vmor %vm3915, %vm3916
  %v3918 = vsel %vm3917, %v3910, %v3914
  %v3919 = vand.u32 2147483647, %v3782
  %vm3920 = vcmp.eq.f32.partialorder %v3919, 8.507059e+37
  %v3921 = vand.u32 %v3782, 2147483648
  %v3922 = vor.u32 1.1754944e-38, %v3921
  %v3923 = vsel %vm3920, %v3922, %v3918
  %v3924 = vmul.f32 1.0, %v3923
  %v3925 = vrcp.pop %v3783
  %v3926 = vmul.f32 %v3783, %v3925
  %v3927 = vsub.f32 1.0, %v3926
  %v3928 = vmul.f32 %v3925, %v3927
  %v3929 = vadd.f32 %v3925, %v3928
  %vm3930 = vweird.f32 %v3783
  %vm3931 = vweird.f32 %v3925
  %vm3932 = vmor %vm3930, %vm3931
  %v3933 = vsel %vm3932, %v3925, %v3929
  %v3934 = vand.u32 2147483647, %v3783
  %vm3935 = vcmp.eq.f32.partialorder %v3934, 8.507059e+37
  %v3936 = vand.u32 %v3783, 2147483648
  %v3937 = vor.u32 1.1754944e-38, %v3936
  %v3938 = vsel %vm3935, %v3937, %v3933
  %v3939 = vmul.f32 1.0, %v3938
  %v3940 = vrcp.pop %v3784
  %v3941 = vmul.f32 %v3784, %v3940
  %v3942 = vsub.f32 1.0, %v3941
  %v3943 = vmul.f32 %v3940, %v3942
  %v3944 = vadd.f32 %v3940, %v3943
  %vm3945 = vweird.f32 %v3784
  %vm3946 = vweird.f32 %v3940
  %vm3947 = vmor %vm3945, %vm3946
  %v3948 = vsel %vm3947, %v3940, %v3944
  %v3949 = vand.u32 2147483647, %v3784
  %vm3950 = vcmp.eq.f32.partialorder %v3949, 8.507059e+37
  %v3951 = vand.u32 %v3784, 2147483648
  %v3952 = vor.u32 1.1754944e-38, %v3951
  %v3953 = vsel %vm3950, %v3952, %v3948
  %v3954 = vmul.f32 1.0, %v3953
  %v3955 = vrcp.pop %v3785
  %v3956 = vmul.f32 %v3785, %v3955
  %v3957 = vsub.f32 1.0, %v3956
  %v3958 = vmul.f32 %v3955, %v3957
  %v3959 = vadd.f32 %v3955, %v3958
  %vm3960 = vweird.f32 %v3785
  %vm3961 = vweird.f32 %v3955
  %vm3962 = vmor %vm3960, %vm3961
  %v3963 = vsel %vm3962, %v3955, %v3959
  %v3964 = vand.u32 2147483647, %v3785
  %vm3965 = vcmp.eq.f32.partialorder %v3964, 8.507059e+37
  %v3966 = vand.u32 %v3785, 2147483648
  %v3967 = vor.u32 1.1754944e-38, %v3966
  %v3968 = vsel %vm3965, %v3967, %v3963
  %v3969 = vmul.f32 1.0, %v3968
  %v3970 = vrcp.pop %v3786
  %v3971 = vmul.f32 %v3786, %v3970
  %v3972 = vsub.f32 1.0, %v3971
  %v3973 = vmul.f32 %v3970, %v3972
  %v3974 = vadd.f32 %v3970, %v3973
  %vm3975 = vweird.f32 %v3786
  %vm3976 = vweird.f32 %v3970
  %vm3977 = vmor %vm3975, %vm3976
  %v3978 = vsel %vm3977, %v3970, %v3974
  %v3979 = vand.u32 2147483647, %v3786
  %vm3980 = vcmp.eq.f32.partialorder %v3979, 8.507059e+37
  %v3981 = vand.u32 %v3786, 2147483648
  %v3982 = vor.u32 1.1754944e-38, %v3981
  %v3983 = vsel %vm3980, %v3982, %v3978
  %v3984 = vmul.f32 1.0, %v3983
  %v3985 = vrcp.pop %v3787
  %v3986 = vmul.f32 %v3787, %v3985
  %v3987 = vsub.f32 1.0, %v3986
  %v3988 = vmul.f32 %v3985, %v3987
  %v3989 = vadd.f32 %v3985, %v3988
  %vm3990 = vweird.f32 %v3787
  %vm3991 = vweird.f32 %v3985
  %vm3992 = vmor %vm3990, %vm3991
  %v3993 = vsel %vm3992, %v3985, %v3989
  %v3994 = vand.u32 2147483647, %v3787
  %vm3995 = vcmp.eq.f32.partialorder %v3994, 8.507059e+37
  %v3996 = vand.u32 %v3787, 2147483648
  %v3997 = vor.u32 1.1754944e-38, %v3996
  %v3998 = vsel %vm3995, %v3997, %v3993
  %v3999 = vmul.f32 1.0, %v3998
  %v4000 = vrcp.pop %v3788
  %v4001 = vmul.f32 %v3788, %v4000
  %v4002 = vsub.f32 1.0, %v4001
  %v4003 = vmul.f32 %v4000, %v4002
  %v4004 = vadd.f32 %v4000, %v4003
  %vm4005 = vweird.f32 %v3788
  %vm4006 = vweird.f32 %v4000
  %vm4007 = vmor %vm4005, %vm4006
  %v4008 = vsel %vm4007, %v4000, %v4004
  %v4009 = vand.u32 2147483647, %v3788
  %vm4010 = vcmp.eq.f32.partialorder %v4009, 8.507059e+37
  %v4011 = vand.u32 %v3788, 2147483648
  %v4012 = vor.u32 1.1754944e-38, %v4011
  %v4013 = vsel %vm4010, %v4012, %v4008
  %v4014 = vmul.f32 1.0, %v4013
  %v4015 = vrcp.pop %v3789
  %v4016 = vmul.f32 %v3789, %v4015
  %v4017 = vsub.f32 1.0, %v4016
  %v4018 = vmul.f32 %v4015, %v4017
  %v4019 = vadd.f32 %v4015, %v4018
  %vm4020 = vweird.f32 %v3789
  %vm4021 = vweird.f32 %v4015
  %vm4022 = vmor %vm4020, %vm4021
  %v4023 = vsel %vm4022, %v4015, %v4019
  %v4024 = vand.u32 2147483647, %v3789
  %vm4025 = vcmp.eq.f32.partialorder %v4024, 8.507059e+37
  %v4026 = vand.u32 %v3789, 2147483648
  %v4027 = vor.u32 1.1754944e-38, %v4026
  %v4028 = vsel %vm4025, %v4027, %v4023
  %v4029 = vmul.f32 1.0, %v4028
  %4030 = vrot.lane.b32.xlu0 %v3675, 32
  %v4031 = vpop.permute.xlu0 %4030
  %4032 = vrot.lane.b32.xlu0 %v3679, 32
  %v4033 = vpop.permute.xlu0 %4032
  %4034 = vrot.lane.b32.xlu0 %v3680, 32
  %v4035 = vpop.permute.xlu0 %4034
  %4036 = vrot.lane.b32.xlu0 %v3681, 32
  %v4037 = vpop.permute.xlu0 %4036
  %4038 = vrot.lane.b32.xlu0 %v3682, 32
  %v4039 = vpop.permute.xlu0 %4038
  %4040 = vrot.lane.b32.xlu0 %v3683, 32
  %v4041 = vpop.permute.xlu0 %4040
  %4042 = vrot.lane.b32.xlu0 %v3684, 32
  %v4043 = vpop.permute.xlu0 %4042
  %4044 = vrot.lane.b32.xlu0 %v3685, 32
  %v4045 = vpop.permute.xlu0 %4044
  %v4054 = vmul.f32 %v3804, %v4031
  %v4055 = vmul.f32 %v3834, %v4033
  %v4056 = vmul.f32 %v3864, %v4035
  %v4057 = vmul.f32 %v3894, %v4037
  %v4058 = vmul.f32 %v3924, %v4039
  %v4059 = vmul.f32 %v3954, %v4041
  %v4060 = vmul.f32 %v3984, %v4043
  %v4061 = vmul.f32 %v4014, %v4045
  %4070 = vrot.lane.b32.xlu0 %v4054, 64
  %v4071 = vpop.permute.xlu0 %4070
  %4072 = vrot.lane.b32.xlu0 %v4055, 64
  %v4073 = vpop.permute.xlu0 %4072
  %4074 = vrot.lane.b32.xlu0 %v4056, 64
  %v4075 = vpop.permute.xlu0 %4074
  %4076 = vrot.lane.b32.xlu0 %v4057, 64
  %v4077 = vpop.permute.xlu0 %4076
  %4078 = vrot.lane.b32.xlu0 %v4058, 64
  %v4079 = vpop.permute.xlu0 %4078
  %4080 = vrot.lane.b32.xlu0 %v4059, 64
  %v4081 = vpop.permute.xlu0 %4080
  %4082 = vrot.lane.b32.xlu0 %v4060, 64
  %v4083 = vpop.permute.xlu0 %4082
  %4084 = vrot.lane.b32.xlu0 %v4061, 64
  %v4085 = vpop.permute.xlu0 %4084
  %v4094 = vadd.f32 %v3635, %v4071
  %v4095 = vadd.f32 %v3637, %v4073
  %v4096 = vadd.f32 %v3639, %v4075
  %v4097 = vadd.f32 %v3641, %v4077
  %v4098 = vadd.f32 %v3643, %v4079
  %v4099 = vadd.f32 %v3645, %v4081
  %v4100 = vadd.f32 %v3647, %v4083
  %v4101 = vadd.f32 %v3649, %v4085
  %v4102 = vtanh.pop %v4094
  %v4103 = vtanh.pop %v4095
  %v4104 = vtanh.pop %v4096
  %v4105 = vtanh.pop %v4097
  %v4106 = vtanh.pop %v4098
  %v4107 = vtanh.pop %v4099
  %v4108 = vtanh.pop %v4100
  %v4109 = vtanh.pop %v4101
  %v4110 = vsub.f32 1.0, %v3819
  %v4111 = vsub.f32 1.0, %v3849
  %v4112 = vsub.f32 1.0, %v3879
  %v4113 = vsub.f32 1.0, %v3909
  %v4114 = vsub.f32 1.0, %v3939
  %v4115 = vsub.f32 1.0, %v3969
  %v4116 = vsub.f32 1.0, %v3999
  %v4117 = vsub.f32 1.0, %v4029
  %4126 = vrot.lane.b32.xlu0 %v4102, 96
  %v4127 = vpop.permute.xlu0 %4126
  %4128 = vrot.lane.b32.xlu0 %v4103, 96
  %v4129 = vpop.permute.xlu0 %4128
  %4130 = vrot.lane.b32.xlu0 %v4104, 96
  %v4131 = vpop.permute.xlu0 %4130
  %4132 = vrot.lane.b32.xlu0 %v4105, 96
  %v4133 = vpop.permute.xlu0 %4132
  %4134 = vrot.lane.b32.xlu0 %v4106, 96
  %v4135 = vpop.permute.xlu0 %4134
  %4136 = vrot.lane.b32.xlu0 %v4107, 96
  %v4137 = vpop.permute.xlu0 %4136
  %4138 = vrot.lane.b32.xlu0 %v4108, 96
  %v4139 = vpop.permute.xlu0 %4138
  %4140 = vrot.lane.b32.xlu0 %v4109, 96
  %v4141 = vpop.permute.xlu0 %4140
  %v4150 = vmul.f32 %v4110, %v4127
  %v4151 = vmul.f32 %v4111, %v4129
  %v4152 = vmul.f32 %v4112, %v4131
  %v4153 = vmul.f32 %v4113, %v4133
  %v4154 = vmul.f32 %v4114, %v4135
  %v4155 = vmul.f32 %v4115, %v4137
  %v4156 = vmul.f32 %v4116, %v4139
  %v4157 = vmul.f32 %v4117, %v4141
  %v4158 = vmul.f32 %v3819, 0.0
  %v4159 = vmul.f32 %v3849, 0.0
  %v4160 = vmul.f32 %v3879, 0.0
  %v4161 = vmul.f32 %v3909, 0.0
  %v4162 = vmul.f32 %v3939, 0.0
  %v4163 = vmul.f32 %v3969, 0.0
  %v4164 = vmul.f32 %v3999, 0.0
  %v4165 = vmul.f32 %v4029, 0.0
  %v4166 = vadd.f32 %v4150, %v4158
  %v4167 = vadd.f32 %v4151, %v4159
  %v4168 = vadd.f32 %v4152, %v4160
  %v4169 = vadd.f32 %v4153, %v4161
  %v4170 = vadd.f32 %v4154, %v4162
  %v4171 = vadd.f32 %v4155, %v4163
  %v4172 = vadd.f32 %v4156, %v4164
  %v4173 = vadd.f32 %v4157, %v4165
  %v4182 = vrot.slane %v4167, 7
  %v4183 = vsel %vm564, %v4182, %v4166
  %v4184 = vrot.slane %v4168, 6
  %v4185 = vsel %vm567, %v4184, %v4183
  %v4186 = vrot.slane %v4169, 5
  %v4187 = vsel %vm570, %v4186, %v4185
  %v4188 = vrot.slane %v4170, 4
  %v4189 = vsel %vm573, %v4188, %v4187
  %v4190 = vrot.slane %v4171, 3
  %v4191 = vsel %vm576, %v4190, %v4189
  %v4192 = vrot.slane %v4172, 2
  %v4193 = vsel %vm579, %v4192, %v4191
  %v4194 = vrot.slane %v4173, 1
  %v4195 = vsel %vm582, %v4194, %v4193
  %v4197 = vsel %vm3584, %v4195, 0.0
  %v4199 = vrot.slane %v4197, 1
  %v4200 = vrot.slane %v4197, 2
  %v4201 = vrot.slane %v4197, 3
  %v4202 = vrot.slane %v4197, 4
  %v4203 = vrot.slane %v4197, 5
  %v4204 = vrot.slane %v4197, 6
  %v4205 = vrot.slane %v4197, 7
  %v4206 = vperm.slane %v4197, 0
  %v4207 = vperm.slane %v4199, 0
  %v4208 = vperm.slane %v4200, 0
  %v4209 = vperm.slane %v4201, 0
  %v4210 = vperm.slane %v4202, 0
  %v4211 = vperm.slane %v4203, 0
  %v4212 = vperm.slane %v4204, 0
  %v4213 = vperm.slane %v4205, 0
  %4214 = vrot.lane.b32.xlu0 %v4206, 32
  %v4215 = vpop.permute.xlu0 %4214
  %4216 = vrot.lane.b32.xlu0 %v4207, 32
  %v4217 = vpop.permute.xlu0 %4216
  %4218 = vrot.lane.b32.xlu0 %v4208, 32
  %v4219 = vpop.permute.xlu0 %4218
  %4220 = vrot.lane.b32.xlu0 %v4209, 32
  %v4221 = vpop.permute.xlu0 %4220
  %4222 = vrot.lane.b32.xlu0 %v4210, 32
  %v4223 = vpop.permute.xlu0 %4222
  %4224 = vrot.lane.b32.xlu0 %v4211, 32
  %v4225 = vpop.permute.xlu0 %4224
  %4226 = vrot.lane.b32.xlu0 %v4212, 32
  %v4227 = vpop.permute.xlu0 %4226
  %4228 = vrot.lane.b32.xlu0 %v4213, 32
  %v4229 = vpop.permute.xlu0 %4228
  %vm4238 = vcmask 516352
  %4239 = vst.msk [vmem:[%s12 + $0x7] sm:$0x1] %vm4238, %v4215
  %4240 = vst.msk [vmem:[%s12 + $0xf] sm:$0x1] %vm4238, %v4217
  %4241 = vst.msk [vmem:[%s12 + $0x17] sm:$0x1] %vm4238, %v4219
  %4242 = vst.msk [vmem:[%s12 + $0x1f] sm:$0x1] %vm4238, %v4221
  %4243 = vst.msk [vmem:[%s12 + $0x27] sm:$0x1] %vm4238, %v4223
  %4244 = vst.msk [vmem:[%s12 + $0x2f] sm:$0x1] %vm4238, %v4225
  %4245 = vst.msk [vmem:[%s12 + $0x37] sm:$0x1] %vm4238, %v4227
  %4246 = vst.msk [vmem:[%s12 + $0x3f] sm:$0x1] %vm4238, %v4229
  %v4247 = vld [vmem:[#allocation2 + $0x6] ss:$0 sm:$0xff]
  %v4248 = vld [vmem:[#allocation2 + $0xe] ss:$0 sm:$0xff]
  %v4249 = vld [vmem:[#allocation2 + $0x16] ss:$0 sm:$0xff]
  %v4250 = vld [vmem:[#allocation2 + $0x1e] ss:$0 sm:$0xff]
  %v4251 = vld [vmem:[#allocation2 + $0x26] ss:$0 sm:$0xff]
  %v4252 = vld [vmem:[#allocation2 + $0x2e] ss:$0 sm:$0xff]
  %v4253 = vld [vmem:[#allocation2 + $0x36] ss:$0 sm:$0xff]
  %v4254 = vld [vmem:[#allocation2 + $0x3e] ss:$0 sm:$0xff]
  %v4255 = vld [vmem:[#allocation2 + $0x46] ss:$0 sm:$0xff]
  %v4256 = vld [vmem:[#allocation2 + $0x4e] ss:$0 sm:$0xff]
  %v4257 = vld [vmem:[#allocation2 + $0x56] ss:$0 sm:$0xff]
  %v4258 = vld [vmem:[#allocation2 + $0x5e] ss:$0 sm:$0xff]
  %v4259 = vld [vmem:[#allocation2 + $0x66] ss:$0 sm:$0xff]
  %v4260 = vld [vmem:[#allocation2 + $0x6e] ss:$0 sm:$0xff]
  %v4261 = vld [vmem:[#allocation2 + $0x76] ss:$0 sm:$0xff]
  %v4262 = vld [vmem:[#allocation2 + $0x7e] ss:$0 sm:$0xff]
  %v4263 = vpack.c.bf16 %v4197, %v4197
  %v4265 = vsel %vm212, %v4263, 0
  %4267 = vmatpush.bf16.msra.mxu0 0
  %4268 = vmatpush.bf16.msra.mxu0 0
  %4269 = vmatpush.bf16.msra.mxu0 0
  %4270 = vmatpush.bf16.msra.mxu0 0
  %4271 = vmatpush.bf16.msra.mxu0 0
  %4272 = vmatpush.bf16.msra.mxu0 0
  %4273 = vmatpush.bf16.msra.mxu0 %v3662
  %4274 = vmatpush.bf16.msra.mxu0 %v3661
  %4275 = vmatmul.bf16.gmra.mxu0 %v4265
  %v4276 = vpop.f32.mrf.mxu0
  %v4277 = vadd.f32 %v3651, %v4276
  %v4278 = vpop.f32.mrf.mxu0
  %4279 = vdwg.mxu0
  %v4281 = vrot.slane %v4277, 1
  %v4282 = vrot.slane %v4277, 2
  %v4283 = vrot.slane %v4277, 3
  %v4284 = vrot.slane %v4277, 4
  %v4285 = vrot.slane %v4277, 5
  %v4286 = vrot.slane %v4277, 6
  %v4287 = vrot.slane %v4277, 7
  %4288 = vrot.lane.b32.xlu0 %v4277, 96
  %v4289 = vpop.permute.xlu0 %4288
  %4290 = vrot.lane.b32.xlu0 %v4281, 96
  %v4291 = vpop.permute.xlu0 %4290
  %4292 = vrot.lane.b32.xlu0 %v4282, 96
  %v4293 = vpop.permute.xlu0 %4292
  %4294 = vrot.lane.b32.xlu0 %v4283, 96
  %v4295 = vpop.permute.xlu0 %4294
  %4296 = vrot.lane.b32.xlu0 %v4284, 96
  %v4297 = vpop.permute.xlu0 %4296
  %4298 = vrot.lane.b32.xlu0 %v4285, 96
  %v4299 = vpop.permute.xlu0 %4298
  %4300 = vrot.lane.b32.xlu0 %v4286, 96
  %v4301 = vpop.permute.xlu0 %4300
  %4302 = vrot.lane.b32.xlu0 %v4287, 96
  %v4303 = vpop.permute.xlu0 %4302
  %v4312 = vadd.f32 %v4247, %v4289
  %v4313 = vadd.f32 %v4248, %v4289
  %v4314 = vadd.f32 %v4249, %v4291
  %v4315 = vadd.f32 %v4250, %v4291
  %v4316 = vadd.f32 %v4251, %v4293
  %v4317 = vadd.f32 %v4252, %v4293
  %v4318 = vadd.f32 %v4253, %v4295
  %v4319 = vadd.f32 %v4254, %v4295
  %v4320 = vadd.f32 %v4255, %v4297
  %v4321 = vadd.f32 %v4256, %v4297
  %v4322 = vadd.f32 %v4257, %v4299
  %v4323 = vadd.f32 %v4258, %v4299
  %v4324 = vadd.f32 %v4259, %v4301
  %v4325 = vadd.f32 %v4260, %v4301
  %v4326 = vadd.f32 %v4261, %v4303
  %v4327 = vadd.f32 %v4262, %v4303
  %v4328 = vxor.u32 %v4312, 2147483648
  %v4329 = vxor.u32 %v4313, 2147483648
  %v4330 = vxor.u32 %v4314, 2147483648
  %v4331 = vxor.u32 %v4315, 2147483648
  %v4332 = vxor.u32 %v4316, 2147483648
  %v4333 = vxor.u32 %v4317, 2147483648
  %v4334 = vxor.u32 %v4318, 2147483648
  %v4335 = vxor.u32 %v4319, 2147483648
  %v4336 = vxor.u32 %v4320, 2147483648
  %v4337 = vxor.u32 %v4321, 2147483648
  %v4338 = vxor.u32 %v4322, 2147483648
  %v4339 = vxor.u32 %v4323, 2147483648
  %v4340 = vxor.u32 %v4324, 2147483648
  %v4341 = vxor.u32 %v4325, 2147483648
  %v4342 = vxor.u32 %v4326, 2147483648
  %v4343 = vxor.u32 %v4327, 2147483648
  %v4344 = vmul.f32 %v4328, 1.442695
  %v4345 = vpow.pop %v4344
  %v4346 = vmul.f32 %v4329, 1.442695
  %v4347 = vpow.pop %v4346
  %v4348 = vmul.f32 %v4330, 1.442695
  %v4349 = vpow.pop %v4348
  %v4350 = vmul.f32 %v4331, 1.442695
  %v4351 = vpow.pop %v4350
  %v4352 = vmul.f32 %v4332, 1.442695
  %v4353 = vpow.pop %v4352
  %v4354 = vmul.f32 %v4333, 1.442695
  %v4355 = vpow.pop %v4354
  %v4356 = vmul.f32 %v4334, 1.442695
  %v4357 = vpow.pop %v4356
  %v4358 = vmul.f32 %v4335, 1.442695
  %v4359 = vpow.pop %v4358
  %v4360 = vmul.f32 %v4336, 1.442695
  %v4361 = vpow.pop %v4360
  %v4362 = vmul.f32 %v4337, 1.442695
  %v4363 = vpow.pop %v4362
  %v4364 = vmul.f32 %v4338, 1.442695
  %v4365 = vpow.pop %v4364
  %v4366 = vmul.f32 %v4339, 1.442695
  %v4367 = vpow.pop %v4366
  %v4368 = vmul.f32 %v4340, 1.442695
  %v4369 = vpow.pop %v4368
  %v4370 = vmul.f32 %v4341, 1.442695
  %v4371 = vpow.pop %v4370
  %v4372 = vmul.f32 %v4342, 1.442695
  %v4373 = vpow.pop %v4372
  %v4374 = vmul.f32 %v4343, 1.442695
  %v4375 = vpow.pop %v4374
  %v4376 = vadd.f32 %v4345, 1.0
  %v4377 = vadd.f32 %v4347, 1.0
  %v4378 = vadd.f32 %v4349, 1.0
  %v4379 = vadd.f32 %v4351, 1.0
  %v4380 = vadd.f32 %v4353, 1.0
  %v4381 = vadd.f32 %v4355, 1.0
  %v4382 = vadd.f32 %v4357, 1.0
  %v4383 = vadd.f32 %v4359, 1.0
  %v4384 = vadd.f32 %v4361, 1.0
  %v4385 = vadd.f32 %v4363, 1.0
  %v4386 = vadd.f32 %v4365, 1.0
  %v4387 = vadd.f32 %v4367, 1.0
  %v4388 = vadd.f32 %v4369, 1.0
  %v4389 = vadd.f32 %v4371, 1.0
  %v4390 = vadd.f32 %v4373, 1.0
  %v4391 = vadd.f32 %v4375, 1.0
  %v4392 = vrcp.pop %v4376
  %v4393 = vmul.f32 %v4376, %v4392
  %v4394 = vsub.f32 1.0, %v4393
  %v4395 = vmul.f32 %v4392, %v4394
  %v4396 = vadd.f32 %v4392, %v4395
  %vm4397 = vweird.f32 %v4376
  %vm4398 = vweird.f32 %v4392
  %vm4399 = vmor %vm4397, %vm4398
  %v4400 = vsel %vm4399, %v4392, %v4396
  %v4401 = vand.u32 2147483647, %v4376
  %vm4402 = vcmp.eq.f32.partialorder %v4401, 8.507059e+37
  %v4403 = vand.u32 %v4376, 2147483648
  %v4404 = vor.u32 1.1754944e-38, %v4403
  %v4405 = vsel %vm4402, %v4404, %v4400
  %v4406 = vmul.f32 1.0, %v4405
  %v4407 = vrcp.pop %v4377
  %v4408 = vmul.f32 %v4377, %v4407
  %v4409 = vsub.f32 1.0, %v4408
  %v4410 = vmul.f32 %v4407, %v4409
  %v4411 = vadd.f32 %v4407, %v4410
  %vm4412 = vweird.f32 %v4377
  %vm4413 = vweird.f32 %v4407
  %vm4414 = vmor %vm4412, %vm4413
  %v4415 = vsel %vm4414, %v4407, %v4411
  %v4416 = vand.u32 2147483647, %v4377
  %vm4417 = vcmp.eq.f32.partialorder %v4416, 8.507059e+37
  %v4418 = vand.u32 %v4377, 2147483648
  %v4419 = vor.u32 1.1754944e-38, %v4418
  %v4420 = vsel %vm4417, %v4419, %v4415
  %v4421 = vmul.f32 1.0, %v4420
  %v4422 = vrcp.pop %v4378
  %v4423 = vmul.f32 %v4378, %v4422
  %v4424 = vsub.f32 1.0, %v4423
  %v4425 = vmul.f32 %v4422, %v4424
  %v4426 = vadd.f32 %v4422, %v4425
  %vm4427 = vweird.f32 %v4378
  %vm4428 = vweird.f32 %v4422
  %vm4429 = vmor %vm4427, %vm4428
  %v4430 = vsel %vm4429, %v4422, %v4426
  %v4431 = vand.u32 2147483647, %v4378
  %vm4432 = vcmp.eq.f32.partialorder %v4431, 8.507059e+37
  %v4433 = vand.u32 %v4378, 2147483648
  %v4434 = vor.u32 1.1754944e-38, %v4433
  %v4435 = vsel %vm4432, %v4434, %v4430
  %v4436 = vmul.f32 1.0, %v4435
  %v4437 = vrcp.pop %v4379
  %v4438 = vmul.f32 %v4379, %v4437
  %v4439 = vsub.f32 1.0, %v4438
  %v4440 = vmul.f32 %v4437, %v4439
  %v4441 = vadd.f32 %v4437, %v4440
  %vm4442 = vweird.f32 %v4379
  %vm4443 = vweird.f32 %v4437
  %vm4444 = vmor %vm4442, %vm4443
  %v4445 = vsel %vm4444, %v4437, %v4441
  %v4446 = vand.u32 2147483647, %v4379
  %vm4447 = vcmp.eq.f32.partialorder %v4446, 8.507059e+37
  %v4448 = vand.u32 %v4379, 2147483648
  %v4449 = vor.u32 1.1754944e-38, %v4448
  %v4450 = vsel %vm4447, %v4449, %v4445
  %v4451 = vmul.f32 1.0, %v4450
  %v4452 = vrcp.pop %v4380
  %v4453 = vmul.f32 %v4380, %v4452
  %v4454 = vsub.f32 1.0, %v4453
  %v4455 = vmul.f32 %v4452, %v4454
  %v4456 = vadd.f32 %v4452, %v4455
  %vm4457 = vweird.f32 %v4380
  %vm4458 = vweird.f32 %v4452
  %vm4459 = vmor %vm4457, %vm4458
  %v4460 = vsel %vm4459, %v4452, %v4456
  %v4461 = vand.u32 2147483647, %v4380
  %vm4462 = vcmp.eq.f32.partialorder %v4461, 8.507059e+37
  %v4463 = vand.u32 %v4380, 2147483648
  %v4464 = vor.u32 1.1754944e-38, %v4463
  %v4465 = vsel %vm4462, %v4464, %v4460
  %v4466 = vmul.f32 1.0, %v4465
  %v4467 = vrcp.pop %v4381
  %v4468 = vmul.f32 %v4381, %v4467
  %v4469 = vsub.f32 1.0, %v4468
  %v4470 = vmul.f32 %v4467, %v4469
  %v4471 = vadd.f32 %v4467, %v4470
  %vm4472 = vweird.f32 %v4381
  %vm4473 = vweird.f32 %v4467
  %vm4474 = vmor %vm4472, %vm4473
  %v4475 = vsel %vm4474, %v4467, %v4471
  %v4476 = vand.u32 2147483647, %v4381
  %vm4477 = vcmp.eq.f32.partialorder %v4476, 8.507059e+37
  %v4478 = vand.u32 %v4381, 2147483648
  %v4479 = vor.u32 1.1754944e-38, %v4478
  %v4480 = vsel %vm4477, %v4479, %v4475
  %v4481 = vmul.f32 1.0, %v4480
  %v4482 = vrcp.pop %v4382
  %v4483 = vmul.f32 %v4382, %v4482
  %v4484 = vsub.f32 1.0, %v4483
  %v4485 = vmul.f32 %v4482, %v4484
  %v4486 = vadd.f32 %v4482, %v4485
  %vm4487 = vweird.f32 %v4382
  %vm4488 = vweird.f32 %v4482
  %vm4489 = vmor %vm4487, %vm4488
  %v4490 = vsel %vm4489, %v4482, %v4486
  %v4491 = vand.u32 2147483647, %v4382
  %vm4492 = vcmp.eq.f32.partialorder %v4491, 8.507059e+37
  %v4493 = vand.u32 %v4382, 2147483648
  %v4494 = vor.u32 1.1754944e-38, %v4493
  %v4495 = vsel %vm4492, %v4494, %v4490
  %v4496 = vmul.f32 1.0, %v4495
  %v4497 = vrcp.pop %v4383
  %v4498 = vmul.f32 %v4383, %v4497
  %v4499 = vsub.f32 1.0, %v4498
  %v4500 = vmul.f32 %v4497, %v4499
  %v4501 = vadd.f32 %v4497, %v4500
  %vm4502 = vweird.f32 %v4383
  %vm4503 = vweird.f32 %v4497
  %vm4504 = vmor %vm4502, %vm4503
  %v4505 = vsel %vm4504, %v4497, %v4501
  %v4506 = vand.u32 2147483647, %v4383
  %vm4507 = vcmp.eq.f32.partialorder %v4506, 8.507059e+37
  %v4508 = vand.u32 %v4383, 2147483648
  %v4509 = vor.u32 1.1754944e-38, %v4508
  %v4510 = vsel %vm4507, %v4509, %v4505
  %v4511 = vmul.f32 1.0, %v4510
  %v4512 = vrcp.pop %v4384
  %v4513 = vmul.f32 %v4384, %v4512
  %v4514 = vsub.f32 1.0, %v4513
  %v4515 = vmul.f32 %v4512, %v4514
  %v4516 = vadd.f32 %v4512, %v4515
  %vm4517 = vweird.f32 %v4384
  %vm4518 = vweird.f32 %v4512
  %vm4519 = vmor %vm4517, %vm4518
  %v4520 = vsel %vm4519, %v4512, %v4516
  %v4521 = vand.u32 2147483647, %v4384
  %vm4522 = vcmp.eq.f32.partialorder %v4521, 8.507059e+37
  %v4523 = vand.u32 %v4384, 2147483648
  %v4524 = vor.u32 1.1754944e-38, %v4523
  %v4525 = vsel %vm4522, %v4524, %v4520
  %v4526 = vmul.f32 1.0, %v4525
  %v4527 = vrcp.pop %v4385
  %v4528 = vmul.f32 %v4385, %v4527
  %v4529 = vsub.f32 1.0, %v4528
  %v4530 = vmul.f32 %v4527, %v4529
  %v4531 = vadd.f32 %v4527, %v4530
  %vm4532 = vweird.f32 %v4385
  %vm4533 = vweird.f32 %v4527
  %vm4534 = vmor %vm4532, %vm4533
  %v4535 = vsel %vm4534, %v4527, %v4531
  %v4536 = vand.u32 2147483647, %v4385
  %vm4537 = vcmp.eq.f32.partialorder %v4536, 8.507059e+37
  %v4538 = vand.u32 %v4385, 2147483648
  %v4539 = vor.u32 1.1754944e-38, %v4538
  %v4540 = vsel %vm4537, %v4539, %v4535
  %v4541 = vmul.f32 1.0, %v4540
  %v4542 = vrcp.pop %v4386
  %v4543 = vmul.f32 %v4386, %v4542
  %v4544 = vsub.f32 1.0, %v4543
  %v4545 = vmul.f32 %v4542, %v4544
  %v4546 = vadd.f32 %v4542, %v4545
  %vm4547 = vweird.f32 %v4386
  %vm4548 = vweird.f32 %v4542
  %vm4549 = vmor %vm4547, %vm4548
  %v4550 = vsel %vm4549, %v4542, %v4546
  %v4551 = vand.u32 2147483647, %v4386
  %vm4552 = vcmp.eq.f32.partialorder %v4551, 8.507059e+37
  %v4553 = vand.u32 %v4386, 2147483648
  %v4554 = vor.u32 1.1754944e-38, %v4553
  %v4555 = vsel %vm4552, %v4554, %v4550
  %v4556 = vmul.f32 1.0, %v4555
  %v4557 = vrcp.pop %v4387
  %v4558 = vmul.f32 %v4387, %v4557
  %v4559 = vsub.f32 1.0, %v4558
  %v4560 = vmul.f32 %v4557, %v4559
  %v4561 = vadd.f32 %v4557, %v4560
  %vm4562 = vweird.f32 %v4387
  %vm4563 = vweird.f32 %v4557
  %vm4564 = vmor %vm4562, %vm4563
  %v4565 = vsel %vm4564, %v4557, %v4561
  %v4566 = vand.u32 2147483647, %v4387
  %vm4567 = vcmp.eq.f32.partialorder %v4566, 8.507059e+37
  %v4568 = vand.u32 %v4387, 2147483648
  %v4569 = vor.u32 1.1754944e-38, %v4568
  %v4570 = vsel %vm4567, %v4569, %v4565
  %v4571 = vmul.f32 1.0, %v4570
  %v4572 = vrcp.pop %v4388
  %v4573 = vmul.f32 %v4388, %v4572
  %v4574 = vsub.f32 1.0, %v4573
  %v4575 = vmul.f32 %v4572, %v4574
  %v4576 = vadd.f32 %v4572, %v4575
  %vm4577 = vweird.f32 %v4388
  %vm4578 = vweird.f32 %v4572
  %vm4579 = vmor %vm4577, %vm4578
  %v4580 = vsel %vm4579, %v4572, %v4576
  %v4581 = vand.u32 2147483647, %v4388
  %vm4582 = vcmp.eq.f32.partialorder %v4581, 8.507059e+37
  %v4583 = vand.u32 %v4388, 2147483648
  %v4584 = vor.u32 1.1754944e-38, %v4583
  %v4585 = vsel %vm4582, %v4584, %v4580
  %v4586 = vmul.f32 1.0, %v4585
  %v4587 = vrcp.pop %v4389
  %v4588 = vmul.f32 %v4389, %v4587
  %v4589 = vsub.f32 1.0, %v4588
  %v4590 = vmul.f32 %v4587, %v4589
  %v4591 = vadd.f32 %v4587, %v4590
  %vm4592 = vweird.f32 %v4389
  %vm4593 = vweird.f32 %v4587
  %vm4594 = vmor %vm4592, %vm4593
  %v4595 = vsel %vm4594, %v4587, %v4591
  %v4596 = vand.u32 2147483647, %v4389
  %vm4597 = vcmp.eq.f32.partialorder %v4596, 8.507059e+37
  %v4598 = vand.u32 %v4389, 2147483648
  %v4599 = vor.u32 1.1754944e-38, %v4598
  %v4600 = vsel %vm4597, %v4599, %v4595
  %v4601 = vmul.f32 1.0, %v4600
  %v4602 = vrcp.pop %v4390
  %v4603 = vmul.f32 %v4390, %v4602
  %v4604 = vsub.f32 1.0, %v4603
  %v4605 = vmul.f32 %v4602, %v4604
  %v4606 = vadd.f32 %v4602, %v4605
  %vm4607 = vweird.f32 %v4390
  %vm4608 = vweird.f32 %v4602
  %vm4609 = vmor %vm4607, %vm4608
  %v4610 = vsel %vm4609, %v4602, %v4606
  %v4611 = vand.u32 2147483647, %v4390
  %vm4612 = vcmp.eq.f32.partialorder %v4611, 8.507059e+37
  %v4613 = vand.u32 %v4390, 2147483648
  %v4614 = vor.u32 1.1754944e-38, %v4613
  %v4615 = vsel %vm4612, %v4614, %v4610
  %v4616 = vmul.f32 1.0, %v4615
  %v4617 = vrcp.pop %v4391
  %v4618 = vmul.f32 %v4391, %v4617
  %v4619 = vsub.f32 1.0, %v4618
  %v4620 = vmul.f32 %v4617, %v4619
  %v4621 = vadd.f32 %v4617, %v4620
  %vm4622 = vweird.f32 %v4391
  %vm4623 = vweird.f32 %v4617
  %vm4624 = vmor %vm4622, %vm4623
  %v4625 = vsel %vm4624, %v4617, %v4621
  %v4626 = vand.u32 2147483647, %v4391
  %vm4627 = vcmp.eq.f32.partialorder %v4626, 8.507059e+37
  %v4628 = vand.u32 %v4391, 2147483648
  %v4629 = vor.u32 1.1754944e-38, %v4628
  %v4630 = vsel %vm4627, %v4629, %v4625
  %v4631 = vmul.f32 1.0, %v4630
  %4632 = vrot.lane.b32.xlu0 %v4277, 32
  %v4633 = vpop.permute.xlu0 %4632
  %4634 = vrot.lane.b32.xlu0 %v4281, 32
  %v4635 = vpop.permute.xlu0 %4634
  %4636 = vrot.lane.b32.xlu0 %v4282, 32
  %v4637 = vpop.permute.xlu0 %4636
  %4638 = vrot.lane.b32.xlu0 %v4283, 32
  %v4639 = vpop.permute.xlu0 %4638
  %4640 = vrot.lane.b32.xlu0 %v4284, 32
  %v4641 = vpop.permute.xlu0 %4640
  %4642 = vrot.lane.b32.xlu0 %v4285, 32
  %v4643 = vpop.permute.xlu0 %4642
  %4644 = vrot.lane.b32.xlu0 %v4286, 32
  %v4645 = vpop.permute.xlu0 %4644
  %4646 = vrot.lane.b32.xlu0 %v4287, 32
  %v4647 = vpop.permute.xlu0 %4646
  %v4656 = vmul.f32 %v4406, %v4633
  %v4657 = vmul.f32 %v4436, %v4635
  %v4658 = vmul.f32 %v4466, %v4637
  %v4659 = vmul.f32 %v4496, %v4639
  %v4660 = vmul.f32 %v4526, %v4641
  %v4661 = vmul.f32 %v4556, %v4643
  %v4662 = vmul.f32 %v4586, %v4645
  %v4663 = vmul.f32 %v4616, %v4647
  %4672 = vrot.lane.b32.xlu0 %v4656, 64
  %v4673 = vpop.permute.xlu0 %4672
  %4674 = vrot.lane.b32.xlu0 %v4657, 64
  %v4675 = vpop.permute.xlu0 %4674
  %4676 = vrot.lane.b32.xlu0 %v4658, 64
  %v4677 = vpop.permute.xlu0 %4676
  %4678 = vrot.lane.b32.xlu0 %v4659, 64
  %v4679 = vpop.permute.xlu0 %4678
  %4680 = vrot.lane.b32.xlu0 %v4660, 64
  %v4681 = vpop.permute.xlu0 %4680
  %4682 = vrot.lane.b32.xlu0 %v4661, 64
  %v4683 = vpop.permute.xlu0 %4682
  %4684 = vrot.lane.b32.xlu0 %v4662, 64
  %v4685 = vpop.permute.xlu0 %4684
  %4686 = vrot.lane.b32.xlu0 %v4663, 64
  %v4687 = vpop.permute.xlu0 %4686
  %v4696 = vadd.f32 %v4248, %v4673
  %v4697 = vadd.f32 %v4250, %v4675
  %v4698 = vadd.f32 %v4252, %v4677
  %v4699 = vadd.f32 %v4254, %v4679
  %v4700 = vadd.f32 %v4256, %v4681
  %v4701 = vadd.f32 %v4258, %v4683
  %v4702 = vadd.f32 %v4260, %v4685
  %v4703 = vadd.f32 %v4262, %v4687
  %v4704 = vtanh.pop %v4696
  %v4705 = vtanh.pop %v4697
  %v4706 = vtanh.pop %v4698
  %v4707 = vtanh.pop %v4699
  %v4708 = vtanh.pop %v4700
  %v4709 = vtanh.pop %v4701
  %v4710 = vtanh.pop %v4702
  %v4711 = vtanh.pop %v4703
  %v4712 = vsub.f32 1.0, %v4421
  %v4713 = vsub.f32 1.0, %v4451
  %v4714 = vsub.f32 1.0, %v4481
  %v4715 = vsub.f32 1.0, %v4511
  %v4716 = vsub.f32 1.0, %v4541
  %v4717 = vsub.f32 1.0, %v4571
  %v4718 = vsub.f32 1.0, %v4601
  %v4719 = vsub.f32 1.0, %v4631
  %4728 = vrot.lane.b32.xlu0 %v4704, 96
  %v4729 = vpop.permute.xlu0 %4728
  %4730 = vrot.lane.b32.xlu0 %v4705, 96
  %v4731 = vpop.permute.xlu0 %4730
  %4732 = vrot.lane.b32.xlu0 %v4706, 96
  %v4733 = vpop.permute.xlu0 %4732
  %4734 = vrot.lane.b32.xlu0 %v4707, 96
  %v4735 = vpop.permute.xlu0 %4734
  %4736 = vrot.lane.b32.xlu0 %v4708, 96
  %v4737 = vpop.permute.xlu0 %4736
  %4738 = vrot.lane.b32.xlu0 %v4709, 96
  %v4739 = vpop.permute.xlu0 %4738
  %4740 = vrot.lane.b32.xlu0 %v4710, 96
  %v4741 = vpop.permute.xlu0 %4740
  %4742 = vrot.lane.b32.xlu0 %v4711, 96
  %v4743 = vpop.permute.xlu0 %4742
  %v4752 = vmul.f32 %v4712, %v4729
  %v4753 = vmul.f32 %v4713, %v4731
  %v4754 = vmul.f32 %v4714, %v4733
  %v4755 = vmul.f32 %v4715, %v4735
  %v4756 = vmul.f32 %v4716, %v4737
  %v4757 = vmul.f32 %v4717, %v4739
  %v4758 = vmul.f32 %v4718, %v4741
  %v4759 = vmul.f32 %v4719, %v4743
  %v4768 = vmul.f32 %v4421, %v4197
  %v4769 = vmul.f32 %v4451, %v4199
  %v4770 = vmul.f32 %v4481, %v4200
  %v4771 = vmul.f32 %v4511, %v4201
  %v4772 = vmul.f32 %v4541, %v4202
  %v4773 = vmul.f32 %v4571, %v4203
  %v4774 = vmul.f32 %v4601, %v4204
  %v4775 = vmul.f32 %v4631, %v4205
  %v4776 = vadd.f32 %v4752, %v4768
  %v4777 = vadd.f32 %v4753, %v4769
  %v4778 = vadd.f32 %v4754, %v4770
  %v4779 = vadd.f32 %v4755, %v4771
  %v4780 = vadd.f32 %v4756, %v4772
  %v4781 = vadd.f32 %v4757, %v4773
  %v4782 = vadd.f32 %v4758, %v4774
  %v4783 = vadd.f32 %v4759, %v4775
  %v4792 = vrot.slane %v4777, 7
  %v4793 = vsel %vm564, %v4792, %v4776
  %v4794 = vrot.slane %v4778, 6
  %v4795 = vsel %vm567, %v4794, %v4793
  %v4796 = vrot.slane %v4779, 5
  %v4797 = vsel %vm570, %v4796, %v4795
  %v4798 = vrot.slane %v4780, 4
  %v4799 = vsel %vm573, %v4798, %v4797
  %v4800 = vrot.slane %v4781, 3
  %v4801 = vsel %vm576, %v4800, %v4799
  %v4802 = vrot.slane %v4782, 2
  %v4803 = vsel %vm579, %v4802, %v4801
  %v4804 = vrot.slane %v4783, 1
  %v4805 = vsel %vm582, %v4804, %v4803
  %v4807 = vsel %vm3151, %v4805, 0.0
  %v4809 = vrot.slane %v4807, 1
  %v4810 = vrot.slane %v4807, 2
  %v4811 = vrot.slane %v4807, 3
  %v4812 = vrot.slane %v4807, 4
  %v4813 = vrot.slane %v4807, 5
  %v4814 = vrot.slane %v4807, 6
  %v4815 = vrot.slane %v4807, 7
  %v4816 = vperm.slane %v4807, 0
  %v4817 = vperm.slane %v4809, 0
  %v4818 = vperm.slane %v4810, 0
  %v4819 = vperm.slane %v4811, 0
  %v4820 = vperm.slane %v4812, 0
  %v4821 = vperm.slane %v4813, 0
  %v4822 = vperm.slane %v4814, 0
  %v4823 = vperm.slane %v4815, 0
  %4824 = vrot.lane.b32.xlu0 %v4816, 32
  %v4825 = vpop.permute.xlu0 %4824
  %4826 = vrot.lane.b32.xlu0 %v4817, 32
  %v4827 = vpop.permute.xlu0 %4826
  %4828 = vrot.lane.b32.xlu0 %v4818, 32
  %v4829 = vpop.permute.xlu0 %4828
  %4830 = vrot.lane.b32.xlu0 %v4819, 32
  %v4831 = vpop.permute.xlu0 %4830
  %4832 = vrot.lane.b32.xlu0 %v4820, 32
  %v4833 = vpop.permute.xlu0 %4832
  %4834 = vrot.lane.b32.xlu0 %v4821, 32
  %v4835 = vpop.permute.xlu0 %4834
  %4836 = vrot.lane.b32.xlu0 %v4822, 32
  %v4837 = vpop.permute.xlu0 %4836
  %4838 = vrot.lane.b32.xlu0 %v4823, 32
  %v4839 = vpop.permute.xlu0 %4838
  %4848 = vst.msk [vmem:[%s12 + $0x6] sm:$0x1] %vm4238, %v4825
  %4849 = vst.msk [vmem:[%s12 + $0xe] sm:$0x1] %vm4238, %v4827
  %4850 = vst.msk [vmem:[%s12 + $0x16] sm:$0x1] %vm4238, %v4829
  %4851 = vst.msk [vmem:[%s12 + $0x1e] sm:$0x1] %vm4238, %v4831
  %4852 = vst.msk [vmem:[%s12 + $0x26] sm:$0x1] %vm4238, %v4833
  %4853 = vst.msk [vmem:[%s12 + $0x2e] sm:$0x1] %vm4238, %v4835
  %4854 = vst.msk [vmem:[%s12 + $0x36] sm:$0x1] %vm4238, %v4837
  %4855 = vst.msk [vmem:[%s12 + $0x3e] sm:$0x1] %vm4238, %v4839
  %v4856 = vsel %vm3151, %v4805, %v4197
  %v4857 = vld [vmem:[#allocation2 + $0x5] ss:$0 sm:$0xff]
  %v4858 = vld [vmem:[#allocation2 + $0xd] ss:$0 sm:$0xff]
  %v4859 = vld [vmem:[#allocation2 + $0x15] ss:$0 sm:$0xff]
  %v4860 = vld [vmem:[#allocation2 + $0x1d] ss:$0 sm:$0xff]
  %v4861 = vld [vmem:[#allocation2 + $0x25] ss:$0 sm:$0xff]
  %v4862 = vld [vmem:[#allocation2 + $0x2d] ss:$0 sm:$0xff]
  %v4863 = vld [vmem:[#allocation2 + $0x35] ss:$0 sm:$0xff]
  %v4864 = vld [vmem:[#allocation2 + $0x3d] ss:$0 sm:$0xff]
  %v4865 = vld [vmem:[#allocation2 + $0x45] ss:$0 sm:$0xff]
  %v4866 = vld [vmem:[#allocation2 + $0x4d] ss:$0 sm:$0xff]
  %v4867 = vld [vmem:[#allocation2 + $0x55] ss:$0 sm:$0xff]
  %v4868 = vld [vmem:[#allocation2 + $0x5d] ss:$0 sm:$0xff]
  %v4869 = vld [vmem:[#allocation2 + $0x65] ss:$0 sm:$0xff]
  %v4870 = vld [vmem:[#allocation2 + $0x6d] ss:$0 sm:$0xff]
  %v4871 = vld [vmem:[#allocation2 + $0x75] ss:$0 sm:$0xff]
  %v4872 = vld [vmem:[#allocation2 + $0x7d] ss:$0 sm:$0xff]
  %v4873 = vpack.c.bf16 %v4856, %v4856
  %v4875 = vsel %vm212, %v4873, 0
  %4877 = vmatpush.bf16.msra.mxu0 0
  %4878 = vmatpush.bf16.msra.mxu0 0
  %4879 = vmatpush.bf16.msra.mxu0 0
  %4880 = vmatpush.bf16.msra.mxu0 0
  %4881 = vmatpush.bf16.msra.mxu0 0
  %4882 = vmatpush.bf16.msra.mxu0 0
  %4883 = vmatpush.bf16.msra.mxu0 %v3662
  %4884 = vmatpush.bf16.msra.mxu0 %v3661
  %4885 = vmatmul.bf16.gmra.mxu0 %v4875
  %v4886 = vpop.f32.mrf.mxu0
  %v4887 = vadd.f32 %v3651, %v4886
  %v4888 = vpop.f32.mrf.mxu0
  %4889 = vdwg.mxu0
  %v4891 = vrot.slane %v4887, 1
  %v4892 = vrot.slane %v4887, 2
  %v4893 = vrot.slane %v4887, 3
  %v4894 = vrot.slane %v4887, 4
  %v4895 = vrot.slane %v4887, 5
  %v4896 = vrot.slane %v4887, 6
  %v4897 = vrot.slane %v4887, 7
  %4898 = vrot.lane.b32.xlu0 %v4887, 96
  %v4899 = vpop.permute.xlu0 %4898
  %4900 = vrot.lane.b32.xlu0 %v4891, 96
  %v4901 = vpop.permute.xlu0 %4900
  %4902 = vrot.lane.b32.xlu0 %v4892, 96
  %v4903 = vpop.permute.xlu0 %4902
  %4904 = vrot.lane.b32.xlu0 %v4893, 96
  %v4905 = vpop.permute.xlu0 %4904
  %4906 = vrot.lane.b32.xlu0 %v4894, 96
  %v4907 = vpop.permute.xlu0 %4906
  %4908 = vrot.lane.b32.xlu0 %v4895, 96
  %v4909 = vpop.permute.xlu0 %4908
  %4910 = vrot.lane.b32.xlu0 %v4896, 96
  %v4911 = vpop.permute.xlu0 %4910
  %4912 = vrot.lane.b32.xlu0 %v4897, 96
  %v4913 = vpop.permute.xlu0 %4912
  %v4922 = vadd.f32 %v4857, %v4899
  %v4923 = vadd.f32 %v4858, %v4899
  %v4924 = vadd.f32 %v4859, %v4901
  %v4925 = vadd.f32 %v4860, %v4901
  %v4926 = vadd.f32 %v4861, %v4903
  %v4927 = vadd.f32 %v4862, %v4903
  %v4928 = vadd.f32 %v4863, %v4905
  %v4929 = vadd.f32 %v4864, %v4905
  %v4930 = vadd.f32 %v4865, %v4907
  %v4931 = vadd.f32 %v4866, %v4907
  %v4932 = vadd.f32 %v4867, %v4909
  %v4933 = vadd.f32 %v4868, %v4909
  %v4934 = vadd.f32 %v4869, %v4911
  %v4935 = vadd.f32 %v4870, %v4911
  %v4936 = vadd.f32 %v4871, %v4913
  %v4937 = vadd.f32 %v4872, %v4913
  %v4938 = vxor.u32 %v4922, 2147483648
  %v4939 = vxor.u32 %v4923, 2147483648
  %v4940 = vxor.u32 %v4924, 2147483648
  %v4941 = vxor.u32 %v4925, 2147483648
  %v4942 = vxor.u32 %v4926, 2147483648
  %v4943 = vxor.u32 %v4927, 2147483648
  %v4944 = vxor.u32 %v4928, 2147483648
  %v4945 = vxor.u32 %v4929, 2147483648
  %v4946 = vxor.u32 %v4930, 2147483648
  %v4947 = vxor.u32 %v4931, 2147483648
  %v4948 = vxor.u32 %v4932, 2147483648
  %v4949 = vxor.u32 %v4933, 2147483648
  %v4950 = vxor.u32 %v4934, 2147483648
  %v4951 = vxor.u32 %v4935, 2147483648
  %v4952 = vxor.u32 %v4936, 2147483648
  %v4953 = vxor.u32 %v4937, 2147483648
  %v4954 = vmul.f32 %v4938, 1.442695
  %v4955 = vpow.pop %v4954
  %v4956 = vmul.f32 %v4939, 1.442695
  %v4957 = vpow.pop %v4956
  %v4958 = vmul.f32 %v4940, 1.442695
  %v4959 = vpow.pop %v4958
  %v4960 = vmul.f32 %v4941, 1.442695
  %v4961 = vpow.pop %v4960
  %v4962 = vmul.f32 %v4942, 1.442695
  %v4963 = vpow.pop %v4962
  %v4964 = vmul.f32 %v4943, 1.442695
  %v4965 = vpow.pop %v4964
  %v4966 = vmul.f32 %v4944, 1.442695
  %v4967 = vpow.pop %v4966
  %v4968 = vmul.f32 %v4945, 1.442695
  %v4969 = vpow.pop %v4968
  %v4970 = vmul.f32 %v4946, 1.442695
  %v4971 = vpow.pop %v4970
  %v4972 = vmul.f32 %v4947, 1.442695
  %v4973 = vpow.pop %v4972
  %v4974 = vmul.f32 %v4948, 1.442695
  %v4975 = vpow.pop %v4974
  %v4976 = vmul.f32 %v4949, 1.442695
  %v4977 = vpow.pop %v4976
  %v4978 = vmul.f32 %v4950, 1.442695
  %v4979 = vpow.pop %v4978
  %v4980 = vmul.f32 %v4951, 1.442695
  %v4981 = vpow.pop %v4980
  %v4982 = vmul.f32 %v4952, 1.442695
  %v4983 = vpow.pop %v4982
  %v4984 = vmul.f32 %v4953, 1.442695
  %v4985 = vpow.pop %v4984
  %v4986 = vadd.f32 %v4955, 1.0
  %v4987 = vadd.f32 %v4957, 1.0
  %v4988 = vadd.f32 %v4959, 1.0
  %v4989 = vadd.f32 %v4961, 1.0
  %v4990 = vadd.f32 %v4963, 1.0
  %v4991 = vadd.f32 %v4965, 1.0
  %v4992 = vadd.f32 %v4967, 1.0
  %v4993 = vadd.f32 %v4969, 1.0
  %v4994 = vadd.f32 %v4971, 1.0
  %v4995 = vadd.f32 %v4973, 1.0
  %v4996 = vadd.f32 %v4975, 1.0
  %v4997 = vadd.f32 %v4977, 1.0
  %v4998 = vadd.f32 %v4979, 1.0
  %v4999 = vadd.f32 %v4981, 1.0
  %v5000 = vadd.f32 %v4983, 1.0
  %v5001 = vadd.f32 %v4985, 1.0
  %v5002 = vrcp.pop %v4986
  %v5003 = vmul.f32 %v4986, %v5002
  %v5004 = vsub.f32 1.0, %v5003
  %v5005 = vmul.f32 %v5002, %v5004
  %v5006 = vadd.f32 %v5002, %v5005
  %vm5007 = vweird.f32 %v4986
  %vm5008 = vweird.f32 %v5002
  %vm5009 = vmor %vm5007, %vm5008
  %v5010 = vsel %vm5009, %v5002, %v5006
  %v5011 = vand.u32 2147483647, %v4986
  %vm5012 = vcmp.eq.f32.partialorder %v5011, 8.507059e+37
  %v5013 = vand.u32 %v4986, 2147483648
  %v5014 = vor.u32 1.1754944e-38, %v5013
  %v5015 = vsel %vm5012, %v5014, %v5010
  %v5016 = vmul.f32 1.0, %v5015
  %v5017 = vrcp.pop %v4987
  %v5018 = vmul.f32 %v4987, %v5017
  %v5019 = vsub.f32 1.0, %v5018
  %v5020 = vmul.f32 %v5017, %v5019
  %v5021 = vadd.f32 %v5017, %v5020
  %vm5022 = vweird.f32 %v4987
  %vm5023 = vweird.f32 %v5017
  %vm5024 = vmor %vm5022, %vm5023
  %v5025 = vsel %vm5024, %v5017, %v5021
  %v5026 = vand.u32 2147483647, %v4987
  %vm5027 = vcmp.eq.f32.partialorder %v5026, 8.507059e+37
  %v5028 = vand.u32 %v4987, 2147483648
  %v5029 = vor.u32 1.1754944e-38, %v5028
  %v5030 = vsel %vm5027, %v5029, %v5025
  %v5031 = vmul.f32 1.0, %v5030
  %v5032 = vrcp.pop %v4988
  %v5033 = vmul.f32 %v4988, %v5032
  %v5034 = vsub.f32 1.0, %v5033
  %v5035 = vmul.f32 %v5032, %v5034
  %v5036 = vadd.f32 %v5032, %v5035
  %vm5037 = vweird.f32 %v4988
  %vm5038 = vweird.f32 %v5032
  %vm5039 = vmor %vm5037, %vm5038
  %v5040 = vsel %vm5039, %v5032, %v5036
  %v5041 = vand.u32 2147483647, %v4988
  %vm5042 = vcmp.eq.f32.partialorder %v5041, 8.507059e+37
  %v5043 = vand.u32 %v4988, 2147483648
  %v5044 = vor.u32 1.1754944e-38, %v5043
  %v5045 = vsel %vm5042, %v5044, %v5040
  %v5046 = vmul.f32 1.0, %v5045
  %v5047 = vrcp.pop %v4989
  %v5048 = vmul.f32 %v4989, %v5047
  %v5049 = vsub.f32 1.0, %v5048
  %v5050 = vmul.f32 %v5047, %v5049
  %v5051 = vadd.f32 %v5047, %v5050
  %vm5052 = vweird.f32 %v4989
  %vm5053 = vweird.f32 %v5047
  %vm5054 = vmor %vm5052, %vm5053
  %v5055 = vsel %vm5054, %v5047, %v5051
  %v5056 = vand.u32 2147483647, %v4989
  %vm5057 = vcmp.eq.f32.partialorder %v5056, 8.507059e+37
  %v5058 = vand.u32 %v4989, 2147483648
  %v5059 = vor.u32 1.1754944e-38, %v5058
  %v5060 = vsel %vm5057, %v5059, %v5055
  %v5061 = vmul.f32 1.0, %v5060
  %v5062 = vrcp.pop %v4990
  %v5063 = vmul.f32 %v4990, %v5062
  %v5064 = vsub.f32 1.0, %v5063
  %v5065 = vmul.f32 %v5062, %v5064
  %v5066 = vadd.f32 %v5062, %v5065
  %vm5067 = vweird.f32 %v4990
  %vm5068 = vweird.f32 %v5062
  %vm5069 = vmor %vm5067, %vm5068
  %v5070 = vsel %vm5069, %v5062, %v5066
  %v5071 = vand.u32 2147483647, %v4990
  %vm5072 = vcmp.eq.f32.partialorder %v5071, 8.507059e+37
  %v5073 = vand.u32 %v4990, 2147483648
  %v5074 = vor.u32 1.1754944e-38, %v5073
  %v5075 = vsel %vm5072, %v5074, %v5070
  %v5076 = vmul.f32 1.0, %v5075
  %v5077 = vrcp.pop %v4991
  %v5078 = vmul.f32 %v4991, %v5077
  %v5079 = vsub.f32 1.0, %v5078
  %v5080 = vmul.f32 %v5077, %v5079
  %v5081 = vadd.f32 %v5077, %v5080
  %vm5082 = vweird.f32 %v4991
  %vm5083 = vweird.f32 %v5077
  %vm5084 = vmor %vm5082, %vm5083
  %v5085 = vsel %vm5084, %v5077, %v5081
  %v5086 = vand.u32 2147483647, %v4991
  %vm5087 = vcmp.eq.f32.partialorder %v5086, 8.507059e+37
  %v5088 = vand.u32 %v4991, 2147483648
  %v5089 = vor.u32 1.1754944e-38, %v5088
  %v5090 = vsel %vm5087, %v5089, %v5085
  %v5091 = vmul.f32 1.0, %v5090
  %v5092 = vrcp.pop %v4992
  %v5093 = vmul.f32 %v4992, %v5092
  %v5094 = vsub.f32 1.0, %v5093
  %v5095 = vmul.f32 %v5092, %v5094
  %v5096 = vadd.f32 %v5092, %v5095
  %vm5097 = vweird.f32 %v4992
  %vm5098 = vweird.f32 %v5092
  %vm5099 = vmor %vm5097, %vm5098
  %v5100 = vsel %vm5099, %v5092, %v5096
  %v5101 = vand.u32 2147483647, %v4992
  %vm5102 = vcmp.eq.f32.partialorder %v5101, 8.507059e+37
  %v5103 = vand.u32 %v4992, 2147483648
  %v5104 = vor.u32 1.1754944e-38, %v5103
  %v5105 = vsel %vm5102, %v5104, %v5100
  %v5106 = vmul.f32 1.0, %v5105
  %v5107 = vrcp.pop %v4993
  %v5108 = vmul.f32 %v4993, %v5107
  %v5109 = vsub.f32 1.0, %v5108
  %v5110 = vmul.f32 %v5107, %v5109
  %v5111 = vadd.f32 %v5107, %v5110
  %vm5112 = vweird.f32 %v4993
  %vm5113 = vweird.f32 %v5107
  %vm5114 = vmor %vm5112, %vm5113
  %v5115 = vsel %vm5114, %v5107, %v5111
  %v5116 = vand.u32 2147483647, %v4993
  %vm5117 = vcmp.eq.f32.partialorder %v5116, 8.507059e+37
  %v5118 = vand.u32 %v4993, 2147483648
  %v5119 = vor.u32 1.1754944e-38, %v5118
  %v5120 = vsel %vm5117, %v5119, %v5115
  %v5121 = vmul.f32 1.0, %v5120
  %v5122 = vrcp.pop %v4994
  %v5123 = vmul.f32 %v4994, %v5122
  %v5124 = vsub.f32 1.0, %v5123
  %v5125 = vmul.f32 %v5122, %v5124
  %v5126 = vadd.f32 %v5122, %v5125
  %vm5127 = vweird.f32 %v4994
  %vm5128 = vweird.f32 %v5122
  %vm5129 = vmor %vm5127, %vm5128
  %v5130 = vsel %vm5129, %v5122, %v5126
  %v5131 = vand.u32 2147483647, %v4994
  %vm5132 = vcmp.eq.f32.partialorder %v5131, 8.507059e+37
  %v5133 = vand.u32 %v4994, 2147483648
  %v5134 = vor.u32 1.1754944e-38, %v5133
  %v5135 = vsel %vm5132, %v5134, %v5130
  %v5136 = vmul.f32 1.0, %v5135
  %v5137 = vrcp.pop %v4995
  %v5138 = vmul.f32 %v4995, %v5137
  %v5139 = vsub.f32 1.0, %v5138
  %v5140 = vmul.f32 %v5137, %v5139
  %v5141 = vadd.f32 %v5137, %v5140
  %vm5142 = vweird.f32 %v4995
  %vm5143 = vweird.f32 %v5137
  %vm5144 = vmor %vm5142, %vm5143
  %v5145 = vsel %vm5144, %v5137, %v5141
  %v5146 = vand.u32 2147483647, %v4995
  %vm5147 = vcmp.eq.f32.partialorder %v5146, 8.507059e+37
  %v5148 = vand.u32 %v4995, 2147483648
  %v5149 = vor.u32 1.1754944e-38, %v5148
  %v5150 = vsel %vm5147, %v5149, %v5145
  %v5151 = vmul.f32 1.0, %v5150
  %v5152 = vrcp.pop %v4996
  %v5153 = vmul.f32 %v4996, %v5152
  %v5154 = vsub.f32 1.0, %v5153
  %v5155 = vmul.f32 %v5152, %v5154
  %v5156 = vadd.f32 %v5152, %v5155
  %vm5157 = vweird.f32 %v4996
  %vm5158 = vweird.f32 %v5152
  %vm5159 = vmor %vm5157, %vm5158
  %v5160 = vsel %vm5159, %v5152, %v5156
  %v5161 = vand.u32 2147483647, %v4996
  %vm5162 = vcmp.eq.f32.partialorder %v5161, 8.507059e+37
  %v5163 = vand.u32 %v4996, 2147483648
  %v5164 = vor.u32 1.1754944e-38, %v5163
  %v5165 = vsel %vm5162, %v5164, %v5160
  %v5166 = vmul.f32 1.0, %v5165
  %v5167 = vrcp.pop %v4997
  %v5168 = vmul.f32 %v4997, %v5167
  %v5169 = vsub.f32 1.0, %v5168
  %v5170 = vmul.f32 %v5167, %v5169
  %v5171 = vadd.f32 %v5167, %v5170
  %vm5172 = vweird.f32 %v4997
  %vm5173 = vweird.f32 %v5167
  %vm5174 = vmor %vm5172, %vm5173
  %v5175 = vsel %vm5174, %v5167, %v5171
  %v5176 = vand.u32 2147483647, %v4997
  %vm5177 = vcmp.eq.f32.partialorder %v5176, 8.507059e+37
  %v5178 = vand.u32 %v4997, 2147483648
  %v5179 = vor.u32 1.1754944e-38, %v5178
  %v5180 = vsel %vm5177, %v5179, %v5175
  %v5181 = vmul.f32 1.0, %v5180
  %v5182 = vrcp.pop %v4998
  %v5183 = vmul.f32 %v4998, %v5182
  %v5184 = vsub.f32 1.0, %v5183
  %v5185 = vmul.f32 %v5182, %v5184
  %v5186 = vadd.f32 %v5182, %v5185
  %vm5187 = vweird.f32 %v4998
  %vm5188 = vweird.f32 %v5182
  %vm5189 = vmor %vm5187, %vm5188
  %v5190 = vsel %vm5189, %v5182, %v5186
  %v5191 = vand.u32 2147483647, %v4998
  %vm5192 = vcmp.eq.f32.partialorder %v5191, 8.507059e+37
  %v5193 = vand.u32 %v4998, 2147483648
  %v5194 = vor.u32 1.1754944e-38, %v5193
  %v5195 = vsel %vm5192, %v5194, %v5190
  %v5196 = vmul.f32 1.0, %v5195
  %v5197 = vrcp.pop %v4999
  %v5198 = vmul.f32 %v4999, %v5197
  %v5199 = vsub.f32 1.0, %v5198
  %v5200 = vmul.f32 %v5197, %v5199
  %v5201 = vadd.f32 %v5197, %v5200
  %vm5202 = vweird.f32 %v4999
  %vm5203 = vweird.f32 %v5197
  %vm5204 = vmor %vm5202, %vm5203
  %v5205 = vsel %vm5204, %v5197, %v5201
  %v5206 = vand.u32 2147483647, %v4999
  %vm5207 = vcmp.eq.f32.partialorder %v5206, 8.507059e+37
  %v5208 = vand.u32 %v4999, 2147483648
  %v5209 = vor.u32 1.1754944e-38, %v5208
  %v5210 = vsel %vm5207, %v5209, %v5205
  %v5211 = vmul.f32 1.0, %v5210
  %v5212 = vrcp.pop %v5000
  %v5213 = vmul.f32 %v5000, %v5212
  %v5214 = vsub.f32 1.0, %v5213
  %v5215 = vmul.f32 %v5212, %v5214
  %v5216 = vadd.f32 %v5212, %v5215
  %vm5217 = vweird.f32 %v5000
  %vm5218 = vweird.f32 %v5212
  %vm5219 = vmor %vm5217, %vm5218
  %v5220 = vsel %vm5219, %v5212, %v5216
  %v5221 = vand.u32 2147483647, %v5000
  %vm5222 = vcmp.eq.f32.partialorder %v5221, 8.507059e+37
  %v5223 = vand.u32 %v5000, 2147483648
  %v5224 = vor.u32 1.1754944e-38, %v5223
  %v5225 = vsel %vm5222, %v5224, %v5220
  %v5226 = vmul.f32 1.0, %v5225
  %v5227 = vrcp.pop %v5001
  %v5228 = vmul.f32 %v5001, %v5227
  %v5229 = vsub.f32 1.0, %v5228
  %v5230 = vmul.f32 %v5227, %v5229
  %v5231 = vadd.f32 %v5227, %v5230
  %vm5232 = vweird.f32 %v5001
  %vm5233 = vweird.f32 %v5227
  %vm5234 = vmor %vm5232, %vm5233
  %v5235 = vsel %vm5234, %v5227, %v5231
  %v5236 = vand.u32 2147483647, %v5001
  %vm5237 = vcmp.eq.f32.partialorder %v5236, 8.507059e+37
  %v5238 = vand.u32 %v5001, 2147483648
  %v5239 = vor.u32 1.1754944e-38, %v5238
  %v5240 = vsel %vm5237, %v5239, %v5235
  %v5241 = vmul.f32 1.0, %v5240
  %5242 = vrot.lane.b32.xlu0 %v4887, 32
  %v5243 = vpop.permute.xlu0 %5242
  %5244 = vrot.lane.b32.xlu0 %v4891, 32
  %v5245 = vpop.permute.xlu0 %5244
  %5246 = vrot.lane.b32.xlu0 %v4892, 32
  %v5247 = vpop.permute.xlu0 %5246
  %5248 = vrot.lane.b32.xlu0 %v4893, 32
  %v5249 = vpop.permute.xlu0 %5248
  %5250 = vrot.lane.b32.xlu0 %v4894, 32
  %v5251 = vpop.permute.xlu0 %5250
  %5252 = vrot.lane.b32.xlu0 %v4895, 32
  %v5253 = vpop.permute.xlu0 %5252
  %5254 = vrot.lane.b32.xlu0 %v4896, 32
  %v5255 = vpop.permute.xlu0 %5254
  %5256 = vrot.lane.b32.xlu0 %v4897, 32
  %v5257 = vpop.permute.xlu0 %5256
  %v5266 = vmul.f32 %v5016, %v5243
  %v5267 = vmul.f32 %v5046, %v5245
  %v5268 = vmul.f32 %v5076, %v5247
  %v5269 = vmul.f32 %v5106, %v5249
  %v5270 = vmul.f32 %v5136, %v5251
  %v5271 = vmul.f32 %v5166, %v5253
  %v5272 = vmul.f32 %v5196, %v5255
  %v5273 = vmul.f32 %v5226, %v5257
  %5282 = vrot.lane.b32.xlu0 %v5266, 64
  %v5283 = vpop.permute.xlu0 %5282
  %5284 = vrot.lane.b32.xlu0 %v5267, 64
  %v5285 = vpop.permute.xlu0 %5284
  %5286 = vrot.lane.b32.xlu0 %v5268, 64
  %v5287 = vpop.permute.xlu0 %5286
  %5288 = vrot.lane.b32.xlu0 %v5269, 64
  %v5289 = vpop.permute.xlu0 %5288
  %5290 = vrot.lane.b32.xlu0 %v5270, 64
  %v5291 = vpop.permute.xlu0 %5290
  %5292 = vrot.lane.b32.xlu0 %v5271, 64
  %v5293 = vpop.permute.xlu0 %5292
  %5294 = vrot.lane.b32.xlu0 %v5272, 64
  %v5295 = vpop.permute.xlu0 %5294
  %5296 = vrot.lane.b32.xlu0 %v5273, 64
  %v5297 = vpop.permute.xlu0 %5296
  %v5306 = vadd.f32 %v4858, %v5283
  %v5307 = vadd.f32 %v4860, %v5285
  %v5308 = vadd.f32 %v4862, %v5287
  %v5309 = vadd.f32 %v4864, %v5289
  %v5310 = vadd.f32 %v4866, %v5291
  %v5311 = vadd.f32 %v4868, %v5293
  %v5312 = vadd.f32 %v4870, %v5295
  %v5313 = vadd.f32 %v4872, %v5297
  %v5314 = vtanh.pop %v5306
  %v5315 = vtanh.pop %v5307
  %v5316 = vtanh.pop %v5308
  %v5317 = vtanh.pop %v5309
  %v5318 = vtanh.pop %v5310
  %v5319 = vtanh.pop %v5311
  %v5320 = vtanh.pop %v5312
  %v5321 = vtanh.pop %v5313
  %v5322 = vsub.f32 1.0, %v5031
  %v5323 = vsub.f32 1.0, %v5061
  %v5324 = vsub.f32 1.0, %v5091
  %v5325 = vsub.f32 1.0, %v5121
  %v5326 = vsub.f32 1.0, %v5151
  %v5327 = vsub.f32 1.0, %v5181
  %v5328 = vsub.f32 1.0, %v5211
  %v5329 = vsub.f32 1.0, %v5241
  %5338 = vrot.lane.b32.xlu0 %v5314, 96
  %v5339 = vpop.permute.xlu0 %5338
  %5340 = vrot.lane.b32.xlu0 %v5315, 96
  %v5341 = vpop.permute.xlu0 %5340
  %5342 = vrot.lane.b32.xlu0 %v5316, 96
  %v5343 = vpop.permute.xlu0 %5342
  %5344 = vrot.lane.b32.xlu0 %v5317, 96
  %v5345 = vpop.permute.xlu0 %5344
  %5346 = vrot.lane.b32.xlu0 %v5318, 96
  %v5347 = vpop.permute.xlu0 %5346
  %5348 = vrot.lane.b32.xlu0 %v5319, 96
  %v5349 = vpop.permute.xlu0 %5348
  %5350 = vrot.lane.b32.xlu0 %v5320, 96
  %v5351 = vpop.permute.xlu0 %5350
  %5352 = vrot.lane.b32.xlu0 %v5321, 96
  %v5353 = vpop.permute.xlu0 %5352
  %v5362 = vmul.f32 %v5322, %v5339
  %v5363 = vmul.f32 %v5323, %v5341
  %v5364 = vmul.f32 %v5324, %v5343
  %v5365 = vmul.f32 %v5325, %v5345
  %v5366 = vmul.f32 %v5326, %v5347
  %v5367 = vmul.f32 %v5327, %v5349
  %v5368 = vmul.f32 %v5328, %v5351
  %v5369 = vmul.f32 %v5329, %v5353
  %v5371 = vrot.slane %v4856, 1
  %v5372 = vrot.slane %v4856, 2
  %v5373 = vrot.slane %v4856, 3
  %v5374 = vrot.slane %v4856, 4
  %v5375 = vrot.slane %v4856, 5
  %v5376 = vrot.slane %v4856, 6
  %v5377 = vrot.slane %v4856, 7
  %v5386 = vmul.f32 %v5031, %v4856
  %v5387 = vmul.f32 %v5061, %v5371
  %v5388 = vmul.f32 %v5091, %v5372
  %v5389 = vmul.f32 %v5121, %v5373
  %v5390 = vmul.f32 %v5151, %v5374
  %v5391 = vmul.f32 %v5181, %v5375
  %v5392 = vmul.f32 %v5211, %v5376
  %v5393 = vmul.f32 %v5241, %v5377
  %v5394 = vadd.f32 %v5362, %v5386
  %v5395 = vadd.f32 %v5363, %v5387
  %v5396 = vadd.f32 %v5364, %v5388
  %v5397 = vadd.f32 %v5365, %v5389
  %v5398 = vadd.f32 %v5366, %v5390
  %v5399 = vadd.f32 %v5367, %v5391
  %v5400 = vadd.f32 %v5368, %v5392
  %v5401 = vadd.f32 %v5369, %v5393
  %v5410 = vrot.slane %v5395, 7
  %v5411 = vsel %vm564, %v5410, %v5394
  %v5412 = vrot.slane %v5396, 6
  %v5413 = vsel %vm567, %v5412, %v5411
  %v5414 = vrot.slane %v5397, 5
  %v5415 = vsel %vm570, %v5414, %v5413
  %v5416 = vrot.slane %v5398, 4
  %v5417 = vsel %vm573, %v5416, %v5415
  %v5418 = vrot.slane %v5399, 3
  %v5419 = vsel %vm576, %v5418, %v5417
  %v5420 = vrot.slane %v5400, 2
  %v5421 = vsel %vm579, %v5420, %v5419
  %v5422 = vrot.slane %v5401, 1
  %v5423 = vsel %vm582, %v5422, %v5421
  %v5425 = vsel %vm2718, %v5423, 0.0
  %v5427 = vrot.slane %v5425, 1
  %v5428 = vrot.slane %v5425, 2
  %v5429 = vrot.slane %v5425, 3
  %v5430 = vrot.slane %v5425, 4
  %v5431 = vrot.slane %v5425, 5
  %v5432 = vrot.slane %v5425, 6
  %v5433 = vrot.slane %v5425, 7
  %v5434 = vperm.slane %v5425, 0
  %v5435 = vperm.slane %v5427, 0
  %v5436 = vperm.slane %v5428, 0
  %v5437 = vperm.slane %v5429, 0
  %v5438 = vperm.slane %v5430, 0
  %v5439 = vperm.slane %v5431, 0
  %v5440 = vperm.slane %v5432, 0
  %v5441 = vperm.slane %v5433, 0
  %5442 = vrot.lane.b32.xlu0 %v5434, 32
  %v5443 = vpop.permute.xlu0 %5442
  %5444 = vrot.lane.b32.xlu0 %v5435, 32
  %v5445 = vpop.permute.xlu0 %5444
  %5446 = vrot.lane.b32.xlu0 %v5436, 32
  %v5447 = vpop.permute.xlu0 %5446
  %5448 = vrot.lane.b32.xlu0 %v5437, 32
  %v5449 = vpop.permute.xlu0 %5448
  %5450 = vrot.lane.b32.xlu0 %v5438, 32
  %v5451 = vpop.permute.xlu0 %5450
  %5452 = vrot.lane.b32.xlu0 %v5439, 32
  %v5453 = vpop.permute.xlu0 %5452
  %5454 = vrot.lane.b32.xlu0 %v5440, 32
  %v5455 = vpop.permute.xlu0 %5454
  %5456 = vrot.lane.b32.xlu0 %v5441, 32
  %v5457 = vpop.permute.xlu0 %5456
  %5466 = vst.msk [vmem:[%s12 + $0x5] sm:$0x1] %vm4238, %v5443
  %5467 = vst.msk [vmem:[%s12 + $0xd] sm:$0x1] %vm4238, %v5445
  %5468 = vst.msk [vmem:[%s12 + $0x15] sm:$0x1] %vm4238, %v5447
  %5469 = vst.msk [vmem:[%s12 + $0x1d] sm:$0x1] %vm4238, %v5449
  %5470 = vst.msk [vmem:[%s12 + $0x25] sm:$0x1] %vm4238, %v5451
  %5471 = vst.msk [vmem:[%s12 + $0x2d] sm:$0x1] %vm4238, %v5453
  %5472 = vst.msk [vmem:[%s12 + $0x35] sm:$0x1] %vm4238, %v5455
  %5473 = vst.msk [vmem:[%s12 + $0x3d] sm:$0x1] %vm4238, %v5457
  %v5474 = vsel %vm2718, %v5423, %v4856
  %v5475 = vld [vmem:[#allocation2 + $0x4] ss:$0 sm:$0xff]
  %v5476 = vld [vmem:[#allocation2 + $0xc] ss:$0 sm:$0xff]
  %v5477 = vld [vmem:[#allocation2 + $0x14] ss:$0 sm:$0xff]
  %v5478 = vld [vmem:[#allocation2 + $0x1c] ss:$0 sm:$0xff]
  %v5479 = vld [vmem:[#allocation2 + $0x24] ss:$0 sm:$0xff]
  %v5480 = vld [vmem:[#allocation2 + $0x2c] ss:$0 sm:$0xff]
  %v5481 = vld [vmem:[#allocation2 + $0x34] ss:$0 sm:$0xff]
  %v5482 = vld [vmem:[#allocation2 + $0x3c] ss:$0 sm:$0xff]
  %v5483 = vld [vmem:[#allocation2 + $0x44] ss:$0 sm:$0xff]
  %v5484 = vld [vmem:[#allocation2 + $0x4c] ss:$0 sm:$0xff]
  %v5485 = vld [vmem:[#allocation2 + $0x54] ss:$0 sm:$0xff]
  %v5486 = vld [vmem:[#allocation2 + $0x5c] ss:$0 sm:$0xff]
  %v5487 = vld [vmem:[#allocation2 + $0x64] ss:$0 sm:$0xff]
  %v5488 = vld [vmem:[#allocation2 + $0x6c] ss:$0 sm:$0xff]
  %v5489 = vld [vmem:[#allocation2 + $0x74] ss:$0 sm:$0xff]
  %v5490 = vld [vmem:[#allocation2 + $0x7c] ss:$0 sm:$0xff]
  %v5491 = vpack.c.bf16 %v5474, %v5474
  %v5493 = vsel %vm212, %v5491, 0
  %5495 = vmatpush.bf16.msra.mxu0 0
  %5496 = vmatpush.bf16.msra.mxu0 0
  %5497 = vmatpush.bf16.msra.mxu0 0
  %5498 = vmatpush.bf16.msra.mxu0 0
  %5499 = vmatpush.bf16.msra.mxu0 0
  %5500 = vmatpush.bf16.msra.mxu0 0
  %5501 = vmatpush.bf16.msra.mxu0 %v3662
  %5502 = vmatpush.bf16.msra.mxu0 %v3661
  %5503 = vmatmul.bf16.gmra.mxu0 %v5493
  %v5504 = vpop.f32.mrf.mxu0
  %v5505 = vadd.f32 %v3651, %v5504
  %v5506 = vpop.f32.mrf.mxu0
  %5507 = vdwg.mxu0
  %v5509 = vrot.slane %v5505, 1
  %v5510 = vrot.slane %v5505, 2
  %v5511 = vrot.slane %v5505, 3
  %v5512 = vrot.slane %v5505, 4
  %v5513 = vrot.slane %v5505, 5
  %v5514 = vrot.slane %v5505, 6
  %v5515 = vrot.slane %v5505, 7
  %5516 = vrot.lane.b32.xlu0 %v5505, 96
  %v5517 = vpop.permute.xlu0 %5516
  %5518 = vrot.lane.b32.xlu0 %v5509, 96
  %v5519 = vpop.permute.xlu0 %5518
  %5520 = vrot.lane.b32.xlu0 %v5510, 96
  %v5521 = vpop.permute.xlu0 %5520
  %5522 = vrot.lane.b32.xlu0 %v5511, 96
  %v5523 = vpop.permute.xlu0 %5522
  %5524 = vrot.lane.b32.xlu0 %v5512, 96
  %v5525 = vpop.permute.xlu0 %5524
  %5526 = vrot.lane.b32.xlu0 %v5513, 96
  %v5527 = vpop.permute.xlu0 %5526
  %5528 = vrot.lane.b32.xlu0 %v5514, 96
  %v5529 = vpop.permute.xlu0 %5528
  %5530 = vrot.lane.b32.xlu0 %v5515, 96
  %v5531 = vpop.permute.xlu0 %5530
  %v5540 = vadd.f32 %v5475, %v5517
  %v5541 = vadd.f32 %v5476, %v5517
  %v5542 = vadd.f32 %v5477, %v5519
  %v5543 = vadd.f32 %v5478, %v5519
  %v5544 = vadd.f32 %v5479, %v5521
  %v5545 = vadd.f32 %v5480, %v5521
  %v5546 = vadd.f32 %v5481, %v5523
  %v5547 = vadd.f32 %v5482, %v5523
  %v5548 = vadd.f32 %v5483, %v5525
  %v5549 = vadd.f32 %v5484, %v5525
  %v5550 = vadd.f32 %v5485, %v5527
  %v5551 = vadd.f32 %v5486, %v5527
  %v5552 = vadd.f32 %v5487, %v5529
  %v5553 = vadd.f32 %v5488, %v5529
  %v5554 = vadd.f32 %v5489, %v5531
  %v5555 = vadd.f32 %v5490, %v5531
  %v5556 = vxor.u32 %v5540, 2147483648
  %v5557 = vxor.u32 %v5541, 2147483648
  %v5558 = vxor.u32 %v5542, 2147483648
  %v5559 = vxor.u32 %v5543, 2147483648
  %v5560 = vxor.u32 %v5544, 2147483648
  %v5561 = vxor.u32 %v5545, 2147483648
  %v5562 = vxor.u32 %v5546, 2147483648
  %v5563 = vxor.u32 %v5547, 2147483648
  %v5564 = vxor.u32 %v5548, 2147483648
  %v5565 = vxor.u32 %v5549, 2147483648
  %v5566 = vxor.u32 %v5550, 2147483648
  %v5567 = vxor.u32 %v5551, 2147483648
  %v5568 = vxor.u32 %v5552, 2147483648
  %v5569 = vxor.u32 %v5553, 2147483648
  %v5570 = vxor.u32 %v5554, 2147483648
  %v5571 = vxor.u32 %v5555, 2147483648
  %v5572 = vmul.f32 %v5556, 1.442695
  %v5573 = vpow.pop %v5572
  %v5574 = vmul.f32 %v5557, 1.442695
  %v5575 = vpow.pop %v5574
  %v5576 = vmul.f32 %v5558, 1.442695
  %v5577 = vpow.pop %v5576
  %v5578 = vmul.f32 %v5559, 1.442695
  %v5579 = vpow.pop %v5578
  %v5580 = vmul.f32 %v5560, 1.442695
  %v5581 = vpow.pop %v5580
  %v5582 = vmul.f32 %v5561, 1.442695
  %v5583 = vpow.pop %v5582
  %v5584 = vmul.f32 %v5562, 1.442695
  %v5585 = vpow.pop %v5584
  %v5586 = vmul.f32 %v5563, 1.442695
  %v5587 = vpow.pop %v5586
  %v5588 = vmul.f32 %v5564, 1.442695
  %v5589 = vpow.pop %v5588
  %v5590 = vmul.f32 %v5565, 1.442695
  %v5591 = vpow.pop %v5590
  %v5592 = vmul.f32 %v5566, 1.442695
  %v5593 = vpow.pop %v5592
  %v5594 = vmul.f32 %v5567, 1.442695
  %v5595 = vpow.pop %v5594
  %v5596 = vmul.f32 %v5568, 1.442695
  %v5597 = vpow.pop %v5596
  %v5598 = vmul.f32 %v5569, 1.442695
  %v5599 = vpow.pop %v5598
  %v5600 = vmul.f32 %v5570, 1.442695
  %v5601 = vpow.pop %v5600
  %v5602 = vmul.f32 %v5571, 1.442695
  %v5603 = vpow.pop %v5602
  %v5604 = vadd.f32 %v5573, 1.0
  %v5605 = vadd.f32 %v5575, 1.0
  %v5606 = vadd.f32 %v5577, 1.0
  %v5607 = vadd.f32 %v5579, 1.0
  %v5608 = vadd.f32 %v5581, 1.0
  %v5609 = vadd.f32 %v5583, 1.0
  %v5610 = vadd.f32 %v5585, 1.0
  %v5611 = vadd.f32 %v5587, 1.0
  %v5612 = vadd.f32 %v5589, 1.0
  %v5613 = vadd.f32 %v5591, 1.0
  %v5614 = vadd.f32 %v5593, 1.0
  %v5615 = vadd.f32 %v5595, 1.0
  %v5616 = vadd.f32 %v5597, 1.0
  %v5617 = vadd.f32 %v5599, 1.0
  %v5618 = vadd.f32 %v5601, 1.0
  %v5619 = vadd.f32 %v5603, 1.0
  %v5620 = vrcp.pop %v5604
  %v5621 = vmul.f32 %v5604, %v5620
  %v5622 = vsub.f32 1.0, %v5621
  %v5623 = vmul.f32 %v5620, %v5622
  %v5624 = vadd.f32 %v5620, %v5623
  %vm5625 = vweird.f32 %v5604
  %vm5626 = vweird.f32 %v5620
  %vm5627 = vmor %vm5625, %vm5626
  %v5628 = vsel %vm5627, %v5620, %v5624
  %v5629 = vand.u32 2147483647, %v5604
  %vm5630 = vcmp.eq.f32.partialorder %v5629, 8.507059e+37
  %v5631 = vand.u32 %v5604, 2147483648
  %v5632 = vor.u32 1.1754944e-38, %v5631
  %v5633 = vsel %vm5630, %v5632, %v5628
  %v5634 = vmul.f32 1.0, %v5633
  %v5635 = vrcp.pop %v5605
  %v5636 = vmul.f32 %v5605, %v5635
  %v5637 = vsub.f32 1.0, %v5636
  %v5638 = vmul.f32 %v5635, %v5637
  %v5639 = vadd.f32 %v5635, %v5638
  %vm5640 = vweird.f32 %v5605
  %vm5641 = vweird.f32 %v5635
  %vm5642 = vmor %vm5640, %vm5641
  %v5643 = vsel %vm5642, %v5635, %v5639
  %v5644 = vand.u32 2147483647, %v5605
  %vm5645 = vcmp.eq.f32.partialorder %v5644, 8.507059e+37
  %v5646 = vand.u32 %v5605, 2147483648
  %v5647 = vor.u32 1.1754944e-38, %v5646
  %v5648 = vsel %vm5645, %v5647, %v5643
  %v5649 = vmul.f32 1.0, %v5648
  %v5650 = vrcp.pop %v5606
  %v5651 = vmul.f32 %v5606, %v5650
  %v5652 = vsub.f32 1.0, %v5651
  %v5653 = vmul.f32 %v5650, %v5652
  %v5654 = vadd.f32 %v5650, %v5653
  %vm5655 = vweird.f32 %v5606
  %vm5656 = vweird.f32 %v5650
  %vm5657 = vmor %vm5655, %vm5656
  %v5658 = vsel %vm5657, %v5650, %v5654
  %v5659 = vand.u32 2147483647, %v5606
  %vm5660 = vcmp.eq.f32.partialorder %v5659, 8.507059e+37
  %v5661 = vand.u32 %v5606, 2147483648
  %v5662 = vor.u32 1.1754944e-38, %v5661
  %v5663 = vsel %vm5660, %v5662, %v5658
  %v5664 = vmul.f32 1.0, %v5663
  %v5665 = vrcp.pop %v5607
  %v5666 = vmul.f32 %v5607, %v5665
  %v5667 = vsub.f32 1.0, %v5666
  %v5668 = vmul.f32 %v5665, %v5667
  %v5669 = vadd.f32 %v5665, %v5668
  %vm5670 = vweird.f32 %v5607
  %vm5671 = vweird.f32 %v5665
  %vm5672 = vmor %vm5670, %vm5671
  %v5673 = vsel %vm5672, %v5665, %v5669
  %v5674 = vand.u32 2147483647, %v5607
  %vm5675 = vcmp.eq.f32.partialorder %v5674, 8.507059e+37
  %v5676 = vand.u32 %v5607, 2147483648
  %v5677 = vor.u32 1.1754944e-38, %v5676
  %v5678 = vsel %vm5675, %v5677, %v5673
  %v5679 = vmul.f32 1.0, %v5678
  %v5680 = vrcp.pop %v5608
  %v5681 = vmul.f32 %v5608, %v5680
  %v5682 = vsub.f32 1.0, %v5681
  %v5683 = vmul.f32 %v5680, %v5682
  %v5684 = vadd.f32 %v5680, %v5683
  %vm5685 = vweird.f32 %v5608
  %vm5686 = vweird.f32 %v5680
  %vm5687 = vmor %vm5685, %vm5686
  %v5688 = vsel %vm5687, %v5680, %v5684
  %v5689 = vand.u32 2147483647, %v5608
  %vm5690 = vcmp.eq.f32.partialorder %v5689, 8.507059e+37
  %v5691 = vand.u32 %v5608, 2147483648
  %v5692 = vor.u32 1.1754944e-38, %v5691
  %v5693 = vsel %vm5690, %v5692, %v5688
  %v5694 = vmul.f32 1.0, %v5693
  %v5695 = vrcp.pop %v5609
  %v5696 = vmul.f32 %v5609, %v5695
  %v5697 = vsub.f32 1.0, %v5696
  %v5698 = vmul.f32 %v5695, %v5697
  %v5699 = vadd.f32 %v5695, %v5698
  %vm5700 = vweird.f32 %v5609
  %vm5701 = vweird.f32 %v5695
  %vm5702 = vmor %vm5700, %vm5701
  %v5703 = vsel %vm5702, %v5695, %v5699
  %v5704 = vand.u32 2147483647, %v5609
  %vm5705 = vcmp.eq.f32.partialorder %v5704, 8.507059e+37
  %v5706 = vand.u32 %v5609, 2147483648
  %v5707 = vor.u32 1.1754944e-38, %v5706
  %v5708 = vsel %vm5705, %v5707, %v5703
  %v5709 = vmul.f32 1.0, %v5708
  %v5710 = vrcp.pop %v5610
  %v5711 = vmul.f32 %v5610, %v5710
  %v5712 = vsub.f32 1.0, %v5711
  %v5713 = vmul.f32 %v5710, %v5712
  %v5714 = vadd.f32 %v5710, %v5713
  %vm5715 = vweird.f32 %v5610
  %vm5716 = vweird.f32 %v5710
  %vm5717 = vmor %vm5715, %vm5716
  %v5718 = vsel %vm5717, %v5710, %v5714
  %v5719 = vand.u32 2147483647, %v5610
  %vm5720 = vcmp.eq.f32.partialorder %v5719, 8.507059e+37
  %v5721 = vand.u32 %v5610, 2147483648
  %v5722 = vor.u32 1.1754944e-38, %v5721
  %v5723 = vsel %vm5720, %v5722, %v5718
  %v5724 = vmul.f32 1.0, %v5723
  %v5725 = vrcp.pop %v5611
  %v5726 = vmul.f32 %v5611, %v5725
  %v5727 = vsub.f32 1.0, %v5726
  %v5728 = vmul.f32 %v5725, %v5727
  %v5729 = vadd.f32 %v5725, %v5728
  %vm5730 = vweird.f32 %v5611
  %vm5731 = vweird.f32 %v5725
  %vm5732 = vmor %vm5730, %vm5731
  %v5733 = vsel %vm5732, %v5725, %v5729
  %v5734 = vand.u32 2147483647, %v5611
  %vm5735 = vcmp.eq.f32.partialorder %v5734, 8.507059e+37
  %v5736 = vand.u32 %v5611, 2147483648
  %v5737 = vor.u32 1.1754944e-38, %v5736
  %v5738 = vsel %vm5735, %v5737, %v5733
  %v5739 = vmul.f32 1.0, %v5738
  %v5740 = vrcp.pop %v5612
  %v5741 = vmul.f32 %v5612, %v5740
  %v5742 = vsub.f32 1.0, %v5741
  %v5743 = vmul.f32 %v5740, %v5742
  %v5744 = vadd.f32 %v5740, %v5743
  %vm5745 = vweird.f32 %v5612
  %vm5746 = vweird.f32 %v5740
  %vm5747 = vmor %vm5745, %vm5746
  %v5748 = vsel %vm5747, %v5740, %v5744
  %v5749 = vand.u32 2147483647, %v5612
  %vm5750 = vcmp.eq.f32.partialorder %v5749, 8.507059e+37
  %v5751 = vand.u32 %v5612, 2147483648
  %v5752 = vor.u32 1.1754944e-38, %v5751
  %v5753 = vsel %vm5750, %v5752, %v5748
  %v5754 = vmul.f32 1.0, %v5753
  %v5755 = vrcp.pop %v5613
  %v5756 = vmul.f32 %v5613, %v5755
  %v5757 = vsub.f32 1.0, %v5756
  %v5758 = vmul.f32 %v5755, %v5757
  %v5759 = vadd.f32 %v5755, %v5758
  %vm5760 = vweird.f32 %v5613
  %vm5761 = vweird.f32 %v5755
  %vm5762 = vmor %vm5760, %vm5761
  %v5763 = vsel %vm5762, %v5755, %v5759
  %v5764 = vand.u32 2147483647, %v5613
  %vm5765 = vcmp.eq.f32.partialorder %v5764, 8.507059e+37
  %v5766 = vand.u32 %v5613, 2147483648
  %v5767 = vor.u32 1.1754944e-38, %v5766
  %v5768 = vsel %vm5765, %v5767, %v5763
  %v5769 = vmul.f32 1.0, %v5768
  %v5770 = vrcp.pop %v5614
  %v5771 = vmul.f32 %v5614, %v5770
  %v5772 = vsub.f32 1.0, %v5771
  %v5773 = vmul.f32 %v5770, %v5772
  %v5774 = vadd.f32 %v5770, %v5773
  %vm5775 = vweird.f32 %v5614
  %vm5776 = vweird.f32 %v5770
  %vm5777 = vmor %vm5775, %vm5776
  %v5778 = vsel %vm5777, %v5770, %v5774
  %v5779 = vand.u32 2147483647, %v5614
  %vm5780 = vcmp.eq.f32.partialorder %v5779, 8.507059e+37
  %v5781 = vand.u32 %v5614, 2147483648
  %v5782 = vor.u32 1.1754944e-38, %v5781
  %v5783 = vsel %vm5780, %v5782, %v5778
  %v5784 = vmul.f32 1.0, %v5783
  %v5785 = vrcp.pop %v5615
  %v5786 = vmul.f32 %v5615, %v5785
  %v5787 = vsub.f32 1.0, %v5786
  %v5788 = vmul.f32 %v5785, %v5787
  %v5789 = vadd.f32 %v5785, %v5788
  %vm5790 = vweird.f32 %v5615
  %vm5791 = vweird.f32 %v5785
  %vm5792 = vmor %vm5790, %vm5791
  %v5793 = vsel %vm5792, %v5785, %v5789
  %v5794 = vand.u32 2147483647, %v5615
  %vm5795 = vcmp.eq.f32.partialorder %v5794, 8.507059e+37
  %v5796 = vand.u32 %v5615, 2147483648
  %v5797 = vor.u32 1.1754944e-38, %v5796
  %v5798 = vsel %vm5795, %v5797, %v5793
  %v5799 = vmul.f32 1.0, %v5798
  %v5800 = vrcp.pop %v5616
  %v5801 = vmul.f32 %v5616, %v5800
  %v5802 = vsub.f32 1.0, %v5801
  %v5803 = vmul.f32 %v5800, %v5802
  %v5804 = vadd.f32 %v5800, %v5803
  %vm5805 = vweird.f32 %v5616
  %vm5806 = vweird.f32 %v5800
  %vm5807 = vmor %vm5805, %vm5806
  %v5808 = vsel %vm5807, %v5800, %v5804
  %v5809 = vand.u32 2147483647, %v5616
  %vm5810 = vcmp.eq.f32.partialorder %v5809, 8.507059e+37
  %v5811 = vand.u32 %v5616, 2147483648
  %v5812 = vor.u32 1.1754944e-38, %v5811
  %v5813 = vsel %vm5810, %v5812, %v5808
  %v5814 = vmul.f32 1.0, %v5813
  %v5815 = vrcp.pop %v5617
  %v5816 = vmul.f32 %v5617, %v5815
  %v5817 = vsub.f32 1.0, %v5816
  %v5818 = vmul.f32 %v5815, %v5817
  %v5819 = vadd.f32 %v5815, %v5818
  %vm5820 = vweird.f32 %v5617
  %vm5821 = vweird.f32 %v5815
  %vm5822 = vmor %vm5820, %vm5821
  %v5823 = vsel %vm5822, %v5815, %v5819
  %v5824 = vand.u32 2147483647, %v5617
  %vm5825 = vcmp.eq.f32.partialorder %v5824, 8.507059e+37
  %v5826 = vand.u32 %v5617, 2147483648
  %v5827 = vor.u32 1.1754944e-38, %v5826
  %v5828 = vsel %vm5825, %v5827, %v5823
  %v5829 = vmul.f32 1.0, %v5828
  %v5830 = vrcp.pop %v5618
  %v5831 = vmul.f32 %v5618, %v5830
  %v5832 = vsub.f32 1.0, %v5831
  %v5833 = vmul.f32 %v5830, %v5832
  %v5834 = vadd.f32 %v5830, %v5833
  %vm5835 = vweird.f32 %v5618
  %vm5836 = vweird.f32 %v5830
  %vm5837 = vmor %vm5835, %vm5836
  %v5838 = vsel %vm5837, %v5830, %v5834
  %v5839 = vand.u32 2147483647, %v5618
  %vm5840 = vcmp.eq.f32.partialorder %v5839, 8.507059e+37
  %v5841 = vand.u32 %v5618, 2147483648
  %v5842 = vor.u32 1.1754944e-38, %v5841
  %v5843 = vsel %vm5840, %v5842, %v5838
  %v5844 = vmul.f32 1.0, %v5843
  %v5845 = vrcp.pop %v5619
  %v5846 = vmul.f32 %v5619, %v5845
  %v5847 = vsub.f32 1.0, %v5846
  %v5848 = vmul.f32 %v5845, %v5847
  %v5849 = vadd.f32 %v5845, %v5848
  %vm5850 = vweird.f32 %v5619
  %vm5851 = vweird.f32 %v5845
  %vm5852 = vmor %vm5850, %vm5851
  %v5853 = vsel %vm5852, %v5845, %v5849
  %v5854 = vand.u32 2147483647, %v5619
  %vm5855 = vcmp.eq.f32.partialorder %v5854, 8.507059e+37
  %v5856 = vand.u32 %v5619, 2147483648
  %v5857 = vor.u32 1.1754944e-38, %v5856
  %v5858 = vsel %vm5855, %v5857, %v5853
  %v5859 = vmul.f32 1.0, %v5858
  %5860 = vrot.lane.b32.xlu0 %v5505, 32
  %v5861 = vpop.permute.xlu0 %5860
  %5862 = vrot.lane.b32.xlu0 %v5509, 32
  %v5863 = vpop.permute.xlu0 %5862
  %5864 = vrot.lane.b32.xlu0 %v5510, 32
  %v5865 = vpop.permute.xlu0 %5864
  %5866 = vrot.lane.b32.xlu0 %v5511, 32
  %v5867 = vpop.permute.xlu0 %5866
  %5868 = vrot.lane.b32.xlu0 %v5512, 32
  %v5869 = vpop.permute.xlu0 %5868
  %5870 = vrot.lane.b32.xlu0 %v5513, 32
  %v5871 = vpop.permute.xlu0 %5870
  %5872 = vrot.lane.b32.xlu0 %v5514, 32
  %v5873 = vpop.permute.xlu0 %5872
  %5874 = vrot.lane.b32.xlu0 %v5515, 32
  %v5875 = vpop.permute.xlu0 %5874
  %v5884 = vmul.f32 %v5634, %v5861
  %v5885 = vmul.f32 %v5664, %v5863
  %v5886 = vmul.f32 %v5694, %v5865
  %v5887 = vmul.f32 %v5724, %v5867
  %v5888 = vmul.f32 %v5754, %v5869
  %v5889 = vmul.f32 %v5784, %v5871
  %v5890 = vmul.f32 %v5814, %v5873
  %v5891 = vmul.f32 %v5844, %v5875
  %5900 = vrot.lane.b32.xlu0 %v5884, 64
  %v5901 = vpop.permute.xlu0 %5900
  %5902 = vrot.lane.b32.xlu0 %v5885, 64
  %v5903 = vpop.permute.xlu0 %5902
  %5904 = vrot.lane.b32.xlu0 %v5886, 64
  %v5905 = vpop.permute.xlu0 %5904
  %5906 = vrot.lane.b32.xlu0 %v5887, 64
  %v5907 = vpop.permute.xlu0 %5906
  %5908 = vrot.lane.b32.xlu0 %v5888, 64
  %v5909 = vpop.permute.xlu0 %5908
  %5910 = vrot.lane.b32.xlu0 %v5889, 64
  %v5911 = vpop.permute.xlu0 %5910
  %5912 = vrot.lane.b32.xlu0 %v5890, 64
  %v5913 = vpop.permute.xlu0 %5912
  %5914 = vrot.lane.b32.xlu0 %v5891, 64
  %v5915 = vpop.permute.xlu0 %5914
  %v5924 = vadd.f32 %v5476, %v5901
  %v5925 = vadd.f32 %v5478, %v5903
  %v5926 = vadd.f32 %v5480, %v5905
  %v5927 = vadd.f32 %v5482, %v5907
  %v5928 = vadd.f32 %v5484, %v5909
  %v5929 = vadd.f32 %v5486, %v5911
  %v5930 = vadd.f32 %v5488, %v5913
  %v5931 = vadd.f32 %v5490, %v5915
  %v5932 = vtanh.pop %v5924
  %v5933 = vtanh.pop %v5925
  %v5934 = vtanh.pop %v5926
  %v5935 = vtanh.pop %v5927
  %v5936 = vtanh.pop %v5928
  %v5937 = vtanh.pop %v5929
  %v5938 = vtanh.pop %v5930
  %v5939 = vtanh.pop %v5931
  %v5940 = vsub.f32 1.0, %v5649
  %v5941 = vsub.f32 1.0, %v5679
  %v5942 = vsub.f32 1.0, %v5709
  %v5943 = vsub.f32 1.0, %v5739
  %v5944 = vsub.f32 1.0, %v5769
  %v5945 = vsub.f32 1.0, %v5799
  %v5946 = vsub.f32 1.0, %v5829
  %v5947 = vsub.f32 1.0, %v5859
  %5956 = vrot.lane.b32.xlu0 %v5932, 96
  %v5957 = vpop.permute.xlu0 %5956
  %5958 = vrot.lane.b32.xlu0 %v5933, 96
  %v5959 = vpop.permute.xlu0 %5958
  %5960 = vrot.lane.b32.xlu0 %v5934, 96
  %v5961 = vpop.permute.xlu0 %5960
  %5962 = vrot.lane.b32.xlu0 %v5935, 96
  %v5963 = vpop.permute.xlu0 %5962
  %5964 = vrot.lane.b32.xlu0 %v5936, 96
  %v5965 = vpop.permute.xlu0 %5964
  %5966 = vrot.lane.b32.xlu0 %v5937, 96
  %v5967 = vpop.permute.xlu0 %5966
  %5968 = vrot.lane.b32.xlu0 %v5938, 96
  %v5969 = vpop.permute.xlu0 %5968
  %5970 = vrot.lane.b32.xlu0 %v5939, 96
  %v5971 = vpop.permute.xlu0 %5970
  %v5980 = vmul.f32 %v5940, %v5957
  %v5981 = vmul.f32 %v5941, %v5959
  %v5982 = vmul.f32 %v5942, %v5961
  %v5983 = vmul.f32 %v5943, %v5963
  %v5984 = vmul.f32 %v5944, %v5965
  %v5985 = vmul.f32 %v5945, %v5967
  %v5986 = vmul.f32 %v5946, %v5969
  %v5987 = vmul.f32 %v5947, %v5971
  %v5989 = vrot.slane %v5474, 1
  %v5990 = vrot.slane %v5474, 2
  %v5991 = vrot.slane %v5474, 3
  %v5992 = vrot.slane %v5474, 4
  %v5993 = vrot.slane %v5474, 5
  %v5994 = vrot.slane %v5474, 6
  %v5995 = vrot.slane %v5474, 7
  %v6004 = vmul.f32 %v5649, %v5474
  %v6005 = vmul.f32 %v5679, %v5989
  %v6006 = vmul.f32 %v5709, %v5990
  %v6007 = vmul.f32 %v5739, %v5991
  %v6008 = vmul.f32 %v5769, %v5992
  %v6009 = vmul.f32 %v5799, %v5993
  %v6010 = vmul.f32 %v5829, %v5994
  %v6011 = vmul.f32 %v5859, %v5995
  %v6012 = vadd.f32 %v5980, %v6004
  %v6013 = vadd.f32 %v5981, %v6005
  %v6014 = vadd.f32 %v5982, %v6006
  %v6015 = vadd.f32 %v5983, %v6007
  %v6016 = vadd.f32 %v5984, %v6008
  %v6017 = vadd.f32 %v5985, %v6009
  %v6018 = vadd.f32 %v5986, %v6010
  %v6019 = vadd.f32 %v5987, %v6011
  %v6028 = vrot.slane %v6013, 7
  %v6029 = vsel %vm564, %v6028, %v6012
  %v6030 = vrot.slane %v6014, 6
  %v6031 = vsel %vm567, %v6030, %v6029
  %v6032 = vrot.slane %v6015, 5
  %v6033 = vsel %vm570, %v6032, %v6031
  %v6034 = vrot.slane %v6016, 4
  %v6035 = vsel %vm573, %v6034, %v6033
  %v6036 = vrot.slane %v6017, 3
  %v6037 = vsel %vm576, %v6036, %v6035
  %v6038 = vrot.slane %v6018, 2
  %v6039 = vsel %vm579, %v6038, %v6037
  %v6040 = vrot.slane %v6019, 1
  %v6041 = vsel %vm582, %v6040, %v6039
  %v6043 = vsel %vm2285, %v6041, 0.0
  %v6045 = vrot.slane %v6043, 1
  %v6046 = vrot.slane %v6043, 2
  %v6047 = vrot.slane %v6043, 3
  %v6048 = vrot.slane %v6043, 4
  %v6049 = vrot.slane %v6043, 5
  %v6050 = vrot.slane %v6043, 6
  %v6051 = vrot.slane %v6043, 7
  %v6052 = vperm.slane %v6043, 0
  %v6053 = vperm.slane %v6045, 0
  %v6054 = vperm.slane %v6046, 0
  %v6055 = vperm.slane %v6047, 0
  %v6056 = vperm.slane %v6048, 0
  %v6057 = vperm.slane %v6049, 0
  %v6058 = vperm.slane %v6050, 0
  %v6059 = vperm.slane %v6051, 0
  %6060 = vrot.lane.b32.xlu0 %v6052, 32
  %v6061 = vpop.permute.xlu0 %6060
  %6062 = vrot.lane.b32.xlu0 %v6053, 32
  %v6063 = vpop.permute.xlu0 %6062
  %6064 = vrot.lane.b32.xlu0 %v6054, 32
  %v6065 = vpop.permute.xlu0 %6064
  %6066 = vrot.lane.b32.xlu0 %v6055, 32
  %v6067 = vpop.permute.xlu0 %6066
  %6068 = vrot.lane.b32.xlu0 %v6056, 32
  %v6069 = vpop.permute.xlu0 %6068
  %6070 = vrot.lane.b32.xlu0 %v6057, 32
  %v6071 = vpop.permute.xlu0 %6070
  %6072 = vrot.lane.b32.xlu0 %v6058, 32
  %v6073 = vpop.permute.xlu0 %6072
  %6074 = vrot.lane.b32.xlu0 %v6059, 32
  %v6075 = vpop.permute.xlu0 %6074
  %6084 = vst.msk [vmem:[%s12 + $0x4] sm:$0x1] %vm4238, %v6061
  %6085 = vst.msk [vmem:[%s12 + $0xc] sm:$0x1] %vm4238, %v6063
  %6086 = vst.msk [vmem:[%s12 + $0x14] sm:$0x1] %vm4238, %v6065
  %6087 = vst.msk [vmem:[%s12 + $0x1c] sm:$0x1] %vm4238, %v6067
  %6088 = vst.msk [vmem:[%s12 + $0x24] sm:$0x1] %vm4238, %v6069
  %6089 = vst.msk [vmem:[%s12 + $0x2c] sm:$0x1] %vm4238, %v6071
  %6090 = vst.msk [vmem:[%s12 + $0x34] sm:$0x1] %vm4238, %v6073
  %6091 = vst.msk [vmem:[%s12 + $0x3c] sm:$0x1] %vm4238, %v6075
  %v6092 = vsel %vm2285, %v6041, %v5474
  %v6093 = vld [vmem:[#allocation2 + $0x3] ss:$0 sm:$0xff]
  %v6094 = vld [vmem:[#allocation2 + $0xb] ss:$0 sm:$0xff]
  %v6095 = vld [vmem:[#allocation2 + $0x13] ss:$0 sm:$0xff]
  %v6096 = vld [vmem:[#allocation2 + $0x1b] ss:$0 sm:$0xff]
  %v6097 = vld [vmem:[#allocation2 + $0x23] ss:$0 sm:$0xff]
  %v6098 = vld [vmem:[#allocation2 + $0x2b] ss:$0 sm:$0xff]
  %v6099 = vld [vmem:[#allocation2 + $0x33] ss:$0 sm:$0xff]
  %v6100 = vld [vmem:[#allocation2 + $0x3b] ss:$0 sm:$0xff]
  %v6101 = vld [vmem:[#allocation2 + $0x43] ss:$0 sm:$0xff]
  %v6102 = vld [vmem:[#allocation2 + $0x4b] ss:$0 sm:$0xff]
  %v6103 = vld [vmem:[#allocation2 + $0x53] ss:$0 sm:$0xff]
  %v6104 = vld [vmem:[#allocation2 + $0x5b] ss:$0 sm:$0xff]
  %v6105 = vld [vmem:[#allocation2 + $0x63] ss:$0 sm:$0xff]
  %v6106 = vld [vmem:[#allocation2 + $0x6b] ss:$0 sm:$0xff]
  %v6107 = vld [vmem:[#allocation2 + $0x73] ss:$0 sm:$0xff]
  %v6108 = vld [vmem:[#allocation2 + $0x7b] ss:$0 sm:$0xff]
  %v6109 = vpack.c.bf16 %v6092, %v6092
  %v6111 = vsel %vm212, %v6109, 0
  %6113 = vmatpush.bf16.msra.mxu0 0
  %6114 = vmatpush.bf16.msra.mxu0 0
  %6115 = vmatpush.bf16.msra.mxu0 0
  %6116 = vmatpush.bf16.msra.mxu0 0
  %6117 = vmatpush.bf16.msra.mxu0 0
  %6118 = vmatpush.bf16.msra.mxu0 0
  %6119 = vmatpush.bf16.msra.mxu0 %v3662
  %6120 = vmatpush.bf16.msra.mxu0 %v3661
  %6121 = vmatmul.bf16.gmra.mxu0 %v6111
  %v6122 = vpop.f32.mrf.mxu0
  %v6123 = vadd.f32 %v3651, %v6122
  %v6124 = vpop.f32.mrf.mxu0
  %6125 = vdwg.mxu0
  %v6127 = vrot.slane %v6123, 1
  %v6128 = vrot.slane %v6123, 2
  %v6129 = vrot.slane %v6123, 3
  %v6130 = vrot.slane %v6123, 4
  %v6131 = vrot.slane %v6123, 5
  %v6132 = vrot.slane %v6123, 6
  %v6133 = vrot.slane %v6123, 7
  %6134 = vrot.lane.b32.xlu0 %v6123, 96
  %v6135 = vpop.permute.xlu0 %6134
  %6136 = vrot.lane.b32.xlu0 %v6127, 96
  %v6137 = vpop.permute.xlu0 %6136
  %6138 = vrot.lane.b32.xlu0 %v6128, 96
  %v6139 = vpop.permute.xlu0 %6138
  %6140 = vrot.lane.b32.xlu0 %v6129, 96
  %v6141 = vpop.permute.xlu0 %6140
  %6142 = vrot.lane.b32.xlu0 %v6130, 96
  %v6143 = vpop.permute.xlu0 %6142
  %6144 = vrot.lane.b32.xlu0 %v6131, 96
  %v6145 = vpop.permute.xlu0 %6144
  %6146 = vrot.lane.b32.xlu0 %v6132, 96
  %v6147 = vpop.permute.xlu0 %6146
  %6148 = vrot.lane.b32.xlu0 %v6133, 96
  %v6149 = vpop.permute.xlu0 %6148
  %v6158 = vadd.f32 %v6093, %v6135
  %v6159 = vadd.f32 %v6094, %v6135
  %v6160 = vadd.f32 %v6095, %v6137
  %v6161 = vadd.f32 %v6096, %v6137
  %v6162 = vadd.f32 %v6097, %v6139
  %v6163 = vadd.f32 %v6098, %v6139
  %v6164 = vadd.f32 %v6099, %v6141
  %v6165 = vadd.f32 %v6100, %v6141
  %v6166 = vadd.f32 %v6101, %v6143
  %v6167 = vadd.f32 %v6102, %v6143
  %v6168 = vadd.f32 %v6103, %v6145
  %v6169 = vadd.f32 %v6104, %v6145
  %v6170 = vadd.f32 %v6105, %v6147
  %v6171 = vadd.f32 %v6106, %v6147
  %v6172 = vadd.f32 %v6107, %v6149
  %v6173 = vadd.f32 %v6108, %v6149
  %v6174 = vxor.u32 %v6158, 2147483648
  %v6175 = vxor.u32 %v6159, 2147483648
  %v6176 = vxor.u32 %v6160, 2147483648
  %v6177 = vxor.u32 %v6161, 2147483648
  %v6178 = vxor.u32 %v6162, 2147483648
  %v6179 = vxor.u32 %v6163, 2147483648
  %v6180 = vxor.u32 %v6164, 2147483648
  %v6181 = vxor.u32 %v6165, 2147483648
  %v6182 = vxor.u32 %v6166, 2147483648
  %v6183 = vxor.u32 %v6167, 2147483648
  %v6184 = vxor.u32 %v6168, 2147483648
  %v6185 = vxor.u32 %v6169, 2147483648
  %v6186 = vxor.u32 %v6170, 2147483648
  %v6187 = vxor.u32 %v6171, 2147483648
  %v6188 = vxor.u32 %v6172, 2147483648
  %v6189 = vxor.u32 %v6173, 2147483648
  %v6190 = vmul.f32 %v6174, 1.442695
  %v6191 = vpow.pop %v6190
  %v6192 = vmul.f32 %v6175, 1.442695
  %v6193 = vpow.pop %v6192
  %v6194 = vmul.f32 %v6176, 1.442695
  %v6195 = vpow.pop %v6194
  %v6196 = vmul.f32 %v6177, 1.442695
  %v6197 = vpow.pop %v6196
  %v6198 = vmul.f32 %v6178, 1.442695
  %v6199 = vpow.pop %v6198
  %v6200 = vmul.f32 %v6179, 1.442695
  %v6201 = vpow.pop %v6200
  %v6202 = vmul.f32 %v6180, 1.442695
  %v6203 = vpow.pop %v6202
  %v6204 = vmul.f32 %v6181, 1.442695
  %v6205 = vpow.pop %v6204
  %v6206 = vmul.f32 %v6182, 1.442695
  %v6207 = vpow.pop %v6206
  %v6208 = vmul.f32 %v6183, 1.442695
  %v6209 = vpow.pop %v6208
  %v6210 = vmul.f32 %v6184, 1.442695
  %v6211 = vpow.pop %v6210
  %v6212 = vmul.f32 %v6185, 1.442695
  %v6213 = vpow.pop %v6212
  %v6214 = vmul.f32 %v6186, 1.442695
  %v6215 = vpow.pop %v6214
  %v6216 = vmul.f32 %v6187, 1.442695
  %v6217 = vpow.pop %v6216
  %v6218 = vmul.f32 %v6188, 1.442695
  %v6219 = vpow.pop %v6218
  %v6220 = vmul.f32 %v6189, 1.442695
  %v6221 = vpow.pop %v6220
  %v6222 = vadd.f32 %v6191, 1.0
  %v6223 = vadd.f32 %v6193, 1.0
  %v6224 = vadd.f32 %v6195, 1.0
  %v6225 = vadd.f32 %v6197, 1.0
  %v6226 = vadd.f32 %v6199, 1.0
  %v6227 = vadd.f32 %v6201, 1.0
  %v6228 = vadd.f32 %v6203, 1.0
  %v6229 = vadd.f32 %v6205, 1.0
  %v6230 = vadd.f32 %v6207, 1.0
  %v6231 = vadd.f32 %v6209, 1.0
  %v6232 = vadd.f32 %v6211, 1.0
  %v6233 = vadd.f32 %v6213, 1.0
  %v6234 = vadd.f32 %v6215, 1.0
  %v6235 = vadd.f32 %v6217, 1.0
  %v6236 = vadd.f32 %v6219, 1.0
  %v6237 = vadd.f32 %v6221, 1.0
  %v6238 = vrcp.pop %v6222
  %v6239 = vmul.f32 %v6222, %v6238
  %v6240 = vsub.f32 1.0, %v6239
  %v6241 = vmul.f32 %v6238, %v6240
  %v6242 = vadd.f32 %v6238, %v6241
  %vm6243 = vweird.f32 %v6222
  %vm6244 = vweird.f32 %v6238
  %vm6245 = vmor %vm6243, %vm6244
  %v6246 = vsel %vm6245, %v6238, %v6242
  %v6247 = vand.u32 2147483647, %v6222
  %vm6248 = vcmp.eq.f32.partialorder %v6247, 8.507059e+37
  %v6249 = vand.u32 %v6222, 2147483648
  %v6250 = vor.u32 1.1754944e-38, %v6249
  %v6251 = vsel %vm6248, %v6250, %v6246
  %v6252 = vmul.f32 1.0, %v6251
  %v6253 = vrcp.pop %v6223
  %v6254 = vmul.f32 %v6223, %v6253
  %v6255 = vsub.f32 1.0, %v6254
  %v6256 = vmul.f32 %v6253, %v6255
  %v6257 = vadd.f32 %v6253, %v6256
  %vm6258 = vweird.f32 %v6223
  %vm6259 = vweird.f32 %v6253
  %vm6260 = vmor %vm6258, %vm6259
  %v6261 = vsel %vm6260, %v6253, %v6257
  %v6262 = vand.u32 2147483647, %v6223
  %vm6263 = vcmp.eq.f32.partialorder %v6262, 8.507059e+37
  %v6264 = vand.u32 %v6223, 2147483648
  %v6265 = vor.u32 1.1754944e-38, %v6264
  %v6266 = vsel %vm6263, %v6265, %v6261
  %v6267 = vmul.f32 1.0, %v6266
  %v6268 = vrcp.pop %v6224
  %v6269 = vmul.f32 %v6224, %v6268
  %v6270 = vsub.f32 1.0, %v6269
  %v6271 = vmul.f32 %v6268, %v6270
  %v6272 = vadd.f32 %v6268, %v6271
  %vm6273 = vweird.f32 %v6224
  %vm6274 = vweird.f32 %v6268
  %vm6275 = vmor %vm6273, %vm6274
  %v6276 = vsel %vm6275, %v6268, %v6272
  %v6277 = vand.u32 2147483647, %v6224
  %vm6278 = vcmp.eq.f32.partialorder %v6277, 8.507059e+37
  %v6279 = vand.u32 %v6224, 2147483648
  %v6280 = vor.u32 1.1754944e-38, %v6279
  %v6281 = vsel %vm6278, %v6280, %v6276
  %v6282 = vmul.f32 1.0, %v6281
  %v6283 = vrcp.pop %v6225
  %v6284 = vmul.f32 %v6225, %v6283
  %v6285 = vsub.f32 1.0, %v6284
  %v6286 = vmul.f32 %v6283, %v6285
  %v6287 = vadd.f32 %v6283, %v6286
  %vm6288 = vweird.f32 %v6225
  %vm6289 = vweird.f32 %v6283
  %vm6290 = vmor %vm6288, %vm6289
  %v6291 = vsel %vm6290, %v6283, %v6287
  %v6292 = vand.u32 2147483647, %v6225
  %vm6293 = vcmp.eq.f32.partialorder %v6292, 8.507059e+37
  %v6294 = vand.u32 %v6225, 2147483648
  %v6295 = vor.u32 1.1754944e-38, %v6294
  %v6296 = vsel %vm6293, %v6295, %v6291
  %v6297 = vmul.f32 1.0, %v6296
  %v6298 = vrcp.pop %v6226
  %v6299 = vmul.f32 %v6226, %v6298
  %v6300 = vsub.f32 1.0, %v6299
  %v6301 = vmul.f32 %v6298, %v6300
  %v6302 = vadd.f32 %v6298, %v6301
  %vm6303 = vweird.f32 %v6226
  %vm6304 = vweird.f32 %v6298
  %vm6305 = vmor %vm6303, %vm6304
  %v6306 = vsel %vm6305, %v6298, %v6302
  %v6307 = vand.u32 2147483647, %v6226
  %vm6308 = vcmp.eq.f32.partialorder %v6307, 8.507059e+37
  %v6309 = vand.u32 %v6226, 2147483648
  %v6310 = vor.u32 1.1754944e-38, %v6309
  %v6311 = vsel %vm6308, %v6310, %v6306
  %v6312 = vmul.f32 1.0, %v6311
  %v6313 = vrcp.pop %v6227
  %v6314 = vmul.f32 %v6227, %v6313
  %v6315 = vsub.f32 1.0, %v6314
  %v6316 = vmul.f32 %v6313, %v6315
  %v6317 = vadd.f32 %v6313, %v6316
  %vm6318 = vweird.f32 %v6227
  %vm6319 = vweird.f32 %v6313
  %vm6320 = vmor %vm6318, %vm6319
  %v6321 = vsel %vm6320, %v6313, %v6317
  %v6322 = vand.u32 2147483647, %v6227
  %vm6323 = vcmp.eq.f32.partialorder %v6322, 8.507059e+37
  %v6324 = vand.u32 %v6227, 2147483648
  %v6325 = vor.u32 1.1754944e-38, %v6324
  %v6326 = vsel %vm6323, %v6325, %v6321
  %v6327 = vmul.f32 1.0, %v6326
  %v6328 = vrcp.pop %v6228
  %v6329 = vmul.f32 %v6228, %v6328
  %v6330 = vsub.f32 1.0, %v6329
  %v6331 = vmul.f32 %v6328, %v6330
  %v6332 = vadd.f32 %v6328, %v6331
  %vm6333 = vweird.f32 %v6228
  %vm6334 = vweird.f32 %v6328
  %vm6335 = vmor %vm6333, %vm6334
  %v6336 = vsel %vm6335, %v6328, %v6332
  %v6337 = vand.u32 2147483647, %v6228
  %vm6338 = vcmp.eq.f32.partialorder %v6337, 8.507059e+37
  %v6339 = vand.u32 %v6228, 2147483648
  %v6340 = vor.u32 1.1754944e-38, %v6339
  %v6341 = vsel %vm6338, %v6340, %v6336
  %v6342 = vmul.f32 1.0, %v6341
  %v6343 = vrcp.pop %v6229
  %v6344 = vmul.f32 %v6229, %v6343
  %v6345 = vsub.f32 1.0, %v6344
  %v6346 = vmul.f32 %v6343, %v6345
  %v6347 = vadd.f32 %v6343, %v6346
  %vm6348 = vweird.f32 %v6229
  %vm6349 = vweird.f32 %v6343
  %vm6350 = vmor %vm6348, %vm6349
  %v6351 = vsel %vm6350, %v6343, %v6347
  %v6352 = vand.u32 2147483647, %v6229
  %vm6353 = vcmp.eq.f32.partialorder %v6352, 8.507059e+37
  %v6354 = vand.u32 %v6229, 2147483648
  %v6355 = vor.u32 1.1754944e-38, %v6354
  %v6356 = vsel %vm6353, %v6355, %v6351
  %v6357 = vmul.f32 1.0, %v6356
  %v6358 = vrcp.pop %v6230
  %v6359 = vmul.f32 %v6230, %v6358
  %v6360 = vsub.f32 1.0, %v6359
  %v6361 = vmul.f32 %v6358, %v6360
  %v6362 = vadd.f32 %v6358, %v6361
  %vm6363 = vweird.f32 %v6230
  %vm6364 = vweird.f32 %v6358
  %vm6365 = vmor %vm6363, %vm6364
  %v6366 = vsel %vm6365, %v6358, %v6362
  %v6367 = vand.u32 2147483647, %v6230
  %vm6368 = vcmp.eq.f32.partialorder %v6367, 8.507059e+37
  %v6369 = vand.u32 %v6230, 2147483648
  %v6370 = vor.u32 1.1754944e-38, %v6369
  %v6371 = vsel %vm6368, %v6370, %v6366
  %v6372 = vmul.f32 1.0, %v6371
  %v6373 = vrcp.pop %v6231
  %v6374 = vmul.f32 %v6231, %v6373
  %v6375 = vsub.f32 1.0, %v6374
  %v6376 = vmul.f32 %v6373, %v6375
  %v6377 = vadd.f32 %v6373, %v6376
  %vm6378 = vweird.f32 %v6231
  %vm6379 = vweird.f32 %v6373
  %vm6380 = vmor %vm6378, %vm6379
  %v6381 = vsel %vm6380, %v6373, %v6377
  %v6382 = vand.u32 2147483647, %v6231
  %vm6383 = vcmp.eq.f32.partialorder %v6382, 8.507059e+37
  %v6384 = vand.u32 %v6231, 2147483648
  %v6385 = vor.u32 1.1754944e-38, %v6384
  %v6386 = vsel %vm6383, %v6385, %v6381
  %v6387 = vmul.f32 1.0, %v6386
  %v6388 = vrcp.pop %v6232
  %v6389 = vmul.f32 %v6232, %v6388
  %v6390 = vsub.f32 1.0, %v6389
  %v6391 = vmul.f32 %v6388, %v6390
  %v6392 = vadd.f32 %v6388, %v6391
  %vm6393 = vweird.f32 %v6232
  %vm6394 = vweird.f32 %v6388
  %vm6395 = vmor %vm6393, %vm6394
  %v6396 = vsel %vm6395, %v6388, %v6392
  %v6397 = vand.u32 2147483647, %v6232
  %vm6398 = vcmp.eq.f32.partialorder %v6397, 8.507059e+37
  %v6399 = vand.u32 %v6232, 2147483648
  %v6400 = vor.u32 1.1754944e-38, %v6399
  %v6401 = vsel %vm6398, %v6400, %v6396
  %v6402 = vmul.f32 1.0, %v6401
  %v6403 = vrcp.pop %v6233
  %v6404 = vmul.f32 %v6233, %v6403
  %v6405 = vsub.f32 1.0, %v6404
  %v6406 = vmul.f32 %v6403, %v6405
  %v6407 = vadd.f32 %v6403, %v6406
  %vm6408 = vweird.f32 %v6233
  %vm6409 = vweird.f32 %v6403
  %vm6410 = vmor %vm6408, %vm6409
  %v6411 = vsel %vm6410, %v6403, %v6407
  %v6412 = vand.u32 2147483647, %v6233
  %vm6413 = vcmp.eq.f32.partialorder %v6412, 8.507059e+37
  %v6414 = vand.u32 %v6233, 2147483648
  %v6415 = vor.u32 1.1754944e-38, %v6414
  %v6416 = vsel %vm6413, %v6415, %v6411
  %v6417 = vmul.f32 1.0, %v6416
  %v6418 = vrcp.pop %v6234
  %v6419 = vmul.f32 %v6234, %v6418
  %v6420 = vsub.f32 1.0, %v6419
  %v6421 = vmul.f32 %v6418, %v6420
  %v6422 = vadd.f32 %v6418, %v6421
  %vm6423 = vweird.f32 %v6234
  %vm6424 = vweird.f32 %v6418
  %vm6425 = vmor %vm6423, %vm6424
  %v6426 = vsel %vm6425, %v6418, %v6422
  %v6427 = vand.u32 2147483647, %v6234
  %vm6428 = vcmp.eq.f32.partialorder %v6427, 8.507059e+37
  %v6429 = vand.u32 %v6234, 2147483648
  %v6430 = vor.u32 1.1754944e-38, %v6429
  %v6431 = vsel %vm6428, %v6430, %v6426
  %v6432 = vmul.f32 1.0, %v6431
  %v6433 = vrcp.pop %v6235
  %v6434 = vmul.f32 %v6235, %v6433
  %v6435 = vsub.f32 1.0, %v6434
  %v6436 = vmul.f32 %v6433, %v6435
  %v6437 = vadd.f32 %v6433, %v6436
  %vm6438 = vweird.f32 %v6235
  %vm6439 = vweird.f32 %v6433
  %vm6440 = vmor %vm6438, %vm6439
  %v6441 = vsel %vm6440, %v6433, %v6437
  %v6442 = vand.u32 2147483647, %v6235
  %vm6443 = vcmp.eq.f32.partialorder %v6442, 8.507059e+37
  %v6444 = vand.u32 %v6235, 2147483648
  %v6445 = vor.u32 1.1754944e-38, %v6444
  %v6446 = vsel %vm6443, %v6445, %v6441
  %v6447 = vmul.f32 1.0, %v6446
  %v6448 = vrcp.pop %v6236
  %v6449 = vmul.f32 %v6236, %v6448
  %v6450 = vsub.f32 1.0, %v6449
  %v6451 = vmul.f32 %v6448, %v6450
  %v6452 = vadd.f32 %v6448, %v6451
  %vm6453 = vweird.f32 %v6236
  %vm6454 = vweird.f32 %v6448
  %vm6455 = vmor %vm6453, %vm6454
  %v6456 = vsel %vm6455, %v6448, %v6452
  %v6457 = vand.u32 2147483647, %v6236
  %vm6458 = vcmp.eq.f32.partialorder %v6457, 8.507059e+37
  %v6459 = vand.u32 %v6236, 2147483648
  %v6460 = vor.u32 1.1754944e-38, %v6459
  %v6461 = vsel %vm6458, %v6460, %v6456
  %v6462 = vmul.f32 1.0, %v6461
  %v6463 = vrcp.pop %v6237
  %v6464 = vmul.f32 %v6237, %v6463
  %v6465 = vsub.f32 1.0, %v6464
  %v6466 = vmul.f32 %v6463, %v6465
  %v6467 = vadd.f32 %v6463, %v6466
  %vm6468 = vweird.f32 %v6237
  %vm6469 = vweird.f32 %v6463
  %vm6470 = vmor %vm6468, %vm6469
  %v6471 = vsel %vm6470, %v6463, %v6467
  %v6472 = vand.u32 2147483647, %v6237
  %vm6473 = vcmp.eq.f32.partialorder %v6472, 8.507059e+37
  %v6474 = vand.u32 %v6237, 2147483648
  %v6475 = vor.u32 1.1754944e-38, %v6474
  %v6476 = vsel %vm6473, %v6475, %v6471
  %v6477 = vmul.f32 1.0, %v6476
  %6478 = vrot.lane.b32.xlu0 %v6123, 32
  %v6479 = vpop.permute.xlu0 %6478
  %6480 = vrot.lane.b32.xlu0 %v6127, 32
  %v6481 = vpop.permute.xlu0 %6480
  %6482 = vrot.lane.b32.xlu0 %v6128, 32
  %v6483 = vpop.permute.xlu0 %6482
  %6484 = vrot.lane.b32.xlu0 %v6129, 32
  %v6485 = vpop.permute.xlu0 %6484
  %6486 = vrot.lane.b32.xlu0 %v6130, 32
  %v6487 = vpop.permute.xlu0 %6486
  %6488 = vrot.lane.b32.xlu0 %v6131, 32
  %v6489 = vpop.permute.xlu0 %6488
  %6490 = vrot.lane.b32.xlu0 %v6132, 32
  %v6491 = vpop.permute.xlu0 %6490
  %6492 = vrot.lane.b32.xlu0 %v6133, 32
  %v6493 = vpop.permute.xlu0 %6492
  %v6502 = vmul.f32 %v6252, %v6479
  %v6503 = vmul.f32 %v6282, %v6481
  %v6504 = vmul.f32 %v6312, %v6483
  %v6505 = vmul.f32 %v6342, %v6485
  %v6506 = vmul.f32 %v6372, %v6487
  %v6507 = vmul.f32 %v6402, %v6489
  %v6508 = vmul.f32 %v6432, %v6491
  %v6509 = vmul.f32 %v6462, %v6493
  %6518 = vrot.lane.b32.xlu0 %v6502, 64
  %v6519 = vpop.permute.xlu0 %6518
  %6520 = vrot.lane.b32.xlu0 %v6503, 64
  %v6521 = vpop.permute.xlu0 %6520
  %6522 = vrot.lane.b32.xlu0 %v6504, 64
  %v6523 = vpop.permute.xlu0 %6522
  %6524 = vrot.lane.b32.xlu0 %v6505, 64
  %v6525 = vpop.permute.xlu0 %6524
  %6526 = vrot.lane.b32.xlu0 %v6506, 64
  %v6527 = vpop.permute.xlu0 %6526
  %6528 = vrot.lane.b32.xlu0 %v6507, 64
  %v6529 = vpop.permute.xlu0 %6528
  %6530 = vrot.lane.b32.xlu0 %v6508, 64
  %v6531 = vpop.permute.xlu0 %6530
  %6532 = vrot.lane.b32.xlu0 %v6509, 64
  %v6533 = vpop.permute.xlu0 %6532
  %v6542 = vadd.f32 %v6094, %v6519
  %v6543 = vadd.f32 %v6096, %v6521
  %v6544 = vadd.f32 %v6098, %v6523
  %v6545 = vadd.f32 %v6100, %v6525
  %v6546 = vadd.f32 %v6102, %v6527
  %v6547 = vadd.f32 %v6104, %v6529
  %v6548 = vadd.f32 %v6106, %v6531
  %v6549 = vadd.f32 %v6108, %v6533
  %v6550 = vtanh.pop %v6542
  %v6551 = vtanh.pop %v6543
  %v6552 = vtanh.pop %v6544
  %v6553 = vtanh.pop %v6545
  %v6554 = vtanh.pop %v6546
  %v6555 = vtanh.pop %v6547
  %v6556 = vtanh.pop %v6548
  %v6557 = vtanh.pop %v6549
  %v6558 = vsub.f32 1.0, %v6267
  %v6559 = vsub.f32 1.0, %v6297
  %v6560 = vsub.f32 1.0, %v6327
  %v6561 = vsub.f32 1.0, %v6357
  %v6562 = vsub.f32 1.0, %v6387
  %v6563 = vsub.f32 1.0, %v6417
  %v6564 = vsub.f32 1.0, %v6447
  %v6565 = vsub.f32 1.0, %v6477
  %6574 = vrot.lane.b32.xlu0 %v6550, 96
  %v6575 = vpop.permute.xlu0 %6574
  %6576 = vrot.lane.b32.xlu0 %v6551, 96
  %v6577 = vpop.permute.xlu0 %6576
  %6578 = vrot.lane.b32.xlu0 %v6552, 96
  %v6579 = vpop.permute.xlu0 %6578
  %6580 = vrot.lane.b32.xlu0 %v6553, 96
  %v6581 = vpop.permute.xlu0 %6580
  %6582 = vrot.lane.b32.xlu0 %v6554, 96
  %v6583 = vpop.permute.xlu0 %6582
  %6584 = vrot.lane.b32.xlu0 %v6555, 96
  %v6585 = vpop.permute.xlu0 %6584
  %6586 = vrot.lane.b32.xlu0 %v6556, 96
  %v6587 = vpop.permute.xlu0 %6586
  %6588 = vrot.lane.b32.xlu0 %v6557, 96
  %v6589 = vpop.permute.xlu0 %6588
  %v6598 = vmul.f32 %v6558, %v6575
  %v6599 = vmul.f32 %v6559, %v6577
  %v6600 = vmul.f32 %v6560, %v6579
  %v6601 = vmul.f32 %v6561, %v6581
  %v6602 = vmul.f32 %v6562, %v6583
  %v6603 = vmul.f32 %v6563, %v6585
  %v6604 = vmul.f32 %v6564, %v6587
  %v6605 = vmul.f32 %v6565, %v6589
  %v6607 = vrot.slane %v6092, 1
  %v6608 = vrot.slane %v6092, 2
  %v6609 = vrot.slane %v6092, 3
  %v6610 = vrot.slane %v6092, 4
  %v6611 = vrot.slane %v6092, 5
  %v6612 = vrot.slane %v6092, 6
  %v6613 = vrot.slane %v6092, 7
  %v6622 = vmul.f32 %v6267, %v6092
  %v6623 = vmul.f32 %v6297, %v6607
  %v6624 = vmul.f32 %v6327, %v6608
  %v6625 = vmul.f32 %v6357, %v6609
  %v6626 = vmul.f32 %v6387, %v6610
  %v6627 = vmul.f32 %v6417, %v6611
  %v6628 = vmul.f32 %v6447, %v6612
  %v6629 = vmul.f32 %v6477, %v6613
  %v6630 = vadd.f32 %v6598, %v6622
  %v6631 = vadd.f32 %v6599, %v6623
  %v6632 = vadd.f32 %v6600, %v6624
  %v6633 = vadd.f32 %v6601, %v6625
  %v6634 = vadd.f32 %v6602, %v6626
  %v6635 = vadd.f32 %v6603, %v6627
  %v6636 = vadd.f32 %v6604, %v6628
  %v6637 = vadd.f32 %v6605, %v6629
  %v6646 = vrot.slane %v6631, 7
  %v6647 = vsel %vm564, %v6646, %v6630
  %v6648 = vrot.slane %v6632, 6
  %v6649 = vsel %vm567, %v6648, %v6647
  %v6650 = vrot.slane %v6633, 5
  %v6651 = vsel %vm570, %v6650, %v6649
  %v6652 = vrot.slane %v6634, 4
  %v6653 = vsel %vm573, %v6652, %v6651
  %v6654 = vrot.slane %v6635, 3
  %v6655 = vsel %vm576, %v6654, %v6653
  %v6656 = vrot.slane %v6636, 2
  %v6657 = vsel %vm579, %v6656, %v6655
  %v6658 = vrot.slane %v6637, 1
  %v6659 = vsel %vm582, %v6658, %v6657
  %v6661 = vsel %vm1852, %v6659, 0.0
  %v6663 = vrot.slane %v6661, 1
  %v6664 = vrot.slane %v6661, 2
  %v6665 = vrot.slane %v6661, 3
  %v6666 = vrot.slane %v6661, 4
  %v6667 = vrot.slane %v6661, 5
  %v6668 = vrot.slane %v6661, 6
  %v6669 = vrot.slane %v6661, 7
  %v6670 = vperm.slane %v6661, 0
  %v6671 = vperm.slane %v6663, 0
  %v6672 = vperm.slane %v6664, 0
  %v6673 = vperm.slane %v6665, 0
  %v6674 = vperm.slane %v6666, 0
  %v6675 = vperm.slane %v6667, 0
  %v6676 = vperm.slane %v6668, 0
  %v6677 = vperm.slane %v6669, 0
  %6678 = vrot.lane.b32.xlu0 %v6670, 32
  %v6679 = vpop.permute.xlu0 %6678
  %6680 = vrot.lane.b32.xlu0 %v6671, 32
  %v6681 = vpop.permute.xlu0 %6680
  %6682 = vrot.lane.b32.xlu0 %v6672, 32
  %v6683 = vpop.permute.xlu0 %6682
  %6684 = vrot.lane.b32.xlu0 %v6673, 32
  %v6685 = vpop.permute.xlu0 %6684
  %6686 = vrot.lane.b32.xlu0 %v6674, 32
  %v6687 = vpop.permute.xlu0 %6686
  %6688 = vrot.lane.b32.xlu0 %v6675, 32
  %v6689 = vpop.permute.xlu0 %6688
  %6690 = vrot.lane.b32.xlu0 %v6676, 32
  %v6691 = vpop.permute.xlu0 %6690
  %6692 = vrot.lane.b32.xlu0 %v6677, 32
  %v6693 = vpop.permute.xlu0 %6692
  %6702 = vst.msk [vmem:[%s12 + $0x3] sm:$0x1] %vm4238, %v6679
  %6703 = vst.msk [vmem:[%s12 + $0xb] sm:$0x1] %vm4238, %v6681
  %6704 = vst.msk [vmem:[%s12 + $0x13] sm:$0x1] %vm4238, %v6683
  %6705 = vst.msk [vmem:[%s12 + $0x1b] sm:$0x1] %vm4238, %v6685
  %6706 = vst.msk [vmem:[%s12 + $0x23] sm:$0x1] %vm4238, %v6687
  %6707 = vst.msk [vmem:[%s12 + $0x2b] sm:$0x1] %vm4238, %v6689
  %6708 = vst.msk [vmem:[%s12 + $0x33] sm:$0x1] %vm4238, %v6691
  %6709 = vst.msk [vmem:[%s12 + $0x3b] sm:$0x1] %vm4238, %v6693
  %v6710 = vsel %vm1852, %v6659, %v6092
  %v6711 = vld [vmem:[#allocation2 + $0x2] ss:$0 sm:$0xff]
  %v6712 = vld [vmem:[#allocation2 + $0xa] ss:$0 sm:$0xff]
  %v6713 = vld [vmem:[#allocation2 + $0x12] ss:$0 sm:$0xff]
  %v6714 = vld [vmem:[#allocation2 + $0x1a] ss:$0 sm:$0xff]
  %v6715 = vld [vmem:[#allocation2 + $0x22] ss:$0 sm:$0xff]
  %v6716 = vld [vmem:[#allocation2 + $0x2a] ss:$0 sm:$0xff]
  %v6717 = vld [vmem:[#allocation2 + $0x32] ss:$0 sm:$0xff]
  %v6718 = vld [vmem:[#allocation2 + $0x3a] ss:$0 sm:$0xff]
  %v6719 = vld [vmem:[#allocation2 + $0x42] ss:$0 sm:$0xff]
  %v6720 = vld [vmem:[#allocation2 + $0x4a] ss:$0 sm:$0xff]
  %v6721 = vld [vmem:[#allocation2 + $0x52] ss:$0 sm:$0xff]
  %v6722 = vld [vmem:[#allocation2 + $0x5a] ss:$0 sm:$0xff]
  %v6723 = vld [vmem:[#allocation2 + $0x62] ss:$0 sm:$0xff]
  %v6724 = vld [vmem:[#allocation2 + $0x6a] ss:$0 sm:$0xff]
  %v6725 = vld [vmem:[#allocation2 + $0x72] ss:$0 sm:$0xff]
  %v6726 = vld [vmem:[#allocation2 + $0x7a] ss:$0 sm:$0xff]
  %v6727 = vpack.c.bf16 %v6710, %v6710
  %v6729 = vsel %vm212, %v6727, 0
  %6731 = vmatpush.bf16.msra.mxu0 0
  %6732 = vmatpush.bf16.msra.mxu0 0
  %6733 = vmatpush.bf16.msra.mxu0 0
  %6734 = vmatpush.bf16.msra.mxu0 0
  %6735 = vmatpush.bf16.msra.mxu0 0
  %6736 = vmatpush.bf16.msra.mxu0 0
  %6737 = vmatpush.bf16.msra.mxu0 %v3662
  %6738 = vmatpush.bf16.msra.mxu0 %v3661
  %6739 = vmatmul.bf16.gmra.mxu0 %v6729
  %v6740 = vpop.f32.mrf.mxu0
  %v6741 = vadd.f32 %v3651, %v6740
  %v6742 = vpop.f32.mrf.mxu0
  %6743 = vdwg.mxu0
  %v6745 = vrot.slane %v6741, 1
  %v6746 = vrot.slane %v6741, 2
  %v6747 = vrot.slane %v6741, 3
  %v6748 = vrot.slane %v6741, 4
  %v6749 = vrot.slane %v6741, 5
  %v6750 = vrot.slane %v6741, 6
  %v6751 = vrot.slane %v6741, 7
  %6752 = vrot.lane.b32.xlu0 %v6741, 96
  %v6753 = vpop.permute.xlu0 %6752
  %6754 = vrot.lane.b32.xlu0 %v6745, 96
  %v6755 = vpop.permute.xlu0 %6754
  %6756 = vrot.lane.b32.xlu0 %v6746, 96
  %v6757 = vpop.permute.xlu0 %6756
  %6758 = vrot.lane.b32.xlu0 %v6747, 96
  %v6759 = vpop.permute.xlu0 %6758
  %6760 = vrot.lane.b32.xlu0 %v6748, 96
  %v6761 = vpop.permute.xlu0 %6760
  %6762 = vrot.lane.b32.xlu0 %v6749, 96
  %v6763 = vpop.permute.xlu0 %6762
  %6764 = vrot.lane.b32.xlu0 %v6750, 96
  %v6765 = vpop.permute.xlu0 %6764
  %6766 = vrot.lane.b32.xlu0 %v6751, 96
  %v6767 = vpop.permute.xlu0 %6766
  %v6776 = vadd.f32 %v6711, %v6753
  %v6777 = vadd.f32 %v6712, %v6753
  %v6778 = vadd.f32 %v6713, %v6755
  %v6779 = vadd.f32 %v6714, %v6755
  %v6780 = vadd.f32 %v6715, %v6757
  %v6781 = vadd.f32 %v6716, %v6757
  %v6782 = vadd.f32 %v6717, %v6759
  %v6783 = vadd.f32 %v6718, %v6759
  %v6784 = vadd.f32 %v6719, %v6761
  %v6785 = vadd.f32 %v6720, %v6761
  %v6786 = vadd.f32 %v6721, %v6763
  %v6787 = vadd.f32 %v6722, %v6763
  %v6788 = vadd.f32 %v6723, %v6765
  %v6789 = vadd.f32 %v6724, %v6765
  %v6790 = vadd.f32 %v6725, %v6767
  %v6791 = vadd.f32 %v6726, %v6767
  %v6792 = vxor.u32 %v6776, 2147483648
  %v6793 = vxor.u32 %v6777, 2147483648
  %v6794 = vxor.u32 %v6778, 2147483648
  %v6795 = vxor.u32 %v6779, 2147483648
  %v6796 = vxor.u32 %v6780, 2147483648
  %v6797 = vxor.u32 %v6781, 2147483648
  %v6798 = vxor.u32 %v6782, 2147483648
  %v6799 = vxor.u32 %v6783, 2147483648
  %v6800 = vxor.u32 %v6784, 2147483648
  %v6801 = vxor.u32 %v6785, 2147483648
  %v6802 = vxor.u32 %v6786, 2147483648
  %v6803 = vxor.u32 %v6787, 2147483648
  %v6804 = vxor.u32 %v6788, 2147483648
  %v6805 = vxor.u32 %v6789, 2147483648
  %v6806 = vxor.u32 %v6790, 2147483648
  %v6807 = vxor.u32 %v6791, 2147483648
  %v6808 = vmul.f32 %v6792, 1.442695
  %v6809 = vpow.pop %v6808
  %v6810 = vmul.f32 %v6793, 1.442695
  %v6811 = vpow.pop %v6810
  %v6812 = vmul.f32 %v6794, 1.442695
  %v6813 = vpow.pop %v6812
  %v6814 = vmul.f32 %v6795, 1.442695
  %v6815 = vpow.pop %v6814
  %v6816 = vmul.f32 %v6796, 1.442695
  %v6817 = vpow.pop %v6816
  %v6818 = vmul.f32 %v6797, 1.442695
  %v6819 = vpow.pop %v6818
  %v6820 = vmul.f32 %v6798, 1.442695
  %v6821 = vpow.pop %v6820
  %v6822 = vmul.f32 %v6799, 1.442695
  %v6823 = vpow.pop %v6822
  %v6824 = vmul.f32 %v6800, 1.442695
  %v6825 = vpow.pop %v6824
  %v6826 = vmul.f32 %v6801, 1.442695
  %v6827 = vpow.pop %v6826
  %v6828 = vmul.f32 %v6802, 1.442695
  %v6829 = vpow.pop %v6828
  %v6830 = vmul.f32 %v6803, 1.442695
  %v6831 = vpow.pop %v6830
  %v6832 = vmul.f32 %v6804, 1.442695
  %v6833 = vpow.pop %v6832
  %v6834 = vmul.f32 %v6805, 1.442695
  %v6835 = vpow.pop %v6834
  %v6836 = vmul.f32 %v6806, 1.442695
  %v6837 = vpow.pop %v6836
  %v6838 = vmul.f32 %v6807, 1.442695
  %v6839 = vpow.pop %v6838
  %v6840 = vadd.f32 %v6809, 1.0
  %v6841 = vadd.f32 %v6811, 1.0
  %v6842 = vadd.f32 %v6813, 1.0
  %v6843 = vadd.f32 %v6815, 1.0
  %v6844 = vadd.f32 %v6817, 1.0
  %v6845 = vadd.f32 %v6819, 1.0
  %v6846 = vadd.f32 %v6821, 1.0
  %v6847 = vadd.f32 %v6823, 1.0
  %v6848 = vadd.f32 %v6825, 1.0
  %v6849 = vadd.f32 %v6827, 1.0
  %v6850 = vadd.f32 %v6829, 1.0
  %v6851 = vadd.f32 %v6831, 1.0
  %v6852 = vadd.f32 %v6833, 1.0
  %v6853 = vadd.f32 %v6835, 1.0
  %v6854 = vadd.f32 %v6837, 1.0
  %v6855 = vadd.f32 %v6839, 1.0
  %v6856 = vrcp.pop %v6840
  %v6857 = vmul.f32 %v6840, %v6856
  %v6858 = vsub.f32 1.0, %v6857
  %v6859 = vmul.f32 %v6856, %v6858
  %v6860 = vadd.f32 %v6856, %v6859
  %vm6861 = vweird.f32 %v6840
  %vm6862 = vweird.f32 %v6856
  %vm6863 = vmor %vm6861, %vm6862
  %v6864 = vsel %vm6863, %v6856, %v6860
  %v6865 = vand.u32 2147483647, %v6840
  %vm6866 = vcmp.eq.f32.partialorder %v6865, 8.507059e+37
  %v6867 = vand.u32 %v6840, 2147483648
  %v6868 = vor.u32 1.1754944e-38, %v6867
  %v6869 = vsel %vm6866, %v6868, %v6864
  %v6870 = vmul.f32 1.0, %v6869
  %v6871 = vrcp.pop %v6841
  %v6872 = vmul.f32 %v6841, %v6871
  %v6873 = vsub.f32 1.0, %v6872
  %v6874 = vmul.f32 %v6871, %v6873
  %v6875 = vadd.f32 %v6871, %v6874
  %vm6876 = vweird.f32 %v6841
  %vm6877 = vweird.f32 %v6871
  %vm6878 = vmor %vm6876, %vm6877
  %v6879 = vsel %vm6878, %v6871, %v6875
  %v6880 = vand.u32 2147483647, %v6841
  %vm6881 = vcmp.eq.f32.partialorder %v6880, 8.507059e+37
  %v6882 = vand.u32 %v6841, 2147483648
  %v6883 = vor.u32 1.1754944e-38, %v6882
  %v6884 = vsel %vm6881, %v6883, %v6879
  %v6885 = vmul.f32 1.0, %v6884
  %v6886 = vrcp.pop %v6842
  %v6887 = vmul.f32 %v6842, %v6886
  %v6888 = vsub.f32 1.0, %v6887
  %v6889 = vmul.f32 %v6886, %v6888
  %v6890 = vadd.f32 %v6886, %v6889
  %vm6891 = vweird.f32 %v6842
  %vm6892 = vweird.f32 %v6886
  %vm6893 = vmor %vm6891, %vm6892
  %v6894 = vsel %vm6893, %v6886, %v6890
  %v6895 = vand.u32 2147483647, %v6842
  %vm6896 = vcmp.eq.f32.partialorder %v6895, 8.507059e+37
  %v6897 = vand.u32 %v6842, 2147483648
  %v6898 = vor.u32 1.1754944e-38, %v6897
  %v6899 = vsel %vm6896, %v6898, %v6894
  %v6900 = vmul.f32 1.0, %v6899
  %v6901 = vrcp.pop %v6843
  %v6902 = vmul.f32 %v6843, %v6901
  %v6903 = vsub.f32 1.0, %v6902
  %v6904 = vmul.f32 %v6901, %v6903
  %v6905 = vadd.f32 %v6901, %v6904
  %vm6906 = vweird.f32 %v6843
  %vm6907 = vweird.f32 %v6901
  %vm6908 = vmor %vm6906, %vm6907
  %v6909 = vsel %vm6908, %v6901, %v6905
  %v6910 = vand.u32 2147483647, %v6843
  %vm6911 = vcmp.eq.f32.partialorder %v6910, 8.507059e+37
  %v6912 = vand.u32 %v6843, 2147483648
  %v6913 = vor.u32 1.1754944e-38, %v6912
  %v6914 = vsel %vm6911, %v6913, %v6909
  %v6915 = vmul.f32 1.0, %v6914
  %v6916 = vrcp.pop %v6844
  %v6917 = vmul.f32 %v6844, %v6916
  %v6918 = vsub.f32 1.0, %v6917
  %v6919 = vmul.f32 %v6916, %v6918
  %v6920 = vadd.f32 %v6916, %v6919
  %vm6921 = vweird.f32 %v6844
  %vm6922 = vweird.f32 %v6916
  %vm6923 = vmor %vm6921, %vm6922
  %v6924 = vsel %vm6923, %v6916, %v6920
  %v6925 = vand.u32 2147483647, %v6844
  %vm6926 = vcmp.eq.f32.partialorder %v6925, 8.507059e+37
  %v6927 = vand.u32 %v6844, 2147483648
  %v6928 = vor.u32 1.1754944e-38, %v6927
  %v6929 = vsel %vm6926, %v6928, %v6924
  %v6930 = vmul.f32 1.0, %v6929
  %v6931 = vrcp.pop %v6845
  %v6932 = vmul.f32 %v6845, %v6931
  %v6933 = vsub.f32 1.0, %v6932
  %v6934 = vmul.f32 %v6931, %v6933
  %v6935 = vadd.f32 %v6931, %v6934
  %vm6936 = vweird.f32 %v6845
  %vm6937 = vweird.f32 %v6931
  %vm6938 = vmor %vm6936, %vm6937
  %v6939 = vsel %vm6938, %v6931, %v6935
  %v6940 = vand.u32 2147483647, %v6845
  %vm6941 = vcmp.eq.f32.partialorder %v6940, 8.507059e+37
  %v6942 = vand.u32 %v6845, 2147483648
  %v6943 = vor.u32 1.1754944e-38, %v6942
  %v6944 = vsel %vm6941, %v6943, %v6939
  %v6945 = vmul.f32 1.0, %v6944
  %v6946 = vrcp.pop %v6846
  %v6947 = vmul.f32 %v6846, %v6946
  %v6948 = vsub.f32 1.0, %v6947
  %v6949 = vmul.f32 %v6946, %v6948
  %v6950 = vadd.f32 %v6946, %v6949
  %vm6951 = vweird.f32 %v6846
  %vm6952 = vweird.f32 %v6946
  %vm6953 = vmor %vm6951, %vm6952
  %v6954 = vsel %vm6953, %v6946, %v6950
  %v6955 = vand.u32 2147483647, %v6846
  %vm6956 = vcmp.eq.f32.partialorder %v6955, 8.507059e+37
  %v6957 = vand.u32 %v6846, 2147483648
  %v6958 = vor.u32 1.1754944e-38, %v6957
  %v6959 = vsel %vm6956, %v6958, %v6954
  %v6960 = vmul.f32 1.0, %v6959
  %v6961 = vrcp.pop %v6847
  %v6962 = vmul.f32 %v6847, %v6961
  %v6963 = vsub.f32 1.0, %v6962
  %v6964 = vmul.f32 %v6961, %v6963
  %v6965 = vadd.f32 %v6961, %v6964
  %vm6966 = vweird.f32 %v6847
  %vm6967 = vweird.f32 %v6961
  %vm6968 = vmor %vm6966, %vm6967
  %v6969 = vsel %vm6968, %v6961, %v6965
  %v6970 = vand.u32 2147483647, %v6847
  %vm6971 = vcmp.eq.f32.partialorder %v6970, 8.507059e+37
  %v6972 = vand.u32 %v6847, 2147483648
  %v6973 = vor.u32 1.1754944e-38, %v6972
  %v6974 = vsel %vm6971, %v6973, %v6969
  %v6975 = vmul.f32 1.0, %v6974
  %v6976 = vrcp.pop %v6848
  %v6977 = vmul.f32 %v6848, %v6976
  %v6978 = vsub.f32 1.0, %v6977
  %v6979 = vmul.f32 %v6976, %v6978
  %v6980 = vadd.f32 %v6976, %v6979
  %vm6981 = vweird.f32 %v6848
  %vm6982 = vweird.f32 %v6976
  %vm6983 = vmor %vm6981, %vm6982
  %v6984 = vsel %vm6983, %v6976, %v6980
  %v6985 = vand.u32 2147483647, %v6848
  %vm6986 = vcmp.eq.f32.partialorder %v6985, 8.507059e+37
  %v6987 = vand.u32 %v6848, 2147483648
  %v6988 = vor.u32 1.1754944e-38, %v6987
  %v6989 = vsel %vm6986, %v6988, %v6984
  %v6990 = vmul.f32 1.0, %v6989
  %v6991 = vrcp.pop %v6849
  %v6992 = vmul.f32 %v6849, %v6991
  %v6993 = vsub.f32 1.0, %v6992
  %v6994 = vmul.f32 %v6991, %v6993
  %v6995 = vadd.f32 %v6991, %v6994
  %vm6996 = vweird.f32 %v6849
  %vm6997 = vweird.f32 %v6991
  %vm6998 = vmor %vm6996, %vm6997
  %v6999 = vsel %vm6998, %v6991, %v6995
  %v7000 = vand.u32 2147483647, %v6849
  %vm7001 = vcmp.eq.f32.partialorder %v7000, 8.507059e+37
  %v7002 = vand.u32 %v6849, 2147483648
  %v7003 = vor.u32 1.1754944e-38, %v7002
  %v7004 = vsel %vm7001, %v7003, %v6999
  %v7005 = vmul.f32 1.0, %v7004
  %v7006 = vrcp.pop %v6850
  %v7007 = vmul.f32 %v6850, %v7006
  %v7008 = vsub.f32 1.0, %v7007
  %v7009 = vmul.f32 %v7006, %v7008
  %v7010 = vadd.f32 %v7006, %v7009
  %vm7011 = vweird.f32 %v6850
  %vm7012 = vweird.f32 %v7006
  %vm7013 = vmor %vm7011, %vm7012
  %v7014 = vsel %vm7013, %v7006, %v7010
  %v7015 = vand.u32 2147483647, %v6850
  %vm7016 = vcmp.eq.f32.partialorder %v7015, 8.507059e+37
  %v7017 = vand.u32 %v6850, 2147483648
  %v7018 = vor.u32 1.1754944e-38, %v7017
  %v7019 = vsel %vm7016, %v7018, %v7014
  %v7020 = vmul.f32 1.0, %v7019
  %v7021 = vrcp.pop %v6851
  %v7022 = vmul.f32 %v6851, %v7021
  %v7023 = vsub.f32 1.0, %v7022
  %v7024 = vmul.f32 %v7021, %v7023
  %v7025 = vadd.f32 %v7021, %v7024
  %vm7026 = vweird.f32 %v6851
  %vm7027 = vweird.f32 %v7021
  %vm7028 = vmor %vm7026, %vm7027
  %v7029 = vsel %vm7028, %v7021, %v7025
  %v7030 = vand.u32 2147483647, %v6851
  %vm7031 = vcmp.eq.f32.partialorder %v7030, 8.507059e+37
  %v7032 = vand.u32 %v6851, 2147483648
  %v7033 = vor.u32 1.1754944e-38, %v7032
  %v7034 = vsel %vm7031, %v7033, %v7029
  %v7035 = vmul.f32 1.0, %v7034
  %v7036 = vrcp.pop %v6852
  %v7037 = vmul.f32 %v6852, %v7036
  %v7038 = vsub.f32 1.0, %v7037
  %v7039 = vmul.f32 %v7036, %v7038
  %v7040 = vadd.f32 %v7036, %v7039
  %vm7041 = vweird.f32 %v6852
  %vm7042 = vweird.f32 %v7036
  %vm7043 = vmor %vm7041, %vm7042
  %v7044 = vsel %vm7043, %v7036, %v7040
  %v7045 = vand.u32 2147483647, %v6852
  %vm7046 = vcmp.eq.f32.partialorder %v7045, 8.507059e+37
  %v7047 = vand.u32 %v6852, 2147483648
  %v7048 = vor.u32 1.1754944e-38, %v7047
  %v7049 = vsel %vm7046, %v7048, %v7044
  %v7050 = vmul.f32 1.0, %v7049
  %v7051 = vrcp.pop %v6853
  %v7052 = vmul.f32 %v6853, %v7051
  %v7053 = vsub.f32 1.0, %v7052
  %v7054 = vmul.f32 %v7051, %v7053
  %v7055 = vadd.f32 %v7051, %v7054
  %vm7056 = vweird.f32 %v6853
  %vm7057 = vweird.f32 %v7051
  %vm7058 = vmor %vm7056, %vm7057
  %v7059 = vsel %vm7058, %v7051, %v7055
  %v7060 = vand.u32 2147483647, %v6853
  %vm7061 = vcmp.eq.f32.partialorder %v7060, 8.507059e+37
  %v7062 = vand.u32 %v6853, 2147483648
  %v7063 = vor.u32 1.1754944e-38, %v7062
  %v7064 = vsel %vm7061, %v7063, %v7059
  %v7065 = vmul.f32 1.0, %v7064
  %v7066 = vrcp.pop %v6854
  %v7067 = vmul.f32 %v6854, %v7066
  %v7068 = vsub.f32 1.0, %v7067
  %v7069 = vmul.f32 %v7066, %v7068
  %v7070 = vadd.f32 %v7066, %v7069
  %vm7071 = vweird.f32 %v6854
  %vm7072 = vweird.f32 %v7066
  %vm7073 = vmor %vm7071, %vm7072
  %v7074 = vsel %vm7073, %v7066, %v7070
  %v7075 = vand.u32 2147483647, %v6854
  %vm7076 = vcmp.eq.f32.partialorder %v7075, 8.507059e+37
  %v7077 = vand.u32 %v6854, 2147483648
  %v7078 = vor.u32 1.1754944e-38, %v7077
  %v7079 = vsel %vm7076, %v7078, %v7074
  %v7080 = vmul.f32 1.0, %v7079
  %v7081 = vrcp.pop %v6855
  %v7082 = vmul.f32 %v6855, %v7081
  %v7083 = vsub.f32 1.0, %v7082
  %v7084 = vmul.f32 %v7081, %v7083
  %v7085 = vadd.f32 %v7081, %v7084
  %vm7086 = vweird.f32 %v6855
  %vm7087 = vweird.f32 %v7081
  %vm7088 = vmor %vm7086, %vm7087
  %v7089 = vsel %vm7088, %v7081, %v7085
  %v7090 = vand.u32 2147483647, %v6855
  %vm7091 = vcmp.eq.f32.partialorder %v7090, 8.507059e+37
  %v7092 = vand.u32 %v6855, 2147483648
  %v7093 = vor.u32 1.1754944e-38, %v7092
  %v7094 = vsel %vm7091, %v7093, %v7089
  %v7095 = vmul.f32 1.0, %v7094
  %7096 = vrot.lane.b32.xlu0 %v6741, 32
  %v7097 = vpop.permute.xlu0 %7096
  %7098 = vrot.lane.b32.xlu0 %v6745, 32
  %v7099 = vpop.permute.xlu0 %7098
  %7100 = vrot.lane.b32.xlu0 %v6746, 32
  %v7101 = vpop.permute.xlu0 %7100
  %7102 = vrot.lane.b32.xlu0 %v6747, 32
  %v7103 = vpop.permute.xlu0 %7102
  %7104 = vrot.lane.b32.xlu0 %v6748, 32
  %v7105 = vpop.permute.xlu0 %7104
  %7106 = vrot.lane.b32.xlu0 %v6749, 32
  %v7107 = vpop.permute.xlu0 %7106
  %7108 = vrot.lane.b32.xlu0 %v6750, 32
  %v7109 = vpop.permute.xlu0 %7108
  %7110 = vrot.lane.b32.xlu0 %v6751, 32
  %v7111 = vpop.permute.xlu0 %7110
  %v7120 = vmul.f32 %v6870, %v7097
  %v7121 = vmul.f32 %v6900, %v7099
  %v7122 = vmul.f32 %v6930, %v7101
  %v7123 = vmul.f32 %v6960, %v7103
  %v7124 = vmul.f32 %v6990, %v7105
  %v7125 = vmul.f32 %v7020, %v7107
  %v7126 = vmul.f32 %v7050, %v7109
  %v7127 = vmul.f32 %v7080, %v7111
  %7136 = vrot.lane.b32.xlu0 %v7120, 64
  %v7137 = vpop.permute.xlu0 %7136
  %7138 = vrot.lane.b32.xlu0 %v7121, 64
  %v7139 = vpop.permute.xlu0 %7138
  %7140 = vrot.lane.b32.xlu0 %v7122, 64
  %v7141 = vpop.permute.xlu0 %7140
  %7142 = vrot.lane.b32.xlu0 %v7123, 64
  %v7143 = vpop.permute.xlu0 %7142
  %7144 = vrot.lane.b32.xlu0 %v7124, 64
  %v7145 = vpop.permute.xlu0 %7144
  %7146 = vrot.lane.b32.xlu0 %v7125, 64
  %v7147 = vpop.permute.xlu0 %7146
  %7148 = vrot.lane.b32.xlu0 %v7126, 64
  %v7149 = vpop.permute.xlu0 %7148
  %7150 = vrot.lane.b32.xlu0 %v7127, 64
  %v7151 = vpop.permute.xlu0 %7150
  %v7160 = vadd.f32 %v6712, %v7137
  %v7161 = vadd.f32 %v6714, %v7139
  %v7162 = vadd.f32 %v6716, %v7141
  %v7163 = vadd.f32 %v6718, %v7143
  %v7164 = vadd.f32 %v6720, %v7145
  %v7165 = vadd.f32 %v6722, %v7147
  %v7166 = vadd.f32 %v6724, %v7149
  %v7167 = vadd.f32 %v6726, %v7151
  %v7168 = vtanh.pop %v7160
  %v7169 = vtanh.pop %v7161
  %v7170 = vtanh.pop %v7162
  %v7171 = vtanh.pop %v7163
  %v7172 = vtanh.pop %v7164
  %v7173 = vtanh.pop %v7165
  %v7174 = vtanh.pop %v7166
  %v7175 = vtanh.pop %v7167
  %v7176 = vsub.f32 1.0, %v6885
  %v7177 = vsub.f32 1.0, %v6915
  %v7178 = vsub.f32 1.0, %v6945
  %v7179 = vsub.f32 1.0, %v6975
  %v7180 = vsub.f32 1.0, %v7005
  %v7181 = vsub.f32 1.0, %v7035
  %v7182 = vsub.f32 1.0, %v7065
  %v7183 = vsub.f32 1.0, %v7095
  %7192 = vrot.lane.b32.xlu0 %v7168, 96
  %v7193 = vpop.permute.xlu0 %7192
  %7194 = vrot.lane.b32.xlu0 %v7169, 96
  %v7195 = vpop.permute.xlu0 %7194
  %7196 = vrot.lane.b32.xlu0 %v7170, 96
  %v7197 = vpop.permute.xlu0 %7196
  %7198 = vrot.lane.b32.xlu0 %v7171, 96
  %v7199 = vpop.permute.xlu0 %7198
  %7200 = vrot.lane.b32.xlu0 %v7172, 96
  %v7201 = vpop.permute.xlu0 %7200
  %7202 = vrot.lane.b32.xlu0 %v7173, 96
  %v7203 = vpop.permute.xlu0 %7202
  %7204 = vrot.lane.b32.xlu0 %v7174, 96
  %v7205 = vpop.permute.xlu0 %7204
  %7206 = vrot.lane.b32.xlu0 %v7175, 96
  %v7207 = vpop.permute.xlu0 %7206
  %v7216 = vmul.f32 %v7176, %v7193
  %v7217 = vmul.f32 %v7177, %v7195
  %v7218 = vmul.f32 %v7178, %v7197
  %v7219 = vmul.f32 %v7179, %v7199
  %v7220 = vmul.f32 %v7180, %v7201
  %v7221 = vmul.f32 %v7181, %v7203
  %v7222 = vmul.f32 %v7182, %v7205
  %v7223 = vmul.f32 %v7183, %v7207
  %v7225 = vrot.slane %v6710, 1
  %v7226 = vrot.slane %v6710, 2
  %v7227 = vrot.slane %v6710, 3
  %v7228 = vrot.slane %v6710, 4
  %v7229 = vrot.slane %v6710, 5
  %v7230 = vrot.slane %v6710, 6
  %v7231 = vrot.slane %v6710, 7
  %v7240 = vmul.f32 %v6885, %v6710
  %v7241 = vmul.f32 %v6915, %v7225
  %v7242 = vmul.f32 %v6945, %v7226
  %v7243 = vmul.f32 %v6975, %v7227
  %v7244 = vmul.f32 %v7005, %v7228
  %v7245 = vmul.f32 %v7035, %v7229
  %v7246 = vmul.f32 %v7065, %v7230
  %v7247 = vmul.f32 %v7095, %v7231
  %v7248 = vadd.f32 %v7216, %v7240
  %v7249 = vadd.f32 %v7217, %v7241
  %v7250 = vadd.f32 %v7218, %v7242
  %v7251 = vadd.f32 %v7219, %v7243
  %v7252 = vadd.f32 %v7220, %v7244
  %v7253 = vadd.f32 %v7221, %v7245
  %v7254 = vadd.f32 %v7222, %v7246
  %v7255 = vadd.f32 %v7223, %v7247
  %v7264 = vrot.slane %v7249, 7
  %v7265 = vsel %vm564, %v7264, %v7248
  %v7266 = vrot.slane %v7250, 6
  %v7267 = vsel %vm567, %v7266, %v7265
  %v7268 = vrot.slane %v7251, 5
  %v7269 = vsel %vm570, %v7268, %v7267
  %v7270 = vrot.slane %v7252, 4
  %v7271 = vsel %vm573, %v7270, %v7269
  %v7272 = vrot.slane %v7253, 3
  %v7273 = vsel %vm576, %v7272, %v7271
  %v7274 = vrot.slane %v7254, 2
  %v7275 = vsel %vm579, %v7274, %v7273
  %v7276 = vrot.slane %v7255, 1
  %v7277 = vsel %vm582, %v7276, %v7275
  %v7279 = vsel %vm1419, %v7277, 0.0
  %v7281 = vrot.slane %v7279, 1
  %v7282 = vrot.slane %v7279, 2
  %v7283 = vrot.slane %v7279, 3
  %v7284 = vrot.slane %v7279, 4
  %v7285 = vrot.slane %v7279, 5
  %v7286 = vrot.slane %v7279, 6
  %v7287 = vrot.slane %v7279, 7
  %v7288 = vperm.slane %v7279, 0
  %v7289 = vperm.slane %v7281, 0
  %v7290 = vperm.slane %v7282, 0
  %v7291 = vperm.slane %v7283, 0
  %v7292 = vperm.slane %v7284, 0
  %v7293 = vperm.slane %v7285, 0
  %v7294 = vperm.slane %v7286, 0
  %v7295 = vperm.slane %v7287, 0
  %7296 = vrot.lane.b32.xlu0 %v7288, 32
  %v7297 = vpop.permute.xlu0 %7296
  %7298 = vrot.lane.b32.xlu0 %v7289, 32
  %v7299 = vpop.permute.xlu0 %7298
  %7300 = vrot.lane.b32.xlu0 %v7290, 32
  %v7301 = vpop.permute.xlu0 %7300
  %7302 = vrot.lane.b32.xlu0 %v7291, 32
  %v7303 = vpop.permute.xlu0 %7302
  %7304 = vrot.lane.b32.xlu0 %v7292, 32
  %v7305 = vpop.permute.xlu0 %7304
  %7306 = vrot.lane.b32.xlu0 %v7293, 32
  %v7307 = vpop.permute.xlu0 %7306
  %7308 = vrot.lane.b32.xlu0 %v7294, 32
  %v7309 = vpop.permute.xlu0 %7308
  %7310 = vrot.lane.b32.xlu0 %v7295, 32
  %v7311 = vpop.permute.xlu0 %7310
  %7320 = vst.msk [vmem:[%s12 + $0x2] sm:$0x1] %vm4238, %v7297
  %7321 = vst.msk [vmem:[%s12 + $0xa] sm:$0x1] %vm4238, %v7299
  %7322 = vst.msk [vmem:[%s12 + $0x12] sm:$0x1] %vm4238, %v7301
  %7323 = vst.msk [vmem:[%s12 + $0x1a] sm:$0x1] %vm4238, %v7303
  %7324 = vst.msk [vmem:[%s12 + $0x22] sm:$0x1] %vm4238, %v7305
  %7325 = vst.msk [vmem:[%s12 + $0x2a] sm:$0x1] %vm4238, %v7307
  %7326 = vst.msk [vmem:[%s12 + $0x32] sm:$0x1] %vm4238, %v7309
  %7327 = vst.msk [vmem:[%s12 + $0x3a] sm:$0x1] %vm4238, %v7311
  %v7328 = vsel %vm1419, %v7277, %v6710
  %v7329 = vld [vmem:[#allocation2 + $0x1] ss:$0 sm:$0xff]
  %v7330 = vld [vmem:[#allocation2 + $0x9] ss:$0 sm:$0xff]
  %v7331 = vld [vmem:[#allocation2 + $0x11] ss:$0 sm:$0xff]
  %v7332 = vld [vmem:[#allocation2 + $0x19] ss:$0 sm:$0xff]
  %v7333 = vld [vmem:[#allocation2 + $0x21] ss:$0 sm:$0xff]
  %v7334 = vld [vmem:[#allocation2 + $0x29] ss:$0 sm:$0xff]
  %v7335 = vld [vmem:[#allocation2 + $0x31] ss:$0 sm:$0xff]
  %v7336 = vld [vmem:[#allocation2 + $0x39] ss:$0 sm:$0xff]
  %v7337 = vld [vmem:[#allocation2 + $0x41] ss:$0 sm:$0xff]
  %v7338 = vld [vmem:[#allocation2 + $0x49] ss:$0 sm:$0xff]
  %v7339 = vld [vmem:[#allocation2 + $0x51] ss:$0 sm:$0xff]
  %v7340 = vld [vmem:[#allocation2 + $0x59] ss:$0 sm:$0xff]
  %v7341 = vld [vmem:[#allocation2 + $0x61] ss:$0 sm:$0xff]
  %v7342 = vld [vmem:[#allocation2 + $0x69] ss:$0 sm:$0xff]
  %v7343 = vld [vmem:[#allocation2 + $0x71] ss:$0 sm:$0xff]
  %v7344 = vld [vmem:[#allocation2 + $0x79] ss:$0 sm:$0xff]
  %v7345 = vpack.c.bf16 %v7328, %v7328
  %v7347 = vsel %vm212, %v7345, 0
  %7349 = vmatpush.bf16.msra.mxu0 0
  %7350 = vmatpush.bf16.msra.mxu0 0
  %7351 = vmatpush.bf16.msra.mxu0 0
  %7352 = vmatpush.bf16.msra.mxu0 0
  %7353 = vmatpush.bf16.msra.mxu0 0
  %7354 = vmatpush.bf16.msra.mxu0 0
  %7355 = vmatpush.bf16.msra.mxu0 %v3662
  %7356 = vmatpush.bf16.msra.mxu0 %v3661
  %7357 = vmatmul.bf16.gmra.mxu0 %v7347
  %v7358 = vpop.f32.mrf.mxu0
  %v7359 = vadd.f32 %v3651, %v7358
  %v7360 = vpop.f32.mrf.mxu0
  %7361 = vdwg.mxu0
  %v7363 = vrot.slane %v7359, 1
  %v7364 = vrot.slane %v7359, 2
  %v7365 = vrot.slane %v7359, 3
  %v7366 = vrot.slane %v7359, 4
  %v7367 = vrot.slane %v7359, 5
  %v7368 = vrot.slane %v7359, 6
  %v7369 = vrot.slane %v7359, 7
  %7370 = vrot.lane.b32.xlu0 %v7359, 96
  %v7371 = vpop.permute.xlu0 %7370
  %7372 = vrot.lane.b32.xlu0 %v7363, 96
  %v7373 = vpop.permute.xlu0 %7372
  %7374 = vrot.lane.b32.xlu0 %v7364, 96
  %v7375 = vpop.permute.xlu0 %7374
  %7376 = vrot.lane.b32.xlu0 %v7365, 96
  %v7377 = vpop.permute.xlu0 %7376
  %7378 = vrot.lane.b32.xlu0 %v7366, 96
  %v7379 = vpop.permute.xlu0 %7378
  %7380 = vrot.lane.b32.xlu0 %v7367, 96
  %v7381 = vpop.permute.xlu0 %7380
  %7382 = vrot.lane.b32.xlu0 %v7368, 96
  %v7383 = vpop.permute.xlu0 %7382
  %7384 = vrot.lane.b32.xlu0 %v7369, 96
  %v7385 = vpop.permute.xlu0 %7384
  %v7394 = vadd.f32 %v7329, %v7371
  %v7395 = vadd.f32 %v7330, %v7371
  %v7396 = vadd.f32 %v7331, %v7373
  %v7397 = vadd.f32 %v7332, %v7373
  %v7398 = vadd.f32 %v7333, %v7375
  %v7399 = vadd.f32 %v7334, %v7375
  %v7400 = vadd.f32 %v7335, %v7377
  %v7401 = vadd.f32 %v7336, %v7377
  %v7402 = vadd.f32 %v7337, %v7379
  %v7403 = vadd.f32 %v7338, %v7379
  %v7404 = vadd.f32 %v7339, %v7381
  %v7405 = vadd.f32 %v7340, %v7381
  %v7406 = vadd.f32 %v7341, %v7383
  %v7407 = vadd.f32 %v7342, %v7383
  %v7408 = vadd.f32 %v7343, %v7385
  %v7409 = vadd.f32 %v7344, %v7385
  %v7410 = vxor.u32 %v7394, 2147483648
  %v7411 = vxor.u32 %v7395, 2147483648
  %v7412 = vxor.u32 %v7396, 2147483648
  %v7413 = vxor.u32 %v7397, 2147483648
  %v7414 = vxor.u32 %v7398, 2147483648
  %v7415 = vxor.u32 %v7399, 2147483648
  %v7416 = vxor.u32 %v7400, 2147483648
  %v7417 = vxor.u32 %v7401, 2147483648
  %v7418 = vxor.u32 %v7402, 2147483648
  %v7419 = vxor.u32 %v7403, 2147483648
  %v7420 = vxor.u32 %v7404, 2147483648
  %v7421 = vxor.u32 %v7405, 2147483648
  %v7422 = vxor.u32 %v7406, 2147483648
  %v7423 = vxor.u32 %v7407, 2147483648
  %v7424 = vxor.u32 %v7408, 2147483648
  %v7425 = vxor.u32 %v7409, 2147483648
  %v7426 = vmul.f32 %v7410, 1.442695
  %v7427 = vpow.pop %v7426
  %v7428 = vmul.f32 %v7411, 1.442695
  %v7429 = vpow.pop %v7428
  %v7430 = vmul.f32 %v7412, 1.442695
  %v7431 = vpow.pop %v7430
  %v7432 = vmul.f32 %v7413, 1.442695
  %v7433 = vpow.pop %v7432
  %v7434 = vmul.f32 %v7414, 1.442695
  %v7435 = vpow.pop %v7434
  %v7436 = vmul.f32 %v7415, 1.442695
  %v7437 = vpow.pop %v7436
  %v7438 = vmul.f32 %v7416, 1.442695
  %v7439 = vpow.pop %v7438
  %v7440 = vmul.f32 %v7417, 1.442695
  %v7441 = vpow.pop %v7440
  %v7442 = vmul.f32 %v7418, 1.442695
  %v7443 = vpow.pop %v7442
  %v7444 = vmul.f32 %v7419, 1.442695
  %v7445 = vpow.pop %v7444
  %v7446 = vmul.f32 %v7420, 1.442695
  %v7447 = vpow.pop %v7446
  %v7448 = vmul.f32 %v7421, 1.442695
  %v7449 = vpow.pop %v7448
  %v7450 = vmul.f32 %v7422, 1.442695
  %v7451 = vpow.pop %v7450
  %v7452 = vmul.f32 %v7423, 1.442695
  %v7453 = vpow.pop %v7452
  %v7454 = vmul.f32 %v7424, 1.442695
  %v7455 = vpow.pop %v7454
  %v7456 = vmul.f32 %v7425, 1.442695
  %v7457 = vpow.pop %v7456
  %v7458 = vadd.f32 %v7427, 1.0
  %v7459 = vadd.f32 %v7429, 1.0
  %v7460 = vadd.f32 %v7431, 1.0
  %v7461 = vadd.f32 %v7433, 1.0
  %v7462 = vadd.f32 %v7435, 1.0
  %v7463 = vadd.f32 %v7437, 1.0
  %v7464 = vadd.f32 %v7439, 1.0
  %v7465 = vadd.f32 %v7441, 1.0
  %v7466 = vadd.f32 %v7443, 1.0
  %v7467 = vadd.f32 %v7445, 1.0
  %v7468 = vadd.f32 %v7447, 1.0
  %v7469 = vadd.f32 %v7449, 1.0
  %v7470 = vadd.f32 %v7451, 1.0
  %v7471 = vadd.f32 %v7453, 1.0
  %v7472 = vadd.f32 %v7455, 1.0
  %v7473 = vadd.f32 %v7457, 1.0
  %v7474 = vrcp.pop %v7458
  %v7475 = vmul.f32 %v7458, %v7474
  %v7476 = vsub.f32 1.0, %v7475
  %v7477 = vmul.f32 %v7474, %v7476
  %v7478 = vadd.f32 %v7474, %v7477
  %vm7479 = vweird.f32 %v7458
  %vm7480 = vweird.f32 %v7474
  %vm7481 = vmor %vm7479, %vm7480
  %v7482 = vsel %vm7481, %v7474, %v7478
  %v7483 = vand.u32 2147483647, %v7458
  %vm7484 = vcmp.eq.f32.partialorder %v7483, 8.507059e+37
  %v7485 = vand.u32 %v7458, 2147483648
  %v7486 = vor.u32 1.1754944e-38, %v7485
  %v7487 = vsel %vm7484, %v7486, %v7482
  %v7488 = vmul.f32 1.0, %v7487
  %v7489 = vrcp.pop %v7459
  %v7490 = vmul.f32 %v7459, %v7489
  %v7491 = vsub.f32 1.0, %v7490
  %v7492 = vmul.f32 %v7489, %v7491
  %v7493 = vadd.f32 %v7489, %v7492
  %vm7494 = vweird.f32 %v7459
  %vm7495 = vweird.f32 %v7489
  %vm7496 = vmor %vm7494, %vm7495
  %v7497 = vsel %vm7496, %v7489, %v7493
  %v7498 = vand.u32 2147483647, %v7459
  %vm7499 = vcmp.eq.f32.partialorder %v7498, 8.507059e+37
  %v7500 = vand.u32 %v7459, 2147483648
  %v7501 = vor.u32 1.1754944e-38, %v7500
  %v7502 = vsel %vm7499, %v7501, %v7497
  %v7503 = vmul.f32 1.0, %v7502
  %v7504 = vrcp.pop %v7460
  %v7505 = vmul.f32 %v7460, %v7504
  %v7506 = vsub.f32 1.0, %v7505
  %v7507 = vmul.f32 %v7504, %v7506
  %v7508 = vadd.f32 %v7504, %v7507
  %vm7509 = vweird.f32 %v7460
  %vm7510 = vweird.f32 %v7504
  %vm7511 = vmor %vm7509, %vm7510
  %v7512 = vsel %vm7511, %v7504, %v7508
  %v7513 = vand.u32 2147483647, %v7460
  %vm7514 = vcmp.eq.f32.partialorder %v7513, 8.507059e+37
  %v7515 = vand.u32 %v7460, 2147483648
  %v7516 = vor.u32 1.1754944e-38, %v7515
  %v7517 = vsel %vm7514, %v7516, %v7512
  %v7518 = vmul.f32 1.0, %v7517
  %v7519 = vrcp.pop %v7461
  %v7520 = vmul.f32 %v7461, %v7519
  %v7521 = vsub.f32 1.0, %v7520
  %v7522 = vmul.f32 %v7519, %v7521
  %v7523 = vadd.f32 %v7519, %v7522
  %vm7524 = vweird.f32 %v7461
  %vm7525 = vweird.f32 %v7519
  %vm7526 = vmor %vm7524, %vm7525
  %v7527 = vsel %vm7526, %v7519, %v7523
  %v7528 = vand.u32 2147483647, %v7461
  %vm7529 = vcmp.eq.f32.partialorder %v7528, 8.507059e+37
  %v7530 = vand.u32 %v7461, 2147483648
  %v7531 = vor.u32 1.1754944e-38, %v7530
  %v7532 = vsel %vm7529, %v7531, %v7527
  %v7533 = vmul.f32 1.0, %v7532
  %v7534 = vrcp.pop %v7462
  %v7535 = vmul.f32 %v7462, %v7534
  %v7536 = vsub.f32 1.0, %v7535
  %v7537 = vmul.f32 %v7534, %v7536
  %v7538 = vadd.f32 %v7534, %v7537
  %vm7539 = vweird.f32 %v7462
  %vm7540 = vweird.f32 %v7534
  %vm7541 = vmor %vm7539, %vm7540
  %v7542 = vsel %vm7541, %v7534, %v7538
  %v7543 = vand.u32 2147483647, %v7462
  %vm7544 = vcmp.eq.f32.partialorder %v7543, 8.507059e+37
  %v7545 = vand.u32 %v7462, 2147483648
  %v7546 = vor.u32 1.1754944e-38, %v7545
  %v7547 = vsel %vm7544, %v7546, %v7542
  %v7548 = vmul.f32 1.0, %v7547
  %v7549 = vrcp.pop %v7463
  %v7550 = vmul.f32 %v7463, %v7549
  %v7551 = vsub.f32 1.0, %v7550
  %v7552 = vmul.f32 %v7549, %v7551
  %v7553 = vadd.f32 %v7549, %v7552
  %vm7554 = vweird.f32 %v7463
  %vm7555 = vweird.f32 %v7549
  %vm7556 = vmor %vm7554, %vm7555
  %v7557 = vsel %vm7556, %v7549, %v7553
  %v7558 = vand.u32 2147483647, %v7463
  %vm7559 = vcmp.eq.f32.partialorder %v7558, 8.507059e+37
  %v7560 = vand.u32 %v7463, 2147483648
  %v7561 = vor.u32 1.1754944e-38, %v7560
  %v7562 = vsel %vm7559, %v7561, %v7557
  %v7563 = vmul.f32 1.0, %v7562
  %v7564 = vrcp.pop %v7464
  %v7565 = vmul.f32 %v7464, %v7564
  %v7566 = vsub.f32 1.0, %v7565
  %v7567 = vmul.f32 %v7564, %v7566
  %v7568 = vadd.f32 %v7564, %v7567
  %vm7569 = vweird.f32 %v7464
  %vm7570 = vweird.f32 %v7564
  %vm7571 = vmor %vm7569, %vm7570
  %v7572 = vsel %vm7571, %v7564, %v7568
  %v7573 = vand.u32 2147483647, %v7464
  %vm7574 = vcmp.eq.f32.partialorder %v7573, 8.507059e+37
  %v7575 = vand.u32 %v7464, 2147483648
  %v7576 = vor.u32 1.1754944e-38, %v7575
  %v7577 = vsel %vm7574, %v7576, %v7572
  %v7578 = vmul.f32 1.0, %v7577
  %v7579 = vrcp.pop %v7465
  %v7580 = vmul.f32 %v7465, %v7579
  %v7581 = vsub.f32 1.0, %v7580
  %v7582 = vmul.f32 %v7579, %v7581
  %v7583 = vadd.f32 %v7579, %v7582
  %vm7584 = vweird.f32 %v7465
  %vm7585 = vweird.f32 %v7579
  %vm7586 = vmor %vm7584, %vm7585
  %v7587 = vsel %vm7586, %v7579, %v7583
  %v7588 = vand.u32 2147483647, %v7465
  %vm7589 = vcmp.eq.f32.partialorder %v7588, 8.507059e+37
  %v7590 = vand.u32 %v7465, 2147483648
  %v7591 = vor.u32 1.1754944e-38, %v7590
  %v7592 = vsel %vm7589, %v7591, %v7587
  %v7593 = vmul.f32 1.0, %v7592
  %v7594 = vrcp.pop %v7466
  %v7595 = vmul.f32 %v7466, %v7594
  %v7596 = vsub.f32 1.0, %v7595
  %v7597 = vmul.f32 %v7594, %v7596
  %v7598 = vadd.f32 %v7594, %v7597
  %vm7599 = vweird.f32 %v7466
  %vm7600 = vweird.f32 %v7594
  %vm7601 = vmor %vm7599, %vm7600
  %v7602 = vsel %vm7601, %v7594, %v7598
  %v7603 = vand.u32 2147483647, %v7466
  %vm7604 = vcmp.eq.f32.partialorder %v7603, 8.507059e+37
  %v7605 = vand.u32 %v7466, 2147483648
  %v7606 = vor.u32 1.1754944e-38, %v7605
  %v7607 = vsel %vm7604, %v7606, %v7602
  %v7608 = vmul.f32 1.0, %v7607
  %v7609 = vrcp.pop %v7467
  %v7610 = vmul.f32 %v7467, %v7609
  %v7611 = vsub.f32 1.0, %v7610
  %v7612 = vmul.f32 %v7609, %v7611
  %v7613 = vadd.f32 %v7609, %v7612
  %vm7614 = vweird.f32 %v7467
  %vm7615 = vweird.f32 %v7609
  %vm7616 = vmor %vm7614, %vm7615
  %v7617 = vsel %vm7616, %v7609, %v7613
  %v7618 = vand.u32 2147483647, %v7467
  %vm7619 = vcmp.eq.f32.partialorder %v7618, 8.507059e+37
  %v7620 = vand.u32 %v7467, 2147483648
  %v7621 = vor.u32 1.1754944e-38, %v7620
  %v7622 = vsel %vm7619, %v7621, %v7617
  %v7623 = vmul.f32 1.0, %v7622
  %v7624 = vrcp.pop %v7468
  %v7625 = vmul.f32 %v7468, %v7624
  %v7626 = vsub.f32 1.0, %v7625
  %v7627 = vmul.f32 %v7624, %v7626
  %v7628 = vadd.f32 %v7624, %v7627
  %vm7629 = vweird.f32 %v7468
  %vm7630 = vweird.f32 %v7624
  %vm7631 = vmor %vm7629, %vm7630
  %v7632 = vsel %vm7631, %v7624, %v7628
  %v7633 = vand.u32 2147483647, %v7468
  %vm7634 = vcmp.eq.f32.partialorder %v7633, 8.507059e+37
  %v7635 = vand.u32 %v7468, 2147483648
  %v7636 = vor.u32 1.1754944e-38, %v7635
  %v7637 = vsel %vm7634, %v7636, %v7632
  %v7638 = vmul.f32 1.0, %v7637
  %v7639 = vrcp.pop %v7469
  %v7640 = vmul.f32 %v7469, %v7639
  %v7641 = vsub.f32 1.0, %v7640
  %v7642 = vmul.f32 %v7639, %v7641
  %v7643 = vadd.f32 %v7639, %v7642
  %vm7644 = vweird.f32 %v7469
  %vm7645 = vweird.f32 %v7639
  %vm7646 = vmor %vm7644, %vm7645
  %v7647 = vsel %vm7646, %v7639, %v7643
  %v7648 = vand.u32 2147483647, %v7469
  %vm7649 = vcmp.eq.f32.partialorder %v7648, 8.507059e+37
  %v7650 = vand.u32 %v7469, 2147483648
  %v7651 = vor.u32 1.1754944e-38, %v7650
  %v7652 = vsel %vm7649, %v7651, %v7647
  %v7653 = vmul.f32 1.0, %v7652
  %v7654 = vrcp.pop %v7470
  %v7655 = vmul.f32 %v7470, %v7654
  %v7656 = vsub.f32 1.0, %v7655
  %v7657 = vmul.f32 %v7654, %v7656
  %v7658 = vadd.f32 %v7654, %v7657
  %vm7659 = vweird.f32 %v7470
  %vm7660 = vweird.f32 %v7654
  %vm7661 = vmor %vm7659, %vm7660
  %v7662 = vsel %vm7661, %v7654, %v7658
  %v7663 = vand.u32 2147483647, %v7470
  %vm7664 = vcmp.eq.f32.partialorder %v7663, 8.507059e+37
  %v7665 = vand.u32 %v7470, 2147483648
  %v7666 = vor.u32 1.1754944e-38, %v7665
  %v7667 = vsel %vm7664, %v7666, %v7662
  %v7668 = vmul.f32 1.0, %v7667
  %v7669 = vrcp.pop %v7471
  %v7670 = vmul.f32 %v7471, %v7669
  %v7671 = vsub.f32 1.0, %v7670
  %v7672 = vmul.f32 %v7669, %v7671
  %v7673 = vadd.f32 %v7669, %v7672
  %vm7674 = vweird.f32 %v7471
  %vm7675 = vweird.f32 %v7669
  %vm7676 = vmor %vm7674, %vm7675
  %v7677 = vsel %vm7676, %v7669, %v7673
  %v7678 = vand.u32 2147483647, %v7471
  %vm7679 = vcmp.eq.f32.partialorder %v7678, 8.507059e+37
  %v7680 = vand.u32 %v7471, 2147483648
  %v7681 = vor.u32 1.1754944e-38, %v7680
  %v7682 = vsel %vm7679, %v7681, %v7677
  %v7683 = vmul.f32 1.0, %v7682
  %v7684 = vrcp.pop %v7472
  %v7685 = vmul.f32 %v7472, %v7684
  %v7686 = vsub.f32 1.0, %v7685
  %v7687 = vmul.f32 %v7684, %v7686
  %v7688 = vadd.f32 %v7684, %v7687
  %vm7689 = vweird.f32 %v7472
  %vm7690 = vweird.f32 %v7684
  %vm7691 = vmor %vm7689, %vm7690
  %v7692 = vsel %vm7691, %v7684, %v7688
  %v7693 = vand.u32 2147483647, %v7472
  %vm7694 = vcmp.eq.f32.partialorder %v7693, 8.507059e+37
  %v7695 = vand.u32 %v7472, 2147483648
  %v7696 = vor.u32 1.1754944e-38, %v7695
  %v7697 = vsel %vm7694, %v7696, %v7692
  %v7698 = vmul.f32 1.0, %v7697
  %v7699 = vrcp.pop %v7473
  %v7700 = vmul.f32 %v7473, %v7699
  %v7701 = vsub.f32 1.0, %v7700
  %v7702 = vmul.f32 %v7699, %v7701
  %v7703 = vadd.f32 %v7699, %v7702
  %vm7704 = vweird.f32 %v7473
  %vm7705 = vweird.f32 %v7699
  %vm7706 = vmor %vm7704, %vm7705
  %v7707 = vsel %vm7706, %v7699, %v7703
  %v7708 = vand.u32 2147483647, %v7473
  %vm7709 = vcmp.eq.f32.partialorder %v7708, 8.507059e+37
  %v7710 = vand.u32 %v7473, 2147483648
  %v7711 = vor.u32 1.1754944e-38, %v7710
  %v7712 = vsel %vm7709, %v7711, %v7707
  %v7713 = vmul.f32 1.0, %v7712
  %7714 = vrot.lane.b32.xlu0 %v7359, 32
  %v7715 = vpop.permute.xlu0 %7714
  %7716 = vrot.lane.b32.xlu0 %v7363, 32
  %v7717 = vpop.permute.xlu0 %7716
  %7718 = vrot.lane.b32.xlu0 %v7364, 32
  %v7719 = vpop.permute.xlu0 %7718
  %7720 = vrot.lane.b32.xlu0 %v7365, 32
  %v7721 = vpop.permute.xlu0 %7720
  %7722 = vrot.lane.b32.xlu0 %v7366, 32
  %v7723 = vpop.permute.xlu0 %7722
  %7724 = vrot.lane.b32.xlu0 %v7367, 32
  %v7725 = vpop.permute.xlu0 %7724
  %7726 = vrot.lane.b32.xlu0 %v7368, 32
  %v7727 = vpop.permute.xlu0 %7726
  %7728 = vrot.lane.b32.xlu0 %v7369, 32
  %v7729 = vpop.permute.xlu0 %7728
  %v7738 = vmul.f32 %v7488, %v7715
  %v7739 = vmul.f32 %v7518, %v7717
  %v7740 = vmul.f32 %v7548, %v7719
  %v7741 = vmul.f32 %v7578, %v7721
  %v7742 = vmul.f32 %v7608, %v7723
  %v7743 = vmul.f32 %v7638, %v7725
  %v7744 = vmul.f32 %v7668, %v7727
  %v7745 = vmul.f32 %v7698, %v7729
  %7754 = vrot.lane.b32.xlu0 %v7738, 64
  %v7755 = vpop.permute.xlu0 %7754
  %7756 = vrot.lane.b32.xlu0 %v7739, 64
  %v7757 = vpop.permute.xlu0 %7756
  %7758 = vrot.lane.b32.xlu0 %v7740, 64
  %v7759 = vpop.permute.xlu0 %7758
  %7760 = vrot.lane.b32.xlu0 %v7741, 64
  %v7761 = vpop.permute.xlu0 %7760
  %7762 = vrot.lane.b32.xlu0 %v7742, 64
  %v7763 = vpop.permute.xlu0 %7762
  %7764 = vrot.lane.b32.xlu0 %v7743, 64
  %v7765 = vpop.permute.xlu0 %7764
  %7766 = vrot.lane.b32.xlu0 %v7744, 64
  %v7767 = vpop.permute.xlu0 %7766
  %7768 = vrot.lane.b32.xlu0 %v7745, 64
  %v7769 = vpop.permute.xlu0 %7768
  %v7778 = vadd.f32 %v7330, %v7755
  %v7779 = vadd.f32 %v7332, %v7757
  %v7780 = vadd.f32 %v7334, %v7759
  %v7781 = vadd.f32 %v7336, %v7761
  %v7782 = vadd.f32 %v7338, %v7763
  %v7783 = vadd.f32 %v7340, %v7765
  %v7784 = vadd.f32 %v7342, %v7767
  %v7785 = vadd.f32 %v7344, %v7769
  %v7786 = vtanh.pop %v7778
  %v7787 = vtanh.pop %v7779
  %v7788 = vtanh.pop %v7780
  %v7789 = vtanh.pop %v7781
  %v7790 = vtanh.pop %v7782
  %v7791 = vtanh.pop %v7783
  %v7792 = vtanh.pop %v7784
  %v7793 = vtanh.pop %v7785
  %v7794 = vsub.f32 1.0, %v7503
  %v7795 = vsub.f32 1.0, %v7533
  %v7796 = vsub.f32 1.0, %v7563
  %v7797 = vsub.f32 1.0, %v7593
  %v7798 = vsub.f32 1.0, %v7623
  %v7799 = vsub.f32 1.0, %v7653
  %v7800 = vsub.f32 1.0, %v7683
  %v7801 = vsub.f32 1.0, %v7713
  %7810 = vrot.lane.b32.xlu0 %v7786, 96
  %v7811 = vpop.permute.xlu0 %7810
  %7812 = vrot.lane.b32.xlu0 %v7787, 96
  %v7813 = vpop.permute.xlu0 %7812
  %7814 = vrot.lane.b32.xlu0 %v7788, 96
  %v7815 = vpop.permute.xlu0 %7814
  %7816 = vrot.lane.b32.xlu0 %v7789, 96
  %v7817 = vpop.permute.xlu0 %7816
  %7818 = vrot.lane.b32.xlu0 %v7790, 96
  %v7819 = vpop.permute.xlu0 %7818
  %7820 = vrot.lane.b32.xlu0 %v7791, 96
  %v7821 = vpop.permute.xlu0 %7820
  %7822 = vrot.lane.b32.xlu0 %v7792, 96
  %v7823 = vpop.permute.xlu0 %7822
  %7824 = vrot.lane.b32.xlu0 %v7793, 96
  %v7825 = vpop.permute.xlu0 %7824
  %v7834 = vmul.f32 %v7794, %v7811
  %v7835 = vmul.f32 %v7795, %v7813
  %v7836 = vmul.f32 %v7796, %v7815
  %v7837 = vmul.f32 %v7797, %v7817
  %v7838 = vmul.f32 %v7798, %v7819
  %v7839 = vmul.f32 %v7799, %v7821
  %v7840 = vmul.f32 %v7800, %v7823
  %v7841 = vmul.f32 %v7801, %v7825
  %v7843 = vrot.slane %v7328, 1
  %v7844 = vrot.slane %v7328, 2
  %v7845 = vrot.slane %v7328, 3
  %v7846 = vrot.slane %v7328, 4
  %v7847 = vrot.slane %v7328, 5
  %v7848 = vrot.slane %v7328, 6
  %v7849 = vrot.slane %v7328, 7
  %v7858 = vmul.f32 %v7503, %v7328
  %v7859 = vmul.f32 %v7533, %v7843
  %v7860 = vmul.f32 %v7563, %v7844
  %v7861 = vmul.f32 %v7593, %v7845
  %v7862 = vmul.f32 %v7623, %v7846
  %v7863 = vmul.f32 %v7653, %v7847
  %v7864 = vmul.f32 %v7683, %v7848
  %v7865 = vmul.f32 %v7713, %v7849
  %v7866 = vadd.f32 %v7834, %v7858
  %v7867 = vadd.f32 %v7835, %v7859
  %v7868 = vadd.f32 %v7836, %v7860
  %v7869 = vadd.f32 %v7837, %v7861
  %v7870 = vadd.f32 %v7838, %v7862
  %v7871 = vadd.f32 %v7839, %v7863
  %v7872 = vadd.f32 %v7840, %v7864
  %v7873 = vadd.f32 %v7841, %v7865
  %v7882 = vrot.slane %v7867, 7
  %v7883 = vsel %vm564, %v7882, %v7866
  %v7884 = vrot.slane %v7868, 6
  %v7885 = vsel %vm567, %v7884, %v7883
  %v7886 = vrot.slane %v7869, 5
  %v7887 = vsel %vm570, %v7886, %v7885
  %v7888 = vrot.slane %v7870, 4
  %v7889 = vsel %vm573, %v7888, %v7887
  %v7890 = vrot.slane %v7871, 3
  %v7891 = vsel %vm576, %v7890, %v7889
  %v7892 = vrot.slane %v7872, 2
  %v7893 = vsel %vm579, %v7892, %v7891
  %v7894 = vrot.slane %v7873, 1
  %v7895 = vsel %vm582, %v7894, %v7893
  %v7897 = vsel %vm986, %v7895, 0.0
  %v7899 = vrot.slane %v7897, 1
  %v7900 = vrot.slane %v7897, 2
  %v7901 = vrot.slane %v7897, 3
  %v7902 = vrot.slane %v7897, 4
  %v7903 = vrot.slane %v7897, 5
  %v7904 = vrot.slane %v7897, 6
  %v7905 = vrot.slane %v7897, 7
  %v7906 = vperm.slane %v7897, 0
  %v7907 = vperm.slane %v7899, 0
  %v7908 = vperm.slane %v7900, 0
  %v7909 = vperm.slane %v7901, 0
  %v7910 = vperm.slane %v7902, 0
  %v7911 = vperm.slane %v7903, 0
  %v7912 = vperm.slane %v7904, 0
  %v7913 = vperm.slane %v7905, 0
  %7914 = vrot.lane.b32.xlu0 %v7906, 32
  %v7915 = vpop.permute.xlu0 %7914
  %7916 = vrot.lane.b32.xlu0 %v7907, 32
  %v7917 = vpop.permute.xlu0 %7916
  %7918 = vrot.lane.b32.xlu0 %v7908, 32
  %v7919 = vpop.permute.xlu0 %7918
  %7920 = vrot.lane.b32.xlu0 %v7909, 32
  %v7921 = vpop.permute.xlu0 %7920
  %7922 = vrot.lane.b32.xlu0 %v7910, 32
  %v7923 = vpop.permute.xlu0 %7922
  %7924 = vrot.lane.b32.xlu0 %v7911, 32
  %v7925 = vpop.permute.xlu0 %7924
  %7926 = vrot.lane.b32.xlu0 %v7912, 32
  %v7927 = vpop.permute.xlu0 %7926
  %7928 = vrot.lane.b32.xlu0 %v7913, 32
  %v7929 = vpop.permute.xlu0 %7928
  %7938 = vst.msk [vmem:[%s12 + $0x1] sm:$0x1] %vm4238, %v7915
  %7939 = vst.msk [vmem:[%s12 + $0x9] sm:$0x1] %vm4238, %v7917
  %7940 = vst.msk [vmem:[%s12 + $0x11] sm:$0x1] %vm4238, %v7919
  %7941 = vst.msk [vmem:[%s12 + $0x19] sm:$0x1] %vm4238, %v7921
  %7942 = vst.msk [vmem:[%s12 + $0x21] sm:$0x1] %vm4238, %v7923
  %7943 = vst.msk [vmem:[%s12 + $0x29] sm:$0x1] %vm4238, %v7925
  %7944 = vst.msk [vmem:[%s12 + $0x31] sm:$0x1] %vm4238, %v7927
  %7945 = vst.msk [vmem:[%s12 + $0x39] sm:$0x1] %vm4238, %v7929
  %v7946 = vsel %vm986, %v7895, %v7328
  %v7947 = vld [vmem:[#allocation2] ss:$0 sm:$0xff]
  %v7948 = vld [vmem:[#allocation2 + $0x8] ss:$0 sm:$0xff]
  %v7949 = vld [vmem:[#allocation2 + $0x10] ss:$0 sm:$0xff]
  %v7950 = vld [vmem:[#allocation2 + $0x18] ss:$0 sm:$0xff]
  %v7951 = vld [vmem:[#allocation2 + $0x20] ss:$0 sm:$0xff]
  %v7952 = vld [vmem:[#allocation2 + $0x28] ss:$0 sm:$0xff]
  %v7953 = vld [vmem:[#allocation2 + $0x30] ss:$0 sm:$0xff]
  %v7954 = vld [vmem:[#allocation2 + $0x38] ss:$0 sm:$0xff]
  %v7955 = vld [vmem:[#allocation2 + $0x40] ss:$0 sm:$0xff]
  %v7956 = vld [vmem:[#allocation2 + $0x48] ss:$0 sm:$0xff]
  %v7957 = vld [vmem:[#allocation2 + $0x50] ss:$0 sm:$0xff]
  %v7958 = vld [vmem:[#allocation2 + $0x58] ss:$0 sm:$0xff]
  %v7959 = vld [vmem:[#allocation2 + $0x60] ss:$0 sm:$0xff]
  %v7960 = vld [vmem:[#allocation2 + $0x68] ss:$0 sm:$0xff]
  %v7961 = vld [vmem:[#allocation2 + $0x70] ss:$0 sm:$0xff]
  %v7962 = vld [vmem:[#allocation2 + $0x78] ss:$0 sm:$0xff]
  %v7963 = vpack.c.bf16 %v7946, %v7946
  %v7965 = vsel %vm212, %v7963, 0
  %7967 = vmatpush.bf16.msra.mxu0 0
  %7968 = vmatpush.bf16.msra.mxu0 0
  %7969 = vmatpush.bf16.msra.mxu0 0
  %7970 = vmatpush.bf16.msra.mxu0 0
  %7971 = vmatpush.bf16.msra.mxu0 0
  %7972 = vmatpush.bf16.msra.mxu0 0
  %7973 = vmatpush.bf16.msra.mxu0 %v3662
  %7974 = vmatpush.bf16.msra.mxu0 %v3661
  %7975 = vmatmul.bf16.gmra.mxu0 %v7965
  %v7976 = vpop.f32.mrf.mxu0
  %v7977 = vadd.f32 %v3651, %v7976
  %v7978 = vpop.f32.mrf.mxu0
  %7979 = vdwg.mxu0
  %v7981 = vrot.slane %v7977, 1
  %v7982 = vrot.slane %v7977, 2
  %v7983 = vrot.slane %v7977, 3
  %v7984 = vrot.slane %v7977, 4
  %v7985 = vrot.slane %v7977, 5
  %v7986 = vrot.slane %v7977, 6
  %v7987 = vrot.slane %v7977, 7
  %7988 = vrot.lane.b32.xlu0 %v7977, 96
  %v7989 = vpop.permute.xlu0 %7988
  %7990 = vrot.lane.b32.xlu0 %v7981, 96
  %v7991 = vpop.permute.xlu0 %7990
  %7992 = vrot.lane.b32.xlu0 %v7982, 96
  %v7993 = vpop.permute.xlu0 %7992
  %7994 = vrot.lane.b32.xlu0 %v7983, 96
  %v7995 = vpop.permute.xlu0 %7994
  %7996 = vrot.lane.b32.xlu0 %v7984, 96
  %v7997 = vpop.permute.xlu0 %7996
  %7998 = vrot.lane.b32.xlu0 %v7985, 96
  %v7999 = vpop.permute.xlu0 %7998
  %8000 = vrot.lane.b32.xlu0 %v7986, 96
  %v8001 = vpop.permute.xlu0 %8000
  %8002 = vrot.lane.b32.xlu0 %v7987, 96
  %v8003 = vpop.permute.xlu0 %8002
  %v8012 = vadd.f32 %v7947, %v7989
  %v8013 = vadd.f32 %v7948, %v7989
  %v8014 = vadd.f32 %v7949, %v7991
  %v8015 = vadd.f32 %v7950, %v7991
  %v8016 = vadd.f32 %v7951, %v7993
  %v8017 = vadd.f32 %v7952, %v7993
  %v8018 = vadd.f32 %v7953, %v7995
  %v8019 = vadd.f32 %v7954, %v7995
  %v8020 = vadd.f32 %v7955, %v7997
  %v8021 = vadd.f32 %v7956, %v7997
  %v8022 = vadd.f32 %v7957, %v7999
  %v8023 = vadd.f32 %v7958, %v7999
  %v8024 = vadd.f32 %v7959, %v8001
  %v8025 = vadd.f32 %v7960, %v8001
  %v8026 = vadd.f32 %v7961, %v8003
  %v8027 = vadd.f32 %v7962, %v8003
  %v8028 = vxor.u32 %v8012, 2147483648
  %v8029 = vxor.u32 %v8013, 2147483648
  %v8030 = vxor.u32 %v8014, 2147483648
  %v8031 = vxor.u32 %v8015, 2147483648
  %v8032 = vxor.u32 %v8016, 2147483648
  %v8033 = vxor.u32 %v8017, 2147483648
  %v8034 = vxor.u32 %v8018, 2147483648
  %v8035 = vxor.u32 %v8019, 2147483648
  %v8036 = vxor.u32 %v8020, 2147483648
  %v8037 = vxor.u32 %v8021, 2147483648
  %v8038 = vxor.u32 %v8022, 2147483648
  %v8039 = vxor.u32 %v8023, 2147483648
  %v8040 = vxor.u32 %v8024, 2147483648
  %v8041 = vxor.u32 %v8025, 2147483648
  %v8042 = vxor.u32 %v8026, 2147483648
  %v8043 = vxor.u32 %v8027, 2147483648
  %v8044 = vmul.f32 %v8028, 1.442695
  %v8045 = vpow.pop %v8044
  %v8046 = vmul.f32 %v8029, 1.442695
  %v8047 = vpow.pop %v8046
  %v8048 = vmul.f32 %v8030, 1.442695
  %v8049 = vpow.pop %v8048
  %v8050 = vmul.f32 %v8031, 1.442695
  %v8051 = vpow.pop %v8050
  %v8052 = vmul.f32 %v8032, 1.442695
  %v8053 = vpow.pop %v8052
  %v8054 = vmul.f32 %v8033, 1.442695
  %v8055 = vpow.pop %v8054
  %v8056 = vmul.f32 %v8034, 1.442695
  %v8057 = vpow.pop %v8056
  %v8058 = vmul.f32 %v8035, 1.442695
  %v8059 = vpow.pop %v8058
  %v8060 = vmul.f32 %v8036, 1.442695
  %v8061 = vpow.pop %v8060
  %v8062 = vmul.f32 %v8037, 1.442695
  %v8063 = vpow.pop %v8062
  %v8064 = vmul.f32 %v8038, 1.442695
  %v8065 = vpow.pop %v8064
  %v8066 = vmul.f32 %v8039, 1.442695
  %v8067 = vpow.pop %v8066
  %v8068 = vmul.f32 %v8040, 1.442695
  %v8069 = vpow.pop %v8068
  %v8070 = vmul.f32 %v8041, 1.442695
  %v8071 = vpow.pop %v8070
  %v8072 = vmul.f32 %v8042, 1.442695
  %v8073 = vpow.pop %v8072
  %v8074 = vmul.f32 %v8043, 1.442695
  %v8075 = vpow.pop %v8074
  %v8076 = vadd.f32 %v8045, 1.0
  %v8077 = vadd.f32 %v8047, 1.0
  %v8078 = vadd.f32 %v8049, 1.0
  %v8079 = vadd.f32 %v8051, 1.0
  %v8080 = vadd.f32 %v8053, 1.0
  %v8081 = vadd.f32 %v8055, 1.0
  %v8082 = vadd.f32 %v8057, 1.0
  %v8083 = vadd.f32 %v8059, 1.0
  %v8084 = vadd.f32 %v8061, 1.0
  %v8085 = vadd.f32 %v8063, 1.0
  %v8086 = vadd.f32 %v8065, 1.0
  %v8087 = vadd.f32 %v8067, 1.0
  %v8088 = vadd.f32 %v8069, 1.0
  %v8089 = vadd.f32 %v8071, 1.0
  %v8090 = vadd.f32 %v8073, 1.0
  %v8091 = vadd.f32 %v8075, 1.0
  %v8092 = vrcp.pop %v8076
  %v8093 = vmul.f32 %v8076, %v8092
  %v8094 = vsub.f32 1.0, %v8093
  %v8095 = vmul.f32 %v8092, %v8094
  %v8096 = vadd.f32 %v8092, %v8095
  %vm8097 = vweird.f32 %v8076
  %vm8098 = vweird.f32 %v8092
  %vm8099 = vmor %vm8097, %vm8098
  %v8100 = vsel %vm8099, %v8092, %v8096
  %v8101 = vand.u32 2147483647, %v8076
  %vm8102 = vcmp.eq.f32.partialorder %v8101, 8.507059e+37
  %v8103 = vand.u32 %v8076, 2147483648
  %v8104 = vor.u32 1.1754944e-38, %v8103
  %v8105 = vsel %vm8102, %v8104, %v8100
  %v8106 = vmul.f32 1.0, %v8105
  %v8107 = vrcp.pop %v8077
  %v8108 = vmul.f32 %v8077, %v8107
  %v8109 = vsub.f32 1.0, %v8108
  %v8110 = vmul.f32 %v8107, %v8109
  %v8111 = vadd.f32 %v8107, %v8110
  %vm8112 = vweird.f32 %v8077
  %vm8113 = vweird.f32 %v8107
  %vm8114 = vmor %vm8112, %vm8113
  %v8115 = vsel %vm8114, %v8107, %v8111
  %v8116 = vand.u32 2147483647, %v8077
  %vm8117 = vcmp.eq.f32.partialorder %v8116, 8.507059e+37
  %v8118 = vand.u32 %v8077, 2147483648
  %v8119 = vor.u32 1.1754944e-38, %v8118
  %v8120 = vsel %vm8117, %v8119, %v8115
  %v8121 = vmul.f32 1.0, %v8120
  %v8122 = vrcp.pop %v8078
  %v8123 = vmul.f32 %v8078, %v8122
  %v8124 = vsub.f32 1.0, %v8123
  %v8125 = vmul.f32 %v8122, %v8124
  %v8126 = vadd.f32 %v8122, %v8125
  %vm8127 = vweird.f32 %v8078
  %vm8128 = vweird.f32 %v8122
  %vm8129 = vmor %vm8127, %vm8128
  %v8130 = vsel %vm8129, %v8122, %v8126
  %v8131 = vand.u32 2147483647, %v8078
  %vm8132 = vcmp.eq.f32.partialorder %v8131, 8.507059e+37
  %v8133 = vand.u32 %v8078, 2147483648
  %v8134 = vor.u32 1.1754944e-38, %v8133
  %v8135 = vsel %vm8132, %v8134, %v8130
  %v8136 = vmul.f32 1.0, %v8135
  %v8137 = vrcp.pop %v8079
  %v8138 = vmul.f32 %v8079, %v8137
  %v8139 = vsub.f32 1.0, %v8138
  %v8140 = vmul.f32 %v8137, %v8139
  %v8141 = vadd.f32 %v8137, %v8140
  %vm8142 = vweird.f32 %v8079
  %vm8143 = vweird.f32 %v8137
  %vm8144 = vmor %vm8142, %vm8143
  %v8145 = vsel %vm8144, %v8137, %v8141
  %v8146 = vand.u32 2147483647, %v8079
  %vm8147 = vcmp.eq.f32.partialorder %v8146, 8.507059e+37
  %v8148 = vand.u32 %v8079, 2147483648
  %v8149 = vor.u32 1.1754944e-38, %v8148
  %v8150 = vsel %vm8147, %v8149, %v8145
  %v8151 = vmul.f32 1.0, %v8150
  %v8152 = vrcp.pop %v8080
  %v8153 = vmul.f32 %v8080, %v8152
  %v8154 = vsub.f32 1.0, %v8153
  %v8155 = vmul.f32 %v8152, %v8154
  %v8156 = vadd.f32 %v8152, %v8155
  %vm8157 = vweird.f32 %v8080
  %vm8158 = vweird.f32 %v8152
  %vm8159 = vmor %vm8157, %vm8158
  %v8160 = vsel %vm8159, %v8152, %v8156
  %v8161 = vand.u32 2147483647, %v8080
  %vm8162 = vcmp.eq.f32.partialorder %v8161, 8.507059e+37
  %v8163 = vand.u32 %v8080, 2147483648
  %v8164 = vor.u32 1.1754944e-38, %v8163
  %v8165 = vsel %vm8162, %v8164, %v8160
  %v8166 = vmul.f32 1.0, %v8165
  %v8167 = vrcp.pop %v8081
  %v8168 = vmul.f32 %v8081, %v8167
  %v8169 = vsub.f32 1.0, %v8168
  %v8170 = vmul.f32 %v8167, %v8169
  %v8171 = vadd.f32 %v8167, %v8170
  %vm8172 = vweird.f32 %v8081
  %vm8173 = vweird.f32 %v8167
  %vm8174 = vmor %vm8172, %vm8173
  %v8175 = vsel %vm8174, %v8167, %v8171
  %v8176 = vand.u32 2147483647, %v8081
  %vm8177 = vcmp.eq.f32.partialorder %v8176, 8.507059e+37
  %v8178 = vand.u32 %v8081, 2147483648
  %v8179 = vor.u32 1.1754944e-38, %v8178
  %v8180 = vsel %vm8177, %v8179, %v8175
  %v8181 = vmul.f32 1.0, %v8180
  %v8182 = vrcp.pop %v8082
  %v8183 = vmul.f32 %v8082, %v8182
  %v8184 = vsub.f32 1.0, %v8183
  %v8185 = vmul.f32 %v8182, %v8184
  %v8186 = vadd.f32 %v8182, %v8185
  %vm8187 = vweird.f32 %v8082
  %vm8188 = vweird.f32 %v8182
  %vm8189 = vmor %vm8187, %vm8188
  %v8190 = vsel %vm8189, %v8182, %v8186
  %v8191 = vand.u32 2147483647, %v8082
  %vm8192 = vcmp.eq.f32.partialorder %v8191, 8.507059e+37
  %v8193 = vand.u32 %v8082, 2147483648
  %v8194 = vor.u32 1.1754944e-38, %v8193
  %v8195 = vsel %vm8192, %v8194, %v8190
  %v8196 = vmul.f32 1.0, %v8195
  %v8197 = vrcp.pop %v8083
  %v8198 = vmul.f32 %v8083, %v8197
  %v8199 = vsub.f32 1.0, %v8198
  %v8200 = vmul.f32 %v8197, %v8199
  %v8201 = vadd.f32 %v8197, %v8200
  %vm8202 = vweird.f32 %v8083
  %vm8203 = vweird.f32 %v8197
  %vm8204 = vmor %vm8202, %vm8203
  %v8205 = vsel %vm8204, %v8197, %v8201
  %v8206 = vand.u32 2147483647, %v8083
  %vm8207 = vcmp.eq.f32.partialorder %v8206, 8.507059e+37
  %v8208 = vand.u32 %v8083, 2147483648
  %v8209 = vor.u32 1.1754944e-38, %v8208
  %v8210 = vsel %vm8207, %v8209, %v8205
  %v8211 = vmul.f32 1.0, %v8210
  %v8212 = vrcp.pop %v8084
  %v8213 = vmul.f32 %v8084, %v8212
  %v8214 = vsub.f32 1.0, %v8213
  %v8215 = vmul.f32 %v8212, %v8214
  %v8216 = vadd.f32 %v8212, %v8215
  %vm8217 = vweird.f32 %v8084
  %vm8218 = vweird.f32 %v8212
  %vm8219 = vmor %vm8217, %vm8218
  %v8220 = vsel %vm8219, %v8212, %v8216
  %v8221 = vand.u32 2147483647, %v8084
  %vm8222 = vcmp.eq.f32.partialorder %v8221, 8.507059e+37
  %v8223 = vand.u32 %v8084, 2147483648
  %v8224 = vor.u32 1.1754944e-38, %v8223
  %v8225 = vsel %vm8222, %v8224, %v8220
  %v8226 = vmul.f32 1.0, %v8225
  %v8227 = vrcp.pop %v8085
  %v8228 = vmul.f32 %v8085, %v8227
  %v8229 = vsub.f32 1.0, %v8228
  %v8230 = vmul.f32 %v8227, %v8229
  %v8231 = vadd.f32 %v8227, %v8230
  %vm8232 = vweird.f32 %v8085
  %vm8233 = vweird.f32 %v8227
  %vm8234 = vmor %vm8232, %vm8233
  %v8235 = vsel %vm8234, %v8227, %v8231
  %v8236 = vand.u32 2147483647, %v8085
  %vm8237 = vcmp.eq.f32.partialorder %v8236, 8.507059e+37
  %v8238 = vand.u32 %v8085, 2147483648
  %v8239 = vor.u32 1.1754944e-38, %v8238
  %v8240 = vsel %vm8237, %v8239, %v8235
  %v8241 = vmul.f32 1.0, %v8240
  %v8242 = vrcp.pop %v8086
  %v8243 = vmul.f32 %v8086, %v8242
  %v8244 = vsub.f32 1.0, %v8243
  %v8245 = vmul.f32 %v8242, %v8244
  %v8246 = vadd.f32 %v8242, %v8245
  %vm8247 = vweird.f32 %v8086
  %vm8248 = vweird.f32 %v8242
  %vm8249 = vmor %vm8247, %vm8248
  %v8250 = vsel %vm8249, %v8242, %v8246
  %v8251 = vand.u32 2147483647, %v8086
  %vm8252 = vcmp.eq.f32.partialorder %v8251, 8.507059e+37
  %v8253 = vand.u32 %v8086, 2147483648
  %v8254 = vor.u32 1.1754944e-38, %v8253
  %v8255 = vsel %vm8252, %v8254, %v8250
  %v8256 = vmul.f32 1.0, %v8255
  %v8257 = vrcp.pop %v8087
  %v8258 = vmul.f32 %v8087, %v8257
  %v8259 = vsub.f32 1.0, %v8258
  %v8260 = vmul.f32 %v8257, %v8259
  %v8261 = vadd.f32 %v8257, %v8260
  %vm8262 = vweird.f32 %v8087
  %vm8263 = vweird.f32 %v8257
  %vm8264 = vmor %vm8262, %vm8263
  %v8265 = vsel %vm8264, %v8257, %v8261
  %v8266 = vand.u32 2147483647, %v8087
  %vm8267 = vcmp.eq.f32.partialorder %v8266, 8.507059e+37
  %v8268 = vand.u32 %v8087, 2147483648
  %v8269 = vor.u32 1.1754944e-38, %v8268
  %v8270 = vsel %vm8267, %v8269, %v8265
  %v8271 = vmul.f32 1.0, %v8270
  %v8272 = vrcp.pop %v8088
  %v8273 = vmul.f32 %v8088, %v8272
  %v8274 = vsub.f32 1.0, %v8273
  %v8275 = vmul.f32 %v8272, %v8274
  %v8276 = vadd.f32 %v8272, %v8275
  %vm8277 = vweird.f32 %v8088
  %vm8278 = vweird.f32 %v8272
  %vm8279 = vmor %vm8277, %vm8278
  %v8280 = vsel %vm8279, %v8272, %v8276
  %v8281 = vand.u32 2147483647, %v8088
  %vm8282 = vcmp.eq.f32.partialorder %v8281, 8.507059e+37
  %v8283 = vand.u32 %v8088, 2147483648
  %v8284 = vor.u32 1.1754944e-38, %v8283
  %v8285 = vsel %vm8282, %v8284, %v8280
  %v8286 = vmul.f32 1.0, %v8285
  %v8287 = vrcp.pop %v8089
  %v8288 = vmul.f32 %v8089, %v8287
  %v8289 = vsub.f32 1.0, %v8288
  %v8290 = vmul.f32 %v8287, %v8289
  %v8291 = vadd.f32 %v8287, %v8290
  %vm8292 = vweird.f32 %v8089
  %vm8293 = vweird.f32 %v8287
  %vm8294 = vmor %vm8292, %vm8293
  %v8295 = vsel %vm8294, %v8287, %v8291
  %v8296 = vand.u32 2147483647, %v8089
  %vm8297 = vcmp.eq.f32.partialorder %v8296, 8.507059e+37
  %v8298 = vand.u32 %v8089, 2147483648
  %v8299 = vor.u32 1.1754944e-38, %v8298
  %v8300 = vsel %vm8297, %v8299, %v8295
  %v8301 = vmul.f32 1.0, %v8300
  %v8302 = vrcp.pop %v8090
  %v8303 = vmul.f32 %v8090, %v8302
  %v8304 = vsub.f32 1.0, %v8303
  %v8305 = vmul.f32 %v8302, %v8304
  %v8306 = vadd.f32 %v8302, %v8305
  %vm8307 = vweird.f32 %v8090
  %vm8308 = vweird.f32 %v8302
  %vm8309 = vmor %vm8307, %vm8308
  %v8310 = vsel %vm8309, %v8302, %v8306
  %v8311 = vand.u32 2147483647, %v8090
  %vm8312 = vcmp.eq.f32.partialorder %v8311, 8.507059e+37
  %v8313 = vand.u32 %v8090, 2147483648
  %v8314 = vor.u32 1.1754944e-38, %v8313
  %v8315 = vsel %vm8312, %v8314, %v8310
  %v8316 = vmul.f32 1.0, %v8315
  %v8317 = vrcp.pop %v8091
  %v8318 = vmul.f32 %v8091, %v8317
  %v8319 = vsub.f32 1.0, %v8318
  %v8320 = vmul.f32 %v8317, %v8319
  %v8321 = vadd.f32 %v8317, %v8320
  %vm8322 = vweird.f32 %v8091
  %vm8323 = vweird.f32 %v8317
  %vm8324 = vmor %vm8322, %vm8323
  %v8325 = vsel %vm8324, %v8317, %v8321
  %v8326 = vand.u32 2147483647, %v8091
  %vm8327 = vcmp.eq.f32.partialorder %v8326, 8.507059e+37
  %v8328 = vand.u32 %v8091, 2147483648
  %v8329 = vor.u32 1.1754944e-38, %v8328
  %v8330 = vsel %vm8327, %v8329, %v8325
  %v8331 = vmul.f32 1.0, %v8330
  %8332 = vrot.lane.b32.xlu0 %v7977, 32
  %v8333 = vpop.permute.xlu0 %8332
  %8334 = vrot.lane.b32.xlu0 %v7981, 32
  %v8335 = vpop.permute.xlu0 %8334
  %8336 = vrot.lane.b32.xlu0 %v7982, 32
  %v8337 = vpop.permute.xlu0 %8336
  %8338 = vrot.lane.b32.xlu0 %v7983, 32
  %v8339 = vpop.permute.xlu0 %8338
  %8340 = vrot.lane.b32.xlu0 %v7984, 32
  %v8341 = vpop.permute.xlu0 %8340
  %8342 = vrot.lane.b32.xlu0 %v7985, 32
  %v8343 = vpop.permute.xlu0 %8342
  %8344 = vrot.lane.b32.xlu0 %v7986, 32
  %v8345 = vpop.permute.xlu0 %8344
  %8346 = vrot.lane.b32.xlu0 %v7987, 32
  %v8347 = vpop.permute.xlu0 %8346
  %v8356 = vmul.f32 %v8106, %v8333
  %v8357 = vmul.f32 %v8136, %v8335
  %v8358 = vmul.f32 %v8166, %v8337
  %v8359 = vmul.f32 %v8196, %v8339
  %v8360 = vmul.f32 %v8226, %v8341
  %v8361 = vmul.f32 %v8256, %v8343
  %v8362 = vmul.f32 %v8286, %v8345
  %v8363 = vmul.f32 %v8316, %v8347
  %8372 = vrot.lane.b32.xlu0 %v8356, 64
  %v8373 = vpop.permute.xlu0 %8372
  %8374 = vrot.lane.b32.xlu0 %v8357, 64
  %v8375 = vpop.permute.xlu0 %8374
  %8376 = vrot.lane.b32.xlu0 %v8358, 64
  %v8377 = vpop.permute.xlu0 %8376
  %8378 = vrot.lane.b32.xlu0 %v8359, 64
  %v8379 = vpop.permute.xlu0 %8378
  %8380 = vrot.lane.b32.xlu0 %v8360, 64
  %v8381 = vpop.permute.xlu0 %8380
  %8382 = vrot.lane.b32.xlu0 %v8361, 64
  %v8383 = vpop.permute.xlu0 %8382
  %8384 = vrot.lane.b32.xlu0 %v8362, 64
  %v8385 = vpop.permute.xlu0 %8384
  %8386 = vrot.lane.b32.xlu0 %v8363, 64
  %v8387 = vpop.permute.xlu0 %8386
  %v8396 = vadd.f32 %v7948, %v8373
  %v8397 = vadd.f32 %v7950, %v8375
  %v8398 = vadd.f32 %v7952, %v8377
  %v8399 = vadd.f32 %v7954, %v8379
  %v8400 = vadd.f32 %v7956, %v8381
  %v8401 = vadd.f32 %v7958, %v8383
  %v8402 = vadd.f32 %v7960, %v8385
  %v8403 = vadd.f32 %v7962, %v8387
  %v8404 = vtanh.pop %v8396
  %v8405 = vtanh.pop %v8397
  %v8406 = vtanh.pop %v8398
  %v8407 = vtanh.pop %v8399
  %v8408 = vtanh.pop %v8400
  %v8409 = vtanh.pop %v8401
  %v8410 = vtanh.pop %v8402
  %v8411 = vtanh.pop %v8403
  %v8412 = vsub.f32 1.0, %v8121
  %v8413 = vsub.f32 1.0, %v8151
  %v8414 = vsub.f32 1.0, %v8181
  %v8415 = vsub.f32 1.0, %v8211
  %v8416 = vsub.f32 1.0, %v8241
  %v8417 = vsub.f32 1.0, %v8271
  %v8418 = vsub.f32 1.0, %v8301
  %v8419 = vsub.f32 1.0, %v8331
  %8428 = vrot.lane.b32.xlu0 %v8404, 96
  %v8429 = vpop.permute.xlu0 %8428
  %8430 = vrot.lane.b32.xlu0 %v8405, 96
  %v8431 = vpop.permute.xlu0 %8430
  %8432 = vrot.lane.b32.xlu0 %v8406, 96
  %v8433 = vpop.permute.xlu0 %8432
  %8434 = vrot.lane.b32.xlu0 %v8407, 96
  %v8435 = vpop.permute.xlu0 %8434
  %8436 = vrot.lane.b32.xlu0 %v8408, 96
  %v8437 = vpop.permute.xlu0 %8436
  %8438 = vrot.lane.b32.xlu0 %v8409, 96
  %v8439 = vpop.permute.xlu0 %8438
  %8440 = vrot.lane.b32.xlu0 %v8410, 96
  %v8441 = vpop.permute.xlu0 %8440
  %8442 = vrot.lane.b32.xlu0 %v8411, 96
  %v8443 = vpop.permute.xlu0 %8442
  %v8452 = vmul.f32 %v8412, %v8429
  %v8453 = vmul.f32 %v8413, %v8431
  %v8454 = vmul.f32 %v8414, %v8433
  %v8455 = vmul.f32 %v8415, %v8435
  %v8456 = vmul.f32 %v8416, %v8437
  %v8457 = vmul.f32 %v8417, %v8439
  %v8458 = vmul.f32 %v8418, %v8441
  %v8459 = vmul.f32 %v8419, %v8443
  %v8461 = vrot.slane %v7946, 1
  %v8462 = vrot.slane %v7946, 2
  %v8463 = vrot.slane %v7946, 3
  %v8464 = vrot.slane %v7946, 4
  %v8465 = vrot.slane %v7946, 5
  %v8466 = vrot.slane %v7946, 6
  %v8467 = vrot.slane %v7946, 7
  %v8476 = vmul.f32 %v8121, %v7946
  %v8477 = vmul.f32 %v8151, %v8461
  %v8478 = vmul.f32 %v8181, %v8462
  %v8479 = vmul.f32 %v8211, %v8463
  %v8480 = vmul.f32 %v8241, %v8464
  %v8481 = vmul.f32 %v8271, %v8465
  %v8482 = vmul.f32 %v8301, %v8466
  %v8483 = vmul.f32 %v8331, %v8467
  %v8484 = vadd.f32 %v8452, %v8476
  %v8485 = vadd.f32 %v8453, %v8477
  %v8486 = vadd.f32 %v8454, %v8478
  %v8487 = vadd.f32 %v8455, %v8479
  %v8488 = vadd.f32 %v8456, %v8480
  %v8489 = vadd.f32 %v8457, %v8481
  %v8490 = vadd.f32 %v8458, %v8482
  %v8491 = vadd.f32 %v8459, %v8483
  %v8500 = vrot.slane %v8485, 7
  %v8501 = vsel %vm564, %v8500, %v8484
  %v8502 = vrot.slane %v8486, 6
  %v8503 = vsel %vm567, %v8502, %v8501
  %v8504 = vrot.slane %v8487, 5
  %v8505 = vsel %vm570, %v8504, %v8503
  %v8506 = vrot.slane %v8488, 4
  %v8507 = vsel %vm573, %v8506, %v8505
  %v8508 = vrot.slane %v8489, 3
  %v8509 = vsel %vm576, %v8508, %v8507
  %v8510 = vrot.slane %v8490, 2
  %v8511 = vsel %vm579, %v8510, %v8509
  %v8512 = vrot.slane %v8491, 1
  %v8513 = vsel %vm582, %v8512, %v8511
  %v8515 = vsel %vm554, %v8513, 0.0
  %v8517 = vrot.slane %v8515, 1
  %v8518 = vrot.slane %v8515, 2
  %v8519 = vrot.slane %v8515, 3
  %v8520 = vrot.slane %v8515, 4
  %v8521 = vrot.slane %v8515, 5
  %v8522 = vrot.slane %v8515, 6
  %v8523 = vrot.slane %v8515, 7
  %v8524 = vperm.slane %v8515, 0
  %v8525 = vperm.slane %v8517, 0
  %v8526 = vperm.slane %v8518, 0
  %v8527 = vperm.slane %v8519, 0
  %v8528 = vperm.slane %v8520, 0
  %v8529 = vperm.slane %v8521, 0
  %v8530 = vperm.slane %v8522, 0
  %v8531 = vperm.slane %v8523, 0
  %8532 = vrot.lane.b32.xlu0 %v8524, 32
  %v8533 = vpop.permute.xlu0 %8532
  %8534 = vrot.lane.b32.xlu0 %v8525, 32
  %v8535 = vpop.permute.xlu0 %8534
  %8536 = vrot.lane.b32.xlu0 %v8526, 32
  %v8537 = vpop.permute.xlu0 %8536
  %8538 = vrot.lane.b32.xlu0 %v8527, 32
  %v8539 = vpop.permute.xlu0 %8538
  %8540 = vrot.lane.b32.xlu0 %v8528, 32
  %v8541 = vpop.permute.xlu0 %8540
  %8542 = vrot.lane.b32.xlu0 %v8529, 32
  %v8543 = vpop.permute.xlu0 %8542
  %8544 = vrot.lane.b32.xlu0 %v8530, 32
  %v8545 = vpop.permute.xlu0 %8544
  %8546 = vrot.lane.b32.xlu0 %v8531, 32
  %v8547 = vpop.permute.xlu0 %8546
  %8556 = vst.msk [vmem:[%s12] sm:$0x1] %vm4238, %v8533
  %8557 = vst.msk [vmem:[%s12 + $0x8] sm:$0x1] %vm4238, %v8535
  %8558 = vst.msk [vmem:[%s12 + $0x10] sm:$0x1] %vm4238, %v8537
  %8559 = vst.msk [vmem:[%s12 + $0x18] sm:$0x1] %vm4238, %v8539
  %8560 = vst.msk [vmem:[%s12 + $0x20] sm:$0x1] %vm4238, %v8541
  %8561 = vst.msk [vmem:[%s12 + $0x28] sm:$0x1] %vm4238, %v8543
  %8562 = vst.msk [vmem:[%s12 + $0x30] sm:$0x1] %vm4238, %v8545
  %8563 = vst.msk [vmem:[%s12 + $0x38] sm:$0x1] %vm4238, %v8547
  %v8564 = vld [vmem:[%s12] sm:$0xff]
  %v8565 = vld [vmem:[%s12 + $0x8] sm:$0xff]
  %v8566 = vld [vmem:[%s12 + $0x10] sm:$0xff]
  %v8567 = vld [vmem:[%s12 + $0x18] sm:$0xff]
  %v8568 = vld [vmem:[%s12 + $0x20] sm:$0xff]
  %v8569 = vld [vmem:[%s12 + $0x28] sm:$0xff]
  %v8570 = vld [vmem:[%s12 + $0x30] sm:$0xff]
  %v8571 = vld [vmem:[%s12 + $0x38] sm:$0xff]
  %v8580 = vrot.slane %v8564, 7
  %v8581 = vrot.slane %v8565, 7
  %v8582 = vrot.slane %v8566, 7
  %v8583 = vrot.slane %v8567, 7
  %v8584 = vrot.slane %v8568, 7
  %v8585 = vrot.slane %v8569, 7
  %v8586 = vrot.slane %v8570, 7
  %v8587 = vrot.slane %v8571, 7
  %vm8596 = vcmask 1040384
  %v8597 = vsel %vm8596, 0.0, %v8580
  %v8598 = vsel %vm8596, 0.0, %v8581
  %v8599 = vsel %vm8596, 0.0, %v8582
  %v8600 = vsel %vm8596, 0.0, %v8583
  %v8601 = vsel %vm8596, 0.0, %v8584
  %v8602 = vsel %vm8596, 0.0, %v8585
  %v8603 = vsel %vm8596, 0.0, %v8586
  %v8604 = vsel %vm8596, 0.0, %v8587
  %v8605 = vsel %vm8596, %v8580, 0.0
  %v8606 = vsel %vm8596, %v8581, 0.0
  %v8607 = vsel %vm8596, %v8582, 0.0
  %v8608 = vsel %vm8596, %v8583, 0.0
  %v8609 = vsel %vm8596, %v8584, 0.0
  %v8610 = vsel %vm8596, %v8585, 0.0
  %v8611 = vsel %vm8596, %v8586, 0.0
  %v8612 = vsel %vm8596, %v8587, 0.0
  %v8613 = vpack.c.bf16 %v8598, %v8597
  %v8614 = vpack.c.bf16 %v8600, %v8599
  %v8615 = vpack.c.bf16 %v8602, %v8601
  %v8616 = vpack.c.bf16 %v8604, %v8603
  %v8617 = vld [vmem:[%s8] sm:$0xf]
  %v8618 = vld [vmem:[%s8 + $0x4] sm:$0xf]
  %v8619 = vld [vmem:[%s8 + $0x8] sm:$0xf]
  %v8620 = vld [vmem:[%s8 + $0xc] sm:$0xf]
  %v8621 = vld [vmem:[%s8 + $0x10] sm:$0xf]
  %v8622 = vld [vmem:[%s8 + $0x14] sm:$0xf]
  %v8623 = vld [vmem:[%s8 + $0x18] sm:$0xf]
  %v8624 = vld [vmem:[%s8 + $0x1c] sm:$0xf]
  %vm8641 = vcmask 1046528
  %v8642 = vrot.slane %v8597, 1
  %v8643 = vrot.slane %v8605, 1
  %v8644 = vsel %vm8641, %v8642, %v8643
  %v8645 = vrot.slane %v8598, 1
  %v8646 = vrot.slane %v8606, 1
  %v8647 = vsel %vm8641, %v8645, %v8646
  %v8648 = vrot.slane %v8599, 1
  %v8649 = vrot.slane %v8607, 1
  %v8650 = vsel %vm8641, %v8648, %v8649
  %v8651 = vrot.slane %v8600, 1
  %v8652 = vrot.slane %v8608, 1
  %v8653 = vsel %vm8641, %v8651, %v8652
  %v8654 = vrot.slane %v8601, 1
  %v8655 = vrot.slane %v8609, 1
  %v8656 = vsel %vm8641, %v8654, %v8655
  %v8657 = vrot.slane %v8602, 1
  %v8658 = vrot.slane %v8610, 1
  %v8659 = vsel %vm8641, %v8657, %v8658
  %v8660 = vrot.slane %v8603, 1
  %v8661 = vrot.slane %v8611, 1
  %v8662 = vsel %vm8641, %v8660, %v8661
  %v8663 = vrot.slane %v8604, 1
  %v8664 = vrot.slane %v8612, 1
  %v8665 = vsel %vm8641, %v8663, %v8664
  %v8674 = vpack.c.bf16 %v8647, %v8644
  %v8675 = vpack.c.bf16 %v8653, %v8650
  %v8676 = vpack.c.bf16 %v8659, %v8656
  %v8677 = vpack.c.bf16 %v8665, %v8662
  %s8678 = scalar_lea.vmem %s8, 32
  %v8679 = vld [vmem:[%s8678] sm:$0xf]
  %v8680 = vld [vmem:[%s8678 + $0x4] sm:$0xf]
  %v8681 = vld [vmem:[%s8678 + $0x8] sm:$0xf]
  %v8682 = vld [vmem:[%s8678 + $0xc] sm:$0xf]
  %v8683 = vld [vmem:[%s8678 + $0x10] sm:$0xf]
  %v8684 = vld [vmem:[%s8678 + $0x14] sm:$0xf]
  %v8685 = vld [vmem:[%s8678 + $0x18] sm:$0xf]
  %v8686 = vld [vmem:[%s8678 + $0x1c] sm:$0xf]
  %v8695 = vunpack.c.l.b16 %v8679
  %v8696 = vunpack.c.l.b16 %v8680
  %v8697 = vunpack.c.l.b16 %v8681
  %v8698 = vunpack.c.l.b16 %v8682
  %v8699 = vunpack.c.l.b16 %v8683
  %v8700 = vunpack.c.l.b16 %v8684
  %v8701 = vunpack.c.l.b16 %v8685
  %v8702 = vunpack.c.l.b16 %v8686
  %v8703 = vpack.c.b16 %v8696, %v8695
  %v8704 = vpack.c.b16 %v8698, %v8697
  %v8705 = vpack.c.b16 %v8700, %v8699
  %v8706 = vpack.c.b16 %v8702, %v8701
  %v8712 = vsel %vm162, %v8674, 0
  %v8715 = vsel %vm162, %v8675, 0
  %v8718 = vsel %vm162, %v8676, 0
  %v8721 = vsel %vm162, %v8677, 0
  %8723 = vmatpush.bf16.msra.mxu0 0
  %8724 = vmatpush.bf16.msra.mxu0 0
  %8725 = vmatpush.bf16.msra.mxu0 0
  %8726 = vmatpush.bf16.msra.mxu0 0
  %8727 = vmatpush.bf16.msra.mxu0 %v8706
  %8728 = vmatpush.bf16.msra.mxu0 %v8705
  %8729 = vmatpush.bf16.msra.mxu0 %v8704
  %8730 = vmatpush.bf16.msra.mxu0 %v8703
  %8731 = vmatmul.bf16.gmra.mxu0 %v8712
  %v8732 = vpop.f32.mrf.mxu0
  %v8733 = vadd.f32 0.0, %v8732
  %v8734 = vpop.f32.mrf.mxu0
  %v8735 = vadd.f32 0.0, %v8734
  %8736 = vmatmul.bf16.gmra.mxu0 %v8715
  %v8737 = vpop.f32.mrf.mxu0
  %v8738 = vadd.f32 0.0, %v8737
  %v8739 = vpop.f32.mrf.mxu0
  %v8740 = vadd.f32 0.0, %v8739
  %8741 = vmatmul.bf16.gmra.mxu0 %v8718
  %v8742 = vpop.f32.mrf.mxu0
  %v8743 = vadd.f32 0.0, %v8742
  %v8744 = vpop.f32.mrf.mxu0
  %v8745 = vadd.f32 0.0, %v8744
  %8746 = vmatmul.bf16.gmra.mxu0 %v8721
  %v8747 = vpop.f32.mrf.mxu0
  %v8748 = vadd.f32 0.0, %v8747
  %v8749 = vpop.f32.mrf.mxu0
  %v8750 = vadd.f32 0.0, %v8749
  %8751 = vdwg.mxu0
  %v8760 = vunpack.c.l.b16 %v8617
  %v8761 = vunpack.c.l.b16 %v8618
  %v8762 = vunpack.c.l.b16 %v8619
  %v8763 = vunpack.c.l.b16 %v8620
  %v8764 = vunpack.c.l.b16 %v8621
  %v8765 = vunpack.c.l.b16 %v8622
  %v8766 = vunpack.c.l.b16 %v8623
  %v8767 = vunpack.c.l.b16 %v8624
  %v8768 = vpack.c.b16 %v8761, %v8760
  %v8769 = vpack.c.b16 %v8763, %v8762
  %v8770 = vpack.c.b16 %v8765, %v8764
  %v8771 = vpack.c.b16 %v8767, %v8766
  %v8777 = vsel %vm162, %v8613, 0
  %v8780 = vsel %vm162, %v8614, 0
  %v8783 = vsel %vm162, %v8615, 0
  %v8786 = vsel %vm162, %v8616, 0
  %8788 = vmatpush.bf16.msra.mxu0 0
  %8789 = vmatpush.bf16.msra.mxu0 0
  %8790 = vmatpush.bf16.msra.mxu0 0
  %8791 = vmatpush.bf16.msra.mxu0 0
  %8792 = vmatpush.bf16.msra.mxu0 %v8771
  %8793 = vmatpush.bf16.msra.mxu0 %v8770
  %8794 = vmatpush.bf16.msra.mxu0 %v8769
  %8795 = vmatpush.bf16.msra.mxu0 %v8768
  %8796 = vmatmul.bf16.gmra.mxu0 %v8777
  %v8797 = vpop.f32.mrf.mxu0
  %v8798 = vadd.f32 %v8733, %v8797
  %v8799 = vpop.f32.mrf.mxu0
  %v8800 = vadd.f32 %v8735, %v8799
  %8801 = vmatmul.bf16.gmra.mxu0 %v8780
  %v8802 = vpop.f32.mrf.mxu0
  %v8803 = vadd.f32 %v8738, %v8802
  %v8804 = vpop.f32.mrf.mxu0
  %v8805 = vadd.f32 %v8740, %v8804
  %8806 = vmatmul.bf16.gmra.mxu0 %v8783
  %v8807 = vpop.f32.mrf.mxu0
  %v8808 = vadd.f32 %v8743, %v8807
  %v8809 = vpop.f32.mrf.mxu0
  %v8810 = vadd.f32 %v8745, %v8809
  %8811 = vmatmul.bf16.gmra.mxu0 %v8786
  %v8812 = vpop.f32.mrf.mxu0
  %v8813 = vadd.f32 %v8748, %v8812
  %v8814 = vpop.f32.mrf.mxu0
  %v8815 = vadd.f32 %v8750, %v8814
  %8816 = vdwg.mxu0
  %vm8817 = vcmask 1045504
  %v8818 = vrot.slane %v8597, 2
  %v8819 = vrot.slane %v8605, 2
  %v8820 = vsel %vm8817, %v8818, %v8819
  %v8821 = vrot.slane %v8598, 2
  %v8822 = vrot.slane %v8606, 2
  %v8823 = vsel %vm8817, %v8821, %v8822
  %v8824 = vrot.slane %v8599, 2
  %v8825 = vrot.slane %v8607, 2
  %v8826 = vsel %vm8817, %v8824, %v8825
  %v8827 = vrot.slane %v8600, 2
  %v8828 = vrot.slane %v8608, 2
  %v8829 = vsel %vm8817, %v8827, %v8828
  %v8830 = vrot.slane %v8601, 2
  %v8831 = vrot.slane %v8609, 2
  %v8832 = vsel %vm8817, %v8830, %v8831
  %v8833 = vrot.slane %v8602, 2
  %v8834 = vrot.slane %v8610, 2
  %v8835 = vsel %vm8817, %v8833, %v8834
  %v8836 = vrot.slane %v8603, 2
  %v8837 = vrot.slane %v8611, 2
  %v8838 = vsel %vm8817, %v8836, %v8837
  %v8839 = vrot.slane %v8604, 2
  %v8840 = vrot.slane %v8612, 2
  %v8841 = vsel %vm8817, %v8839, %v8840
  %v8850 = vpack.c.bf16 %v8823, %v8820
  %v8851 = vpack.c.bf16 %v8829, %v8826
  %v8852 = vpack.c.bf16 %v8835, %v8832
  %v8853 = vpack.c.bf16 %v8841, %v8838
  %s8854 = scalar_lea.vmem %s8, 64
  %v8855 = vld [vmem:[%s8854] sm:$0xf]
  %v8856 = vld [vmem:[%s8854 + $0x4] sm:$0xf]
  %v8857 = vld [vmem:[%s8854 + $0x8] sm:$0xf]
  %v8858 = vld [vmem:[%s8854 + $0xc] sm:$0xf]
  %v8859 = vld [vmem:[%s8854 + $0x10] sm:$0xf]
  %v8860 = vld [vmem:[%s8854 + $0x14] sm:$0xf]
  %v8861 = vld [vmem:[%s8854 + $0x18] sm:$0xf]
  %v8862 = vld [vmem:[%s8854 + $0x1c] sm:$0xf]
  %v8871 = vunpack.c.l.b16 %v8855
  %v8872 = vunpack.c.l.b16 %v8856
  %v8873 = vunpack.c.l.b16 %v8857
  %v8874 = vunpack.c.l.b16 %v8858
  %v8875 = vunpack.c.l.b16 %v8859
  %v8876 = vunpack.c.l.b16 %v8860
  %v8877 = vunpack.c.l.b16 %v8861
  %v8878 = vunpack.c.l.b16 %v8862
  %v8879 = vpack.c.b16 %v8872, %v8871
  %v8880 = vpack.c.b16 %v8874, %v8873
  %v8881 = vpack.c.b16 %v8876, %v8875
  %v8882 = vpack.c.b16 %v8878, %v8877
  %v8888 = vsel %vm162, %v8850, 0
  %v8891 = vsel %vm162, %v8851, 0
  %v8894 = vsel %vm162, %v8852, 0
  %v8897 = vsel %vm162, %v8853, 0
  %8899 = vmatpush.bf16.msra.mxu0 0
  %8900 = vmatpush.bf16.msra.mxu0 0
  %8901 = vmatpush.bf16.msra.mxu0 0
  %8902 = vmatpush.bf16.msra.mxu0 0
  %8903 = vmatpush.bf16.msra.mxu0 %v8882
  %8904 = vmatpush.bf16.msra.mxu0 %v8881
  %8905 = vmatpush.bf16.msra.mxu0 %v8880
  %8906 = vmatpush.bf16.msra.mxu0 %v8879
  %8907 = vmatmul.bf16.gmra.mxu0 %v8888
  %v8908 = vpop.f32.mrf.mxu0
  %v8909 = vadd.f32 0.0, %v8908
  %v8910 = vpop.f32.mrf.mxu0
  %v8911 = vadd.f32 0.0, %v8910
  %8912 = vmatmul.bf16.gmra.mxu0 %v8891
  %v8913 = vpop.f32.mrf.mxu0
  %v8914 = vadd.f32 0.0, %v8913
  %v8915 = vpop.f32.mrf.mxu0
  %v8916 = vadd.f32 0.0, %v8915
  %8917 = vmatmul.bf16.gmra.mxu0 %v8894
  %v8918 = vpop.f32.mrf.mxu0
  %v8919 = vadd.f32 0.0, %v8918
  %v8920 = vpop.f32.mrf.mxu0
  %v8921 = vadd.f32 0.0, %v8920
  %8922 = vmatmul.bf16.gmra.mxu0 %v8897
  %v8923 = vpop.f32.mrf.mxu0
  %v8924 = vadd.f32 0.0, %v8923
  %v8925 = vpop.f32.mrf.mxu0
  %v8926 = vadd.f32 0.0, %v8925
  %8927 = vdwg.mxu0
  %v8928 = vadd.f32 %v8798, %v8909
  %v8929 = vadd.f32 %v8800, %v8911
  %v8930 = vadd.f32 %v8803, %v8914
  %v8931 = vadd.f32 %v8805, %v8916
  %v8932 = vadd.f32 %v8808, %v8919
  %v8933 = vadd.f32 %v8810, %v8921
  %v8934 = vadd.f32 %v8813, %v8924
  %v8935 = vadd.f32 %v8815, %v8926
  %v8936 = vld [vmem:[%s9] sm:$0x1]
  %v8938 = vperm.slane %v8936, 0
  %v8940 = vadd.f32 %v8928, %v8938
  %v8941 = vadd.f32 %v8929, %v8938
  %v8942 = vadd.f32 %v8930, %v8938
  %v8943 = vadd.f32 %v8931, %v8938
  %v8944 = vadd.f32 %v8932, %v8938
  %v8945 = vadd.f32 %v8933, %v8938
  %v8946 = vadd.f32 %v8934, %v8938
  %v8947 = vadd.f32 %v8935, %v8938
  %v8948 = vmax.f32 %v8940, 0.0
  %v8949 = vmax.f32 %v8941, 0.0
  %v8950 = vmax.f32 %v8942, 0.0
  %v8951 = vmax.f32 %v8943, 0.0
  %v8952 = vmax.f32 %v8944, 0.0
  %v8953 = vmax.f32 %v8945, 0.0
  %v8954 = vmax.f32 %v8946, 0.0
  %v8955 = vmax.f32 %v8947, 0.0
  %vm8956 = vcmask 64512
  %v8957 = vsel %vm8956, %v8948, -inf
  %v8958 = vrot.slane %v8957, 4
  %v8959 = vmax.f32 %v8957, %v8958
  %v8960 = vrot.slane %v8959, 2
  %v8961 = vmax.f32 %v8959, %v8960
  %v8962 = vrot.slane %v8961, 1
  %v8963 = vmax.f32 %v8961, %v8962
  %v8964 = vsel %vm8956, %v8949, -inf
  %v8965 = vrot.slane %v8964, 4
  %v8966 = vmax.f32 %v8964, %v8965
  %v8967 = vrot.slane %v8966, 2
  %v8968 = vmax.f32 %v8966, %v8967
  %v8969 = vrot.slane %v8968, 1
  %v8970 = vmax.f32 %v8968, %v8969
  %v8971 = vsel %vm8956, %v8950, -inf
  %v8972 = vrot.slane %v8971, 4
  %v8973 = vmax.f32 %v8971, %v8972
  %v8974 = vrot.slane %v8973, 2
  %v8975 = vmax.f32 %v8973, %v8974
  %v8976 = vrot.slane %v8975, 1
  %v8977 = vmax.f32 %v8975, %v8976
  %v8978 = vsel %vm8956, %v8951, -inf
  %v8979 = vrot.slane %v8978, 4
  %v8980 = vmax.f32 %v8978, %v8979
  %v8981 = vrot.slane %v8980, 2
  %v8982 = vmax.f32 %v8980, %v8981
  %v8983 = vrot.slane %v8982, 1
  %v8984 = vmax.f32 %v8982, %v8983
  %v8985 = vsel %vm8956, %v8952, -inf
  %v8986 = vrot.slane %v8985, 4
  %v8987 = vmax.f32 %v8985, %v8986
  %v8988 = vrot.slane %v8987, 2
  %v8989 = vmax.f32 %v8987, %v8988
  %v8990 = vrot.slane %v8989, 1
  %v8991 = vmax.f32 %v8989, %v8990
  %v8992 = vsel %vm8956, %v8953, -inf
  %v8993 = vrot.slane %v8992, 4
  %v8994 = vmax.f32 %v8992, %v8993
  %v8995 = vrot.slane %v8994, 2
  %v8996 = vmax.f32 %v8994, %v8995
  %v8997 = vrot.slane %v8996, 1
  %v8998 = vmax.f32 %v8996, %v8997
  %v8999 = vsel %vm8956, %v8954, -inf
  %v9000 = vrot.slane %v8999, 4
  %v9001 = vmax.f32 %v8999, %v9000
  %v9002 = vrot.slane %v9001, 2
  %v9003 = vmax.f32 %v9001, %v9002
  %v9004 = vrot.slane %v9003, 1
  %v9005 = vmax.f32 %v9003, %v9004
  %v9006 = vsel %vm8956, %v8955, -inf
  %v9007 = vrot.slane %v9006, 4
  %v9008 = vmax.f32 %v9006, %v9007
  %v9009 = vrot.slane %v9008, 2
  %v9010 = vmax.f32 %v9008, %v9009
  %v9011 = vrot.slane %v9010, 1
  %v9012 = vmax.f32 %v9010, %v9011
  %v9013 = vld [vmem:[%s10] sm:$0xff]
  %v9014 = vld [vmem:[%s11] sm:$0x1]
  %v9016 = vperm.slane %v9014, 0
  %v9026 = vsel %vm564, %v8970, %v8963
  %v9027 = vsel %vm567, %v8977, %v9026
  %v9028 = vsel %vm570, %v8984, %v9027
  %v9029 = vsel %vm573, %v8991, %v9028
  %v9030 = vsel %vm576, %v8998, %v9029
  %v9031 = vsel %vm579, %v9005, %v9030
  %v9032 = vsel %vm582, %v9012, %v9031
  %v9033 = vsel %vm8956, %v9032, 0
  %9035 = vmatpush.msra.mxu0 0.0
  %9036 = vmatpush.msra.mxu0 0.0
  %9037 = vmatpush.msra.mxu0 0.0
  %9038 = vmatpush.msra.mxu0 0.0
  %9039 = vmatpush.msra.mxu0 0.0
  %9040 = vmatpush.msra.mxu0 0.0
  %9041 = vmatpush.msra.mxu0 0.0
  %9042 = vmatpush.msra.mxu0 0.0
  %9043 = vmatpush.msra.mxu0 0.0
  %9044 = vmatpush.msra.mxu0 0.0
  %9045 = vmatpush.msra.mxu0 0.0
  %9046 = vmatpush.msra.mxu0 0.0
  %9047 = vmatpush.msra.mxu0 0.0
  %9048 = vmatpush.msra.mxu0 0.0
  %9049 = vmatpush.msra.mxu0 0.0
  %9050 = vmatpush.msra.mxu0 %v9013
  %9051 = vmatmul.f32.gmra.mxu0 %v9033
  %v9052 = vpop.f32.mrf.mxu0
  %v9053 = vadd.f32 %v9016, %v9052
  %9054 = vdwg.mxu0
  %v9055 = vxor.u32 %v9053, 2147483648
  %v9056 = vmul.f32 %v9055, 1.442695
  %v9057 = vpow.pop %v9056
  %v9058 = vadd.f32 %v9057, 1.0
  %v9059 = vrcp.pop %v9058
  %v9060 = vmul.f32 %v9058, %v9059
  %v9061 = vsub.f32 1.0, %v9060
  %v9062 = vmul.f32 %v9059, %v9061
  %v9063 = vadd.f32 %v9059, %v9062
  %vm9064 = vweird.f32 %v9058
  %vm9065 = vweird.f32 %v9059
  %vm9066 = vmor %vm9064, %vm9065
  %v9067 = vsel %vm9066, %v9059, %v9063
  %v9068 = vand.u32 2147483647, %v9058
  %vm9069 = vcmp.eq.f32.partialorder %v9068, 8.507059e+37
  %v9070 = vand.u32 %v9058, 2147483648
  %v9071 = vor.u32 1.1754944e-38, %v9070
  %v9072 = vsel %vm9069, %v9071, %v9067
  %v9073 = vmul.f32 1.0, %v9072
  %vm9074 = vcmp.lt.f32.partialorder %v9073, 0.35
  %v9075 = vsel %vm9074, 0.0, %v9073
  %vm9076 = vcmask 31744
  %9077 = vst.msk [vmem:[%s13] sm:$0xff] %vm9076, %v9075
  // Predicated region
  $region50: #{cnet_forward.1} parent=0 // pred_check
    _
  $region51: #{cnet_forward.1} parent=0 // pred_check_branch
    %9079 = sbr.rel (0) target = $region53
  $region52: #{cnet_forward.1} parent=0 // pred_region
    _
  $region53: #{cnet_forward.1} parent=0 // pred_fallthru
    _
  // Predicated region
  $region54: #{cnet_forward.1} parent=0 // pred_check
    _
  $region55: #{cnet_forward.1} parent=0 // pred_check_branch
    %9081 = sbr.rel (0) target = $region57
  $region56: #{cnet_forward.1} parent=0 // pred_region
    _
  $region57: #{cnet_forward.1} parent=0 // pred_fallthru
    _
  // Predicated region
  $region58: #{cnet_forward.1} parent=0 // pred_check
    _
  $region59: #{cnet_forward.1} parent=0 // pred_check_branch
    %9083 = sbr.rel (0) target = $region61
  $region60: #{cnet_forward.1} parent=0 // pred_region
    _
  $region61: #{cnet_forward.1} parent=0 // pred_fallthru
    _
  // Predicated region
  $region62: #{cnet_forward.1} parent=0 // pred_check
    _
  $region63: #{cnet_forward.1} parent=0 // pred_check_branch
    %9085 = sbr.rel (0) target = $region65
  $region64: #{cnet_forward.1} parent=0 // pred_region
    _
  $region65: #{cnet_forward.1} parent=0 // pred_fallthru
    _

</llo_original>
